<compile_context>
chip_gen: v7x
topology: tpu7x:2x2x1
jax: 0.10.0
libtpu: 0.0.40
codegen_flags: <defaults>
</compile_context>

<pallas_src>
import functools
import numpy as np
import jax
import jax.numpy as jnp
from jax import lax
from jax.experimental import pallas as pl
from jax.experimental.pallas import tpu as pltpu


_BB = 16   # batch tile: native bf16 sublane tile; one grid step per tile


# ----------------------------------------------------------------------------
# Fused kernel: Bi-LSTM recurrence + attention + classifier (one pallas_call)
# ----------------------------------------------------------------------------

def fused_text_classifier_kernel(
        embeds_ref,    # (T, Bb, Ep)   time-major embeddings (matmul dtype)
        len_ref,       # (Bb, 1)       int32 sequence lengths (0 for pad rows)
        wih_ref,       # (Ep, 8Hp)     [Wih_f | Wih_b], gate order i,f,g,o
        whh_ref,       # (Hp, 8Hp)     [Whh_f | Whh_b]  (batch-stacked form)
        b_ref,         # (1, 8Hp)      [b_f | b_b]  (b_ih + b_hh), f32
        watt_ref,      # (Hp, Hp)
        batt_ref,      # (1, Hp)
        wcls_ref,      # (Hp, Cp)
        bcls_ref,      # (1, Cp)
        logits_ref,    # (Bb, Cp)      output
        attn_ref,      # (Bb, T)       output
        gx_ref,        # (T, Bb, 8Hp)  scratch: hoisted input-gate projections
        outf_ref,      # (T, Bb, Hp)   scratch: forward outputs (time-major)
        outb_ref,      # (T, Bb, Hp)   scratch: backward outputs (time-major)
        *, unroll):
    T, Bb, Ep = embeds_ref.shape
    GH2 = wih_ref.shape[1]          # 8 * Hp
    GH = GH2 // 2                   # 4 * Hp  (one direction's gates)
    Hp = GH // 4
    mm_dtype = whh_ref.dtype        # matmul operand dtype (bf16 by default)
    lengths = len_ref[...]          # (Bb, 1) int32

    # (1) Hoisted input projection: one big MXU GEMM for BOTH directions,
    #     (T*Bb, Ep) @ (Ep, 8Hp), instead of T tiny matmuls inside the
    #     serialized recurrence.  Stored in the (narrow) scratch dtype.
    x2d = embeds_ref[...].reshape(T * Bb, Ep)
    gx = jnp.dot(x2d, wih_ref[...], preferred_element_type=jnp.float32)
    gx_ref[...] = (gx + b_ref[...]).reshape(T, Bb, GH2).astype(gx_ref.dtype)

    whh = whh_ref[...]              # (Hp, 8Hp) = [Whh_f | Whh_b]

    def gate_block(gates, c):
        # gates: (Bb, 4Hp); every Hp-wide gate slice is lane-aligned.
        i = jax.nn.sigmoid(gates[:, 0 * Hp:1 * Hp])
        f = jax.nn.sigmoid(gates[:, 1 * Hp:2 * Hp])
        g = jnp.tanh(gates[:, 2 * Hp:3 * Hp])
        o = jax.nn.sigmoid(gates[:, 3 * Hp:4 * Hp])
        c_new = f * c + i * g
        return o * jnp.tanh(c_new), c_new

    zeros = jnp.zeros((Bb, Hp), jnp.float32)

    # (2) Fused fwd/bwd recurrence: forward processes timestep s, backward
    #     processes T-1-s.  Batch-stacked form: ONE (2Bb, Hp) @ (Hp, 8Hp)
    #     matmul per step produces both directions' recurrent contributions
    #     (no zero block-diagonal, half the contraction depth).
    # TODO(synk): hold Whh resident in MXU staging registers across the loop
    # via pltpu.matmul_push_rhs / matmul_acc_lhs / matmul_pop.
    def step(s, carry):
        h_f, c_f, h_b, c_b = carry
        t_b = T - 1 - s
        h_stack = jnp.concatenate([h_f, h_b], axis=0).astype(mm_dtype)  # (2Bb, Hp)
        y = jnp.dot(h_stack, whh, preferred_element_type=jnp.float32)   # (2Bb, 8Hp)
        gates_f = y[:Bb, :GH] + gx_ref[s, :, :GH]
        gates_b = y[Bb:, GH:] + gx_ref[t_b, :, GH:]
        hf_new, cf_new = gate_block(gates_f, c_f)
        hb_new, cb_new = gate_block(gates_b, c_b)
        # packed-sequence masking: only positions t < length update / emit.
        v_f = lengths > s
        v_b = lengths > t_b
        outf_ref[s] = jnp.where(v_f, hf_new, 0.0).astype(outf_ref.dtype)
        outb_ref[t_b] = jnp.where(v_b, hb_new, 0.0).astype(outb_ref.dtype)
        return (jnp.where(v_f, hf_new, h_f), jnp.where(v_f, cf_new, c_f),
                jnp.where(v_b, hb_new, h_b), jnp.where(v_b, cb_new, c_b))

    h_f, c_f, h_b, c_b = lax.fori_loop(
        0, T, step, (zeros, zeros, zeros, zeros), unroll=unroll)

    # (3) Attention + classifier fused in-kernel: the (T,Bb,Hp) LSTM output
    #     never leaves VMEM and is used directly in time-major layout (no
    #     batch-major relayout copy / extra scratch).
    out_tbh = (outf_ref[...].astype(jnp.float32)
               + outb_ref[...].astype(jnp.float32))            # (T, Bb, Hp)
    final_h = h_f + h_b                                        # (Bb, Hp)

    # attention query = ReLU(Linear(final_hidden))
    a = jnp.dot(final_h.astype(mm_dtype), watt_ref[...],
                preferred_element_type=jnp.float32) + batt_ref[...]
    a = jnp.maximum(a, 0.0)                                    # (Bb, Hp)

    # scores[b,t] = a[b,:] . tanh(out[t,b,:]) via lane reduction (a bmm here
    # would leave the MXU nearly empty at <=16 LHS rows); the (T,Bb)->(Bb,T)
    # layout move is a single trans-B identity matmul on the MXU.
    scores_tb = jnp.sum(a[None, :, :] * jnp.tanh(out_tbh), axis=-1)   # (T, Bb)
    r = lax.broadcasted_iota(jnp.int32, (Bb, Bb), 0)
    c = lax.broadcasted_iota(jnp.int32, (Bb, Bb), 1)
    eye_b = (r == c).astype(jnp.float32)
    scores_bt = lax.dot_general(eye_b, scores_tb, (((1,), (1,)), ((), ())),
                                preferred_element_type=jnp.float32)   # (Bb, T)

    # softmax over T (padded t keeps score exactly 0, matching the torch
    # reference's unmasked softmax over pad_packed_sequence output).
    m = jnp.max(scores_bt, axis=-1, keepdims=True)
    e = jnp.exp(scores_bt - m)
    attn_bt = e / jnp.sum(e, axis=-1, keepdims=True)                  # (Bb, T)

    # context = sum_t attn[:, t] * out[t]  -- T vector FMAs on (Bb, Hp) tiles.
    # TODO(synk): for large T switch this static unroll to a lax.fori_loop.
    ctx = jnp.zeros((Bb, Hp), jnp.float32)
    for t in range(T):
        ctx = ctx + attn_bt[:, t:t + 1] * out_tbh[t]

    # classifier (Dropout is identity at inference)
    logits_ref[...] = jnp.dot(ctx.astype(mm_dtype), wcls_ref[...],
                              preferred_element_type=jnp.float32) + bcls_ref[...]
    attn_ref[...] = attn_bt


# ------------------------------- Wrappers ------------------------------------

def _round_up(n, m):
    return ((n + m - 1) // m) * m


def _pad_to(x, shape):
    return jnp.pad(x, [(0, s - d) for d, s in zip(x.shape, shape)])


def _pad_gate_cols(w, Hp):
    # w: (in_dim, 4H) with gate order [i, f, g, o]; zero-pad each gate to Hp.
    parts = jnp.split(w, 4, axis=-1)
    return jnp.concatenate([_pad_to(p, (p.shape[0], Hp)) for p in parts], axis=-1)


def run_fused(embeds_tbe, lengths_b1, params, *, bb=_BB, unroll=None):
    T, Bp, Ep = embeds_tbe.shape
    Hp = params['w_att'].shape[0]
    Cp = params['w_cls'].shape[1]
    assert Bp % bb == 0
    grid = (Bp // bb,)
    if unroll is None:
        unroll = min(T, 8)          # partial unroll; bounded code size for big T

    mm = jnp.dtype(params['wih_cat'].dtype)   # matmul operand dtype
    sd = params['wih_cat'].dtype              # scratch storage dtype (= mm)
    f32 = 4

    # Explicit scoped-VMEM budget: per-block inputs/outputs (double-buffered)
    # + persistent scratch + headroom.  Capped at 64 MiB (v7x physical VMEM).
    per_block_io = (T * bb * Ep * mm.itemsize            # embeds block
                    + bb * 4                              # lengths
                    + Ep * 8 * Hp * mm.itemsize           # wih
                    + Hp * 8 * Hp * mm.itemsize           # whh
                    + 8 * Hp * f32                        # bias
                    + Hp * Hp * mm.itemsize + Hp * f32    # w_att, b_att
                    + Hp * Cp * mm.itemsize + Cp * f32    # w_cls, b_cls
                    + bb * Cp * f32 + bb * T * f32)       # outputs
    scratch_bytes = (T * bb * 8 * Hp + 2 * T * bb * Hp) * mm.itemsize
    vmem_limit = int(min(2 * per_block_io + scratch_bytes + (4 << 20), 64 << 20))

    kernel = functools.partial(fused_text_classifier_kernel, unroll=unroll)
    return pl.pallas_call(
        kernel,
        grid=grid,
        out_shape=(jax.ShapeDtypeStruct((Bp, Cp), jnp.float32),
                   jax.ShapeDtypeStruct((Bp, T), jnp.float32)),
        in_specs=[
            pl.BlockSpec((T, bb, Ep), lambda i: (0, i, 0)),   # embeddings
            pl.BlockSpec((bb, 1), lambda i: (i, 0)),          # lengths
            pl.BlockSpec((Ep, 8 * Hp), lambda i: (0, 0)),     # Wih (both dirs)
            pl.BlockSpec((Hp, 8 * Hp), lambda i: (0, 0)),     # Whh (batch-stacked)
            pl.BlockSpec((1, 8 * Hp), lambda i: (0, 0)),      # bias
            pl.BlockSpec((Hp, Hp), lambda i: (0, 0)),         # W_att
            pl.BlockSpec((1, Hp), lambda i: (0, 0)),          # b_att
            pl.BlockSpec((Hp, Cp), lambda i: (0, 0)),         # W_cls
            pl.BlockSpec((1, Cp), lambda i: (0, 0)),          # b_cls
        ],
        out_specs=(pl.BlockSpec((bb, Cp), lambda i: (i, 0)),
                   pl.BlockSpec((bb, T), lambda i: (i, 0))),
        scratch_shapes=[
            pltpu.VMEM((T, bb, 8 * Hp), sd),   # hoisted gate projections
            pltpu.VMEM((T, bb, Hp), sd),       # forward outputs
            pltpu.VMEM((T, bb, Hp), sd),       # backward outputs
        ],
        compiler_params=pltpu.CompilerParams(
            dimension_semantics=("parallel",),        # v7x: 2 TCs split batch tiles
            vmem_limit_bytes=vmem_limit),
    )(embeds_tbe, lengths_b1,
      params['wih_cat'], params['whh_cat'], params['b_cat'],
      params['w_att'], params['b_att'], params['w_cls'], params['b_cls'])


def text_classifier_forward(x, lengths, params):
    lengths = np.asarray(lengths)
    B = x.shape[0]
    C = params['num_labels']

    # pad_packed_sequence trims the padded output to max(lengths)
    t_eff = int(lengths.max())
    x_trim = x[:, :t_eff]

    # embedding gather, gathered directly time-major -> no XLA transpose.
    # TODO(synk): for large vocabularies fuse this gather into the kernel
    # (scalar-prefetch token ids + row gather / manual DMA) instead of jnp.take.
    embeds_tbe = jnp.take(params['emb'], x_trim.T, axis=0)       # (T, B, Ep)

    # Pad batch to the batch tile; padded rows get length 0 (stay zero).
    # NOTE: per-step recurrence cost is flat in batch up to the MXU row count,
    # so batching many requests (Bp up to 64-256) is nearly free throughput.
    Bp = max(_BB, _round_up(B, _BB))
    if Bp > B:
        embeds_tbe = jnp.pad(embeds_tbe, ((0, 0), (0, Bp - B), (0, 0)))
    embeds_tbe = embeds_tbe.astype(params['wih_cat'].dtype)
    lengths_b1 = jnp.zeros((Bp, 1), jnp.int32).at[:B, 0].set(
        jnp.asarray(lengths, jnp.int32))

    logits_p, attn_p = run_fused(embeds_tbe, lengths_b1, params)

    # un-pad: torch returns output (B, num_labels), attention (B, 1, T_eff)
    return logits_p[:B, :C], attn_p[:B, None, :]


# ---------------------------- Parameter packing -------------------------------

def init_params(key, V, E, H, C, matmul_dtype=jnp.bfloat16):
    """Random params matching the torch module's init, packed/padded for the
    kernel.  matmul_dtype=bfloat16 (default) casts MXU operands and the
    gx/output scratches only; accumulation, gate and state math stay f32
    (so it is also safe on v5e, which has no bf16 VPU/EUP).  Pass
    matmul_dtype=jnp.float32 for bit-exact f32 math."""
    # NOTE/TODO(synk): at tiny H (< 128) every gate is zero-padded to 128
    # lanes; real deployments should use H as a multiple of 128 (or pack the
    # 4 gates of one direction into a single 128-lane group).
    Ep, Hp, Cp = _round_up(E, 128), _round_up(H, 128), _round_up(C, 128)
    keys = jax.random.split(key, 13)

    irange = 0.5 / E                       # init_weights() of the module
    k = 1.0 / float(np.sqrt(H))            # default torch LSTM / Linear init

    def u(kk, shape, lo, hi):
        return jax.random.uniform(kk, shape, jnp.float32, lo, hi)

    emb = u(keys[0], (V, E), -irange, irange)
    wih_f = u(keys[1], (E, 4 * H), -k, k)
    whh_f = u(keys[2], (H, 4 * H), -k, k)
    b_f = u(keys[3], (1, 4 * H), -k, k) + u(keys[4], (1, 4 * H), -k, k)
    wih_b = u(keys[5], (E, 4 * H), -k, k)
    whh_b = u(keys[6], (H, 4 * H), -k, k)
    b_b = u(keys[7], (1, 4 * H), -k, k) + u(keys[8], (1, 4 * H), -k, k)
    w_att = u(keys[9], (H, H), -k, k)
    b_att = u(keys[10], (1, H), -k, k)
    w_cls = u(keys[11], (H, C), -k, k)
    b_cls = u(keys[12], (1, C), -k, k)

    # ---- pack / zero-pad to (8,128)-friendly shapes for the kernel ----
    wih_cat = jnp.concatenate(
        [_pad_to(_pad_gate_cols(wih_f, Hp), (Ep, 4 * Hp)),
         _pad_to(_pad_gate_cols(wih_b, Hp), (Ep, 4 * Hp))], axis=1)

    # Batch-stacked recurrence weight: (Hp, 8Hp) = [Whh_f | Whh_b]
    whh_cat = jnp.concatenate(
        [_pad_to(_pad_gate_cols(whh_f, Hp), (Hp, 4 * Hp)),
         _pad_to(_pad_gate_cols(whh_b, Hp), (Hp, 4 * Hp))], axis=1)

    b_cat = jnp.concatenate(
        [_pad_gate_cols(b_f, Hp), _pad_gate_cols(b_b, Hp)], axis=1)

    return {
        'emb':     _pad_to(emb, (V, Ep)),
        'wih_cat': wih_cat.astype(matmul_dtype),
        'whh_cat': whh_cat.astype(matmul_dtype),
        'b_cat':   b_cat,
        'w_att':   _pad_to(w_att, (Hp, Hp)).astype(matmul_dtype),
        'b_att':   _pad_to(b_att, (1, Hp)),
        'w_cls':   _pad_to(w_cls, (Hp, Cp)).astype(matmul_dtype),
        'b_cls':   _pad_to(b_cls, (1, Cp)),
        'num_labels': C,
    }


# --------------------------------- Main ---------------------------------------

if __name__ == "__main__":
    B, T, V, E, H, C = 2, 8, 32, 16, 16, 3   # batch, seq, vocab, emb, hidden, labels

    key = jax.random.PRNGKey(0)
    pkey, xkey = jax.random.split(key)

    # TODO(synk): hidden_layers > 1 (stacked bidirectional LSTM) not
    # implemented; this is the single-layer case.  Dropout is identity (eval).
    params = init_params(pkey, V, E, H, C)   # bf16 MXU operands, f32 gate math

    x = jax.random.randint(xkey, (B, T), 0, V, dtype=jnp.int32)
    lengths = np.array([T, 5], dtype=np.int32)   # enforce_sorted=False semantics

    logits, attention = text_classifier_forward(x, lengths, params)
    jax.block_until_ready((logits, attention))

    assert logits.shape == (B, C)
    assert attention.shape == (B, 1, int(np.max(lengths)))
    assert bool(jnp.all(jnp.isfinite(logits)))
    assert bool(jnp.all(jnp.isfinite(attention)))
    print("KERNEL_OK")
</pallas_src>

<mosaic_0001>
module attributes {stable_mosaic.version = 11 : i64} {
  func.func @fused_text_classifier_kernel(%arg0: i32, %arg1: memref<8x16x128xbf16, #tpu.memory_space<vmem>>, %arg2: memref<16x1xi32, #tpu.memory_space<vmem>>, %arg3: memref<128x1024xbf16, #tpu.memory_space<vmem>>, %arg4: memref<128x1024xbf16, #tpu.memory_space<vmem>>, %arg5: memref<1x1024xf32, #tpu.memory_space<vmem>>, %arg6: memref<128x128xbf16, #tpu.memory_space<vmem>>, %arg7: memref<1x128xf32, #tpu.memory_space<vmem>>, %arg8: memref<128x128xbf16, #tpu.memory_space<vmem>>, %arg9: memref<1x128xf32, #tpu.memory_space<vmem>>, %arg10: memref<16x128xf32, #tpu.memory_space<vmem>>, %arg11: memref<16x8xf32, #tpu.memory_space<vmem>>, %arg12: memref<8x16x1024xbf16, #tpu.memory_space<vmem>>, %arg13: memref<8x16x128xbf16, #tpu.memory_space<vmem>>, %arg14: memref<8x16x128xbf16, #tpu.memory_space<vmem>>) attributes {dimension_semantics = [#tpu.dimension_semantics<parallel>], iteration_bounds = array<i64: 1>, scalar_prefetch = 0 : i64, scratch_operands = 3 : i64, tpu.core_type = #tpu.core_type<tc>, window_params = [{transform_indices = @transform_0, window_bounds = array<i64: 8, 16, 128>}, {transform_indices = @transform_1, window_bounds = array<i64: 16, 1>}, {pipeline_mode = #tpu.pipeline_mode<synchronous>, transform_indices = @transform_2, window_bounds = array<i64: 128, 1024>}, {pipeline_mode = #tpu.pipeline_mode<synchronous>, transform_indices = @transform_3, window_bounds = array<i64: 128, 1024>}, {pipeline_mode = #tpu.pipeline_mode<synchronous>, transform_indices = @transform_4, window_bounds = array<i64: 1, 1024>}, {pipeline_mode = #tpu.pipeline_mode<synchronous>, transform_indices = @transform_5, window_bounds = array<i64: 128, 128>}, {pipeline_mode = #tpu.pipeline_mode<synchronous>, transform_indices = @transform_6, window_bounds = array<i64: 1, 128>}, {pipeline_mode = #tpu.pipeline_mode<synchronous>, transform_indices = @transform_7, window_bounds = array<i64: 128, 128>}, {pipeline_mode = #tpu.pipeline_mode<synchronous>, transform_indices = @transform_8, window_bounds = array<i64: 1, 128>}, {transform_indices = @transform_9, window_bounds = array<i64: 16, 128>}, {transform_indices = @transform_10, window_bounds = array<i64: 16, 8>}]} {
    %c0 = arith.constant 0 : index
    %c0_0 = arith.constant 0 : index
    %0 = vector.load %arg2[%c0, %c0_0] : memref<16x1xi32, #tpu.memory_space<vmem>>, vector<16x1xi32>
    %c0_1 = arith.constant 0 : index
    %c0_2 = arith.constant 0 : index
    %c0_3 = arith.constant 0 : index
    %1 = vector.load %arg1[%c0_1, %c0_2, %c0_3] : memref<8x16x128xbf16, #tpu.memory_space<vmem>>, vector<8x16x128xbf16>
    %2 = vector.shape_cast %1 : vector<8x16x128xbf16> to vector<128x128xbf16>
    %c0_4 = arith.constant 0 : index
    %c0_5 = arith.constant 0 : index
    %3 = vector.load %arg3[%c0_4, %c0_5] : memref<128x1024xbf16, #tpu.memory_space<vmem>>, vector<128x1024xbf16>
    %cst = arith.constant dense<0.000000e+00> : vector<128x1024xf32>
    %4 = tpu.matmul %2, %3, %cst {dimension_numbers = #tpu.dot_dimension_numbers<[1], [0], [0], [1], [0, 0, 1, 1], [], []>} : vector<128x128xbf16>, vector<128x1024xbf16>, vector<128x1024xf32> -> vector<128x1024xf32>
    %c0_6 = arith.constant 0 : index
    %c0_7 = arith.constant 0 : index
    %5 = vector.load %arg5[%c0_6, %c0_7] : memref<1x1024xf32, #tpu.memory_space<vmem>>, vector<1x1024xf32>
    %6 = vector.broadcast %5 : vector<1x1024xf32> to vector<128x1024xf32>
    %7 = arith.addf %4, %6 : vector<128x1024xf32>
    %8 = vector.shape_cast %7 : vector<128x1024xf32> to vector<8x16x1024xf32>
    %9 = arith.truncf %8 : vector<8x16x1024xf32> to vector<8x16x1024xbf16>
    %c0_8 = arith.constant 0 : index
    %c0_9 = arith.constant 0 : index
    %c0_10 = arith.constant 0 : index
    %10 = vector.load %arg12[%c0_8, %c0_9, %c0_10] : memref<8x16x1024xbf16, #tpu.memory_space<vmem>>, vector<8x16x1024xbf16>
    tpu.vector_store %arg12[%c0_8, %c0_9, %c0_10], %9 {strides = array<i32>} : memref<8x16x1024xbf16, #tpu.memory_space<vmem>>, vector<8x16x1024xbf16>,
    %c0_11 = arith.constant 0 : index
    %c0_12 = arith.constant 0 : index
    %11 = vector.load %arg4[%c0_11, %c0_12] : memref<128x1024xbf16, #tpu.memory_space<vmem>>, vector<128x1024xbf16>
    %cst_13 = arith.constant 0.000000e+00 : f32
    %12 = vector.broadcast %cst_13 : f32 to vector<16x128xf32>
    %c0_i32 = arith.constant 0 : i32
    %c7_i32 = arith.constant 7 : i32
    %13 = arith.subi %c7_i32, %c0_i32 : i32
    %14 = tpu.concatenate %12, %12 in 0 : vector<16x128xf32>, vector<16x128xf32> -> vector<32x128xf32>
    %15 = arith.truncf %14 : vector<32x128xf32> to vector<32x128xbf16>
    %cst_14 = arith.constant dense<0.000000e+00> : vector<32x1024xf32>
    %16 = tpu.matmul %15, %11, %cst_14 {dimension_numbers = #tpu.dot_dimension_numbers<[1], [0], [0], [1], [0, 0, 1, 1], [], []>} : vector<32x128xbf16>, vector<128x1024xbf16>, vector<32x1024xf32> -> vector<32x1024xf32>
    %17 = vector.extract_strided_slice %16 {offsets = [0, 0], sizes = [16, 512], strides = [1, 1]} : vector<32x1024xf32> to vector<16x512xf32>
    %18 = arith.index_cast %c0_i32 : i32 to index
    %c0_15 = arith.constant 0 : index
    %c0_16 = arith.constant 0 : index
    %19 = vector.load %arg12[%18, %c0_15, %c0_16] : memref<8x16x1024xbf16, #tpu.memory_space<vmem>>, vector<1x16x512xbf16>
    %20 = vector.shape_cast %19 : vector<1x16x512xbf16> to vector<16x512xbf16>
    %21 = arith.extf %20 : vector<16x512xbf16> to vector<16x512xf32>
    %22 = arith.addf %17, %21 : vector<16x512xf32>
    %23 = vector.extract_strided_slice %16 {offsets = [16, 512], sizes = [16, 512], strides = [1, 1]} : vector<32x1024xf32> to vector<16x512xf32>
    %24 = arith.index_cast %13 : i32 to index
    %c0_17 = arith.constant 0 : index
    %c512 = arith.constant 512 : index
    %25 = vector.load %arg12[%24, %c0_17, %c512] : memref<8x16x1024xbf16, #tpu.memory_space<vmem>>, vector<1x16x512xbf16>
    %26 = vector.shape_cast %25 : vector<1x16x512xbf16> to vector<16x512xbf16>
    %27 = arith.extf %26 : vector<16x512xbf16> to vector<16x512xf32>
    %28 = arith.addf %23, %27 : vector<16x512xf32>
    %29 = vector.extract_strided_slice %22 {offsets = [0, 0], sizes = [16, 128], strides = [1, 1]} : vector<16x512xf32> to vector<16x128xf32>
    %30 = arith.negf %29 : vector<16x128xf32>
    %31 = math.exp %30 : vector<16x128xf32>
    %cst_18 = arith.constant 1.000000e+00 : f32
    %32 = vector.broadcast %cst_18 : f32 to vector<16x128xf32>
    %33 = arith.addf %32, %31 : vector<16x128xf32>
    %34 = arith.divf %32, %33 : vector<16x128xf32>
    %35 = vector.extract_strided_slice %22 {offsets = [0, 128], sizes = [16, 128], strides = [1, 1]} : vector<16x512xf32> to vector<16x128xf32>
    %36 = arith.negf %35 : vector<16x128xf32>
    %37 = math.exp %36 : vector<16x128xf32>
    %cst_19 = arith.constant 1.000000e+00 : f32
    %38 = vector.broadcast %cst_19 : f32 to vector<16x128xf32>
    %39 = arith.addf %38, %37 : vector<16x128xf32>
    %40 = arith.divf %38, %39 : vector<16x128xf32>
    %41 = vector.extract_strided_slice %22 {offsets = [0, 256], sizes = [16, 128], strides = [1, 1]} : vector<16x512xf32> to vector<16x128xf32>
    %42 = math.tanh %41 : vector<16x128xf32>
    %43 = vector.extract_strided_slice %22 {offsets = [0, 384], sizes = [16, 128], strides = [1, 1]} : vector<16x512xf32> to vector<16x128xf32>
    %44 = arith.negf %43 : vector<16x128xf32>
    %45 = math.exp %44 : vector<16x128xf32>
    %cst_20 = arith.constant 1.000000e+00 : f32
    %46 = vector.broadcast %cst_20 : f32 to vector<16x128xf32>
    %47 = arith.addf %46, %45 : vector<16x128xf32>
    %48 = arith.divf %46, %47 : vector<16x128xf32>
    %49 = arith.mulf %40, %12 : vector<16x128xf32>
    %50 = arith.mulf %34, %42 : vector<16x128xf32>
    %51 = arith.addf %49, %50 : vector<16x128xf32>
    %52 = math.tanh %51 : vector<16x128xf32>
    %53 = arith.mulf %48, %52 : vector<16x128xf32>
    %54 = vector.extract_strided_slice %28 {offsets = [0, 0], sizes = [16, 128], strides = [1, 1]} : vector<16x512xf32> to vector<16x128xf32>
    %55 = arith.negf %54 : vector<16x128xf32>
    %56 = math.exp %55 : vector<16x128xf32>
    %cst_21 = arith.constant 1.000000e+00 : f32
    %57 = vector.broadcast %cst_21 : f32 to vector<16x128xf32>
    %58 = arith.addf %57, %56 : vector<16x128xf32>
    %59 = arith.divf %57, %58 : vector<16x128xf32>
    %60 = vector.extract_strided_slice %28 {offsets = [0, 128], sizes = [16, 128], strides = [1, 1]} : vector<16x512xf32> to vector<16x128xf32>
    %61 = arith.negf %60 : vector<16x128xf32>
    %62 = math.exp %61 : vector<16x128xf32>
    %cst_22 = arith.constant 1.000000e+00 : f32
    %63 = vector.broadcast %cst_22 : f32 to vector<16x128xf32>
    %64 = arith.addf %63, %62 : vector<16x128xf32>
    %65 = arith.divf %63, %64 : vector<16x128xf32>
    %66 = vector.extract_strided_slice %28 {offsets = [0, 256], sizes = [16, 128], strides = [1, 1]} : vector<16x512xf32> to vector<16x128xf32>
    %67 = math.tanh %66 : vector<16x128xf32>
    %68 = vector.extract_strided_slice %28 {offsets = [0, 384], sizes = [16, 128], strides = [1, 1]} : vector<16x512xf32> to vector<16x128xf32>
    %69 = arith.negf %68 : vector<16x128xf32>
    %70 = math.exp %69 : vector<16x128xf32>
    %cst_23 = arith.constant 1.000000e+00 : f32
    %71 = vector.broadcast %cst_23 : f32 to vector<16x128xf32>
    %72 = arith.addf %71, %70 : vector<16x128xf32>
    %73 = arith.divf %71, %72 : vector<16x128xf32>
    %74 = arith.mulf %65, %12 : vector<16x128xf32>
    %75 = arith.mulf %59, %67 : vector<16x128xf32>
    %76 = arith.addf %74, %75 : vector<16x128xf32>
    %77 = math.tanh %76 : vector<16x128xf32>
    %78 = arith.mulf %73, %77 : vector<16x128xf32>
    %79 = vector.broadcast %c0_i32 : i32 to vector<16x1xi32>
    %80 = arith.cmpi sgt, %0, %79 : vector<16x1xi32>
    %81 = vector.broadcast %13 : i32 to vector<16x1xi32>
    %82 = arith.cmpi sgt, %0, %81 : vector<16x1xi32>
    %cst_24 = arith.constant 0.000000e+00 : f32
    %83 = vector.shape_cast %80 : vector<16x1xi1> to vector<16x1xi1>
    %84 = vector.broadcast %83 : vector<16x1xi1> to vector<16x128xi1>
    %85 = vector.broadcast %cst_24 : f32 to vector<16x128xf32>
    %86 = arith.select %84, %53, %85 : vector<16x128xi1>, vector<16x128xf32>
    %87 = arith.truncf %86 : vector<16x128xf32> to vector<16x128xbf16>
    %88 = arith.index_cast %c0_i32 : i32 to index
    %c0_25 = arith.constant 0 : index
    %c0_26 = arith.constant 0 : index
    %89 = vector.load %arg13[%88, %c0_25, %c0_26] : memref<8x16x128xbf16, #tpu.memory_space<vmem>>, vector<1x16x128xbf16>
    %90 = vector.shape_cast %89 : vector<1x16x128xbf16> to vector<16x128xbf16>
    %91 = vector.shape_cast %87 : vector<16x128xbf16> to vector<1x16x128xbf16>
    tpu.vector_store %arg13[%88, %c0_25, %c0_26], %91 {strides = array<i32>} : memref<8x16x128xbf16, #tpu.memory_space<vmem>>, vector<1x16x128xbf16>,
    %cst_27 = arith.constant 0.000000e+00 : f32
    %92 = vector.shape_cast %82 : vector<16x1xi1> to vector<16x1xi1>
    %93 = vector.broadcast %92 : vector<16x1xi1> to vector<16x128xi1>
    %94 = vector.broadcast %cst_27 : f32 to vector<16x128xf32>
    %95 = arith.select %93, %78, %94 : vector<16x128xi1>, vector<16x128xf32>
    %96 = arith.truncf %95 : vector<16x128xf32> to vector<16x128xbf16>
    %97 = arith.index_cast %13 : i32 to index
    %c0_28 = arith.constant 0 : index
    %c0_29 = arith.constant 0 : index
    %98 = vector.load %arg14[%97, %c0_28, %c0_29] : memref<8x16x128xbf16, #tpu.memory_space<vmem>>, vector<1x16x128xbf16>
    %99 = vector.shape_cast %98 : vector<1x16x128xbf16> to vector<16x128xbf16>
    %100 = vector.shape_cast %96 : vector<16x128xbf16> to vector<1x16x128xbf16>
    tpu.vector_store %arg14[%97, %c0_28, %c0_29], %100 {strides = array<i32>} : memref<8x16x128xbf16, #tpu.memory_space<vmem>>, vector<1x16x128xbf16>,
    %101 = vector.shape_cast %80 : vector<16x1xi1> to vector<16x1xi1>
    %102 = vector.broadcast %101 : vector<16x1xi1> to vector<16x128xi1>
    %103 = arith.select %102, %53, %12 : vector<16x128xi1>, vector<16x128xf32>
    %104 = vector.shape_cast %80 : vector<16x1xi1> to vector<16x1xi1>
    %105 = vector.broadcast %104 : vector<16x1xi1> to vector<16x128xi1>
    %106 = arith.select %105, %51, %12 : vector<16x128xi1>, vector<16x128xf32>
    %107 = vector.shape_cast %82 : vector<16x1xi1> to vector<16x1xi1>
    %108 = vector.broadcast %107 : vector<16x1xi1> to vector<16x128xi1>
    %109 = arith.select %108, %78, %12 : vector<16x128xi1>, vector<16x128xf32>
    %110 = vector.shape_cast %82 : vector<16x1xi1> to vector<16x1xi1>
    %111 = vector.broadcast %110 : vector<16x1xi1> to vector<16x128xi1>
    %112 = arith.select %111, %76, %12 : vector<16x128xi1>, vector<16x128xf32>
    %c1_i32 = arith.constant 1 : i32
    %c7_i32_30 = arith.constant 7 : i32
    %113 = arith.subi %c7_i32_30, %c1_i32 : i32
    %114 = tpu.concatenate %103, %109 in 0 : vector<16x128xf32>, vector<16x128xf32> -> vector<32x128xf32>
    %115 = arith.truncf %114 : vector<32x128xf32> to vector<32x128xbf16>
    %cst_31 = arith.constant dense<0.000000e+00> : vector<32x1024xf32>
    %116 = tpu.matmul %115, %11, %cst_31 {dimension_numbers = #tpu.dot_dimension_numbers<[1], [0], [0], [1], [0, 0, 1, 1], [], []>} : vector<32x128xbf16>, vector<128x1024xbf16>, vector<32x1024xf32> -> vector<32x1024xf32>
    %117 = vector.extract_strided_slice %116 {offsets = [0, 0], sizes = [16, 512], strides = [1, 1]} : vector<32x1024xf32> to vector<16x512xf32>
    %118 = arith.index_cast %c1_i32 : i32 to index
    %c0_32 = arith.constant 0 : index
    %c0_33 = arith.constant 0 : index
    %119 = vector.load %arg12[%118, %c0_32, %c0_33] : memref<8x16x1024xbf16, #tpu.memory_space<vmem>>, vector<1x16x512xbf16>
    %120 = vector.shape_cast %119 : vector<1x16x512xbf16> to vector<16x512xbf16>
    %121 = arith.extf %120 : vector<16x512xbf16> to vector<16x512xf32>
    %122 = arith.addf %117, %121 : vector<16x512xf32>
    %123 = vector.extract_strided_slice %116 {offsets = [16, 512], sizes = [16, 512], strides = [1, 1]} : vector<32x1024xf32> to vector<16x512xf32>
    %124 = arith.index_cast %113 : i32 to index
    %c0_34 = arith.constant 0 : index
    %c512_35 = arith.constant 512 : index
    %125 = vector.load %arg12[%124, %c0_34, %c512_35] : memref<8x16x1024xbf16, #tpu.memory_space<vmem>>, vector<1x16x512xbf16>
    %126 = vector.shape_cast %125 : vector<1x16x512xbf16> to vector<16x512xbf16>
    %127 = arith.extf %126 : vector<16x512xbf16> to vector<16x512xf32>
    %128 = arith.addf %123, %127 : vector<16x512xf32>
    %129 = vector.extract_strided_slice %122 {offsets = [0, 0], sizes = [16, 128], strides = [1, 1]} : vector<16x512xf32> to vector<16x128xf32>
    %130 = arith.negf %129 : vector<16x128xf32>
    %131 = math.exp %130 : vector<16x128xf32>
    %cst_36 = arith.constant 1.000000e+00 : f32
    %132 = vector.broadcast %cst_36 : f32 to vector<16x128xf32>
    %133 = arith.addf %132, %131 : vector<16x128xf32>
    %134 = arith.divf %132, %133 : vector<16x128xf32>
    %135 = vector.extract_strided_slice %122 {offsets = [0, 128], sizes = [16, 128], strides = [1, 1]} : vector<16x512xf32> to vector<16x128xf32>
    %136 = arith.negf %135 : vector<16x128xf32>
    %137 = math.exp %136 : vector<16x128xf32>
    %cst_37 = arith.constant 1.000000e+00 : f32
    %138 = vector.broadcast %cst_37 : f32 to vector<16x128xf32>
    %139 = arith.addf %138, %137 : vector<16x128xf32>
    %140 = arith.divf %138, %139 : vector<16x128xf32>
    %141 = vector.extract_strided_slice %122 {offsets = [0, 256], sizes = [16, 128], strides = [1, 1]} : vector<16x512xf32> to vector<16x128xf32>
    %142 = math.tanh %141 : vector<16x128xf32>
    %143 = vector.extract_strided_slice %122 {offsets = [0, 384], sizes = [16, 128], strides = [1, 1]} : vector<16x512xf32> to vector<16x128xf32>
    %144 = arith.negf %143 : vector<16x128xf32>
    %145 = math.exp %144 : vector<16x128xf32>
    %cst_38 = arith.constant 1.000000e+00 : f32
    %146 = vector.broadcast %cst_38 : f32 to vector<16x128xf32>
    %147 = arith.addf %146, %145 : vector<16x128xf32>
    %148 = arith.divf %146, %147 : vector<16x128xf32>
    %149 = arith.mulf %140, %106 : vector<16x128xf32>
    %150 = arith.mulf %134, %142 : vector<16x128xf32>
    %151 = arith.addf %149, %150 : vector<16x128xf32>
    %152 = math.tanh %151 : vector<16x128xf32>
    %153 = arith.mulf %148, %152 : vector<16x128xf32>
    %154 = vector.extract_strided_slice %128 {offsets = [0, 0], sizes = [16, 128], strides = [1, 1]} : vector<16x512xf32> to vector<16x128xf32>
    %155 = arith.negf %154 : vector<16x128xf32>
    %156 = math.exp %155 : vector<16x128xf32>
    %cst_39 = arith.constant 1.000000e+00 : f32
    %157 = vector.broadcast %cst_39 : f32 to vector<16x128xf32>
    %158 = arith.addf %157, %156 : vector<16x128xf32>
    %159 = arith.divf %157, %158 : vector<16x128xf32>
    %160 = vector.extract_strided_slice %128 {offsets = [0, 128], sizes = [16, 128], strides = [1, 1]} : vector<16x512xf32> to vector<16x128xf32>
    %161 = arith.negf %160 : vector<16x128xf32>
    %162 = math.exp %161 : vector<16x128xf32>
    %cst_40 = arith.constant 1.000000e+00 : f32
    %163 = vector.broadcast %cst_40 : f32 to vector<16x128xf32>
    %164 = arith.addf %163, %162 : vector<16x128xf32>
    %165 = arith.divf %163, %164 : vector<16x128xf32>
    %166 = vector.extract_strided_slice %128 {offsets = [0, 256], sizes = [16, 128], strides = [1, 1]} : vector<16x512xf32> to vector<16x128xf32>
    %167 = math.tanh %166 : vector<16x128xf32>
    %168 = vector.extract_strided_slice %128 {offsets = [0, 384], sizes = [16, 128], strides = [1, 1]} : vector<16x512xf32> to vector<16x128xf32>
    %169 = arith.negf %168 : vector<16x128xf32>
    %170 = math.exp %169 : vector<16x128xf32>
    %cst_41 = arith.constant 1.000000e+00 : f32
    %171 = vector.broadcast %cst_41 : f32 to vector<16x128xf32>
    %172 = arith.addf %171, %170 : vector<16x128xf32>
    %173 = arith.divf %171, %172 : vector<16x128xf32>
    %174 = arith.mulf %165, %112 : vector<16x128xf32>
    %175 = arith.mulf %159, %167 : vector<16x128xf32>
    %176 = arith.addf %174, %175 : vector<16x128xf32>
    %177 = math.tanh %176 : vector<16x128xf32>
    %178 = arith.mulf %173, %177 : vector<16x128xf32>
    %179 = vector.broadcast %c1_i32 : i32 to vector<16x1xi32>
    %180 = arith.cmpi sgt, %0, %179 : vector<16x1xi32>
    %181 = vector.broadcast %113 : i32 to vector<16x1xi32>
    %182 = arith.cmpi sgt, %0, %181 : vector<16x1xi32>
    %cst_42 = arith.constant 0.000000e+00 : f32
    %183 = vector.shape_cast %180 : vector<16x1xi1> to vector<16x1xi1>
    %184 = vector.broadcast %183 : vector<16x1xi1> to vector<16x128xi1>
    %185 = vector.broadcast %cst_42 : f32 to vector<16x128xf32>
    %186 = arith.select %184, %153, %185 : vector<16x128xi1>, vector<16x128xf32>
    %187 = arith.truncf %186 : vector<16x128xf32> to vector<16x128xbf16>
    %188 = arith.index_cast %c1_i32 : i32 to index
    %c0_43 = arith.constant 0 : index
    %c0_44 = arith.constant 0 : index
    %189 = vector.load %arg13[%188, %c0_43, %c0_44] : memref<8x16x128xbf16, #tpu.memory_space<vmem>>, vector<1x16x128xbf16>
    %190 = vector.shape_cast %189 : vector<1x16x128xbf16> to vector<16x128xbf16>
    %191 = vector.shape_cast %187 : vector<16x128xbf16> to vector<1x16x128xbf16>
    tpu.vector_store %arg13[%188, %c0_43, %c0_44], %191 {strides = array<i32>} : memref<8x16x128xbf16, #tpu.memory_space<vmem>>, vector<1x16x128xbf16>,
    %cst_45 = arith.constant 0.000000e+00 : f32
    %192 = vector.shape_cast %182 : vector<16x1xi1> to vector<16x1xi1>
    %193 = vector.broadcast %192 : vector<16x1xi1> to vector<16x128xi1>
    %194 = vector.broadcast %cst_45 : f32 to vector<16x128xf32>
    %195 = arith.select %193, %178, %194 : vector<16x128xi1>, vector<16x128xf32>
    %196 = arith.truncf %195 : vector<16x128xf32> to vector<16x128xbf16>
    %197 = arith.index_cast %113 : i32 to index
    %c0_46 = arith.constant 0 : index
    %c0_47 = arith.constant 0 : index
    %198 = vector.load %arg14[%197, %c0_46, %c0_47] : memref<8x16x128xbf16, #tpu.memory_space<vmem>>, vector<1x16x128xbf16>
    %199 = vector.shape_cast %198 : vector<1x16x128xbf16> to vector<16x128xbf16>
    %200 = vector.shape_cast %196 : vector<16x128xbf16> to vector<1x16x128xbf16>
    tpu.vector_store %arg14[%197, %c0_46, %c0_47], %200 {strides = array<i32>} : memref<8x16x128xbf16, #tpu.memory_space<vmem>>, vector<1x16x128xbf16>,
    %201 = vector.shape_cast %180 : vector<16x1xi1> to vector<16x1xi1>
    %202 = vector.broadcast %201 : vector<16x1xi1> to vector<16x128xi1>
    %203 = arith.select %202, %153, %103 : vector<16x128xi1>, vector<16x128xf32>
    %204 = vector.shape_cast %180 : vector<16x1xi1> to vector<16x1xi1>
    %205 = vector.broadcast %204 : vector<16x1xi1> to vector<16x128xi1>
    %206 = arith.select %205, %151, %106 : vector<16x128xi1>, vector<16x128xf32>
    %207 = vector.shape_cast %182 : vector<16x1xi1> to vector<16x1xi1>
    %208 = vector.broadcast %207 : vector<16x1xi1> to vector<16x128xi1>
    %209 = arith.select %208, %178, %109 : vector<16x128xi1>, vector<16x128xf32>
    %210 = vector.shape_cast %182 : vector<16x1xi1> to vector<16x1xi1>
    %211 = vector.broadcast %210 : vector<16x1xi1> to vector<16x128xi1>
    %212 = arith.select %211, %176, %112 : vector<16x128xi1>, vector<16x128xf32>
    %c2_i32 = arith.constant 2 : i32
    %c7_i32_48 = arith.constant 7 : i32
    %213 = arith.subi %c7_i32_48, %c2_i32 : i32
    %214 = tpu.concatenate %203, %209 in 0 : vector<16x128xf32>, vector<16x128xf32> -> vector<32x128xf32>
    %215 = arith.truncf %214 : vector<32x128xf32> to vector<32x128xbf16>
    %cst_49 = arith.constant dense<0.000000e+00> : vector<32x1024xf32>
    %216 = tpu.matmul %215, %11, %cst_49 {dimension_numbers = #tpu.dot_dimension_numbers<[1], [0], [0], [1], [0, 0, 1, 1], [], []>} : vector<32x128xbf16>, vector<128x1024xbf16>, vector<32x1024xf32> -> vector<32x1024xf32>
    %217 = vector.extract_strided_slice %216 {offsets = [0, 0], sizes = [16, 512], strides = [1, 1]} : vector<32x1024xf32> to vector<16x512xf32>
    %218 = arith.index_cast %c2_i32 : i32 to index
    %c0_50 = arith.constant 0 : index
    %c0_51 = arith.constant 0 : index
    %219 = vector.load %arg12[%218, %c0_50, %c0_51] : memref<8x16x1024xbf16, #tpu.memory_space<vmem>>, vector<1x16x512xbf16>
    %220 = vector.shape_cast %219 : vector<1x16x512xbf16> to vector<16x512xbf16>
    %221 = arith.extf %220 : vector<16x512xbf16> to vector<16x512xf32>
    %222 = arith.addf %217, %221 : vector<16x512xf32>
    %223 = vector.extract_strided_slice %216 {offsets = [16, 512], sizes = [16, 512], strides = [1, 1]} : vector<32x1024xf32> to vector<16x512xf32>
    %224 = arith.index_cast %213 : i32 to index
    %c0_52 = arith.constant 0 : index
    %c512_53 = arith.constant 512 : index
    %225 = vector.load %arg12[%224, %c0_52, %c512_53] : memref<8x16x1024xbf16, #tpu.memory_space<vmem>>, vector<1x16x512xbf16>
    %226 = vector.shape_cast %225 : vector<1x16x512xbf16> to vector<16x512xbf16>
    %227 = arith.extf %226 : vector<16x512xbf16> to vector<16x512xf32>
    %228 = arith.addf %223, %227 : vector<16x512xf32>
    %229 = vector.extract_strided_slice %222 {offsets = [0, 0], sizes = [16, 128], strides = [1, 1]} : vector<16x512xf32> to vector<16x128xf32>
    %230 = arith.negf %229 : vector<16x128xf32>
    %231 = math.exp %230 : vector<16x128xf32>
    %cst_54 = arith.constant 1.000000e+00 : f32
    %232 = vector.broadcast %cst_54 : f32 to vector<16x128xf32>
    %233 = arith.addf %232, %231 : vector<16x128xf32>
    %234 = arith.divf %232, %233 : vector<16x128xf32>
    %235 = vector.extract_strided_slice %222 {offsets = [0, 128], sizes = [16, 128], strides = [1, 1]} : vector<16x512xf32> to vector<16x128xf32>
    %236 = arith.negf %235 : vector<16x128xf32>
    %237 = math.exp %236 : vector<16x128xf32>
    %cst_55 = arith.constant 1.000000e+00 : f32
    %238 = vector.broadcast %cst_55 : f32 to vector<16x128xf32>
    %239 = arith.addf %238, %237 : vector<16x128xf32>
    %240 = arith.divf %238, %239 : vector<16x128xf32>
    %241 = vector.extract_strided_slice %222 {offsets = [0, 256], sizes = [16, 128], strides = [1, 1]} : vector<16x512xf32> to vector<16x128xf32>
    %242 = math.tanh %241 : vector<16x128xf32>
    %243 = vector.extract_strided_slice %222 {offsets = [0, 384], sizes = [16, 128], strides = [1, 1]} : vector<16x512xf32> to vector<16x128xf32>
    %244 = arith.negf %243 : vector<16x128xf32>
    %245 = math.exp %244 : vector<16x128xf32>
    %cst_56 = arith.constant 1.000000e+00 : f32
    %246 = vector.broadcast %cst_56 : f32 to vector<16x128xf32>
    %247 = arith.addf %246, %245 : vector<16x128xf32>
    %248 = arith.divf %246, %247 : vector<16x128xf32>
    %249 = arith.mulf %240, %206 : vector<16x128xf32>
    %250 = arith.mulf %234, %242 : vector<16x128xf32>
    %251 = arith.addf %249, %250 : vector<16x128xf32>
    %252 = math.tanh %251 : vector<16x128xf32>
    %253 = arith.mulf %248, %252 : vector<16x128xf32>
    %254 = vector.extract_strided_slice %228 {offsets = [0, 0], sizes = [16, 128], strides = [1, 1]} : vector<16x512xf32> to vector<16x128xf32>
    %255 = arith.negf %254 : vector<16x128xf32>
    %256 = math.exp %255 : vector<16x128xf32>
    %cst_57 = arith.constant 1.000000e+00 : f32
    %257 = vector.broadcast %cst_57 : f32 to vector<16x128xf32>
    %258 = arith.addf %257, %256 : vector<16x128xf32>
    %259 = arith.divf %257, %258 : vector<16x128xf32>
    %260 = vector.extract_strided_slice %228 {offsets = [0, 128], sizes = [16, 128], strides = [1, 1]} : vector<16x512xf32> to vector<16x128xf32>
    %261 = arith.negf %260 : vector<16x128xf32>
    %262 = math.exp %261 : vector<16x128xf32>
    %cst_58 = arith.constant 1.000000e+00 : f32
    %263 = vector.broadcast %cst_58 : f32 to vector<16x128xf32>
    %264 = arith.addf %263, %262 : vector<16x128xf32>
    %265 = arith.divf %263, %264 : vector<16x128xf32>
    %266 = vector.extract_strided_slice %228 {offsets = [0, 256], sizes = [16, 128], strides = [1, 1]} : vector<16x512xf32> to vector<16x128xf32>
    %267 = math.tanh %266 : vector<16x128xf32>
    %268 = vector.extract_strided_slice %228 {offsets = [0, 384], sizes = [16, 128], strides = [1, 1]} : vector<16x512xf32> to vector<16x128xf32>
    %269 = arith.negf %268 : vector<16x128xf32>
    %270 = math.exp %269 : vector<16x128xf32>
    %cst_59 = arith.constant 1.000000e+00 : f32
    %271 = vector.broadcast %cst_59 : f32 to vector<16x128xf32>
    %272 = arith.addf %271, %270 : vector<16x128xf32>
    %273 = arith.divf %271, %272 : vector<16x128xf32>
    %274 = arith.mulf %265, %212 : vector<16x128xf32>
    %275 = arith.mulf %259, %267 : vector<16x128xf32>
    %276 = arith.addf %274, %275 : vector<16x128xf32>
    %277 = math.tanh %276 : vector<16x128xf32>
    %278 = arith.mulf %273, %277 : vector<16x128xf32>
    %279 = vector.broadcast %c2_i32 : i32 to vector<16x1xi32>
    %280 = arith.cmpi sgt, %0, %279 : vector<16x1xi32>
    %281 = vector.broadcast %213 : i32 to vector<16x1xi32>
    %282 = arith.cmpi sgt, %0, %281 : vector<16x1xi32>
    %cst_60 = arith.constant 0.000000e+00 : f32
    %283 = vector.shape_cast %280 : vector<16x1xi1> to vector<16x1xi1>
    %284 = vector.broadcast %283 : vector<16x1xi1> to vector<16x128xi1>
    %285 = vector.broadcast %cst_60 : f32 to vector<16x128xf32>
    %286 = arith.select %284, %253, %285 : vector<16x128xi1>, vector<16x128xf32>
    %287 = arith.truncf %286 : vector<16x128xf32> to vector<16x128xbf16>
    %288 = arith.index_cast %c2_i32 : i32 to index
    %c0_61 = arith.constant 0 : index
    %c0_62 = arith.constant 0 : index
    %289 = vector.load %arg13[%288, %c0_61, %c0_62] : memref<8x16x128xbf16, #tpu.memory_space<vmem>>, vector<1x16x128xbf16>
    %290 = vector.shape_cast %289 : vector<1x16x128xbf16> to vector<16x128xbf16>
    %291 = vector.shape_cast %287 : vector<16x128xbf16> to vector<1x16x128xbf16>
    tpu.vector_store %arg13[%288, %c0_61, %c0_62], %291 {strides = array<i32>} : memref<8x16x128xbf16, #tpu.memory_space<vmem>>, vector<1x16x128xbf16>,
    %cst_63 = arith.constant 0.000000e+00 : f32
    %292 = vector.shape_cast %282 : vector<16x1xi1> to vector<16x1xi1>
    %293 = vector.broadcast %292 : vector<16x1xi1> to vector<16x128xi1>
    %294 = vector.broadcast %cst_63 : f32 to vector<16x128xf32>
    %295 = arith.select %293, %278, %294 : vector<16x128xi1>, vector<16x128xf32>
    %296 = arith.truncf %295 : vector<16x128xf32> to vector<16x128xbf16>
    %297 = arith.index_cast %213 : i32 to index
    %c0_64 = arith.constant 0 : index
    %c0_65 = arith.constant 0 : index
    %298 = vector.load %arg14[%297, %c0_64, %c0_65] : memref<8x16x128xbf16, #tpu.memory_space<vmem>>, vector<1x16x128xbf16>
    %299 = vector.shape_cast %298 : vector<1x16x128xbf16> to vector<16x128xbf16>
    %300 = vector.shape_cast %296 : vector<16x128xbf16> to vector<1x16x128xbf16>
    tpu.vector_store %arg14[%297, %c0_64, %c0_65], %300 {strides = array<i32>} : memref<8x16x128xbf16, #tpu.memory_space<vmem>>, vector<1x16x128xbf16>,
    %301 = vector.shape_cast %280 : vector<16x1xi1> to vector<16x1xi1>
    %302 = vector.broadcast %301 : vector<16x1xi1> to vector<16x128xi1>
    %303 = arith.select %302, %253, %203 : vector<16x128xi1>, vector<16x128xf32>
    %304 = vector.shape_cast %280 : vector<16x1xi1> to vector<16x1xi1>
    %305 = vector.broadcast %304 : vector<16x1xi1> to vector<16x128xi1>
    %306 = arith.select %305, %251, %206 : vector<16x128xi1>, vector<16x128xf32>
    %307 = vector.shape_cast %282 : vector<16x1xi1> to vector<16x1xi1>
    %308 = vector.broadcast %307 : vector<16x1xi1> to vector<16x128xi1>
    %309 = arith.select %308, %278, %209 : vector<16x128xi1>, vector<16x128xf32>
    %310 = vector.shape_cast %282 : vector<16x1xi1> to vector<16x1xi1>
    %311 = vector.broadcast %310 : vector<16x1xi1> to vector<16x128xi1>
    %312 = arith.select %311, %276, %212 : vector<16x128xi1>, vector<16x128xf32>
    %c3_i32 = arith.constant 3 : i32
    %c7_i32_66 = arith.constant 7 : i32
    %313 = arith.subi %c7_i32_66, %c3_i32 : i32
    %314 = tpu.concatenate %303, %309 in 0 : vector<16x128xf32>, vector<16x128xf32> -> vector<32x128xf32>
    %315 = arith.truncf %314 : vector<32x128xf32> to vector<32x128xbf16>
    %cst_67 = arith.constant dense<0.000000e+00> : vector<32x1024xf32>
    %316 = tpu.matmul %315, %11, %cst_67 {dimension_numbers = #tpu.dot_dimension_numbers<[1], [0], [0], [1], [0, 0, 1, 1], [], []>} : vector<32x128xbf16>, vector<128x1024xbf16>, vector<32x1024xf32> -> vector<32x1024xf32>
    %317 = vector.extract_strided_slice %316 {offsets = [0, 0], sizes = [16, 512], strides = [1, 1]} : vector<32x1024xf32> to vector<16x512xf32>
    %318 = arith.index_cast %c3_i32 : i32 to index
    %c0_68 = arith.constant 0 : index
    %c0_69 = arith.constant 0 : index
    %319 = vector.load %arg12[%318, %c0_68, %c0_69] : memref<8x16x1024xbf16, #tpu.memory_space<vmem>>, vector<1x16x512xbf16>
    %320 = vector.shape_cast %319 : vector<1x16x512xbf16> to vector<16x512xbf16>
    %321 = arith.extf %320 : vector<16x512xbf16> to vector<16x512xf32>
    %322 = arith.addf %317, %321 : vector<16x512xf32>
    %323 = vector.extract_strided_slice %316 {offsets = [16, 512], sizes = [16, 512], strides = [1, 1]} : vector<32x1024xf32> to vector<16x512xf32>
    %324 = arith.index_cast %313 : i32 to index
    %c0_70 = arith.constant 0 : index
    %c512_71 = arith.constant 512 : index
    %325 = vector.load %arg12[%324, %c0_70, %c512_71] : memref<8x16x1024xbf16, #tpu.memory_space<vmem>>, vector<1x16x512xbf16>
    %326 = vector.shape_cast %325 : vector<1x16x512xbf16> to vector<16x512xbf16>
    %327 = arith.extf %326 : vector<16x512xbf16> to vector<16x512xf32>
    %328 = arith.addf %323, %327 : vector<16x512xf32>
    %329 = vector.extract_strided_slice %322 {offsets = [0, 0], sizes = [16, 128], strides = [1, 1]} : vector<16x512xf32> to vector<16x128xf32>
    %330 = arith.negf %329 : vector<16x128xf32>
    %331 = math.exp %330 : vector<16x128xf32>
    %cst_72 = arith.constant 1.000000e+00 : f32
    %332 = vector.broadcast %cst_72 : f32 to vector<16x128xf32>
    %333 = arith.addf %332, %331 : vector<16x128xf32>
    %334 = arith.divf %332, %333 : vector<16x128xf32>
    %335 = vector.extract_strided_slice %322 {offsets = [0, 128], sizes = [16, 128], strides = [1, 1]} : vector<16x512xf32> to vector<16x128xf32>
    %336 = arith.negf %335 : vector<16x128xf32>
    %337 = math.exp %336 : vector<16x128xf32>
    %cst_73 = arith.constant 1.000000e+00 : f32
    %338 = vector.broadcast %cst_73 : f32 to vector<16x128xf32>
    %339 = arith.addf %338, %337 : vector<16x128xf32>
    %340 = arith.divf %338, %339 : vector<16x128xf32>
    %341 = vector.extract_strided_slice %322 {offsets = [0, 256], sizes = [16, 128], strides = [1, 1]} : vector<16x512xf32> to vector<16x128xf32>
    %342 = math.tanh %341 : vector<16x128xf32>
    %343 = vector.extract_strided_slice %322 {offsets = [0, 384], sizes = [16, 128], strides = [1, 1]} : vector<16x512xf32> to vector<16x128xf32>
    %344 = arith.negf %343 : vector<16x128xf32>
    %345 = math.exp %344 : vector<16x128xf32>
    %cst_74 = arith.constant 1.000000e+00 : f32
    %346 = vector.broadcast %cst_74 : f32 to vector<16x128xf32>
    %347 = arith.addf %346, %345 : vector<16x128xf32>
    %348 = arith.divf %346, %347 : vector<16x128xf32>
    %349 = arith.mulf %340, %306 : vector<16x128xf32>
    %350 = arith.mulf %334, %342 : vector<16x128xf32>
    %351 = arith.addf %349, %350 : vector<16x128xf32>
    %352 = math.tanh %351 : vector<16x128xf32>
    %353 = arith.mulf %348, %352 : vector<16x128xf32>
    %354 = vector.extract_strided_slice %328 {offsets = [0, 0], sizes = [16, 128], strides = [1, 1]} : vector<16x512xf32> to vector<16x128xf32>
    %355 = arith.negf %354 : vector<16x128xf32>
    %356 = math.exp %355 : vector<16x128xf32>
    %cst_75 = arith.constant 1.000000e+00 : f32
    %357 = vector.broadcast %cst_75 : f32 to vector<16x128xf32>
    %358 = arith.addf %357, %356 : vector<16x128xf32>
    %359 = arith.divf %357, %358 : vector<16x128xf32>
    %360 = vector.extract_strided_slice %328 {offsets = [0, 128], sizes = [16, 128], strides = [1, 1]} : vector<16x512xf32> to vector<16x128xf32>
    %361 = arith.negf %360 : vector<16x128xf32>
    %362 = math.exp %361 : vector<16x128xf32>
    %cst_76 = arith.constant 1.000000e+00 : f32
    %363 = vector.broadcast %cst_76 : f32 to vector<16x128xf32>
    %364 = arith.addf %363, %362 : vector<16x128xf32>
    %365 = arith.divf %363, %364 : vector<16x128xf32>
    %366 = vector.extract_strided_slice %328 {offsets = [0, 256], sizes = [16, 128], strides = [1, 1]} : vector<16x512xf32> to vector<16x128xf32>
    %367 = math.tanh %366 : vector<16x128xf32>
    %368 = vector.extract_strided_slice %328 {offsets = [0, 384], sizes = [16, 128], strides = [1, 1]} : vector<16x512xf32> to vector<16x128xf32>
    %369 = arith.negf %368 : vector<16x128xf32>
    %370 = math.exp %369 : vector<16x128xf32>
    %cst_77 = arith.constant 1.000000e+00 : f32
    %371 = vector.broadcast %cst_77 : f32 to vector<16x128xf32>
    %372 = arith.addf %371, %370 : vector<16x128xf32>
    %373 = arith.divf %371, %372 : vector<16x128xf32>
    %374 = arith.mulf %365, %312 : vector<16x128xf32>
    %375 = arith.mulf %359, %367 : vector<16x128xf32>
    %376 = arith.addf %374, %375 : vector<16x128xf32>
    %377 = math.tanh %376 : vector<16x128xf32>
    %378 = arith.mulf %373, %377 : vector<16x128xf32>
    %379 = vector.broadcast %c3_i32 : i32 to vector<16x1xi32>
    %380 = arith.cmpi sgt, %0, %379 : vector<16x1xi32>
    %381 = vector.broadcast %313 : i32 to vector<16x1xi32>
    %382 = arith.cmpi sgt, %0, %381 : vector<16x1xi32>
    %cst_78 = arith.constant 0.000000e+00 : f32
    %383 = vector.shape_cast %380 : vector<16x1xi1> to vector<16x1xi1>
    %384 = vector.broadcast %383 : vector<16x1xi1> to vector<16x128xi1>
    %385 = vector.broadcast %cst_78 : f32 to vector<16x128xf32>
    %386 = arith.select %384, %353, %385 : vector<16x128xi1>, vector<16x128xf32>
    %387 = arith.truncf %386 : vector<16x128xf32> to vector<16x128xbf16>
    %388 = arith.index_cast %c3_i32 : i32 to index
    %c0_79 = arith.constant 0 : index
    %c0_80 = arith.constant 0 : index
    %389 = vector.load %arg13[%388, %c0_79, %c0_80] : memref<8x16x128xbf16, #tpu.memory_space<vmem>>, vector<1x16x128xbf16>
    %390 = vector.shape_cast %389 : vector<1x16x128xbf16> to vector<16x128xbf16>
    %391 = vector.shape_cast %387 : vector<16x128xbf16> to vector<1x16x128xbf16>
    tpu.vector_store %arg13[%388, %c0_79, %c0_80], %391 {strides = array<i32>} : memref<8x16x128xbf16, #tpu.memory_space<vmem>>, vector<1x16x128xbf16>,
    %cst_81 = arith.constant 0.000000e+00 : f32
    %392 = vector.shape_cast %382 : vector<16x1xi1> to vector<16x1xi1>
    %393 = vector.broadcast %392 : vector<16x1xi1> to vector<16x128xi1>
    %394 = vector.broadcast %cst_81 : f32 to vector<16x128xf32>
    %395 = arith.select %393, %378, %394 : vector<16x128xi1>, vector<16x128xf32>
    %396 = arith.truncf %395 : vector<16x128xf32> to vector<16x128xbf16>
    %397 = arith.index_cast %313 : i32 to index
    %c0_82 = arith.constant 0 : index
    %c0_83 = arith.constant 0 : index
    %398 = vector.load %arg14[%397, %c0_82, %c0_83] : memref<8x16x128xbf16, #tpu.memory_space<vmem>>, vector<1x16x128xbf16>
    %399 = vector.shape_cast %398 : vector<1x16x128xbf16> to vector<16x128xbf16>
    %400 = vector.shape_cast %396 : vector<16x128xbf16> to vector<1x16x128xbf16>
    tpu.vector_store %arg14[%397, %c0_82, %c0_83], %400 {strides = array<i32>} : memref<8x16x128xbf16, #tpu.memory_space<vmem>>, vector<1x16x128xbf16>,
    %401 = vector.shape_cast %380 : vector<16x1xi1> to vector<16x1xi1>
    %402 = vector.broadcast %401 : vector<16x1xi1> to vector<16x128xi1>
    %403 = arith.select %402, %353, %303 : vector<16x128xi1>, vector<16x128xf32>
    %404 = vector.shape_cast %380 : vector<16x1xi1> to vector<16x1xi1>
    %405 = vector.broadcast %404 : vector<16x1xi1> to vector<16x128xi1>
    %406 = arith.select %405, %351, %306 : vector<16x128xi1>, vector<16x128xf32>
    %407 = vector.shape_cast %382 : vector<16x1xi1> to vector<16x1xi1>
    %408 = vector.broadcast %407 : vector<16x1xi1> to vector<16x128xi1>
    %409 = arith.select %408, %378, %309 : vector<16x128xi1>, vector<16x128xf32>
    %410 = vector.shape_cast %382 : vector<16x1xi1> to vector<16x1xi1>
    %411 = vector.broadcast %410 : vector<16x1xi1> to vector<16x128xi1>
    %412 = arith.select %411, %376, %312 : vector<16x128xi1>, vector<16x128xf32>
    %c4_i32 = arith.constant 4 : i32
    %c7_i32_84 = arith.constant 7 : i32
    %413 = arith.subi %c7_i32_84, %c4_i32 : i32
    %414 = tpu.concatenate %403, %409 in 0 : vector<16x128xf32>, vector<16x128xf32> -> vector<32x128xf32>
    %415 = arith.truncf %414 : vector<32x128xf32> to vector<32x128xbf16>
    %cst_85 = arith.constant dense<0.000000e+00> : vector<32x1024xf32>
    %416 = tpu.matmul %415, %11, %cst_85 {dimension_numbers = #tpu.dot_dimension_numbers<[1], [0], [0], [1], [0, 0, 1, 1], [], []>} : vector<32x128xbf16>, vector<128x1024xbf16>, vector<32x1024xf32> -> vector<32x1024xf32>
    %417 = vector.extract_strided_slice %416 {offsets = [0, 0], sizes = [16, 512], strides = [1, 1]} : vector<32x1024xf32> to vector<16x512xf32>
    %418 = arith.index_cast %c4_i32 : i32 to index
    %c0_86 = arith.constant 0 : index
    %c0_87 = arith.constant 0 : index
    %419 = vector.load %arg12[%418, %c0_86, %c0_87] : memref<8x16x1024xbf16, #tpu.memory_space<vmem>>, vector<1x16x512xbf16>
    %420 = vector.shape_cast %419 : vector<1x16x512xbf16> to vector<16x512xbf16>
    %421 = arith.extf %420 : vector<16x512xbf16> to vector<16x512xf32>
    %422 = arith.addf %417, %421 : vector<16x512xf32>
    %423 = vector.extract_strided_slice %416 {offsets = [16, 512], sizes = [16, 512], strides = [1, 1]} : vector<32x1024xf32> to vector<16x512xf32>
    %424 = arith.index_cast %413 : i32 to index
    %c0_88 = arith.constant 0 : index
    %c512_89 = arith.constant 512 : index
    %425 = vector.load %arg12[%424, %c0_88, %c512_89] : memref<8x16x1024xbf16, #tpu.memory_space<vmem>>, vector<1x16x512xbf16>
    %426 = vector.shape_cast %425 : vector<1x16x512xbf16> to vector<16x512xbf16>
    %427 = arith.extf %426 : vector<16x512xbf16> to vector<16x512xf32>
    %428 = arith.addf %423, %427 : vector<16x512xf32>
    %429 = vector.extract_strided_slice %422 {offsets = [0, 0], sizes = [16, 128], strides = [1, 1]} : vector<16x512xf32> to vector<16x128xf32>
    %430 = arith.negf %429 : vector<16x128xf32>
    %431 = math.exp %430 : vector<16x128xf32>
    %cst_90 = arith.constant 1.000000e+00 : f32
    %432 = vector.broadcast %cst_90 : f32 to vector<16x128xf32>
    %433 = arith.addf %432, %431 : vector<16x128xf32>
    %434 = arith.divf %432, %433 : vector<16x128xf32>
    %435 = vector.extract_strided_slice %422 {offsets = [0, 128], sizes = [16, 128], strides = [1, 1]} : vector<16x512xf32> to vector<16x128xf32>
    %436 = arith.negf %435 : vector<16x128xf32>
    %437 = math.exp %436 : vector<16x128xf32>
    %cst_91 = arith.constant 1.000000e+00 : f32
    %438 = vector.broadcast %cst_91 : f32 to vector<16x128xf32>
    %439 = arith.addf %438, %437 : vector<16x128xf32>
    %440 = arith.divf %438, %439 : vector<16x128xf32>
    %441 = vector.extract_strided_slice %422 {offsets = [0, 256], sizes = [16, 128], strides = [1, 1]} : vector<16x512xf32> to vector<16x128xf32>
    %442 = math.tanh %441 : vector<16x128xf32>
    %443 = vector.extract_strided_slice %422 {offsets = [0, 384], sizes = [16, 128], strides = [1, 1]} : vector<16x512xf32> to vector<16x128xf32>
    %444 = arith.negf %443 : vector<16x128xf32>
    %445 = math.exp %444 : vector<16x128xf32>
    %cst_92 = arith.constant 1.000000e+00 : f32
    %446 = vector.broadcast %cst_92 : f32 to vector<16x128xf32>
    %447 = arith.addf %446, %445 : vector<16x128xf32>
    %448 = arith.divf %446, %447 : vector<16x128xf32>
    %449 = arith.mulf %440, %406 : vector<16x128xf32>
    %450 = arith.mulf %434, %442 : vector<16x128xf32>
    %451 = arith.addf %449, %450 : vector<16x128xf32>
    %452 = math.tanh %451 : vector<16x128xf32>
    %453 = arith.mulf %448, %452 : vector<16x128xf32>
    %454 = vector.extract_strided_slice %428 {offsets = [0, 0], sizes = [16, 128], strides = [1, 1]} : vector<16x512xf32> to vector<16x128xf32>
    %455 = arith.negf %454 : vector<16x128xf32>
    %456 = math.exp %455 : vector<16x128xf32>
    %cst_93 = arith.constant 1.000000e+00 : f32
    %457 = vector.broadcast %cst_93 : f32 to vector<16x128xf32>
    %458 = arith.addf %457, %456 : vector<16x128xf32>
    %459 = arith.divf %457, %458 : vector<16x128xf32>
    %460 = vector.extract_strided_slice %428 {offsets = [0, 128], sizes = [16, 128], strides = [1, 1]} : vector<16x512xf32> to vector<16x128xf32>
    %461 = arith.negf %460 : vector<16x128xf32>
    %462 = math.exp %461 : vector<16x128xf32>
    %cst_94 = arith.constant 1.000000e+00 : f32
    %463 = vector.broadcast %cst_94 : f32 to vector<16x128xf32>
    %464 = arith.addf %463, %462 : vector<16x128xf32>
    %465 = arith.divf %463, %464 : vector<16x128xf32>
    %466 = vector.extract_strided_slice %428 {offsets = [0, 256], sizes = [16, 128], strides = [1, 1]} : vector<16x512xf32> to vector<16x128xf32>
    %467 = math.tanh %466 : vector<16x128xf32>
    %468 = vector.extract_strided_slice %428 {offsets = [0, 384], sizes = [16, 128], strides = [1, 1]} : vector<16x512xf32> to vector<16x128xf32>
    %469 = arith.negf %468 : vector<16x128xf32>
    %470 = math.exp %469 : vector<16x128xf32>
    %cst_95 = arith.constant 1.000000e+00 : f32
    %471 = vector.broadcast %cst_95 : f32 to vector<16x128xf32>
    %472 = arith.addf %471, %470 : vector<16x128xf32>
    %473 = arith.divf %471, %472 : vector<16x128xf32>
    %474 = arith.mulf %465, %412 : vector<16x128xf32>
    %475 = arith.mulf %459, %467 : vector<16x128xf32>
    %476 = arith.addf %474, %475 : vector<16x128xf32>
    %477 = math.tanh %476 : vector<16x128xf32>
    %478 = arith.mulf %473, %477 : vector<16x128xf32>
    %479 = vector.broadcast %c4_i32 : i32 to vector<16x1xi32>
    %480 = arith.cmpi sgt, %0, %479 : vector<16x1xi32>
    %481 = vector.broadcast %413 : i32 to vector<16x1xi32>
    %482 = arith.cmpi sgt, %0, %481 : vector<16x1xi32>
    %cst_96 = arith.constant 0.000000e+00 : f32
    %483 = vector.shape_cast %480 : vector<16x1xi1> to vector<16x1xi1>
    %484 = vector.broadcast %483 : vector<16x1xi1> to vector<16x128xi1>
    %485 = vector.broadcast %cst_96 : f32 to vector<16x128xf32>
    %486 = arith.select %484, %453, %485 : vector<16x128xi1>, vector<16x128xf32>
    %487 = arith.truncf %486 : vector<16x128xf32> to vector<16x128xbf16>
    %488 = arith.index_cast %c4_i32 : i32 to index
    %c0_97 = arith.constant 0 : index
    %c0_98 = arith.constant 0 : index
    %489 = vector.load %arg13[%488, %c0_97, %c0_98] : memref<8x16x128xbf16, #tpu.memory_space<vmem>>, vector<1x16x128xbf16>
    %490 = vector.shape_cast %489 : vector<1x16x128xbf16> to vector<16x128xbf16>
    %491 = vector.shape_cast %487 : vector<16x128xbf16> to vector<1x16x128xbf16>
    tpu.vector_store %arg13[%488, %c0_97, %c0_98], %491 {strides = array<i32>} : memref<8x16x128xbf16, #tpu.memory_space<vmem>>, vector<1x16x128xbf16>,
    %cst_99 = arith.constant 0.000000e+00 : f32
    %492 = vector.shape_cast %482 : vector<16x1xi1> to vector<16x1xi1>
    %493 = vector.broadcast %492 : vector<16x1xi1> to vector<16x128xi1>
    %494 = vector.broadcast %cst_99 : f32 to vector<16x128xf32>
    %495 = arith.select %493, %478, %494 : vector<16x128xi1>, vector<16x128xf32>
    %496 = arith.truncf %495 : vector<16x128xf32> to vector<16x128xbf16>
    %497 = arith.index_cast %413 : i32 to index
    %c0_100 = arith.constant 0 : index
    %c0_101 = arith.constant 0 : index
    %498 = vector.load %arg14[%497, %c0_100, %c0_101] : memref<8x16x128xbf16, #tpu.memory_space<vmem>>, vector<1x16x128xbf16>
    %499 = vector.shape_cast %498 : vector<1x16x128xbf16> to vector<16x128xbf16>
    %500 = vector.shape_cast %496 : vector<16x128xbf16> to vector<1x16x128xbf16>
    tpu.vector_store %arg14[%497, %c0_100, %c0_101], %500 {strides = array<i32>} : memref<8x16x128xbf16, #tpu.memory_space<vmem>>, vector<1x16x128xbf16>,
    %501 = vector.shape_cast %480 : vector<16x1xi1> to vector<16x1xi1>
    %502 = vector.broadcast %501 : vector<16x1xi1> to vector<16x128xi1>
    %503 = arith.select %502, %453, %403 : vector<16x128xi1>, vector<16x128xf32>
    %504 = vector.shape_cast %480 : vector<16x1xi1> to vector<16x1xi1>
    %505 = vector.broadcast %504 : vector<16x1xi1> to vector<16x128xi1>
    %506 = arith.select %505, %451, %406 : vector<16x128xi1>, vector<16x128xf32>
    %507 = vector.shape_cast %482 : vector<16x1xi1> to vector<16x1xi1>
    %508 = vector.broadcast %507 : vector<16x1xi1> to vector<16x128xi1>
    %509 = arith.select %508, %478, %409 : vector<16x128xi1>, vector<16x128xf32>
    %510 = vector.shape_cast %482 : vector<16x1xi1> to vector<16x1xi1>
    %511 = vector.broadcast %510 : vector<16x1xi1> to vector<16x128xi1>
    %512 = arith.select %511, %476, %412 : vector<16x128xi1>, vector<16x128xf32>
    %c5_i32 = arith.constant 5 : i32
    %c7_i32_102 = arith.constant 7 : i32
    %513 = arith.subi %c7_i32_102, %c5_i32 : i32
    %514 = tpu.concatenate %503, %509 in 0 : vector<16x128xf32>, vector<16x128xf32> -> vector<32x128xf32>
    %515 = arith.truncf %514 : vector<32x128xf32> to vector<32x128xbf16>
    %cst_103 = arith.constant dense<0.000000e+00> : vector<32x1024xf32>
    %516 = tpu.matmul %515, %11, %cst_103 {dimension_numbers = #tpu.dot_dimension_numbers<[1], [0], [0], [1], [0, 0, 1, 1], [], []>} : vector<32x128xbf16>, vector<128x1024xbf16>, vector<32x1024xf32> -> vector<32x1024xf32>
    %517 = vector.extract_strided_slice %516 {offsets = [0, 0], sizes = [16, 512], strides = [1, 1]} : vector<32x1024xf32> to vector<16x512xf32>
    %518 = arith.index_cast %c5_i32 : i32 to index
    %c0_104 = arith.constant 0 : index
    %c0_105 = arith.constant 0 : index
    %519 = vector.load %arg12[%518, %c0_104, %c0_105] : memref<8x16x1024xbf16, #tpu.memory_space<vmem>>, vector<1x16x512xbf16>
    %520 = vector.shape_cast %519 : vector<1x16x512xbf16> to vector<16x512xbf16>
    %521 = arith.extf %520 : vector<16x512xbf16> to vector<16x512xf32>
    %522 = arith.addf %517, %521 : vector<16x512xf32>
    %523 = vector.extract_strided_slice %516 {offsets = [16, 512], sizes = [16, 512], strides = [1, 1]} : vector<32x1024xf32> to vector<16x512xf32>
    %524 = arith.index_cast %513 : i32 to index
    %c0_106 = arith.constant 0 : index
    %c512_107 = arith.constant 512 : index
    %525 = vector.load %arg12[%524, %c0_106, %c512_107] : memref<8x16x1024xbf16, #tpu.memory_space<vmem>>, vector<1x16x512xbf16>
    %526 = vector.shape_cast %525 : vector<1x16x512xbf16> to vector<16x512xbf16>
    %527 = arith.extf %526 : vector<16x512xbf16> to vector<16x512xf32>
    %528 = arith.addf %523, %527 : vector<16x512xf32>
    %529 = vector.extract_strided_slice %522 {offsets = [0, 0], sizes = [16, 128], strides = [1, 1]} : vector<16x512xf32> to vector<16x128xf32>
    %530 = arith.negf %529 : vector<16x128xf32>
    %531 = math.exp %530 : vector<16x128xf32>
    %cst_108 = arith.constant 1.000000e+00 : f32
    %532 = vector.broadcast %cst_108 : f32 to vector<16x128xf32>
    %533 = arith.addf %532, %531 : vector<16x128xf32>
    %534 = arith.divf %532, %533 : vector<16x128xf32>
    %535 = vector.extract_strided_slice %522 {offsets = [0, 128], sizes = [16, 128], strides = [1, 1]} : vector<16x512xf32> to vector<16x128xf32>
    %536 = arith.negf %535 : vector<16x128xf32>
    %537 = math.exp %536 : vector<16x128xf32>
    %cst_109 = arith.constant 1.000000e+00 : f32
    %538 = vector.broadcast %cst_109 : f32 to vector<16x128xf32>
    %539 = arith.addf %538, %537 : vector<16x128xf32>
    %540 = arith.divf %538, %539 : vector<16x128xf32>
    %541 = vector.extract_strided_slice %522 {offsets = [0, 256], sizes = [16, 128], strides = [1, 1]} : vector<16x512xf32> to vector<16x128xf32>
    %542 = math.tanh %541 : vector<16x128xf32>
    %543 = vector.extract_strided_slice %522 {offsets = [0, 384], sizes = [16, 128], strides = [1, 1]} : vector<16x512xf32> to vector<16x128xf32>
    %544 = arith.negf %543 : vector<16x128xf32>
    %545 = math.exp %544 : vector<16x128xf32>
    %cst_110 = arith.constant 1.000000e+00 : f32
    %546 = vector.broadcast %cst_110 : f32 to vector<16x128xf32>
    %547 = arith.addf %546, %545 : vector<16x128xf32>
    %548 = arith.divf %546, %547 : vector<16x128xf32>
    %549 = arith.mulf %540, %506 : vector<16x128xf32>
    %550 = arith.mulf %534, %542 : vector<16x128xf32>
    %551 = arith.addf %549, %550 : vector<16x128xf32>
    %552 = math.tanh %551 : vector<16x128xf32>
    %553 = arith.mulf %548, %552 : vector<16x128xf32>
    %554 = vector.extract_strided_slice %528 {offsets = [0, 0], sizes = [16, 128], strides = [1, 1]} : vector<16x512xf32> to vector<16x128xf32>
    %555 = arith.negf %554 : vector<16x128xf32>
    %556 = math.exp %555 : vector<16x128xf32>
    %cst_111 = arith.constant 1.000000e+00 : f32
    %557 = vector.broadcast %cst_111 : f32 to vector<16x128xf32>
    %558 = arith.addf %557, %556 : vector<16x128xf32>
    %559 = arith.divf %557, %558 : vector<16x128xf32>
    %560 = vector.extract_strided_slice %528 {offsets = [0, 128], sizes = [16, 128], strides = [1, 1]} : vector<16x512xf32> to vector<16x128xf32>
    %561 = arith.negf %560 : vector<16x128xf32>
    %562 = math.exp %561 : vector<16x128xf32>
    %cst_112 = arith.constant 1.000000e+00 : f32
    %563 = vector.broadcast %cst_112 : f32 to vector<16x128xf32>
    %564 = arith.addf %563, %562 : vector<16x128xf32>
    %565 = arith.divf %563, %564 : vector<16x128xf32>
    %566 = vector.extract_strided_slice %528 {offsets = [0, 256], sizes = [16, 128], strides = [1, 1]} : vector<16x512xf32> to vector<16x128xf32>
    %567 = math.tanh %566 : vector<16x128xf32>
    %568 = vector.extract_strided_slice %528 {offsets = [0, 384], sizes = [16, 128], strides = [1, 1]} : vector<16x512xf32> to vector<16x128xf32>
    %569 = arith.negf %568 : vector<16x128xf32>
    %570 = math.exp %569 : vector<16x128xf32>
    %cst_113 = arith.constant 1.000000e+00 : f32
    %571 = vector.broadcast %cst_113 : f32 to vector<16x128xf32>
    %572 = arith.addf %571, %570 : vector<16x128xf32>
    %573 = arith.divf %571, %572 : vector<16x128xf32>
    %574 = arith.mulf %565, %512 : vector<16x128xf32>
    %575 = arith.mulf %559, %567 : vector<16x128xf32>
    %576 = arith.addf %574, %575 : vector<16x128xf32>
    %577 = math.tanh %576 : vector<16x128xf32>
    %578 = arith.mulf %573, %577 : vector<16x128xf32>
    %579 = vector.broadcast %c5_i32 : i32 to vector<16x1xi32>
    %580 = arith.cmpi sgt, %0, %579 : vector<16x1xi32>
    %581 = vector.broadcast %513 : i32 to vector<16x1xi32>
    %582 = arith.cmpi sgt, %0, %581 : vector<16x1xi32>
    %cst_114 = arith.constant 0.000000e+00 : f32
    %583 = vector.shape_cast %580 : vector<16x1xi1> to vector<16x1xi1>
    %584 = vector.broadcast %583 : vector<16x1xi1> to vector<16x128xi1>
    %585 = vector.broadcast %cst_114 : f32 to vector<16x128xf32>
    %586 = arith.select %584, %553, %585 : vector<16x128xi1>, vector<16x128xf32>
    %587 = arith.truncf %586 : vector<16x128xf32> to vector<16x128xbf16>
    %588 = arith.index_cast %c5_i32 : i32 to index
    %c0_115 = arith.constant 0 : index
    %c0_116 = arith.constant 0 : index
    %589 = vector.load %arg13[%588, %c0_115, %c0_116] : memref<8x16x128xbf16, #tpu.memory_space<vmem>>, vector<1x16x128xbf16>
    %590 = vector.shape_cast %589 : vector<1x16x128xbf16> to vector<16x128xbf16>
    %591 = vector.shape_cast %587 : vector<16x128xbf16> to vector<1x16x128xbf16>
    tpu.vector_store %arg13[%588, %c0_115, %c0_116], %591 {strides = array<i32>} : memref<8x16x128xbf16, #tpu.memory_space<vmem>>, vector<1x16x128xbf16>,
    %cst_117 = arith.constant 0.000000e+00 : f32
    %592 = vector.shape_cast %582 : vector<16x1xi1> to vector<16x1xi1>
    %593 = vector.broadcast %592 : vector<16x1xi1> to vector<16x128xi1>
    %594 = vector.broadcast %cst_117 : f32 to vector<16x128xf32>
    %595 = arith.select %593, %578, %594 : vector<16x128xi1>, vector<16x128xf32>
    %596 = arith.truncf %595 : vector<16x128xf32> to vector<16x128xbf16>
    %597 = arith.index_cast %513 : i32 to index
    %c0_118 = arith.constant 0 : index
    %c0_119 = arith.constant 0 : index
    %598 = vector.load %arg14[%597, %c0_118, %c0_119] : memref<8x16x128xbf16, #tpu.memory_space<vmem>>, vector<1x16x128xbf16>
    %599 = vector.shape_cast %598 : vector<1x16x128xbf16> to vector<16x128xbf16>
    %600 = vector.shape_cast %596 : vector<16x128xbf16> to vector<1x16x128xbf16>
    tpu.vector_store %arg14[%597, %c0_118, %c0_119], %600 {strides = array<i32>} : memref<8x16x128xbf16, #tpu.memory_space<vmem>>, vector<1x16x128xbf16>,
    %601 = vector.shape_cast %580 : vector<16x1xi1> to vector<16x1xi1>
    %602 = vector.broadcast %601 : vector<16x1xi1> to vector<16x128xi1>
    %603 = arith.select %602, %553, %503 : vector<16x128xi1>, vector<16x128xf32>
    %604 = vector.shape_cast %580 : vector<16x1xi1> to vector<16x1xi1>
    %605 = vector.broadcast %604 : vector<16x1xi1> to vector<16x128xi1>
    %606 = arith.select %605, %551, %506 : vector<16x128xi1>, vector<16x128xf32>
    %607 = vector.shape_cast %582 : vector<16x1xi1> to vector<16x1xi1>
    %608 = vector.broadcast %607 : vector<16x1xi1> to vector<16x128xi1>
    %609 = arith.select %608, %578, %509 : vector<16x128xi1>, vector<16x128xf32>
    %610 = vector.shape_cast %582 : vector<16x1xi1> to vector<16x1xi1>
    %611 = vector.broadcast %610 : vector<16x1xi1> to vector<16x128xi1>
    %612 = arith.select %611, %576, %512 : vector<16x128xi1>, vector<16x128xf32>
    %c6_i32 = arith.constant 6 : i32
    %c7_i32_120 = arith.constant 7 : i32
    %613 = arith.subi %c7_i32_120, %c6_i32 : i32
    %614 = tpu.concatenate %603, %609 in 0 : vector<16x128xf32>, vector<16x128xf32> -> vector<32x128xf32>
    %615 = arith.truncf %614 : vector<32x128xf32> to vector<32x128xbf16>
    %cst_121 = arith.constant dense<0.000000e+00> : vector<32x1024xf32>
    %616 = tpu.matmul %615, %11, %cst_121 {dimension_numbers = #tpu.dot_dimension_numbers<[1], [0], [0], [1], [0, 0, 1, 1], [], []>} : vector<32x128xbf16>, vector<128x1024xbf16>, vector<32x1024xf32> -> vector<32x1024xf32>
    %617 = vector.extract_strided_slice %616 {offsets = [0, 0], sizes = [16, 512], strides = [1, 1]} : vector<32x1024xf32> to vector<16x512xf32>
    %618 = arith.index_cast %c6_i32 : i32 to index
    %c0_122 = arith.constant 0 : index
    %c0_123 = arith.constant 0 : index
    %619 = vector.load %arg12[%618, %c0_122, %c0_123] : memref<8x16x1024xbf16, #tpu.memory_space<vmem>>, vector<1x16x512xbf16>
    %620 = vector.shape_cast %619 : vector<1x16x512xbf16> to vector<16x512xbf16>
    %621 = arith.extf %620 : vector<16x512xbf16> to vector<16x512xf32>
    %622 = arith.addf %617, %621 : vector<16x512xf32>
    %623 = vector.extract_strided_slice %616 {offsets = [16, 512], sizes = [16, 512], strides = [1, 1]} : vector<32x1024xf32> to vector<16x512xf32>
    %624 = arith.index_cast %613 : i32 to index
    %c0_124 = arith.constant 0 : index
    %c512_125 = arith.constant 512 : index
    %625 = vector.load %arg12[%624, %c0_124, %c512_125] : memref<8x16x1024xbf16, #tpu.memory_space<vmem>>, vector<1x16x512xbf16>
    %626 = vector.shape_cast %625 : vector<1x16x512xbf16> to vector<16x512xbf16>
    %627 = arith.extf %626 : vector<16x512xbf16> to vector<16x512xf32>
    %628 = arith.addf %623, %627 : vector<16x512xf32>
    %629 = vector.extract_strided_slice %622 {offsets = [0, 0], sizes = [16, 128], strides = [1, 1]} : vector<16x512xf32> to vector<16x128xf32>
    %630 = arith.negf %629 : vector<16x128xf32>
    %631 = math.exp %630 : vector<16x128xf32>
    %cst_126 = arith.constant 1.000000e+00 : f32
    %632 = vector.broadcast %cst_126 : f32 to vector<16x128xf32>
    %633 = arith.addf %632, %631 : vector<16x128xf32>
    %634 = arith.divf %632, %633 : vector<16x128xf32>
    %635 = vector.extract_strided_slice %622 {offsets = [0, 128], sizes = [16, 128], strides = [1, 1]} : vector<16x512xf32> to vector<16x128xf32>
    %636 = arith.negf %635 : vector<16x128xf32>
    %637 = math.exp %636 : vector<16x128xf32>
    %cst_127 = arith.constant 1.000000e+00 : f32
    %638 = vector.broadcast %cst_127 : f32 to vector<16x128xf32>
    %639 = arith.addf %638, %637 : vector<16x128xf32>
    %640 = arith.divf %638, %639 : vector<16x128xf32>
    %641 = vector.extract_strided_slice %622 {offsets = [0, 256], sizes = [16, 128], strides = [1, 1]} : vector<16x512xf32> to vector<16x128xf32>
    %642 = math.tanh %641 : vector<16x128xf32>
    %643 = vector.extract_strided_slice %622 {offsets = [0, 384], sizes = [16, 128], strides = [1, 1]} : vector<16x512xf32> to vector<16x128xf32>
    %644 = arith.negf %643 : vector<16x128xf32>
    %645 = math.exp %644 : vector<16x128xf32>
    %cst_128 = arith.constant 1.000000e+00 : f32
    %646 = vector.broadcast %cst_128 : f32 to vector<16x128xf32>
    %647 = arith.addf %646, %645 : vector<16x128xf32>
    %648 = arith.divf %646, %647 : vector<16x128xf32>
    %649 = arith.mulf %640, %606 : vector<16x128xf32>
    %650 = arith.mulf %634, %642 : vector<16x128xf32>
    %651 = arith.addf %649, %650 : vector<16x128xf32>
    %652 = math.tanh %651 : vector<16x128xf32>
    %653 = arith.mulf %648, %652 : vector<16x128xf32>
    %654 = vector.extract_strided_slice %628 {offsets = [0, 0], sizes = [16, 128], strides = [1, 1]} : vector<16x512xf32> to vector<16x128xf32>
    %655 = arith.negf %654 : vector<16x128xf32>
    %656 = math.exp %655 : vector<16x128xf32>
    %cst_129 = arith.constant 1.000000e+00 : f32
    %657 = vector.broadcast %cst_129 : f32 to vector<16x128xf32>
    %658 = arith.addf %657, %656 : vector<16x128xf32>
    %659 = arith.divf %657, %658 : vector<16x128xf32>
    %660 = vector.extract_strided_slice %628 {offsets = [0, 128], sizes = [16, 128], strides = [1, 1]} : vector<16x512xf32> to vector<16x128xf32>
    %661 = arith.negf %660 : vector<16x128xf32>
    %662 = math.exp %661 : vector<16x128xf32>
    %cst_130 = arith.constant 1.000000e+00 : f32
    %663 = vector.broadcast %cst_130 : f32 to vector<16x128xf32>
    %664 = arith.addf %663, %662 : vector<16x128xf32>
    %665 = arith.divf %663, %664 : vector<16x128xf32>
    %666 = vector.extract_strided_slice %628 {offsets = [0, 256], sizes = [16, 128], strides = [1, 1]} : vector<16x512xf32> to vector<16x128xf32>
    %667 = math.tanh %666 : vector<16x128xf32>
    %668 = vector.extract_strided_slice %628 {offsets = [0, 384], sizes = [16, 128], strides = [1, 1]} : vector<16x512xf32> to vector<16x128xf32>
    %669 = arith.negf %668 : vector<16x128xf32>
    %670 = math.exp %669 : vector<16x128xf32>
    %cst_131 = arith.constant 1.000000e+00 : f32
    %671 = vector.broadcast %cst_131 : f32 to vector<16x128xf32>
    %672 = arith.addf %671, %670 : vector<16x128xf32>
    %673 = arith.divf %671, %672 : vector<16x128xf32>
    %674 = arith.mulf %665, %612 : vector<16x128xf32>
    %675 = arith.mulf %659, %667 : vector<16x128xf32>
    %676 = arith.addf %674, %675 : vector<16x128xf32>
    %677 = math.tanh %676 : vector<16x128xf32>
    %678 = arith.mulf %673, %677 : vector<16x128xf32>
    %679 = vector.broadcast %c6_i32 : i32 to vector<16x1xi32>
    %680 = arith.cmpi sgt, %0, %679 : vector<16x1xi32>
    %681 = vector.broadcast %613 : i32 to vector<16x1xi32>
    %682 = arith.cmpi sgt, %0, %681 : vector<16x1xi32>
    %cst_132 = arith.constant 0.000000e+00 : f32
    %683 = vector.shape_cast %680 : vector<16x1xi1> to vector<16x1xi1>
    %684 = vector.broadcast %683 : vector<16x1xi1> to vector<16x128xi1>
    %685 = vector.broadcast %cst_132 : f32 to vector<16x128xf32>
    %686 = arith.select %684, %653, %685 : vector<16x128xi1>, vector<16x128xf32>
    %687 = arith.truncf %686 : vector<16x128xf32> to vector<16x128xbf16>
    %688 = arith.index_cast %c6_i32 : i32 to index
    %c0_133 = arith.constant 0 : index
    %c0_134 = arith.constant 0 : index
    %689 = vector.load %arg13[%688, %c0_133, %c0_134] : memref<8x16x128xbf16, #tpu.memory_space<vmem>>, vector<1x16x128xbf16>
    %690 = vector.shape_cast %689 : vector<1x16x128xbf16> to vector<16x128xbf16>
    %691 = vector.shape_cast %687 : vector<16x128xbf16> to vector<1x16x128xbf16>
    tpu.vector_store %arg13[%688, %c0_133, %c0_134], %691 {strides = array<i32>} : memref<8x16x128xbf16, #tpu.memory_space<vmem>>, vector<1x16x128xbf16>,
    %cst_135 = arith.constant 0.000000e+00 : f32
    %692 = vector.shape_cast %682 : vector<16x1xi1> to vector<16x1xi1>
    %693 = vector.broadcast %692 : vector<16x1xi1> to vector<16x128xi1>
    %694 = vector.broadcast %cst_135 : f32 to vector<16x128xf32>
    %695 = arith.select %693, %678, %694 : vector<16x128xi1>, vector<16x128xf32>
    %696 = arith.truncf %695 : vector<16x128xf32> to vector<16x128xbf16>
    %697 = arith.index_cast %613 : i32 to index
    %c0_136 = arith.constant 0 : index
    %c0_137 = arith.constant 0 : index
    %698 = vector.load %arg14[%697, %c0_136, %c0_137] : memref<8x16x128xbf16, #tpu.memory_space<vmem>>, vector<1x16x128xbf16>
    %699 = vector.shape_cast %698 : vector<1x16x128xbf16> to vector<16x128xbf16>
    %700 = vector.shape_cast %696 : vector<16x128xbf16> to vector<1x16x128xbf16>
    tpu.vector_store %arg14[%697, %c0_136, %c0_137], %700 {strides = array<i32>} : memref<8x16x128xbf16, #tpu.memory_space<vmem>>, vector<1x16x128xbf16>,
    %701 = vector.shape_cast %680 : vector<16x1xi1> to vector<16x1xi1>
    %702 = vector.broadcast %701 : vector<16x1xi1> to vector<16x128xi1>
    %703 = arith.select %702, %653, %603 : vector<16x128xi1>, vector<16x128xf32>
    %704 = vector.shape_cast %680 : vector<16x1xi1> to vector<16x1xi1>
    %705 = vector.broadcast %704 : vector<16x1xi1> to vector<16x128xi1>
    %706 = arith.select %705, %651, %606 : vector<16x128xi1>, vector<16x128xf32>
    %707 = vector.shape_cast %682 : vector<16x1xi1> to vector<16x1xi1>
    %708 = vector.broadcast %707 : vector<16x1xi1> to vector<16x128xi1>
    %709 = arith.select %708, %678, %609 : vector<16x128xi1>, vector<16x128xf32>
    %710 = vector.shape_cast %682 : vector<16x1xi1> to vector<16x1xi1>
    %711 = vector.broadcast %710 : vector<16x1xi1> to vector<16x128xi1>
    %712 = arith.select %711, %676, %612 : vector<16x128xi1>, vector<16x128xf32>
    %c7_i32_138 = arith.constant 7 : i32
    %c7_i32_139 = arith.constant 7 : i32
    %713 = arith.subi %c7_i32_139, %c7_i32_138 : i32
    %714 = tpu.concatenate %703, %709 in 0 : vector<16x128xf32>, vector<16x128xf32> -> vector<32x128xf32>
    %715 = arith.truncf %714 : vector<32x128xf32> to vector<32x128xbf16>
    %cst_140 = arith.constant dense<0.000000e+00> : vector<32x1024xf32>
    %716 = tpu.matmul %715, %11, %cst_140 {dimension_numbers = #tpu.dot_dimension_numbers<[1], [0], [0], [1], [0, 0, 1, 1], [], []>} : vector<32x128xbf16>, vector<128x1024xbf16>, vector<32x1024xf32> -> vector<32x1024xf32>
    %717 = vector.extract_strided_slice %716 {offsets = [0, 0], sizes = [16, 512], strides = [1, 1]} : vector<32x1024xf32> to vector<16x512xf32>
    %718 = arith.index_cast %c7_i32_138 : i32 to index
    %c0_141 = arith.constant 0 : index
    %c0_142 = arith.constant 0 : index
    %719 = vector.load %arg12[%718, %c0_141, %c0_142] : memref<8x16x1024xbf16, #tpu.memory_space<vmem>>, vector<1x16x512xbf16>
    %720 = vector.shape_cast %719 : vector<1x16x512xbf16> to vector<16x512xbf16>
    %721 = arith.extf %720 : vector<16x512xbf16> to vector<16x512xf32>
    %722 = arith.addf %717, %721 : vector<16x512xf32>
    %723 = vector.extract_strided_slice %716 {offsets = [16, 512], sizes = [16, 512], strides = [1, 1]} : vector<32x1024xf32> to vector<16x512xf32>
    %724 = arith.index_cast %713 : i32 to index
    %c0_143 = arith.constant 0 : index
    %c512_144 = arith.constant 512 : index
    %725 = vector.load %arg12[%724, %c0_143, %c512_144] : memref<8x16x1024xbf16, #tpu.memory_space<vmem>>, vector<1x16x512xbf16>
    %726 = vector.shape_cast %725 : vector<1x16x512xbf16> to vector<16x512xbf16>
    %727 = arith.extf %726 : vector<16x512xbf16> to vector<16x512xf32>
    %728 = arith.addf %723, %727 : vector<16x512xf32>
    %729 = vector.extract_strided_slice %722 {offsets = [0, 0], sizes = [16, 128], strides = [1, 1]} : vector<16x512xf32> to vector<16x128xf32>
    %730 = arith.negf %729 : vector<16x128xf32>
    %731 = math.exp %730 : vector<16x128xf32>
    %cst_145 = arith.constant 1.000000e+00 : f32
    %732 = vector.broadcast %cst_145 : f32 to vector<16x128xf32>
    %733 = arith.addf %732, %731 : vector<16x128xf32>
    %734 = arith.divf %732, %733 : vector<16x128xf32>
    %735 = vector.extract_strided_slice %722 {offsets = [0, 128], sizes = [16, 128], strides = [1, 1]} : vector<16x512xf32> to vector<16x128xf32>
    %736 = arith.negf %735 : vector<16x128xf32>
    %737 = math.exp %736 : vector<16x128xf32>
    %cst_146 = arith.constant 1.000000e+00 : f32
    %738 = vector.broadcast %cst_146 : f32 to vector<16x128xf32>
    %739 = arith.addf %738, %737 : vector<16x128xf32>
    %740 = arith.divf %738, %739 : vector<16x128xf32>
    %741 = vector.extract_strided_slice %722 {offsets = [0, 256], sizes = [16, 128], strides = [1, 1]} : vector<16x512xf32> to vector<16x128xf32>
    %742 = math.tanh %741 : vector<16x128xf32>
    %743 = vector.extract_strided_slice %722 {offsets = [0, 384], sizes = [16, 128], strides = [1, 1]} : vector<16x512xf32> to vector<16x128xf32>
    %744 = arith.negf %743 : vector<16x128xf32>
    %745 = math.exp %744 : vector<16x128xf32>
    %cst_147 = arith.constant 1.000000e+00 : f32
    %746 = vector.broadcast %cst_147 : f32 to vector<16x128xf32>
    %747 = arith.addf %746, %745 : vector<16x128xf32>
    %748 = arith.divf %746, %747 : vector<16x128xf32>
    %749 = arith.mulf %740, %706 : vector<16x128xf32>
    %750 = arith.mulf %734, %742 : vector<16x128xf32>
    %751 = arith.addf %749, %750 : vector<16x128xf32>
    %752 = math.tanh %751 : vector<16x128xf32>
    %753 = arith.mulf %748, %752 : vector<16x128xf32>
    %754 = vector.extract_strided_slice %728 {offsets = [0, 0], sizes = [16, 128], strides = [1, 1]} : vector<16x512xf32> to vector<16x128xf32>
    %755 = arith.negf %754 : vector<16x128xf32>
    %756 = math.exp %755 : vector<16x128xf32>
    %cst_148 = arith.constant 1.000000e+00 : f32
    %757 = vector.broadcast %cst_148 : f32 to vector<16x128xf32>
    %758 = arith.addf %757, %756 : vector<16x128xf32>
    %759 = arith.divf %757, %758 : vector<16x128xf32>
    %760 = vector.extract_strided_slice %728 {offsets = [0, 128], sizes = [16, 128], strides = [1, 1]} : vector<16x512xf32> to vector<16x128xf32>
    %761 = arith.negf %760 : vector<16x128xf32>
    %762 = math.exp %761 : vector<16x128xf32>
    %cst_149 = arith.constant 1.000000e+00 : f32
    %763 = vector.broadcast %cst_149 : f32 to vector<16x128xf32>
    %764 = arith.addf %763, %762 : vector<16x128xf32>
    %765 = arith.divf %763, %764 : vector<16x128xf32>
    %766 = vector.extract_strided_slice %728 {offsets = [0, 256], sizes = [16, 128], strides = [1, 1]} : vector<16x512xf32> to vector<16x128xf32>
    %767 = math.tanh %766 : vector<16x128xf32>
    %768 = vector.extract_strided_slice %728 {offsets = [0, 384], sizes = [16, 128], strides = [1, 1]} : vector<16x512xf32> to vector<16x128xf32>
    %769 = arith.negf %768 : vector<16x128xf32>
    %770 = math.exp %769 : vector<16x128xf32>
    %cst_150 = arith.constant 1.000000e+00 : f32
    %771 = vector.broadcast %cst_150 : f32 to vector<16x128xf32>
    %772 = arith.addf %771, %770 : vector<16x128xf32>
    %773 = arith.divf %771, %772 : vector<16x128xf32>
    %774 = arith.mulf %765, %712 : vector<16x128xf32>
    %775 = arith.mulf %759, %767 : vector<16x128xf32>
    %776 = arith.addf %774, %775 : vector<16x128xf32>
    %777 = math.tanh %776 : vector<16x128xf32>
    %778 = arith.mulf %773, %777 : vector<16x128xf32>
    %779 = vector.broadcast %c7_i32_138 : i32 to vector<16x1xi32>
    %780 = arith.cmpi sgt, %0, %779 : vector<16x1xi32>
    %781 = vector.broadcast %713 : i32 to vector<16x1xi32>
    %782 = arith.cmpi sgt, %0, %781 : vector<16x1xi32>
    %cst_151 = arith.constant 0.000000e+00 : f32
    %783 = vector.shape_cast %780 : vector<16x1xi1> to vector<16x1xi1>
    %784 = vector.broadcast %783 : vector<16x1xi1> to vector<16x128xi1>
    %785 = vector.broadcast %cst_151 : f32 to vector<16x128xf32>
    %786 = arith.select %784, %753, %785 : vector<16x128xi1>, vector<16x128xf32>
    %787 = arith.truncf %786 : vector<16x128xf32> to vector<16x128xbf16>
    %788 = arith.index_cast %c7_i32_138 : i32 to index
    %c0_152 = arith.constant 0 : index
    %c0_153 = arith.constant 0 : index
    %789 = vector.load %arg13[%788, %c0_152, %c0_153] : memref<8x16x128xbf16, #tpu.memory_space<vmem>>, vector<1x16x128xbf16>
    %790 = vector.shape_cast %789 : vector<1x16x128xbf16> to vector<16x128xbf16>
    %791 = vector.shape_cast %787 : vector<16x128xbf16> to vector<1x16x128xbf16>
    tpu.vector_store %arg13[%788, %c0_152, %c0_153], %791 {strides = array<i32>} : memref<8x16x128xbf16, #tpu.memory_space<vmem>>, vector<1x16x128xbf16>,
    %cst_154 = arith.constant 0.000000e+00 : f32
    %792 = vector.shape_cast %782 : vector<16x1xi1> to vector<16x1xi1>
    %793 = vector.broadcast %792 : vector<16x1xi1> to vector<16x128xi1>
    %794 = vector.broadcast %cst_154 : f32 to vector<16x128xf32>
    %795 = arith.select %793, %778, %794 : vector<16x128xi1>, vector<16x128xf32>
    %796 = arith.truncf %795 : vector<16x128xf32> to vector<16x128xbf16>
    %797 = arith.index_cast %713 : i32 to index
    %c0_155 = arith.constant 0 : index
    %c0_156 = arith.constant 0 : index
    %798 = vector.load %arg14[%797, %c0_155, %c0_156] : memref<8x16x128xbf16, #tpu.memory_space<vmem>>, vector<1x16x128xbf16>
    %799 = vector.shape_cast %798 : vector<1x16x128xbf16> to vector<16x128xbf16>
    %800 = vector.shape_cast %796 : vector<16x128xbf16> to vector<1x16x128xbf16>
    tpu.vector_store %arg14[%797, %c0_155, %c0_156], %800 {strides = array<i32>} : memref<8x16x128xbf16, #tpu.memory_space<vmem>>, vector<1x16x128xbf16>,
    %801 = vector.shape_cast %780 : vector<16x1xi1> to vector<16x1xi1>
    %802 = vector.broadcast %801 : vector<16x1xi1> to vector<16x128xi1>
    %803 = arith.select %802, %753, %703 : vector<16x128xi1>, vector<16x128xf32>
    %804 = vector.shape_cast %780 : vector<16x1xi1> to vector<16x1xi1>
    %805 = vector.broadcast %804 : vector<16x1xi1> to vector<16x128xi1>
    %806 = arith.select %805, %751, %706 : vector<16x128xi1>, vector<16x128xf32>
    %807 = vector.shape_cast %782 : vector<16x1xi1> to vector<16x1xi1>
    %808 = vector.broadcast %807 : vector<16x1xi1> to vector<16x128xi1>
    %809 = arith.select %808, %778, %709 : vector<16x128xi1>, vector<16x128xf32>
    %810 = vector.shape_cast %782 : vector<16x1xi1> to vector<16x1xi1>
    %811 = vector.broadcast %810 : vector<16x1xi1> to vector<16x128xi1>
    %812 = arith.select %811, %776, %712 : vector<16x128xi1>, vector<16x128xf32>
    %c8_i32 = arith.constant 8 : i32
    %c0_157 = arith.constant 0 : index
    %c0_158 = arith.constant 0 : index
    %c0_159 = arith.constant 0 : index
    %813 = vector.load %arg13[%c0_157, %c0_158, %c0_159] : memref<8x16x128xbf16, #tpu.memory_space<vmem>>, vector<8x16x128xbf16>
    %814 = arith.extf %813 : vector<8x16x128xbf16> to vector<8x16x128xf32>
    %c0_160 = arith.constant 0 : index
    %c0_161 = arith.constant 0 : index
    %c0_162 = arith.constant 0 : index
    %815 = vector.load %arg14[%c0_160, %c0_161, %c0_162] : memref<8x16x128xbf16, #tpu.memory_space<vmem>>, vector<8x16x128xbf16>
    %816 = arith.extf %815 : vector<8x16x128xbf16> to vector<8x16x128xf32>
    %817 = arith.addf %814, %816 : vector<8x16x128xf32>
    %818 = arith.addf %803, %809 : vector<16x128xf32>
    %819 = arith.truncf %818 : vector<16x128xf32> to vector<16x128xbf16>
    %c0_163 = arith.constant 0 : index
    %c0_164 = arith.constant 0 : index
    %820 = vector.load %arg6[%c0_163, %c0_164] : memref<128x128xbf16, #tpu.memory_space<vmem>>, vector<128x128xbf16>
    %cst_165 = arith.constant dense<0.000000e+00> : vector<16x128xf32>
    %821 = tpu.matmul %819, %820, %cst_165 {dimension_numbers = #tpu.dot_dimension_numbers<[1], [0], [0], [1], [0, 0, 1, 1], [], []>} : vector<16x128xbf16>, vector<128x128xbf16>, vector<16x128xf32> -> vector<16x128xf32>
    %c0_166 = arith.constant 0 : index
    %c0_167 = arith.constant 0 : index
    %822 = vector.load %arg7[%c0_166, %c0_167] : memref<1x128xf32, #tpu.memory_space<vmem>>, vector<1x128xf32>
    %823 = vector.broadcast %822 : vector<1x128xf32> to vector<16x128xf32>
    %824 = arith.addf %821, %823 : vector<16x128xf32>
    %cst_168 = arith.constant 0.000000e+00 : f32
    %825 = vector.broadcast %cst_168 : f32 to vector<16x128xf32>
    %826 = arith.maximumf %824, %825 : vector<16x128xf32>
    %827 = vector.shape_cast %826 : vector<16x128xf32> to vector<1x16x128xf32>
    %828 = math.tanh %817 : vector<8x16x128xf32>
    %829 = vector.broadcast %827 : vector<1x16x128xf32> to vector<8x16x128xf32>
    %830 = arith.mulf %829, %828 : vector<8x16x128xf32>
    %cst_169 = arith.constant dense<0.000000e+00> : vector<8x16xf32>
    %831 = vector.multi_reduction <add>, %830, %cst_169 [2] : vector<8x16x128xf32> to vector<8x16xf32>
    %832 = tpu.iota {dimensions = array<i32: 0>} : vector<16x16xi32>
    %833 = tpu.iota {dimensions = array<i32: 1>} : vector<16x16xi32>
    %834 = arith.cmpi eq, %832, %833 : vector<16x16xi32>
    %835 = arith.extui %834 : vector<16x16xi1> to vector<16x16xi32>
    %836 = arith.sitofp %835 : vector<16x16xi32> to vector<16x16xf32>
    %cst_170 = arith.constant dense<0.000000e+00> : vector<16x8xf32>
    %837 = tpu.matmul %836, %831, %cst_170 {dimension_numbers = #tpu.dot_dimension_numbers<[1], [1], [0], [0], [0, 0, 1, 0], [], []>} : vector<16x16xf32>, vector<8x16xf32>, vector<16x8xf32> -> vector<16x8xf32>
    %cst_171 = arith.constant dense<0xFF800000> : vector<16xf32>
    %838 = vector.multi_reduction <maximumf>, %837, %cst_171 [1] : vector<16x8xf32> to vector<16xf32>
    %839 = vector.shape_cast %838 : vector<16xf32> to vector<16x1xf32>
    %840 = vector.broadcast %839 : vector<16x1xf32> to vector<16x8xf32>
    %841 = arith.subf %837, %840 : vector<16x8xf32>
    %842 = math.exp %841 : vector<16x8xf32>
    %cst_172 = arith.constant dense<0.000000e+00> : vector<16xf32>
    %843 = vector.multi_reduction <add>, %842, %cst_172 [1] : vector<16x8xf32> to vector<16xf32>
    %844 = vector.shape_cast %843 : vector<16xf32> to vector<16x1xf32>
    %845 = vector.broadcast %844 : vector<16x1xf32> to vector<16x8xf32>
    %846 = arith.divf %842, %845 : vector<16x8xf32>
    %cst_173 = arith.constant 0.000000e+00 : f32
    %847 = vector.broadcast %cst_173 : f32 to vector<16x128xf32>
    %848 = vector.extract_strided_slice %846 {offsets = [0, 0], sizes = [16, 1], strides = [1, 1]} : vector<16x8xf32> to vector<16x1xf32>
    %849 = vector.extract_strided_slice %817 {offsets = [0, 0, 0], sizes = [1, 16, 128], strides = [1, 1, 1]} : vector<8x16x128xf32> to vector<1x16x128xf32>
    %850 = vector.shape_cast %849 : vector<1x16x128xf32> to vector<16x128xf32>
    %851 = vector.broadcast %848 : vector<16x1xf32> to vector<16x128xf32>
    %852 = arith.mulf %851, %850 : vector<16x128xf32>
    %853 = arith.addf %847, %852 : vector<16x128xf32>
    %854 = vector.extract_strided_slice %846 {offsets = [0, 1], sizes = [16, 1], strides = [1, 1]} : vector<16x8xf32> to vector<16x1xf32>
    %855 = vector.extract_strided_slice %817 {offsets = [1, 0, 0], sizes = [1, 16, 128], strides = [1, 1, 1]} : vector<8x16x128xf32> to vector<1x16x128xf32>
    %856 = vector.shape_cast %855 : vector<1x16x128xf32> to vector<16x128xf32>
    %857 = vector.broadcast %854 : vector<16x1xf32> to vector<16x128xf32>
    %858 = arith.mulf %857, %856 : vector<16x128xf32>
    %859 = arith.addf %853, %858 : vector<16x128xf32>
    %860 = vector.extract_strided_slice %846 {offsets = [0, 2], sizes = [16, 1], strides = [1, 1]} : vector<16x8xf32> to vector<16x1xf32>
    %861 = vector.extract_strided_slice %817 {offsets = [2, 0, 0], sizes = [1, 16, 128], strides = [1, 1, 1]} : vector<8x16x128xf32> to vector<1x16x128xf32>
    %862 = vector.shape_cast %861 : vector<1x16x128xf32> to vector<16x128xf32>
    %863 = vector.broadcast %860 : vector<16x1xf32> to vector<16x128xf32>
    %864 = arith.mulf %863, %862 : vector<16x128xf32>
    %865 = arith.addf %859, %864 : vector<16x128xf32>
    %866 = vector.extract_strided_slice %846 {offsets = [0, 3], sizes = [16, 1], strides = [1, 1]} : vector<16x8xf32> to vector<16x1xf32>
    %867 = vector.extract_strided_slice %817 {offsets = [3, 0, 0], sizes = [1, 16, 128], strides = [1, 1, 1]} : vector<8x16x128xf32> to vector<1x16x128xf32>
    %868 = vector.shape_cast %867 : vector<1x16x128xf32> to vector<16x128xf32>
    %869 = vector.broadcast %866 : vector<16x1xf32> to vector<16x128xf32>
    %870 = arith.mulf %869, %868 : vector<16x128xf32>
    %871 = arith.addf %865, %870 : vector<16x128xf32>
    %872 = vector.extract_strided_slice %846 {offsets = [0, 4], sizes = [16, 1], strides = [1, 1]} : vector<16x8xf32> to vector<16x1xf32>
    %873 = vector.extract_strided_slice %817 {offsets = [4, 0, 0], sizes = [1, 16, 128], strides = [1, 1, 1]} : vector<8x16x128xf32> to vector<1x16x128xf32>
    %874 = vector.shape_cast %873 : vector<1x16x128xf32> to vector<16x128xf32>
    %875 = vector.broadcast %872 : vector<16x1xf32> to vector<16x128xf32>
    %876 = arith.mulf %875, %874 : vector<16x128xf32>
    %877 = arith.addf %871, %876 : vector<16x128xf32>
    %878 = vector.extract_strided_slice %846 {offsets = [0, 5], sizes = [16, 1], strides = [1, 1]} : vector<16x8xf32> to vector<16x1xf32>
    %879 = vector.extract_strided_slice %817 {offsets = [5, 0, 0], sizes = [1, 16, 128], strides = [1, 1, 1]} : vector<8x16x128xf32> to vector<1x16x128xf32>
    %880 = vector.shape_cast %879 : vector<1x16x128xf32> to vector<16x128xf32>
    %881 = vector.broadcast %878 : vector<16x1xf32> to vector<16x128xf32>
    %882 = arith.mulf %881, %880 : vector<16x128xf32>
    %883 = arith.addf %877, %882 : vector<16x128xf32>
    %884 = vector.extract_strided_slice %846 {offsets = [0, 6], sizes = [16, 1], strides = [1, 1]} : vector<16x8xf32> to vector<16x1xf32>
    %885 = vector.extract_strided_slice %817 {offsets = [6, 0, 0], sizes = [1, 16, 128], strides = [1, 1, 1]} : vector<8x16x128xf32> to vector<1x16x128xf32>
    %886 = vector.shape_cast %885 : vector<1x16x128xf32> to vector<16x128xf32>
    %887 = vector.broadcast %884 : vector<16x1xf32> to vector<16x128xf32>
    %888 = arith.mulf %887, %886 : vector<16x128xf32>
    %889 = arith.addf %883, %888 : vector<16x128xf32>
    %890 = vector.extract_strided_slice %846 {offsets = [0, 7], sizes = [16, 1], strides = [1, 1]} : vector<16x8xf32> to vector<16x1xf32>
    %891 = vector.extract_strided_slice %817 {offsets = [7, 0, 0], sizes = [1, 16, 128], strides = [1, 1, 1]} : vector<8x16x128xf32> to vector<1x16x128xf32>
    %892 = vector.shape_cast %891 : vector<1x16x128xf32> to vector<16x128xf32>
    %893 = vector.broadcast %890 : vector<16x1xf32> to vector<16x128xf32>
    %894 = arith.mulf %893, %892 : vector<16x128xf32>
    %895 = arith.addf %889, %894 : vector<16x128xf32>
    %896 = arith.truncf %895 : vector<16x128xf32> to vector<16x128xbf16>
    %c0_174 = arith.constant 0 : index
    %c0_175 = arith.constant 0 : index
    %897 = vector.load %arg8[%c0_174, %c0_175] : memref<128x128xbf16, #tpu.memory_space<vmem>>, vector<128x128xbf16>
    %cst_176 = arith.constant dense<0.000000e+00> : vector<16x128xf32>
    %898 = tpu.matmul %896, %897, %cst_176 {dimension_numbers = #tpu.dot_dimension_numbers<[1], [0], [0], [1], [0, 0, 1, 1], [], []>} : vector<16x128xbf16>, vector<128x128xbf16>, vector<16x128xf32> -> vector<16x128xf32>
    %c0_177 = arith.constant 0 : index
    %c0_178 = arith.constant 0 : index
    %899 = vector.load %arg9[%c0_177, %c0_178] : memref<1x128xf32, #tpu.memory_space<vmem>>, vector<1x128xf32>
    %900 = vector.broadcast %899 : vector<1x128xf32> to vector<16x128xf32>
    %901 = arith.addf %898, %900 : vector<16x128xf32>
    %c0_179 = arith.constant 0 : index
    %c0_180 = arith.constant 0 : index
    %902 = vector.load %arg10[%c0_179, %c0_180] : memref<16x128xf32, #tpu.memory_space<vmem>>, vector<16x128xf32>
    tpu.vector_store %arg10[%c0_179, %c0_180], %901 {strides = array<i32>} : memref<16x128xf32, #tpu.memory_space<vmem>>, vector<16x128xf32>,
    %c0_181 = arith.constant 0 : index
    %c0_182 = arith.constant 0 : index
    %903 = vector.load %arg11[%c0_181, %c0_182] : memref<16x8xf32, #tpu.memory_space<vmem>>, vector<16x8xf32>
    tpu.vector_store %arg11[%c0_181, %c0_182], %846 {strides = array<i32>} : memref<16x8xf32, #tpu.memory_space<vmem>>, vector<16x8xf32>,
    return
  }
  func.func @transform_0(%arg0: i32) -> (i32, i32, i32) {
    %c0_i32 = arith.constant 0 : i32
    %c0_i32_0 = arith.constant 0 : i32
    %c0_i32_1 = arith.constant 0 : i32
    return %c0_i32, %arg0, %c0_i32_0 : i32, i32, i32
  }
  func.func @transform_1(%arg0: i32) -> (i32, i32) {
    %c0_i32 = arith.constant 0 : i32
    %c0_i32_0 = arith.constant 0 : i32
    return %arg0, %c0_i32 : i32, i32
  }
  func.func @transform_2(%arg0: i32) -> (i32, i32) {
    %c0_i32 = arith.constant 0 : i32
    %c0_i32_0 = arith.constant 0 : i32
    %c0_i32_1 = arith.constant 0 : i32
    return %c0_i32, %c0_i32_0 : i32, i32
  }
  func.func @transform_3(%arg0: i32) -> (i32, i32) {
    %c0_i32 = arith.constant 0 : i32
    %c0_i32_0 = arith.constant 0 : i32
    %c0_i32_1 = arith.constant 0 : i32
    return %c0_i32, %c0_i32_0 : i32, i32
  }
  func.func @transform_4(%arg0: i32) -> (i32, i32) {
    %c0_i32 = arith.constant 0 : i32
    %c0_i32_0 = arith.constant 0 : i32
    %c0_i32_1 = arith.constant 0 : i32
    return %c0_i32, %c0_i32_0 : i32, i32
  }
  func.func @transform_5(%arg0: i32) -> (i32, i32) {
    %c0_i32 = arith.constant 0 : i32
    %c0_i32_0 = arith.constant 0 : i32
    %c0_i32_1 = arith.constant 0 : i32
    return %c0_i32, %c0_i32_0 : i32, i32
  }
  func.func @transform_6(%arg0: i32) -> (i32, i32) {
    %c0_i32 = arith.constant 0 : i32
    %c0_i32_0 = arith.constant 0 : i32
    %c0_i32_1 = arith.constant 0 : i32
    return %c0_i32, %c0_i32_0 : i32, i32
  }
  func.func @transform_7(%arg0: i32) -> (i32, i32) {
    %c0_i32 = arith.constant 0 : i32
    %c0_i32_0 = arith.constant 0 : i32
    %c0_i32_1 = arith.constant 0 : i32
    return %c0_i32, %c0_i32_0 : i32, i32
  }
  func.func @transform_8(%arg0: i32) -> (i32, i32) {
    %c0_i32 = arith.constant 0 : i32
    %c0_i32_0 = arith.constant 0 : i32
    %c0_i32_1 = arith.constant 0 : i32
    return %c0_i32, %c0_i32_0 : i32, i32
  }
  func.func @transform_9(%arg0: i32) -> (i32, i32) {
    %c0_i32 = arith.constant 0 : i32
    %c0_i32_0 = arith.constant 0 : i32
    return %arg0, %c0_i32 : i32, i32
  }
  func.func @transform_10(%arg0: i32) -> (i32, i32) {
    %c0_i32 = arith.constant 0 : i32
    %c0_i32_0 = arith.constant 0 : i32
    return %arg0, %c0_i32 : i32, i32
  }
}

</mosaic_0001>

<llo_original>
// kernel: tpu_custom_call.1
$region0: #{tpu_custom_call.1}
  #allocation0 [shape = 'u32[]', space=smem, size = 0x4, offset = 0x4, fixed_abs, tag = 'smem constant byte address 0x4 - core index']
  #allocation1 [shape = 'u32[144,128]{1,0:T(1,128)}', space=vmem, size = 0x12000, scoped, tag = 'internal scratch']
  #allocation2 [shape = 'bf16[8,16,1024]{2,1,0:T(16,128)(2,1)}', space=vmem, size = 0x40000, scoped, tag = 'scratch operand']
  #allocation3 [shape = 'bf16[8,16,128]{2,1,0:T(16,128)(2,1)}', space=vmem, size = 0x8000, scoped, tag = 'scratch operand']
  #allocation4 [shape = 'bf16[8,16,128]{2,1,0:T(16,128)(2,1)}', space=vmem, size = 0x8000, scoped, tag = 'scratch operand']
  %s0 = inlined_call_operand.hbm [shape: bf16[8,16,128], index: 0, kind: input, shape index: {}]
  %s1 = inlined_call_operand.vmem [shape: s32[16,1], index: 1, kind: input, shape index: {}]
  %s2 = inlined_call_operand.hbm [shape: bf16[128,1024], index: 2, kind: input, shape index: {}]
  %s3 = inlined_call_operand.hbm [shape: bf16[128,1024], index: 3, kind: input, shape index: {}]
  %s4 = inlined_call_operand.vmem [shape: f32[1,1024], index: 4, kind: input, shape index: {}]
  %s5 = inlined_call_operand.hbm [shape: bf16[128,128], index: 5, kind: input, shape index: {}]
  %s6 = inlined_call_operand.vmem [shape: f32[1,128], index: 6, kind: input, shape index: {}]
  %s7 = inlined_call_operand.hbm [shape: bf16[128,128], index: 7, kind: input, shape index: {}]
  %s8 = inlined_call_operand.vmem [shape: f32[1,128], index: 8, kind: input, shape index: {}]
  %s9 = inlined_call_operand.hbm [shape: f32[16,128], index: 9, kind: output, shape index: {0}]
  %s10 = inlined_call_operand.vmem [shape: f32[16,8], index: 10, kind: output, shape index: {1}]
  %11 = xla_tuple %s9, %s10
  %s12 = sld [smem:[#allocation0]]
  $region74: #{tpu_custom_call.1} parent=0
    _
  %s14 = ssub.s32 1, %s12
  %s15 = scalar_select 0, %s14, %s12
  $region1: #{tpu_custom_call.1} parent=0
    #allocation5 [shape = 'u8[32768]{0}', space=vmem, size = 0x8000, scoped, tag = 'input window, operand 0, single buffered']
    #allocation6 [shape = 's32[1]{0}', space=sflag, size = 0x4, scoped, tag = 'scoped memory for tpu_custom_call.1']
    #allocation7 [shape = 's32[1]{0}', space=sflag, size = 0x4, scoped, tag = 'scoped memory for tpu_custom_call.1']
    #allocation8 [shape = 'u8[262144]{0}', space=vmem, size = 0x40000, scoped, tag = 'input window, operand 2, single buffered']
    #allocation9 [shape = 's32[1]{0}', space=sflag, size = 0x4, scoped, tag = 'scoped memory for tpu_custom_call.1']
    #allocation10 [shape = 'u8[262144]{0}', space=vmem, size = 0x40000, scoped, tag = 'input window, operand 3, single buffered']
    #allocation11 [shape = 'u8[32768]{0}', space=vmem, size = 0x8000, scoped, tag = 'input window, operand 5, single buffered']
    #allocation12 [shape = 's32[1]{0}', space=sflag, size = 0x4, scoped, tag = 'scoped memory for tpu_custom_call.1']
    #allocation13 [shape = 'u8[32768]{0}', space=vmem, size = 0x8000, scoped, tag = 'input window, operand 7, single buffered']
    #allocation14 [shape = 'u8[8192]{0}', space=vmem, size = 0x2000, scoped, tag = 'output window, operand 0, single buffered']
    %16 = vsyncpa [#allocation6], 0
    %17 = vsyncpa [#allocation9], 0
    %18 = vsyncpa [#allocation12], 0
    %19 = vsyncpa [#allocation7], 0
    // Predicated region
    $region2: #{tpu_custom_call.1} parent=1 // pred_check
      _
    $region3: #{tpu_custom_call.1} parent=1 // pred_check_branch
      %21 = sbr.rel (0) target = $region5
    $region4: #{tpu_custom_call.1} parent=1 // pred_region
      %s23 = ssub.s32 1024, 1024
      %24 = vsyncadd [#allocation6], %s23
      %s25 = sshll.u32 [#allocation5], 4
      %s26 = int_to_ptr.vmem [resolvable:$true] %s25
      %31 = dma.hbm_to_vmem [thread:$0]  %s0, 1024, %s26, [#allocation6], 64, 64, 4
    $region5: #{tpu_custom_call.1} parent=1 // pred_fallthru
      _
    // Predicated region
    $region6: #{tpu_custom_call.1} parent=1 // pred_check
      _
    $region7: #{tpu_custom_call.1} parent=1 // pred_check_branch
      %33 = sbr.rel (0) target = $region9
    $region8: #{tpu_custom_call.1} parent=1 // pred_region
      _
    $region9: #{tpu_custom_call.1} parent=1 // pred_fallthru
      _
    // Predicated region
    $region10: #{tpu_custom_call.1} parent=1 // pred_check
      _
    $region11: #{tpu_custom_call.1} parent=1 // pred_check_branch
      %35 = sbr.rel (0) target = $region13
    $region12: #{tpu_custom_call.1} parent=1 // pred_region
      %s37 = ssub.s32 8192, 8192
      %38 = vsyncadd [#allocation9], %s37
      %s39 = sshll.u32 [#allocation8], 4
      %s40 = int_to_ptr.vmem [resolvable:$true] %s39
      %45 = dma.hbm_to_vmem [thread:$0]  %s2, 8192, %s40, [#allocation9], 512, 512, 32
    $region13: #{tpu_custom_call.1} parent=1 // pred_fallthru
      _
    // Predicated region
    $region14: #{tpu_custom_call.1} parent=1 // pred_check
      _
    $region15: #{tpu_custom_call.1} parent=1 // pred_check_branch
      %47 = sbr.rel (0) target = $region17
    $region16: #{tpu_custom_call.1} parent=1 // pred_region
      %s49 = ssub.s32 8192, 8192
      %50 = vsyncadd [#allocation9], %s49
      %s51 = sshll.u32 [#allocation10], 4
      %s52 = int_to_ptr.vmem [resolvable:$true] %s51
      %57 = dma.hbm_to_vmem [thread:$0]  %s3, 8192, %s52, [#allocation9], 512, 512, 32
    $region17: #{tpu_custom_call.1} parent=1 // pred_fallthru
      _
    // Predicated region
    $region18: #{tpu_custom_call.1} parent=1 // pred_check
      _
    $region19: #{tpu_custom_call.1} parent=1 // pred_check_branch
      %59 = sbr.rel (0) target = $region21
    $region20: #{tpu_custom_call.1} parent=1 // pred_region
      _
    $region21: #{tpu_custom_call.1} parent=1 // pred_fallthru
      _
    // Predicated region
    $region22: #{tpu_custom_call.1} parent=1 // pred_check
      _
    $region23: #{tpu_custom_call.1} parent=1 // pred_check_branch
      %61 = sbr.rel (0) target = $region25
    $region24: #{tpu_custom_call.1} parent=1 // pred_region
      %s63 = ssub.s32 1024, 1024
      %64 = vsyncadd [#allocation12], %s63
      %s65 = sshll.u32 [#allocation11], 4
      %s66 = int_to_ptr.vmem [resolvable:$true] %s65
      %71 = dma.hbm_to_vmem [thread:$0]  %s5, 1024, %s66, [#allocation12], 64, 64, 4
    $region25: #{tpu_custom_call.1} parent=1 // pred_fallthru
      _
    // Predicated region
    $region26: #{tpu_custom_call.1} parent=1 // pred_check
      _
    $region27: #{tpu_custom_call.1} parent=1 // pred_check_branch
      %73 = sbr.rel (0) target = $region29
    $region28: #{tpu_custom_call.1} parent=1 // pred_region
      _
    $region29: #{tpu_custom_call.1} parent=1 // pred_fallthru
      _
    // Predicated region
    $region30: #{tpu_custom_call.1} parent=1 // pred_check
      _
    $region31: #{tpu_custom_call.1} parent=1 // pred_check_branch
      %75 = sbr.rel (0) target = $region33
    $region32: #{tpu_custom_call.1} parent=1 // pred_region
      %s77 = ssub.s32 1024, 1024
      %78 = vsyncadd [#allocation12], %s77
      %s79 = sshll.u32 [#allocation13], 4
      %s80 = int_to_ptr.vmem [resolvable:$true] %s79
      %85 = dma.hbm_to_vmem [thread:$0]  %s7, 1024, %s80, [#allocation12], 64, 64, 4
    $region33: #{tpu_custom_call.1} parent=1 // pred_fallthru
      _
    // Predicated region
    $region34: #{tpu_custom_call.1} parent=1 // pred_check
      _
    $region35: #{tpu_custom_call.1} parent=1 // pred_check_branch
      %87 = sbr.rel (0) target = $region37
    $region36: #{tpu_custom_call.1} parent=1 // pred_region
      _
    $region37: #{tpu_custom_call.1} parent=1 // pred_fallthru
      _
    // Predicated region
    $region38: #{tpu_custom_call.1} parent=1 // pred_check
      _
    $region39: #{tpu_custom_call.1} parent=1 // pred_check_branch
      %89 = sbr.rel (0) target = $region41
    $region40: #{tpu_custom_call.1} parent=1 // pred_region
      %90 = dma.done [#allocation6], 1024
    $region41: #{tpu_custom_call.1} parent=1 // pred_fallthru
      _
    // Predicated region
    $region42: #{tpu_custom_call.1} parent=1 // pred_check
      _
    $region43: #{tpu_custom_call.1} parent=1 // pred_check_branch
      %92 = sbr.rel (0) target = $region45
    $region44: #{tpu_custom_call.1} parent=1 // pred_region
      %93 = dma.done [#allocation9], 8192
    $region45: #{tpu_custom_call.1} parent=1 // pred_fallthru
      _
    // Predicated region
    $region46: #{tpu_custom_call.1} parent=1 // pred_check
      _
    $region47: #{tpu_custom_call.1} parent=1 // pred_check_branch
      %95 = sbr.rel (0) target = $region49
    $region48: #{tpu_custom_call.1} parent=1 // pred_region
      %96 = dma.done [#allocation9], 8192
    $region49: #{tpu_custom_call.1} parent=1 // pred_fallthru
      _
    // Predicated region
    $region50: #{tpu_custom_call.1} parent=1 // pred_check
      _
    $region51: #{tpu_custom_call.1} parent=1 // pred_check_branch
      %98 = sbr.rel (0) target = $region53
    $region52: #{tpu_custom_call.1} parent=1 // pred_region
      %99 = dma.done [#allocation12], 1024
    $region53: #{tpu_custom_call.1} parent=1 // pred_fallthru
      _
    // Predicated region
    $region54: #{tpu_custom_call.1} parent=1 // pred_check
      _
    $region55: #{tpu_custom_call.1} parent=1 // pred_check_branch
      %101 = sbr.rel (0) target = $region57
    $region56: #{tpu_custom_call.1} parent=1 // pred_region
      %102 = dma.done [#allocation12], 1024
    $region57: #{tpu_custom_call.1} parent=1 // pred_fallthru
      _
    %v104 = vld [vmem:[%s1] sm:$0xff]
    %v105 = vld [vmem:[%s1 + $0x8] sm:$0xff]
    %v106 = vld [vmem:[#allocation5] sm:$0xf]
    %v107 = vld [vmem:[#allocation5 + $0x4] sm:$0xf]
    %v108 = vld [vmem:[#allocation5 + $0x8] sm:$0xf]
    %v109 = vld [vmem:[#allocation5 + $0xc] sm:$0xf]
    %v110 = vld [vmem:[#allocation5 + $0x10] sm:$0xf]
    %v111 = vld [vmem:[#allocation5 + $0x14] sm:$0xf]
    %v112 = vld [vmem:[#allocation5 + $0x18] sm:$0xf]
    %v113 = vld [vmem:[#allocation5 + $0x1c] sm:$0xf]
    %v114 = vld [vmem:[#allocation5 + $0x20] sm:$0xf]
    %v115 = vld [vmem:[#allocation5 + $0x24] sm:$0xf]
    %v116 = vld [vmem:[#allocation5 + $0x28] sm:$0xf]
    %v117 = vld [vmem:[#allocation5 + $0x2c] sm:$0xf]
    %v118 = vld [vmem:[#allocation5 + $0x30] sm:$0xf]
    %v119 = vld [vmem:[#allocation5 + $0x34] sm:$0xf]
    %v120 = vld [vmem:[#allocation5 + $0x38] sm:$0xf]
    %v121 = vld [vmem:[#allocation5 + $0x3c] sm:$0xf]
    %v122 = vld [vmem:[#allocation8] sm:$0xff]
    %v123 = vld [vmem:[#allocation8 + $0x8] sm:$0xff]
    %v124 = vld [vmem:[#allocation8 + $0x10] sm:$0xff]
    %v125 = vld [vmem:[#allocation8 + $0x18] sm:$0xff]
    %v126 = vld [vmem:[#allocation8 + $0x20] sm:$0xff]
    %v127 = vld [vmem:[#allocation8 + $0x28] sm:$0xff]
    %v128 = vld [vmem:[#allocation8 + $0x30] sm:$0xff]
    %v129 = vld [vmem:[#allocation8 + $0x38] sm:$0xff]
    %v130 = vld [vmem:[#allocation8 + $0x40] sm:$0xff]
    %v131 = vld [vmem:[#allocation8 + $0x48] sm:$0xff]
    %v132 = vld [vmem:[#allocation8 + $0x50] sm:$0xff]
    %v133 = vld [vmem:[#allocation8 + $0x58] sm:$0xff]
    %v134 = vld [vmem:[#allocation8 + $0x60] sm:$0xff]
    %v135 = vld [vmem:[#allocation8 + $0x68] sm:$0xff]
    %v136 = vld [vmem:[#allocation8 + $0x70] sm:$0xff]
    %v137 = vld [vmem:[#allocation8 + $0x78] sm:$0xff]
    %v138 = vld [vmem:[#allocation8 + $0x80] sm:$0xff]
    %v139 = vld [vmem:[#allocation8 + $0x88] sm:$0xff]
    %v140 = vld [vmem:[#allocation8 + $0x90] sm:$0xff]
    %v141 = vld [vmem:[#allocation8 + $0x98] sm:$0xff]
    %v142 = vld [vmem:[#allocation8 + $0xa0] sm:$0xff]
    %v143 = vld [vmem:[#allocation8 + $0xa8] sm:$0xff]
    %v144 = vld [vmem:[#allocation8 + $0xb0] sm:$0xff]
    %v145 = vld [vmem:[#allocation8 + $0xb8] sm:$0xff]
    %v146 = vld [vmem:[#allocation8 + $0xc0] sm:$0xff]
    %v147 = vld [vmem:[#allocation8 + $0xc8] sm:$0xff]
    %v148 = vld [vmem:[#allocation8 + $0xd0] sm:$0xff]
    %v149 = vld [vmem:[#allocation8 + $0xd8] sm:$0xff]
    %v150 = vld [vmem:[#allocation8 + $0xe0] sm:$0xff]
    %v151 = vld [vmem:[#allocation8 + $0xe8] sm:$0xff]
    %v152 = vld [vmem:[#allocation8 + $0xf0] sm:$0xff]
    %v153 = vld [vmem:[#allocation8 + $0xf8] sm:$0xff]
    %v154 = vld [vmem:[#allocation8 + $0x100] sm:$0xff]
    %v155 = vld [vmem:[#allocation8 + $0x108] sm:$0xff]
    %v156 = vld [vmem:[#allocation8 + $0x110] sm:$0xff]
    %v157 = vld [vmem:[#allocation8 + $0x118] sm:$0xff]
    %v158 = vld [vmem:[#allocation8 + $0x120] sm:$0xff]
    %v159 = vld [vmem:[#allocation8 + $0x128] sm:$0xff]
    %v160 = vld [vmem:[#allocation8 + $0x130] sm:$0xff]
    %v161 = vld [vmem:[#allocation8 + $0x138] sm:$0xff]
    %v162 = vld [vmem:[#allocation8 + $0x140] sm:$0xff]
    %v163 = vld [vmem:[#allocation8 + $0x148] sm:$0xff]
    %v164 = vld [vmem:[#allocation8 + $0x150] sm:$0xff]
    %v165 = vld [vmem:[#allocation8 + $0x158] sm:$0xff]
    %v166 = vld [vmem:[#allocation8 + $0x160] sm:$0xff]
    %v167 = vld [vmem:[#allocation8 + $0x168] sm:$0xff]
    %v168 = vld [vmem:[#allocation8 + $0x170] sm:$0xff]
    %v169 = vld [vmem:[#allocation8 + $0x178] sm:$0xff]
    %v170 = vld [vmem:[#allocation8 + $0x180] sm:$0xff]
    %v171 = vld [vmem:[#allocation8 + $0x188] sm:$0xff]
    %v172 = vld [vmem:[#allocation8 + $0x190] sm:$0xff]
    %v173 = vld [vmem:[#allocation8 + $0x198] sm:$0xff]
    %v174 = vld [vmem:[#allocation8 + $0x1a0] sm:$0xff]
    %v175 = vld [vmem:[#allocation8 + $0x1a8] sm:$0xff]
    %v176 = vld [vmem:[#allocation8 + $0x1b0] sm:$0xff]
    %v177 = vld [vmem:[#allocation8 + $0x1b8] sm:$0xff]
    %v178 = vld [vmem:[#allocation8 + $0x1c0] sm:$0xff]
    %v179 = vld [vmem:[#allocation8 + $0x1c8] sm:$0xff]
    %v180 = vld [vmem:[#allocation8 + $0x1d0] sm:$0xff]
    %v181 = vld [vmem:[#allocation8 + $0x1d8] sm:$0xff]
    %v182 = vld [vmem:[#allocation8 + $0x1e0] sm:$0xff]
    %v183 = vld [vmem:[#allocation8 + $0x1e8] sm:$0xff]
    %v184 = vld [vmem:[#allocation8 + $0x1f0] sm:$0xff]
    %v185 = vld [vmem:[#allocation8 + $0x1f8] sm:$0xff]
    %v186 = vld [vmem:[%s4] sm:$0xff]
    %v188 = vlaneseq
    %v189 = vshrl.u32 %v188, 7
    %v190 = vsub.s32 0, %v189
    %v191 = vrot.slane %v186, %v190
    %v192 = vlaneseq
    %v193 = vshrl.u32 %v192, 7
    %v194 = vsub.s32 1, %v193
    %v195 = vrot.slane %v186, %v194
    %v196 = vlaneseq
    %v197 = vshrl.u32 %v196, 7
    %v198 = vsub.s32 2, %v197
    %v199 = vrot.slane %v186, %v198
    %v200 = vlaneseq
    %v201 = vshrl.u32 %v200, 7
    %v202 = vsub.s32 3, %v201
    %v203 = vrot.slane %v186, %v202
    %v204 = vlaneseq
    %v205 = vshrl.u32 %v204, 7
    %v206 = vsub.s32 4, %v205
    %v207 = vrot.slane %v186, %v206
    %v208 = vlaneseq
    %v209 = vshrl.u32 %v208, 7
    %v210 = vsub.s32 5, %v209
    %v211 = vrot.slane %v186, %v210
    %v212 = vlaneseq
    %v213 = vshrl.u32 %v212, 7
    %v214 = vsub.s32 6, %v213
    %v215 = vrot.slane %v186, %v214
    %v216 = vlaneseq
    %v217 = vshrl.u32 %v216, 7
    %v218 = vsub.s32 7, %v217
    %v219 = vrot.slane %v186, %v218
    %v244 = vunpack.c.l.b16 %v106
    %v245 = vunpack.c.l.b16 %v107
    %v246 = vunpack.c.l.b16 %v108
    %v247 = vunpack.c.l.b16 %v109
    %v248 = vunpack.c.l.b16 %v110
    %v249 = vunpack.c.l.b16 %v111
    %v250 = vunpack.c.l.b16 %v112
    %v251 = vunpack.c.l.b16 %v113
    %v252 = vunpack.c.l.b16 %v114
    %v253 = vunpack.c.l.b16 %v115
    %v254 = vunpack.c.l.b16 %v116
    %v255 = vunpack.c.l.b16 %v117
    %v256 = vunpack.c.l.b16 %v118
    %v257 = vunpack.c.l.b16 %v119
    %v258 = vunpack.c.l.b16 %v120
    %v259 = vunpack.c.l.b16 %v121
    %v260 = vpack.c.b16 %v245, %v244
    %v261 = vpack.c.b16 %v247, %v246
    %v262 = vpack.c.b16 %v249, %v248
    %v263 = vpack.c.b16 %v251, %v250
    %v264 = vpack.c.b16 %v253, %v252
    %v265 = vpack.c.b16 %v255, %v254
    %v266 = vpack.c.b16 %v257, %v256
    %v267 = vpack.c.b16 %v259, %v258
    %v340 = vunpack.c.l.b16 %v122
    %v341 = vunpack.c.h.b16 %v122
    %v342 = vunpack.c.l.b16 %v123
    %v343 = vunpack.c.h.b16 %v123
    %v344 = vunpack.c.l.b16 %v124
    %v345 = vunpack.c.h.b16 %v124
    %v346 = vunpack.c.l.b16 %v125
    %v347 = vunpack.c.h.b16 %v125
    %v348 = vunpack.c.l.b16 %v126
    %v349 = vunpack.c.h.b16 %v126
    %v350 = vunpack.c.l.b16 %v127
    %v351 = vunpack.c.h.b16 %v127
    %v352 = vunpack.c.l.b16 %v128
    %v353 = vunpack.c.h.b16 %v128
    %v354 = vunpack.c.l.b16 %v129
    %v355 = vunpack.c.h.b16 %v129
    %v356 = vunpack.c.l.b16 %v130
    %v357 = vunpack.c.h.b16 %v130
    %v358 = vunpack.c.l.b16 %v131
    %v359 = vunpack.c.h.b16 %v131
    %v360 = vunpack.c.l.b16 %v132
    %v361 = vunpack.c.h.b16 %v132
    %v362 = vunpack.c.l.b16 %v133
    %v363 = vunpack.c.h.b16 %v133
    %v364 = vunpack.c.l.b16 %v134
    %v365 = vunpack.c.h.b16 %v134
    %v366 = vunpack.c.l.b16 %v135
    %v367 = vunpack.c.h.b16 %v135
    %v368 = vunpack.c.l.b16 %v136
    %v369 = vunpack.c.h.b16 %v136
    %v370 = vunpack.c.l.b16 %v137
    %v371 = vunpack.c.h.b16 %v137
    %v372 = vunpack.c.l.b16 %v138
    %v373 = vunpack.c.h.b16 %v138
    %v374 = vunpack.c.l.b16 %v139
    %v375 = vunpack.c.h.b16 %v139
    %v376 = vunpack.c.l.b16 %v140
    %v377 = vunpack.c.h.b16 %v140
    %v378 = vunpack.c.l.b16 %v141
    %v379 = vunpack.c.h.b16 %v141
    %v380 = vunpack.c.l.b16 %v142
    %v381 = vunpack.c.h.b16 %v142
    %v382 = vunpack.c.l.b16 %v143
    %v383 = vunpack.c.h.b16 %v143
    %v384 = vunpack.c.l.b16 %v144
    %v385 = vunpack.c.h.b16 %v144
    %v386 = vunpack.c.l.b16 %v145
    %v387 = vunpack.c.h.b16 %v145
    %v388 = vunpack.c.l.b16 %v146
    %v389 = vunpack.c.h.b16 %v146
    %v390 = vunpack.c.l.b16 %v147
    %v391 = vunpack.c.h.b16 %v147
    %v392 = vunpack.c.l.b16 %v148
    %v393 = vunpack.c.h.b16 %v148
    %v394 = vunpack.c.l.b16 %v149
    %v395 = vunpack.c.h.b16 %v149
    %v396 = vunpack.c.l.b16 %v150
    %v397 = vunpack.c.h.b16 %v150
    %v398 = vunpack.c.l.b16 %v151
    %v399 = vunpack.c.h.b16 %v151
    %v400 = vunpack.c.l.b16 %v152
    %v401 = vunpack.c.h.b16 %v152
    %v402 = vunpack.c.l.b16 %v153
    %v403 = vunpack.c.h.b16 %v153
    %v404 = vunpack.c.l.b16 %v154
    %v405 = vunpack.c.h.b16 %v154
    %v406 = vunpack.c.l.b16 %v155
    %v407 = vunpack.c.h.b16 %v155
    %v408 = vunpack.c.l.b16 %v156
    %v409 = vunpack.c.h.b16 %v156
    %v410 = vunpack.c.l.b16 %v157
    %v411 = vunpack.c.h.b16 %v157
    %v412 = vunpack.c.l.b16 %v158
    %v413 = vunpack.c.h.b16 %v158
    %v414 = vunpack.c.l.b16 %v159
    %v415 = vunpack.c.h.b16 %v159
    %v416 = vunpack.c.l.b16 %v160
    %v417 = vunpack.c.h.b16 %v160
    %v418 = vunpack.c.l.b16 %v161
    %v419 = vunpack.c.h.b16 %v161
    %v420 = vunpack.c.l.b16 %v162
    %v421 = vunpack.c.h.b16 %v162
    %v422 = vunpack.c.l.b16 %v163
    %v423 = vunpack.c.h.b16 %v163
    %v424 = vunpack.c.l.b16 %v164
    %v425 = vunpack.c.h.b16 %v164
    %v426 = vunpack.c.l.b16 %v165
    %v427 = vunpack.c.h.b16 %v165
    %v428 = vunpack.c.l.b16 %v166
    %v429 = vunpack.c.h.b16 %v166
    %v430 = vunpack.c.l.b16 %v167
    %v431 = vunpack.c.h.b16 %v167
    %v432 = vunpack.c.l.b16 %v168
    %v433 = vunpack.c.h.b16 %v168
    %v434 = vunpack.c.l.b16 %v169
    %v435 = vunpack.c.h.b16 %v169
    %v436 = vunpack.c.l.b16 %v170
    %v437 = vunpack.c.h.b16 %v170
    %v438 = vunpack.c.l.b16 %v171
    %v439 = vunpack.c.h.b16 %v171
    %v440 = vunpack.c.l.b16 %v172
    %v441 = vunpack.c.h.b16 %v172
    %v442 = vunpack.c.l.b16 %v173
    %v443 = vunpack.c.h.b16 %v173
    %v444 = vunpack.c.l.b16 %v174
    %v445 = vunpack.c.h.b16 %v174
    %v446 = vunpack.c.l.b16 %v175
    %v447 = vunpack.c.h.b16 %v175
    %v448 = vunpack.c.l.b16 %v176
    %v449 = vunpack.c.h.b16 %v176
    %v450 = vunpack.c.l.b16 %v177
    %v451 = vunpack.c.h.b16 %v177
    %v452 = vunpack.c.l.b16 %v178
    %v453 = vunpack.c.h.b16 %v178
    %v454 = vunpack.c.l.b16 %v179
    %v455 = vunpack.c.h.b16 %v179
    %v456 = vunpack.c.l.b16 %v180
    %v457 = vunpack.c.h.b16 %v180
    %v458 = vunpack.c.l.b16 %v181
    %v459 = vunpack.c.h.b16 %v181
    %v460 = vunpack.c.l.b16 %v182
    %v461 = vunpack.c.h.b16 %v182
    %v462 = vunpack.c.l.b16 %v183
    %v463 = vunpack.c.h.b16 %v183
    %v464 = vunpack.c.l.b16 %v184
    %v465 = vunpack.c.h.b16 %v184
    %v466 = vunpack.c.l.b16 %v185
    %v467 = vunpack.c.h.b16 %v185
    %v468 = vpack.c.b16 %v348, %v340
    %v469 = vpack.c.b16 %v349, %v341
    %v470 = vpack.c.b16 %v350, %v342
    %v471 = vpack.c.b16 %v351, %v343
    %v472 = vpack.c.b16 %v352, %v344
    %v473 = vpack.c.b16 %v353, %v345
    %v474 = vpack.c.b16 %v354, %v346
    %v475 = vpack.c.b16 %v355, %v347
    %v476 = vpack.c.b16 %v364, %v356
    %v477 = vpack.c.b16 %v365, %v357
    %v478 = vpack.c.b16 %v366, %v358
    %v479 = vpack.c.b16 %v367, %v359
    %v480 = vpack.c.b16 %v368, %v360
    %v481 = vpack.c.b16 %v369, %v361
    %v482 = vpack.c.b16 %v370, %v362
    %v483 = vpack.c.b16 %v371, %v363
    %v484 = vpack.c.b16 %v380, %v372
    %v485 = vpack.c.b16 %v381, %v373
    %v486 = vpack.c.b16 %v382, %v374
    %v487 = vpack.c.b16 %v383, %v375
    %v488 = vpack.c.b16 %v384, %v376
    %v489 = vpack.c.b16 %v385, %v377
    %v490 = vpack.c.b16 %v386, %v378
    %v491 = vpack.c.b16 %v387, %v379
    %v492 = vpack.c.b16 %v396, %v388
    %v493 = vpack.c.b16 %v397, %v389
    %v494 = vpack.c.b16 %v398, %v390
    %v495 = vpack.c.b16 %v399, %v391
    %v496 = vpack.c.b16 %v400, %v392
    %v497 = vpack.c.b16 %v401, %v393
    %v498 = vpack.c.b16 %v402, %v394
    %v499 = vpack.c.b16 %v403, %v395
    %v500 = vpack.c.b16 %v412, %v404
    %v501 = vpack.c.b16 %v413, %v405
    %v502 = vpack.c.b16 %v414, %v406
    %v503 = vpack.c.b16 %v415, %v407
    %v504 = vpack.c.b16 %v416, %v408
    %v505 = vpack.c.b16 %v417, %v409
    %v506 = vpack.c.b16 %v418, %v410
    %v507 = vpack.c.b16 %v419, %v411
    %v508 = vpack.c.b16 %v428, %v420
    %v509 = vpack.c.b16 %v429, %v421
    %v510 = vpack.c.b16 %v430, %v422
    %v511 = vpack.c.b16 %v431, %v423
    %v512 = vpack.c.b16 %v432, %v424
    %v513 = vpack.c.b16 %v433, %v425
    %v514 = vpack.c.b16 %v434, %v426
    %v515 = vpack.c.b16 %v435, %v427
    %v516 = vpack.c.b16 %v444, %v436
    %v517 = vpack.c.b16 %v445, %v437
    %v518 = vpack.c.b16 %v446, %v438
    %v519 = vpack.c.b16 %v447, %v439
    %v520 = vpack.c.b16 %v448, %v440
    %v521 = vpack.c.b16 %v449, %v441
    %v522 = vpack.c.b16 %v450, %v442
    %v523 = vpack.c.b16 %v451, %v443
    %v524 = vpack.c.b16 %v460, %v452
    %v525 = vpack.c.b16 %v461, %v453
    %v526 = vpack.c.b16 %v462, %v454
    %v527 = vpack.c.b16 %v463, %v455
    %v528 = vpack.c.b16 %v464, %v456
    %v529 = vpack.c.b16 %v465, %v457
    %v530 = vpack.c.b16 %v466, %v458
    %v531 = vpack.c.b16 %v467, %v459
    %596 = vmatprep.subr.bf16.mxu0 %v469
    %597 = vmatpush1.bf16.msra.mxu0 %v468
    %598 = vmatprep.subr.bf16.mxu0 %v477
    %599 = vmatpush1.bf16.msra.mxu0 %v476
    %600 = vmatprep.subr.bf16.mxu0 %v485
    %601 = vmatpush1.bf16.msra.mxu0 %v484
    %602 = vmatprep.subr.bf16.mxu0 %v493
    %603 = vmatpush1.bf16.msra.mxu0 %v492
    %604 = vmatprep.subr.bf16.mxu0 %v501
    %605 = vmatpush1.bf16.msra.mxu0 %v500
    %606 = vmatprep.subr.bf16.mxu0 %v509
    %607 = vmatpush1.bf16.msra.mxu0 %v508
    %608 = vmatprep.subr.bf16.mxu0 %v517
    %609 = vmatpush1.bf16.msra.mxu0 %v516
    %610 = vmatprep.subr.bf16.mxu0 %v525
    %611 = vmatpush1.bf16.msra.mxu0 %v524
    %612 = vmatprep.subr.bf16.mxu0 0
    %613 = vmatpush1.bf16.msra.mxu0 0
    %614 = vmatprep.subr.bf16.mxu0 0
    %615 = vmatpush1.bf16.msra.mxu0 0
    %616 = vmatprep.subr.bf16.mxu0 0
    %617 = vmatpush1.bf16.msra.mxu0 0
    %618 = vmatprep.subr.bf16.mxu0 0
    %619 = vmatpush1.bf16.msra.mxu0 0
    %620 = vmatprep.subr.bf16.mxu0 0
    %621 = vmatpush1.bf16.msra.mxu0 0
    %622 = vmatprep.subr.bf16.mxu0 0
    %623 = vmatpush1.bf16.msra.mxu0 0
    %624 = vmatprep.subr.bf16.mxu0 0
    %625 = vmatpush1.bf16.msra.mxu0 0
    %626 = vmatprep.subr.bf16.mxu0 0
    %627 = vmatpush1.bf16.msra.mxu0 0
    %628 = vmatprep.mubr.bf16.mxu0 0
    %629 = vmatmul.mubr.bf16.gmra.mrb[0].mxu0 %v260
    %v630 = vpop.f32.mrb[0].mxu0
    %v631 = vadd.f32 %v191, %v630
    %v632 = vpop.f32.mrb[0].mxu0
    %v633 = vadd.f32 %v195, %v632
    %v634 = vpop.f32.mrb[0].mxu0
    %v635 = vadd.f32 %v191, %v634
    %v636 = vpop.f32.mrb[0].mxu0
    %v637 = vadd.f32 %v195, %v636
    %638 = vmatprep.mubr.bf16.mxu0 0
    %639 = vmatmul.mubr.bf16.gmra.mrb[0].mxu0 %v261
    %v640 = vpop.f32.mrb[0].mxu0
    %v641 = vadd.f32 %v191, %v640
    %v642 = vpop.f32.mrb[0].mxu0
    %v643 = vadd.f32 %v195, %v642
    %v644 = vpop.f32.mrb[0].mxu0
    %v645 = vadd.f32 %v191, %v644
    %v646 = vpop.f32.mrb[0].mxu0
    %v647 = vadd.f32 %v195, %v646
    %648 = vmatprep.mubr.bf16.mxu0 0
    %649 = vmatmul.mubr.bf16.gmra.mrb[0].mxu0 %v262
    %v650 = vpop.f32.mrb[0].mxu0
    %v651 = vadd.f32 %v191, %v650
    %v652 = vpop.f32.mrb[0].mxu0
    %v653 = vadd.f32 %v195, %v652
    %v654 = vpop.f32.mrb[0].mxu0
    %v655 = vadd.f32 %v191, %v654
    %v656 = vpop.f32.mrb[0].mxu0
    %v657 = vadd.f32 %v195, %v656
    %658 = vmatprep.mubr.bf16.mxu0 0
    %659 = vmatmul.mubr.bf16.gmra.mrb[0].mxu0 %v263
    %v660 = vpop.f32.mrb[0].mxu0
    %v661 = vadd.f32 %v191, %v660
    %v662 = vpop.f32.mrb[0].mxu0
    %v663 = vadd.f32 %v195, %v662
    %v664 = vpop.f32.mrb[0].mxu0
    %v665 = vadd.f32 %v191, %v664
    %v666 = vpop.f32.mrb[0].mxu0
    %v667 = vadd.f32 %v195, %v666
    %668 = vmatprep.mubr.bf16.mxu0 0
    %669 = vmatmul.mubr.bf16.gmra.mrb[0].mxu0 %v264
    %v670 = vpop.f32.mrb[0].mxu0
    %v671 = vadd.f32 %v191, %v670
    %v672 = vpop.f32.mrb[0].mxu0
    %v673 = vadd.f32 %v195, %v672
    %v674 = vpop.f32.mrb[0].mxu0
    %v675 = vadd.f32 %v191, %v674
    %v676 = vpop.f32.mrb[0].mxu0
    %v677 = vadd.f32 %v195, %v676
    %678 = vmatprep.mubr.bf16.mxu0 0
    %679 = vmatmul.mubr.bf16.gmra.mrb[0].mxu0 %v265
    %v680 = vpop.f32.mrb[0].mxu0
    %v681 = vadd.f32 %v191, %v680
    %v682 = vpop.f32.mrb[0].mxu0
    %v683 = vadd.f32 %v195, %v682
    %v684 = vpop.f32.mrb[0].mxu0
    %v685 = vadd.f32 %v191, %v684
    %v686 = vpop.f32.mrb[0].mxu0
    %v687 = vadd.f32 %v195, %v686
    %688 = vmatprep.mubr.bf16.mxu0 0
    %689 = vmatmul.mubr.bf16.gmra.mrb[0].mxu0 %v266
    %v690 = vpop.f32.mrb[0].mxu0
    %v691 = vadd.f32 %v191, %v690
    %v692 = vpop.f32.mrb[0].mxu0
    %v693 = vadd.f32 %v195, %v692
    %v694 = vpop.f32.mrb[0].mxu0
    %v695 = vadd.f32 %v191, %v694
    %v696 = vpop.f32.mrb[0].mxu0
    %v697 = vadd.f32 %v195, %v696
    %698 = vmatprep.mubr.bf16.mxu0 0
    %699 = vmatmul.mubr.bf16.gmra.mrb[0].mxu0 %v267
    %v700 = vpop.f32.mrb[0].mxu0
    %v701 = vadd.f32 %v191, %v700
    %v702 = vpop.f32.mrb[0].mxu0
    %v703 = vadd.f32 %v195, %v702
    %v704 = vpop.f32.mrb[0].mxu0
    %v705 = vadd.f32 %v191, %v704
    %v706 = vpop.f32.mrb[0].mxu0
    %v707 = vadd.f32 %v195, %v706
    %708 = vdwg.mxu0
    %709 = vmatprep.subr.bf16.mxu0 %v471
    %710 = vmatpush1.bf16.msra.mxu0 %v470
    %711 = vmatprep.subr.bf16.mxu0 %v479
    %712 = vmatpush1.bf16.msra.mxu0 %v478
    %713 = vmatprep.subr.bf16.mxu0 %v487
    %714 = vmatpush1.bf16.msra.mxu0 %v486
    %715 = vmatprep.subr.bf16.mxu0 %v495
    %716 = vmatpush1.bf16.msra.mxu0 %v494
    %717 = vmatprep.subr.bf16.mxu0 %v503
    %718 = vmatpush1.bf16.msra.mxu0 %v502
    %719 = vmatprep.subr.bf16.mxu0 %v511
    %720 = vmatpush1.bf16.msra.mxu0 %v510
    %721 = vmatprep.subr.bf16.mxu0 %v519
    %722 = vmatpush1.bf16.msra.mxu0 %v518
    %723 = vmatprep.subr.bf16.mxu0 %v527
    %724 = vmatpush1.bf16.msra.mxu0 %v526
    %725 = vmatprep.subr.bf16.mxu0 0
    %726 = vmatpush1.bf16.msra.mxu0 0
    %727 = vmatprep.subr.bf16.mxu0 0
    %728 = vmatpush1.bf16.msra.mxu0 0
    %729 = vmatprep.subr.bf16.mxu0 0
    %730 = vmatpush1.bf16.msra.mxu0 0
    %731 = vmatprep.subr.bf16.mxu0 0
    %732 = vmatpush1.bf16.msra.mxu0 0
    %733 = vmatprep.subr.bf16.mxu0 0
    %734 = vmatpush1.bf16.msra.mxu0 0
    %735 = vmatprep.subr.bf16.mxu0 0
    %736 = vmatpush1.bf16.msra.mxu0 0
    %737 = vmatprep.subr.bf16.mxu0 0
    %738 = vmatpush1.bf16.msra.mxu0 0
    %739 = vmatprep.subr.bf16.mxu0 0
    %740 = vmatpush1.bf16.msra.mxu0 0
    %741 = vmatprep.mubr.bf16.mxu0 0
    %742 = vmatmul.mubr.bf16.gmra.mrb[0].mxu0 %v260
    %v743 = vpop.f32.mrb[0].mxu0
    %v744 = vadd.f32 %v199, %v743
    %v745 = vpop.f32.mrb[0].mxu0
    %v746 = vadd.f32 %v203, %v745
    %v747 = vpop.f32.mrb[0].mxu0
    %v748 = vadd.f32 %v199, %v747
    %v749 = vpop.f32.mrb[0].mxu0
    %v750 = vadd.f32 %v203, %v749
    %751 = vmatprep.mubr.bf16.mxu0 0
    %752 = vmatmul.mubr.bf16.gmra.mrb[0].mxu0 %v261
    %v753 = vpop.f32.mrb[0].mxu0
    %v754 = vadd.f32 %v199, %v753
    %v755 = vpop.f32.mrb[0].mxu0
    %v756 = vadd.f32 %v203, %v755
    %v757 = vpop.f32.mrb[0].mxu0
    %v758 = vadd.f32 %v199, %v757
    %v759 = vpop.f32.mrb[0].mxu0
    %v760 = vadd.f32 %v203, %v759
    %761 = vmatprep.mubr.bf16.mxu0 0
    %762 = vmatmul.mubr.bf16.gmra.mrb[0].mxu0 %v262
    %v763 = vpop.f32.mrb[0].mxu0
    %v764 = vadd.f32 %v199, %v763
    %v765 = vpop.f32.mrb[0].mxu0
    %v766 = vadd.f32 %v203, %v765
    %v767 = vpop.f32.mrb[0].mxu0
    %v768 = vadd.f32 %v199, %v767
    %v769 = vpop.f32.mrb[0].mxu0
    %v770 = vadd.f32 %v203, %v769
    %771 = vmatprep.mubr.bf16.mxu0 0
    %772 = vmatmul.mubr.bf16.gmra.mrb[0].mxu0 %v263
    %v773 = vpop.f32.mrb[0].mxu0
    %v774 = vadd.f32 %v199, %v773
    %v775 = vpop.f32.mrb[0].mxu0
    %v776 = vadd.f32 %v203, %v775
    %v777 = vpop.f32.mrb[0].mxu0
    %v778 = vadd.f32 %v199, %v777
    %v779 = vpop.f32.mrb[0].mxu0
    %v780 = vadd.f32 %v203, %v779
    %781 = vmatprep.mubr.bf16.mxu0 0
    %782 = vmatmul.mubr.bf16.gmra.mrb[0].mxu0 %v264
    %v783 = vpop.f32.mrb[0].mxu0
    %v784 = vadd.f32 %v199, %v783
    %v785 = vpop.f32.mrb[0].mxu0
    %v786 = vadd.f32 %v203, %v785
    %v787 = vpop.f32.mrb[0].mxu0
    %v788 = vadd.f32 %v199, %v787
    %v789 = vpop.f32.mrb[0].mxu0
    %v790 = vadd.f32 %v203, %v789
    %791 = vmatprep.mubr.bf16.mxu0 0
    %792 = vmatmul.mubr.bf16.gmra.mrb[0].mxu0 %v265
    %v793 = vpop.f32.mrb[0].mxu0
    %v794 = vadd.f32 %v199, %v793
    %v795 = vpop.f32.mrb[0].mxu0
    %v796 = vadd.f32 %v203, %v795
    %v797 = vpop.f32.mrb[0].mxu0
    %v798 = vadd.f32 %v199, %v797
    %v799 = vpop.f32.mrb[0].mxu0
    %v800 = vadd.f32 %v203, %v799
    %801 = vmatprep.mubr.bf16.mxu0 0
    %802 = vmatmul.mubr.bf16.gmra.mrb[0].mxu0 %v266
    %v803 = vpop.f32.mrb[0].mxu0
    %v804 = vadd.f32 %v199, %v803
    %v805 = vpop.f32.mrb[0].mxu0
    %v806 = vadd.f32 %v203, %v805
    %v807 = vpop.f32.mrb[0].mxu0
    %v808 = vadd.f32 %v199, %v807
    %v809 = vpop.f32.mrb[0].mxu0
    %v810 = vadd.f32 %v203, %v809
    %811 = vmatprep.mubr.bf16.mxu0 0
    %812 = vmatmul.mubr.bf16.gmra.mrb[0].mxu0 %v267
    %v813 = vpop.f32.mrb[0].mxu0
    %v814 = vadd.f32 %v199, %v813
    %v815 = vpop.f32.mrb[0].mxu0
    %v816 = vadd.f32 %v203, %v815
    %v817 = vpop.f32.mrb[0].mxu0
    %v818 = vadd.f32 %v199, %v817
    %v819 = vpop.f32.mrb[0].mxu0
    %v820 = vadd.f32 %v203, %v819
    %821 = vdwg.mxu0
    %822 = vmatprep.subr.bf16.mxu0 %v473
    %823 = vmatpush1.bf16.msra.mxu0 %v472
    %824 = vmatprep.subr.bf16.mxu0 %v481
    %825 = vmatpush1.bf16.msra.mxu0 %v480
    %826 = vmatprep.subr.bf16.mxu0 %v489
    %827 = vmatpush1.bf16.msra.mxu0 %v488
    %828 = vmatprep.subr.bf16.mxu0 %v497
    %829 = vmatpush1.bf16.msra.mxu0 %v496
    %830 = vmatprep.subr.bf16.mxu0 %v505
    %831 = vmatpush1.bf16.msra.mxu0 %v504
    %832 = vmatprep.subr.bf16.mxu0 %v513
    %833 = vmatpush1.bf16.msra.mxu0 %v512
    %834 = vmatprep.subr.bf16.mxu0 %v521
    %835 = vmatpush1.bf16.msra.mxu0 %v520
    %836 = vmatprep.subr.bf16.mxu0 %v529
    %837 = vmatpush1.bf16.msra.mxu0 %v528
    %838 = vmatprep.subr.bf16.mxu0 0
    %839 = vmatpush1.bf16.msra.mxu0 0
    %840 = vmatprep.subr.bf16.mxu0 0
    %841 = vmatpush1.bf16.msra.mxu0 0
    %842 = vmatprep.subr.bf16.mxu0 0
    %843 = vmatpush1.bf16.msra.mxu0 0
    %844 = vmatprep.subr.bf16.mxu0 0
    %845 = vmatpush1.bf16.msra.mxu0 0
    %846 = vmatprep.subr.bf16.mxu0 0
    %847 = vmatpush1.bf16.msra.mxu0 0
    %848 = vmatprep.subr.bf16.mxu0 0
    %849 = vmatpush1.bf16.msra.mxu0 0
    %850 = vmatprep.subr.bf16.mxu0 0
    %851 = vmatpush1.bf16.msra.mxu0 0
    %852 = vmatprep.subr.bf16.mxu0 0
    %853 = vmatpush1.bf16.msra.mxu0 0
    %854 = vmatprep.mubr.bf16.mxu0 0
    %855 = vmatmul.mubr.bf16.gmra.mrb[0].mxu0 %v260
    %v856 = vpop.f32.mrb[0].mxu0
    %v857 = vadd.f32 %v207, %v856
    %v858 = vpop.f32.mrb[0].mxu0
    %v859 = vadd.f32 %v211, %v858
    %v860 = vpop.f32.mrb[0].mxu0
    %v861 = vadd.f32 %v207, %v860
    %v862 = vpop.f32.mrb[0].mxu0
    %v863 = vadd.f32 %v211, %v862
    %864 = vmatprep.mubr.bf16.mxu0 0
    %865 = vmatmul.mubr.bf16.gmra.mrb[0].mxu0 %v261
    %v866 = vpop.f32.mrb[0].mxu0
    %v867 = vadd.f32 %v207, %v866
    %v868 = vpop.f32.mrb[0].mxu0
    %v869 = vadd.f32 %v211, %v868
    %v870 = vpop.f32.mrb[0].mxu0
    %v871 = vadd.f32 %v207, %v870
    %v872 = vpop.f32.mrb[0].mxu0
    %v873 = vadd.f32 %v211, %v872
    %874 = vmatprep.mubr.bf16.mxu0 0
    %875 = vmatmul.mubr.bf16.gmra.mrb[0].mxu0 %v262
    %v876 = vpop.f32.mrb[0].mxu0
    %v877 = vadd.f32 %v207, %v876
    %v878 = vpop.f32.mrb[0].mxu0
    %v879 = vadd.f32 %v211, %v878
    %v880 = vpop.f32.mrb[0].mxu0
    %v881 = vadd.f32 %v207, %v880
    %v882 = vpop.f32.mrb[0].mxu0
    %v883 = vadd.f32 %v211, %v882
    %884 = vmatprep.mubr.bf16.mxu0 0
    %885 = vmatmul.mubr.bf16.gmra.mrb[0].mxu0 %v263
    %v886 = vpop.f32.mrb[0].mxu0
    %v887 = vadd.f32 %v207, %v886
    %v888 = vpop.f32.mrb[0].mxu0
    %v889 = vadd.f32 %v211, %v888
    %v890 = vpop.f32.mrb[0].mxu0
    %v891 = vadd.f32 %v207, %v890
    %v892 = vpop.f32.mrb[0].mxu0
    %v893 = vadd.f32 %v211, %v892
    %894 = vmatprep.mubr.bf16.mxu0 0
    %895 = vmatmul.mubr.bf16.gmra.mrb[0].mxu0 %v264
    %v896 = vpop.f32.mrb[0].mxu0
    %v897 = vadd.f32 %v207, %v896
    %v898 = vpop.f32.mrb[0].mxu0
    %v899 = vadd.f32 %v211, %v898
    %v900 = vpop.f32.mrb[0].mxu0
    %v901 = vadd.f32 %v207, %v900
    %v902 = vpop.f32.mrb[0].mxu0
    %v903 = vadd.f32 %v211, %v902
    %904 = vmatprep.mubr.bf16.mxu0 0
    %905 = vmatmul.mubr.bf16.gmra.mrb[0].mxu0 %v265
    %v906 = vpop.f32.mrb[0].mxu0
    %v907 = vadd.f32 %v207, %v906
    %v908 = vpop.f32.mrb[0].mxu0
    %v909 = vadd.f32 %v211, %v908
    %v910 = vpop.f32.mrb[0].mxu0
    %v911 = vadd.f32 %v207, %v910
    %v912 = vpop.f32.mrb[0].mxu0
    %v913 = vadd.f32 %v211, %v912
    %914 = vmatprep.mubr.bf16.mxu0 0
    %915 = vmatmul.mubr.bf16.gmra.mrb[0].mxu0 %v266
    %v916 = vpop.f32.mrb[0].mxu0
    %v917 = vadd.f32 %v207, %v916
    %v918 = vpop.f32.mrb[0].mxu0
    %v919 = vadd.f32 %v211, %v918
    %v920 = vpop.f32.mrb[0].mxu0
    %v921 = vadd.f32 %v207, %v920
    %v922 = vpop.f32.mrb[0].mxu0
    %v923 = vadd.f32 %v211, %v922
    %924 = vmatprep.mubr.bf16.mxu0 0
    %925 = vmatmul.mubr.bf16.gmra.mrb[0].mxu0 %v267
    %v926 = vpop.f32.mrb[0].mxu0
    %v927 = vadd.f32 %v207, %v926
    %v928 = vpop.f32.mrb[0].mxu0
    %v929 = vadd.f32 %v211, %v928
    %v930 = vpop.f32.mrb[0].mxu0
    %v931 = vadd.f32 %v207, %v930
    %v932 = vpop.f32.mrb[0].mxu0
    %v933 = vadd.f32 %v211, %v932
    %934 = vdwg.mxu0
    %935 = vmatprep.subr.bf16.mxu0 %v475
    %936 = vmatpush1.bf16.msra.mxu0 %v474
    %937 = vmatprep.subr.bf16.mxu0 %v483
    %938 = vmatpush1.bf16.msra.mxu0 %v482
    %939 = vmatprep.subr.bf16.mxu0 %v491
    %940 = vmatpush1.bf16.msra.mxu0 %v490
    %941 = vmatprep.subr.bf16.mxu0 %v499
    %942 = vmatpush1.bf16.msra.mxu0 %v498
    %943 = vmatprep.subr.bf16.mxu0 %v507
    %944 = vmatpush1.bf16.msra.mxu0 %v506
    %945 = vmatprep.subr.bf16.mxu0 %v515
    %946 = vmatpush1.bf16.msra.mxu0 %v514
    %947 = vmatprep.subr.bf16.mxu0 %v523
    %948 = vmatpush1.bf16.msra.mxu0 %v522
    %949 = vmatprep.subr.bf16.mxu0 %v531
    %950 = vmatpush1.bf16.msra.mxu0 %v530
    %951 = vmatprep.subr.bf16.mxu0 0
    %952 = vmatpush1.bf16.msra.mxu0 0
    %953 = vmatprep.subr.bf16.mxu0 0
    %954 = vmatpush1.bf16.msra.mxu0 0
    %955 = vmatprep.subr.bf16.mxu0 0
    %956 = vmatpush1.bf16.msra.mxu0 0
    %957 = vmatprep.subr.bf16.mxu0 0
    %958 = vmatpush1.bf16.msra.mxu0 0
    %959 = vmatprep.subr.bf16.mxu0 0
    %960 = vmatpush1.bf16.msra.mxu0 0
    %961 = vmatprep.subr.bf16.mxu0 0
    %962 = vmatpush1.bf16.msra.mxu0 0
    %963 = vmatprep.subr.bf16.mxu0 0
    %964 = vmatpush1.bf16.msra.mxu0 0
    %965 = vmatprep.subr.bf16.mxu0 0
    %966 = vmatpush1.bf16.msra.mxu0 0
    %967 = vmatprep.mubr.bf16.mxu0 0
    %968 = vmatmul.mubr.bf16.gmra.mrb[0].mxu0 %v260
    %v969 = vpop.f32.mrb[0].mxu0
    %v970 = vadd.f32 %v215, %v969
    %v971 = vpop.f32.mrb[0].mxu0
    %v972 = vadd.f32 %v219, %v971
    %v973 = vpop.f32.mrb[0].mxu0
    %v974 = vadd.f32 %v215, %v973
    %v975 = vpop.f32.mrb[0].mxu0
    %v976 = vadd.f32 %v219, %v975
    %977 = vmatprep.mubr.bf16.mxu0 0
    %978 = vmatmul.mubr.bf16.gmra.mrb[0].mxu0 %v261
    %v979 = vpop.f32.mrb[0].mxu0
    %v980 = vadd.f32 %v215, %v979
    %v981 = vpop.f32.mrb[0].mxu0
    %v982 = vadd.f32 %v219, %v981
    %v983 = vpop.f32.mrb[0].mxu0
    %v984 = vadd.f32 %v215, %v983
    %v985 = vpop.f32.mrb[0].mxu0
    %v986 = vadd.f32 %v219, %v985
    %987 = vmatprep.mubr.bf16.mxu0 0
    %988 = vmatmul.mubr.bf16.gmra.mrb[0].mxu0 %v262
    %v989 = vpop.f32.mrb[0].mxu0
    %v990 = vadd.f32 %v215, %v989
    %v991 = vpop.f32.mrb[0].mxu0
    %v992 = vadd.f32 %v219, %v991
    %v993 = vpop.f32.mrb[0].mxu0
    %v994 = vadd.f32 %v215, %v993
    %v995 = vpop.f32.mrb[0].mxu0
    %v996 = vadd.f32 %v219, %v995
    %997 = vmatprep.mubr.bf16.mxu0 0
    %998 = vmatmul.mubr.bf16.gmra.mrb[0].mxu0 %v263
    %v999 = vpop.f32.mrb[0].mxu0
    %v1000 = vadd.f32 %v215, %v999
    %v1001 = vpop.f32.mrb[0].mxu0
    %v1002 = vadd.f32 %v219, %v1001
    %v1003 = vpop.f32.mrb[0].mxu0
    %v1004 = vadd.f32 %v215, %v1003
    %v1005 = vpop.f32.mrb[0].mxu0
    %v1006 = vadd.f32 %v219, %v1005
    %1007 = vmatprep.mubr.bf16.mxu0 0
    %1008 = vmatmul.mubr.bf16.gmra.mrb[0].mxu0 %v264
    %v1009 = vpop.f32.mrb[0].mxu0
    %v1010 = vadd.f32 %v215, %v1009
    %v1011 = vpop.f32.mrb[0].mxu0
    %v1012 = vadd.f32 %v219, %v1011
    %v1013 = vpop.f32.mrb[0].mxu0
    %v1014 = vadd.f32 %v215, %v1013
    %v1015 = vpop.f32.mrb[0].mxu0
    %v1016 = vadd.f32 %v219, %v1015
    %1017 = vmatprep.mubr.bf16.mxu0 0
    %1018 = vmatmul.mubr.bf16.gmra.mrb[0].mxu0 %v265
    %v1019 = vpop.f32.mrb[0].mxu0
    %v1020 = vadd.f32 %v215, %v1019
    %v1021 = vpop.f32.mrb[0].mxu0
    %v1022 = vadd.f32 %v219, %v1021
    %v1023 = vpop.f32.mrb[0].mxu0
    %v1024 = vadd.f32 %v215, %v1023
    %v1025 = vpop.f32.mrb[0].mxu0
    %v1026 = vadd.f32 %v219, %v1025
    %1027 = vmatprep.mubr.bf16.mxu0 0
    %1028 = vmatmul.mubr.bf16.gmra.mrb[0].mxu0 %v266
    %v1029 = vpop.f32.mrb[0].mxu0
    %v1030 = vadd.f32 %v215, %v1029
    %v1031 = vpop.f32.mrb[0].mxu0
    %v1032 = vadd.f32 %v219, %v1031
    %v1033 = vpop.f32.mrb[0].mxu0
    %v1034 = vadd.f32 %v215, %v1033
    %v1035 = vpop.f32.mrb[0].mxu0
    %v1036 = vadd.f32 %v219, %v1035
    %1037 = vmatprep.mubr.bf16.mxu0 0
    %1038 = vmatmul.mubr.bf16.gmra.mrb[0].mxu0 %v267
    %v1039 = vpop.f32.mrb[0].mxu0
    %v1040 = vadd.f32 %v215, %v1039
    %v1041 = vpop.f32.mrb[0].mxu0
    %v1042 = vadd.f32 %v219, %v1041
    %v1043 = vpop.f32.mrb[0].mxu0
    %v1044 = vadd.f32 %v215, %v1043
    %v1045 = vpop.f32.mrb[0].mxu0
    %v1046 = vadd.f32 %v219, %v1045
    %1047 = vdwg.mxu0
    %v1048 = vpack.c.bf16 %v635, %v631
    %v1049 = vpack.c.bf16 %v637, %v633
    %v1050 = vpack.c.bf16 %v748, %v744
    %v1051 = vpack.c.bf16 %v750, %v746
    %v1052 = vpack.c.bf16 %v861, %v857
    %v1053 = vpack.c.bf16 %v863, %v859
    %v1054 = vpack.c.bf16 %v974, %v970
    %v1055 = vpack.c.bf16 %v976, %v972
    %v1056 = vpack.c.bf16 %v645, %v641
    %v1057 = vpack.c.bf16 %v647, %v643
    %v1058 = vpack.c.bf16 %v758, %v754
    %v1059 = vpack.c.bf16 %v760, %v756
    %v1060 = vpack.c.bf16 %v871, %v867
    %v1061 = vpack.c.bf16 %v873, %v869
    %v1062 = vpack.c.bf16 %v984, %v980
    %v1063 = vpack.c.bf16 %v986, %v982
    %v1064 = vpack.c.bf16 %v655, %v651
    %v1065 = vpack.c.bf16 %v657, %v653
    %v1066 = vpack.c.bf16 %v768, %v764
    %v1067 = vpack.c.bf16 %v770, %v766
    %v1068 = vpack.c.bf16 %v881, %v877
    %v1069 = vpack.c.bf16 %v883, %v879
    %v1070 = vpack.c.bf16 %v994, %v990
    %v1071 = vpack.c.bf16 %v996, %v992
    %v1072 = vpack.c.bf16 %v665, %v661
    %v1073 = vpack.c.bf16 %v667, %v663
    %v1074 = vpack.c.bf16 %v778, %v774
    %v1075 = vpack.c.bf16 %v780, %v776
    %v1076 = vpack.c.bf16 %v891, %v887
    %v1077 = vpack.c.bf16 %v893, %v889
    %v1078 = vpack.c.bf16 %v1004, %v1000
    %v1079 = vpack.c.bf16 %v1006, %v1002
    %v1080 = vpack.c.bf16 %v675, %v671
    %v1081 = vpack.c.bf16 %v677, %v673
    %v1082 = vpack.c.bf16 %v788, %v784
    %v1083 = vpack.c.bf16 %v790, %v786
    %v1084 = vpack.c.bf16 %v901, %v897
    %v1085 = vpack.c.bf16 %v903, %v899
    %v1086 = vpack.c.bf16 %v1014, %v1010
    %v1087 = vpack.c.bf16 %v1016, %v1012
    %v1088 = vpack.c.bf16 %v685, %v681
    %v1089 = vpack.c.bf16 %v687, %v683
    %v1090 = vpack.c.bf16 %v798, %v794
    %v1091 = vpack.c.bf16 %v800, %v796
    %v1092 = vpack.c.bf16 %v911, %v907
    %v1093 = vpack.c.bf16 %v913, %v909
    %v1094 = vpack.c.bf16 %v1024, %v1020
    %v1095 = vpack.c.bf16 %v1026, %v1022
    %v1096 = vpack.c.bf16 %v695, %v691
    %v1097 = vpack.c.bf16 %v697, %v693
    %v1098 = vpack.c.bf16 %v808, %v804
    %v1099 = vpack.c.bf16 %v810, %v806
    %v1100 = vpack.c.bf16 %v921, %v917
    %v1101 = vpack.c.bf16 %v923, %v919
    %v1102 = vpack.c.bf16 %v1034, %v1030
    %v1103 = vpack.c.bf16 %v1036, %v1032
    %v1104 = vpack.c.bf16 %v705, %v701
    %v1105 = vpack.c.bf16 %v707, %v703
    %v1106 = vpack.c.bf16 %v818, %v814
    %v1107 = vpack.c.bf16 %v820, %v816
    %v1108 = vpack.c.bf16 %v931, %v927
    %v1109 = vpack.c.bf16 %v933, %v929
    %v1110 = vpack.c.bf16 %v1044, %v1040
    %v1111 = vpack.c.bf16 %v1046, %v1042
    %1112 = vst [vmem:[#allocation2] sm:$0xff] %v1048
    %1113 = vst [vmem:[#allocation2 + $0x8] sm:$0xff] %v1049
    %1114 = vst [vmem:[#allocation2 + $0x10] sm:$0xff] %v1050
    %1115 = vst [vmem:[#allocation2 + $0x18] sm:$0xff] %v1051
    %1116 = vst [vmem:[#allocation2 + $0x20] sm:$0xff] %v1052
    %1117 = vst [vmem:[#allocation2 + $0x28] sm:$0xff] %v1053
    %1118 = vst [vmem:[#allocation2 + $0x30] sm:$0xff] %v1054
    %1119 = vst [vmem:[#allocation2 + $0x38] sm:$0xff] %v1055
    %1120 = vst [vmem:[#allocation2 + $0x40] sm:$0xff] %v1056
    %1121 = vst [vmem:[#allocation2 + $0x48] sm:$0xff] %v1057
    %1122 = vst [vmem:[#allocation2 + $0x50] sm:$0xff] %v1058
    %1123 = vst [vmem:[#allocation2 + $0x58] sm:$0xff] %v1059
    %1124 = vst [vmem:[#allocation2 + $0x60] sm:$0xff] %v1060
    %1125 = vst [vmem:[#allocation2 + $0x68] sm:$0xff] %v1061
    %1126 = vst [vmem:[#allocation2 + $0x70] sm:$0xff] %v1062
    %1127 = vst [vmem:[#allocation2 + $0x78] sm:$0xff] %v1063
    %1128 = vst [vmem:[#allocation2 + $0x80] sm:$0xff] %v1064
    %1129 = vst [vmem:[#allocation2 + $0x88] sm:$0xff] %v1065
    %1130 = vst [vmem:[#allocation2 + $0x90] sm:$0xff] %v1066
    %1131 = vst [vmem:[#allocation2 + $0x98] sm:$0xff] %v1067
    %1132 = vst [vmem:[#allocation2 + $0xa0] sm:$0xff] %v1068
    %1133 = vst [vmem:[#allocation2 + $0xa8] sm:$0xff] %v1069
    %1134 = vst [vmem:[#allocation2 + $0xb0] sm:$0xff] %v1070
    %1135 = vst [vmem:[#allocation2 + $0xb8] sm:$0xff] %v1071
    %1136 = vst [vmem:[#allocation2 + $0xc0] sm:$0xff] %v1072
    %1137 = vst [vmem:[#allocation2 + $0xc8] sm:$0xff] %v1073
    %1138 = vst [vmem:[#allocation2 + $0xd0] sm:$0xff] %v1074
    %1139 = vst [vmem:[#allocation2 + $0xd8] sm:$0xff] %v1075
    %1140 = vst [vmem:[#allocation2 + $0xe0] sm:$0xff] %v1076
    %1141 = vst [vmem:[#allocation2 + $0xe8] sm:$0xff] %v1077
    %1142 = vst [vmem:[#allocation2 + $0xf0] sm:$0xff] %v1078
    %1143 = vst [vmem:[#allocation2 + $0xf8] sm:$0xff] %v1079
    %1144 = vst [vmem:[#allocation2 + $0x100] sm:$0xff] %v1080
    %1145 = vst [vmem:[#allocation2 + $0x108] sm:$0xff] %v1081
    %1146 = vst [vmem:[#allocation2 + $0x110] sm:$0xff] %v1082
    %1147 = vst [vmem:[#allocation2 + $0x118] sm:$0xff] %v1083
    %1148 = vst [vmem:[#allocation2 + $0x120] sm:$0xff] %v1084
    %1149 = vst [vmem:[#allocation2 + $0x128] sm:$0xff] %v1085
    %1150 = vst [vmem:[#allocation2 + $0x130] sm:$0xff] %v1086
    %1151 = vst [vmem:[#allocation2 + $0x138] sm:$0xff] %v1087
    %1152 = vst [vmem:[#allocation2 + $0x140] sm:$0xff] %v1088
    %1153 = vst [vmem:[#allocation2 + $0x148] sm:$0xff] %v1089
    %1154 = vst [vmem:[#allocation2 + $0x150] sm:$0xff] %v1090
    %1155 = vst [vmem:[#allocation2 + $0x158] sm:$0xff] %v1091
    %1156 = vst [vmem:[#allocation2 + $0x160] sm:$0xff] %v1092
    %1157 = vst [vmem:[#allocation2 + $0x168] sm:$0xff] %v1093
    %1158 = vst [vmem:[#allocation2 + $0x170] sm:$0xff] %v1094
    %1159 = vst [vmem:[#allocation2 + $0x178] sm:$0xff] %v1095
    %1160 = vst [vmem:[#allocation2 + $0x180] sm:$0xff] %v1096
    %1161 = vst [vmem:[#allocation2 + $0x188] sm:$0xff] %v1097
    %1162 = vst [vmem:[#allocation2 + $0x190] sm:$0xff] %v1098
    %1163 = vst [vmem:[#allocation2 + $0x198] sm:$0xff] %v1099
    %1164 = vst [vmem:[#allocation2 + $0x1a0] sm:$0xff] %v1100
    %1165 = vst [vmem:[#allocation2 + $0x1a8] sm:$0xff] %v1101
    %1166 = vst [vmem:[#allocation2 + $0x1b0] sm:$0xff] %v1102
    %1167 = vst [vmem:[#allocation2 + $0x1b8] sm:$0xff] %v1103
    %1168 = vst [vmem:[#allocation2 + $0x1c0] sm:$0xff] %v1104
    %1169 = vst [vmem:[#allocation2 + $0x1c8] sm:$0xff] %v1105
    %1170 = vst [vmem:[#allocation2 + $0x1d0] sm:$0xff] %v1106
    %1171 = vst [vmem:[#allocation2 + $0x1d8] sm:$0xff] %v1107
    %1172 = vst [vmem:[#allocation2 + $0x1e0] sm:$0xff] %v1108
    %1173 = vst [vmem:[#allocation2 + $0x1e8] sm:$0xff] %v1109
    %1174 = vst [vmem:[#allocation2 + $0x1f0] sm:$0xff] %v1110
    %1175 = vst [vmem:[#allocation2 + $0x1f8] sm:$0xff] %v1111
    %v1176 = vld [vmem:[#allocation10] sm:$0xff]
    %v1177 = vld [vmem:[#allocation10 + $0x8] sm:$0xff]
    %v1178 = vld [vmem:[#allocation10 + $0x10] sm:$0xff]
    %v1179 = vld [vmem:[#allocation10 + $0x18] sm:$0xff]
    %v1180 = vld [vmem:[#allocation10 + $0x20] sm:$0xff]
    %v1181 = vld [vmem:[#allocation10 + $0x28] sm:$0xff]
    %v1182 = vld [vmem:[#allocation10 + $0x30] sm:$0xff]
    %v1183 = vld [vmem:[#allocation10 + $0x38] sm:$0xff]
    %v1184 = vld [vmem:[#allocation10 + $0x40] sm:$0xff]
    %v1185 = vld [vmem:[#allocation10 + $0x48] sm:$0xff]
    %v1186 = vld [vmem:[#allocation10 + $0x50] sm:$0xff]
    %v1187 = vld [vmem:[#allocation10 + $0x58] sm:$0xff]
    %v1188 = vld [vmem:[#allocation10 + $0x60] sm:$0xff]
    %v1189 = vld [vmem:[#allocation10 + $0x68] sm:$0xff]
    %v1190 = vld [vmem:[#allocation10 + $0x70] sm:$0xff]
    %v1191 = vld [vmem:[#allocation10 + $0x78] sm:$0xff]
    %v1192 = vld [vmem:[#allocation10 + $0x80] sm:$0xff]
    %v1193 = vld [vmem:[#allocation10 + $0x88] sm:$0xff]
    %v1194 = vld [vmem:[#allocation10 + $0x90] sm:$0xff]
    %v1195 = vld [vmem:[#allocation10 + $0x98] sm:$0xff]
    %v1196 = vld [vmem:[#allocation10 + $0xa0] sm:$0xff]
    %v1197 = vld [vmem:[#allocation10 + $0xa8] sm:$0xff]
    %v1198 = vld [vmem:[#allocation10 + $0xb0] sm:$0xff]
    %v1199 = vld [vmem:[#allocation10 + $0xb8] sm:$0xff]
    %v1200 = vld [vmem:[#allocation10 + $0xc0] sm:$0xff]
    %v1201 = vld [vmem:[#allocation10 + $0xc8] sm:$0xff]
    %v1202 = vld [vmem:[#allocation10 + $0xd0] sm:$0xff]
    %v1203 = vld [vmem:[#allocation10 + $0xd8] sm:$0xff]
    %v1204 = vld [vmem:[#allocation10 + $0xe0] sm:$0xff]
    %v1205 = vld [vmem:[#allocation10 + $0xe8] sm:$0xff]
    %v1206 = vld [vmem:[#allocation10 + $0xf0] sm:$0xff]
    %v1207 = vld [vmem:[#allocation10 + $0xf8] sm:$0xff]
    %v1208 = vld [vmem:[#allocation10 + $0x100] sm:$0xff]
    %v1209 = vld [vmem:[#allocation10 + $0x108] sm:$0xff]
    %v1210 = vld [vmem:[#allocation10 + $0x110] sm:$0xff]
    %v1211 = vld [vmem:[#allocation10 + $0x118] sm:$0xff]
    %v1212 = vld [vmem:[#allocation10 + $0x120] sm:$0xff]
    %v1213 = vld [vmem:[#allocation10 + $0x128] sm:$0xff]
    %v1214 = vld [vmem:[#allocation10 + $0x130] sm:$0xff]
    %v1215 = vld [vmem:[#allocation10 + $0x138] sm:$0xff]
    %v1216 = vld [vmem:[#allocation10 + $0x140] sm:$0xff]
    %v1217 = vld [vmem:[#allocation10 + $0x148] sm:$0xff]
    %v1218 = vld [vmem:[#allocation10 + $0x150] sm:$0xff]
    %v1219 = vld [vmem:[#allocation10 + $0x158] sm:$0xff]
    %v1220 = vld [vmem:[#allocation10 + $0x160] sm:$0xff]
    %v1221 = vld [vmem:[#allocation10 + $0x168] sm:$0xff]
    %v1222 = vld [vmem:[#allocation10 + $0x170] sm:$0xff]
    %v1223 = vld [vmem:[#allocation10 + $0x178] sm:$0xff]
    %v1224 = vld [vmem:[#allocation10 + $0x180] sm:$0xff]
    %v1225 = vld [vmem:[#allocation10 + $0x188] sm:$0xff]
    %v1226 = vld [vmem:[#allocation10 + $0x190] sm:$0xff]
    %v1227 = vld [vmem:[#allocation10 + $0x198] sm:$0xff]
    %v1228 = vld [vmem:[#allocation10 + $0x1a0] sm:$0xff]
    %v1229 = vld [vmem:[#allocation10 + $0x1a8] sm:$0xff]
    %v1230 = vld [vmem:[#allocation10 + $0x1b0] sm:$0xff]
    %v1231 = vld [vmem:[#allocation10 + $0x1b8] sm:$0xff]
    %v1232 = vld [vmem:[#allocation10 + $0x1c0] sm:$0xff]
    %v1233 = vld [vmem:[#allocation10 + $0x1c8] sm:$0xff]
    %v1234 = vld [vmem:[#allocation10 + $0x1d0] sm:$0xff]
    %v1235 = vld [vmem:[#allocation10 + $0x1d8] sm:$0xff]
    %v1236 = vld [vmem:[#allocation10 + $0x1e0] sm:$0xff]
    %v1237 = vld [vmem:[#allocation10 + $0x1e8] sm:$0xff]
    %v1238 = vld [vmem:[#allocation10 + $0x1f0] sm:$0xff]
    %v1239 = vld [vmem:[#allocation10 + $0x1f8] sm:$0xff]
    %v1240 = vpack.c.bf16 0.0, 0.0
    %v1305 = vunpack.c.l.b16 %v1176
    %v1306 = vunpack.c.h.b16 %v1176
    %v1307 = vunpack.c.l.b16 %v1177
    %v1308 = vunpack.c.h.b16 %v1177
    %v1309 = vunpack.c.l.b16 %v1178
    %v1310 = vunpack.c.h.b16 %v1178
    %v1311 = vunpack.c.l.b16 %v1179
    %v1312 = vunpack.c.h.b16 %v1179
    %v1313 = vunpack.c.l.b16 %v1180
    %v1314 = vunpack.c.h.b16 %v1180
    %v1315 = vunpack.c.l.b16 %v1181
    %v1316 = vunpack.c.h.b16 %v1181
    %v1317 = vunpack.c.l.b16 %v1182
    %v1318 = vunpack.c.h.b16 %v1182
    %v1319 = vunpack.c.l.b16 %v1183
    %v1320 = vunpack.c.h.b16 %v1183
    %v1321 = vunpack.c.l.b16 %v1184
    %v1322 = vunpack.c.h.b16 %v1184
    %v1323 = vunpack.c.l.b16 %v1185
    %v1324 = vunpack.c.h.b16 %v1185
    %v1325 = vunpack.c.l.b16 %v1186
    %v1326 = vunpack.c.h.b16 %v1186
    %v1327 = vunpack.c.l.b16 %v1187
    %v1328 = vunpack.c.h.b16 %v1187
    %v1329 = vunpack.c.l.b16 %v1188
    %v1330 = vunpack.c.h.b16 %v1188
    %v1331 = vunpack.c.l.b16 %v1189
    %v1332 = vunpack.c.h.b16 %v1189
    %v1333 = vunpack.c.l.b16 %v1190
    %v1334 = vunpack.c.h.b16 %v1190
    %v1335 = vunpack.c.l.b16 %v1191
    %v1336 = vunpack.c.h.b16 %v1191
    %v1337 = vunpack.c.l.b16 %v1192
    %v1338 = vunpack.c.h.b16 %v1192
    %v1339 = vunpack.c.l.b16 %v1193
    %v1340 = vunpack.c.h.b16 %v1193
    %v1341 = vunpack.c.l.b16 %v1194
    %v1342 = vunpack.c.h.b16 %v1194
    %v1343 = vunpack.c.l.b16 %v1195
    %v1344 = vunpack.c.h.b16 %v1195
    %v1345 = vunpack.c.l.b16 %v1196
    %v1346 = vunpack.c.h.b16 %v1196
    %v1347 = vunpack.c.l.b16 %v1197
    %v1348 = vunpack.c.h.b16 %v1197
    %v1349 = vunpack.c.l.b16 %v1198
    %v1350 = vunpack.c.h.b16 %v1198
    %v1351 = vunpack.c.l.b16 %v1199
    %v1352 = vunpack.c.h.b16 %v1199
    %v1353 = vunpack.c.l.b16 %v1200
    %v1354 = vunpack.c.h.b16 %v1200
    %v1355 = vunpack.c.l.b16 %v1201
    %v1356 = vunpack.c.h.b16 %v1201
    %v1357 = vunpack.c.l.b16 %v1202
    %v1358 = vunpack.c.h.b16 %v1202
    %v1359 = vunpack.c.l.b16 %v1203
    %v1360 = vunpack.c.h.b16 %v1203
    %v1361 = vunpack.c.l.b16 %v1204
    %v1362 = vunpack.c.h.b16 %v1204
    %v1363 = vunpack.c.l.b16 %v1205
    %v1364 = vunpack.c.h.b16 %v1205
    %v1365 = vunpack.c.l.b16 %v1206
    %v1366 = vunpack.c.h.b16 %v1206
    %v1367 = vunpack.c.l.b16 %v1207
    %v1368 = vunpack.c.h.b16 %v1207
    %v1369 = vunpack.c.l.b16 %v1208
    %v1370 = vunpack.c.h.b16 %v1208
    %v1371 = vunpack.c.l.b16 %v1209
    %v1372 = vunpack.c.h.b16 %v1209
    %v1373 = vunpack.c.l.b16 %v1210
    %v1374 = vunpack.c.h.b16 %v1210
    %v1375 = vunpack.c.l.b16 %v1211
    %v1376 = vunpack.c.h.b16 %v1211
    %v1377 = vunpack.c.l.b16 %v1212
    %v1378 = vunpack.c.h.b16 %v1212
    %v1379 = vunpack.c.l.b16 %v1213
    %v1380 = vunpack.c.h.b16 %v1213
    %v1381 = vunpack.c.l.b16 %v1214
    %v1382 = vunpack.c.h.b16 %v1214
    %v1383 = vunpack.c.l.b16 %v1215
    %v1384 = vunpack.c.h.b16 %v1215
    %v1385 = vunpack.c.l.b16 %v1216
    %v1386 = vunpack.c.h.b16 %v1216
    %v1387 = vunpack.c.l.b16 %v1217
    %v1388 = vunpack.c.h.b16 %v1217
    %v1389 = vunpack.c.l.b16 %v1218
    %v1390 = vunpack.c.h.b16 %v1218
    %v1391 = vunpack.c.l.b16 %v1219
    %v1392 = vunpack.c.h.b16 %v1219
    %v1393 = vunpack.c.l.b16 %v1220
    %v1394 = vunpack.c.h.b16 %v1220
    %v1395 = vunpack.c.l.b16 %v1221
    %v1396 = vunpack.c.h.b16 %v1221
    %v1397 = vunpack.c.l.b16 %v1222
    %v1398 = vunpack.c.h.b16 %v1222
    %v1399 = vunpack.c.l.b16 %v1223
    %v1400 = vunpack.c.h.b16 %v1223
    %v1401 = vunpack.c.l.b16 %v1224
    %v1402 = vunpack.c.h.b16 %v1224
    %v1403 = vunpack.c.l.b16 %v1225
    %v1404 = vunpack.c.h.b16 %v1225
    %v1405 = vunpack.c.l.b16 %v1226
    %v1406 = vunpack.c.h.b16 %v1226
    %v1407 = vunpack.c.l.b16 %v1227
    %v1408 = vunpack.c.h.b16 %v1227
    %v1409 = vunpack.c.l.b16 %v1228
    %v1410 = vunpack.c.h.b16 %v1228
    %v1411 = vunpack.c.l.b16 %v1229
    %v1412 = vunpack.c.h.b16 %v1229
    %v1413 = vunpack.c.l.b16 %v1230
    %v1414 = vunpack.c.h.b16 %v1230
    %v1415 = vunpack.c.l.b16 %v1231
    %v1416 = vunpack.c.h.b16 %v1231
    %v1417 = vunpack.c.l.b16 %v1232
    %v1418 = vunpack.c.h.b16 %v1232
    %v1419 = vunpack.c.l.b16 %v1233
    %v1420 = vunpack.c.h.b16 %v1233
    %v1421 = vunpack.c.l.b16 %v1234
    %v1422 = vunpack.c.h.b16 %v1234
    %v1423 = vunpack.c.l.b16 %v1235
    %v1424 = vunpack.c.h.b16 %v1235
    %v1425 = vunpack.c.l.b16 %v1236
    %v1426 = vunpack.c.h.b16 %v1236
    %v1427 = vunpack.c.l.b16 %v1237
    %v1428 = vunpack.c.h.b16 %v1237
    %v1429 = vunpack.c.l.b16 %v1238
    %v1430 = vunpack.c.h.b16 %v1238
    %v1431 = vunpack.c.l.b16 %v1239
    %v1432 = vunpack.c.h.b16 %v1239
    %v1433 = vpack.c.b16 %v1313, %v1305
    %v1434 = vpack.c.b16 %v1314, %v1306
    %v1435 = vpack.c.b16 %v1315, %v1307
    %v1436 = vpack.c.b16 %v1316, %v1308
    %v1437 = vpack.c.b16 %v1317, %v1309
    %v1438 = vpack.c.b16 %v1318, %v1310
    %v1439 = vpack.c.b16 %v1319, %v1311
    %v1440 = vpack.c.b16 %v1320, %v1312
    %v1441 = vpack.c.b16 %v1329, %v1321
    %v1442 = vpack.c.b16 %v1330, %v1322
    %v1443 = vpack.c.b16 %v1331, %v1323
    %v1444 = vpack.c.b16 %v1332, %v1324
    %v1445 = vpack.c.b16 %v1333, %v1325
    %v1446 = vpack.c.b16 %v1334, %v1326
    %v1447 = vpack.c.b16 %v1335, %v1327
    %v1448 = vpack.c.b16 %v1336, %v1328
    %v1449 = vpack.c.b16 %v1345, %v1337
    %v1450 = vpack.c.b16 %v1346, %v1338
    %v1451 = vpack.c.b16 %v1347, %v1339
    %v1452 = vpack.c.b16 %v1348, %v1340
    %v1453 = vpack.c.b16 %v1349, %v1341
    %v1454 = vpack.c.b16 %v1350, %v1342
    %v1455 = vpack.c.b16 %v1351, %v1343
    %v1456 = vpack.c.b16 %v1352, %v1344
    %v1457 = vpack.c.b16 %v1361, %v1353
    %v1458 = vpack.c.b16 %v1362, %v1354
    %v1459 = vpack.c.b16 %v1363, %v1355
    %v1460 = vpack.c.b16 %v1364, %v1356
    %v1461 = vpack.c.b16 %v1365, %v1357
    %v1462 = vpack.c.b16 %v1366, %v1358
    %v1463 = vpack.c.b16 %v1367, %v1359
    %v1464 = vpack.c.b16 %v1368, %v1360
    %v1465 = vpack.c.b16 %v1377, %v1369
    %v1466 = vpack.c.b16 %v1378, %v1370
    %v1467 = vpack.c.b16 %v1379, %v1371
    %v1468 = vpack.c.b16 %v1380, %v1372
    %v1469 = vpack.c.b16 %v1381, %v1373
    %v1470 = vpack.c.b16 %v1382, %v1374
    %v1471 = vpack.c.b16 %v1383, %v1375
    %v1472 = vpack.c.b16 %v1384, %v1376
    %v1473 = vpack.c.b16 %v1393, %v1385
    %v1474 = vpack.c.b16 %v1394, %v1386
    %v1475 = vpack.c.b16 %v1395, %v1387
    %v1476 = vpack.c.b16 %v1396, %v1388
    %v1477 = vpack.c.b16 %v1397, %v1389
    %v1478 = vpack.c.b16 %v1398, %v1390
    %v1479 = vpack.c.b16 %v1399, %v1391
    %v1480 = vpack.c.b16 %v1400, %v1392
    %v1481 = vpack.c.b16 %v1409, %v1401
    %v1482 = vpack.c.b16 %v1410, %v1402
    %v1483 = vpack.c.b16 %v1411, %v1403
    %v1484 = vpack.c.b16 %v1412, %v1404
    %v1485 = vpack.c.b16 %v1413, %v1405
    %v1486 = vpack.c.b16 %v1414, %v1406
    %v1487 = vpack.c.b16 %v1415, %v1407
    %v1488 = vpack.c.b16 %v1416, %v1408
    %v1489 = vpack.c.b16 %v1425, %v1417
    %v1490 = vpack.c.b16 %v1426, %v1418
    %v1491 = vpack.c.b16 %v1427, %v1419
    %v1492 = vpack.c.b16 %v1428, %v1420
    %v1493 = vpack.c.b16 %v1429, %v1421
    %v1494 = vpack.c.b16 %v1430, %v1422
    %v1495 = vpack.c.b16 %v1431, %v1423
    %v1496 = vpack.c.b16 %v1432, %v1424
    %1561 = vmatprep.subr.bf16.mxu0 %v1434
    %1562 = vmatpush1.bf16.msra.mxu0 %v1433
    %1563 = vmatprep.subr.bf16.mxu0 %v1442
    %1564 = vmatpush1.bf16.msra.mxu0 %v1441
    %1565 = vmatprep.subr.bf16.mxu0 %v1450
    %1566 = vmatpush1.bf16.msra.mxu0 %v1449
    %1567 = vmatprep.subr.bf16.mxu0 %v1458
    %1568 = vmatpush1.bf16.msra.mxu0 %v1457
    %1569 = vmatprep.subr.bf16.mxu0 %v1466
    %1570 = vmatpush1.bf16.msra.mxu0 %v1465
    %1571 = vmatprep.subr.bf16.mxu0 %v1474
    %1572 = vmatpush1.bf16.msra.mxu0 %v1473
    %1573 = vmatprep.subr.bf16.mxu0 %v1482
    %1574 = vmatpush1.bf16.msra.mxu0 %v1481
    %1575 = vmatprep.subr.bf16.mxu0 %v1490
    %1576 = vmatpush1.bf16.msra.mxu0 %v1489
    %1577 = vmatprep.subr.bf16.mxu0 0
    %1578 = vmatpush1.bf16.msra.mxu0 0
    %1579 = vmatprep.subr.bf16.mxu0 0
    %1580 = vmatpush1.bf16.msra.mxu0 0
    %1581 = vmatprep.subr.bf16.mxu0 0
    %1582 = vmatpush1.bf16.msra.mxu0 0
    %1583 = vmatprep.subr.bf16.mxu0 0
    %1584 = vmatpush1.bf16.msra.mxu0 0
    %1585 = vmatprep.subr.bf16.mxu0 0
    %1586 = vmatpush1.bf16.msra.mxu0 0
    %1587 = vmatprep.subr.bf16.mxu0 0
    %1588 = vmatpush1.bf16.msra.mxu0 0
    %1589 = vmatprep.subr.bf16.mxu0 0
    %1590 = vmatpush1.bf16.msra.mxu0 0
    %1591 = vmatprep.subr.bf16.mxu0 0
    %1592 = vmatpush1.bf16.msra.mxu0 0
    %1593 = vmatprep.mubr.bf16.mxu0 0
    %1594 = vmatmul.mubr.bf16.gmra.mrb[0].mxu0 %v1240
    %v1595 = vpop.f32.mrb[0].mxu0
    %v1596 = vadd.f32 0.0, %v1595
    %v1597 = vpop.f32.mrb[0].mxu0
    %v1598 = vadd.f32 0.0, %v1597
    %v1599 = vpop.f32.mrb[0].mxu0
    %v1600 = vadd.f32 0.0, %v1599
    %v1601 = vpop.f32.mrb[0].mxu0
    %v1602 = vadd.f32 0.0, %v1601
    %1603 = vmatprep.mubr.bf16.mxu0 0
    %1604 = vmatmul.mubr.bf16.gmra.mrb[0].mxu0 %v1240
    %v1605 = vpop.f32.mrb[0].mxu0
    %v1606 = vpop.f32.mrb[0].mxu0
    %v1607 = vpop.f32.mrb[0].mxu0
    %v1608 = vpop.f32.mrb[0].mxu0
    %1609 = vdwg.mxu0
    %1610 = vmatprep.subr.bf16.mxu0 %v1436
    %1611 = vmatpush1.bf16.msra.mxu0 %v1435
    %1612 = vmatprep.subr.bf16.mxu0 %v1444
    %1613 = vmatpush1.bf16.msra.mxu0 %v1443
    %1614 = vmatprep.subr.bf16.mxu0 %v1452
    %1615 = vmatpush1.bf16.msra.mxu0 %v1451
    %1616 = vmatprep.subr.bf16.mxu0 %v1460
    %1617 = vmatpush1.bf16.msra.mxu0 %v1459
    %1618 = vmatprep.subr.bf16.mxu0 %v1468
    %1619 = vmatpush1.bf16.msra.mxu0 %v1467
    %1620 = vmatprep.subr.bf16.mxu0 %v1476
    %1621 = vmatpush1.bf16.msra.mxu0 %v1475
    %1622 = vmatprep.subr.bf16.mxu0 %v1484
    %1623 = vmatpush1.bf16.msra.mxu0 %v1483
    %1624 = vmatprep.subr.bf16.mxu0 %v1492
    %1625 = vmatpush1.bf16.msra.mxu0 %v1491
    %1626 = vmatprep.subr.bf16.mxu0 0
    %1627 = vmatpush1.bf16.msra.mxu0 0
    %1628 = vmatprep.subr.bf16.mxu0 0
    %1629 = vmatpush1.bf16.msra.mxu0 0
    %1630 = vmatprep.subr.bf16.mxu0 0
    %1631 = vmatpush1.bf16.msra.mxu0 0
    %1632 = vmatprep.subr.bf16.mxu0 0
    %1633 = vmatpush1.bf16.msra.mxu0 0
    %1634 = vmatprep.subr.bf16.mxu0 0
    %1635 = vmatpush1.bf16.msra.mxu0 0
    %1636 = vmatprep.subr.bf16.mxu0 0
    %1637 = vmatpush1.bf16.msra.mxu0 0
    %1638 = vmatprep.subr.bf16.mxu0 0
    %1639 = vmatpush1.bf16.msra.mxu0 0
    %1640 = vmatprep.subr.bf16.mxu0 0
    %1641 = vmatpush1.bf16.msra.mxu0 0
    %1642 = vmatprep.mubr.bf16.mxu0 0
    %1643 = vmatmul.mubr.bf16.gmra.mrb[0].mxu0 %v1240
    %v1644 = vpop.f32.mrb[0].mxu0
    %v1645 = vadd.f32 0.0, %v1644
    %v1646 = vpop.f32.mrb[0].mxu0
    %v1647 = vadd.f32 0.0, %v1646
    %v1648 = vpop.f32.mrb[0].mxu0
    %v1649 = vadd.f32 0.0, %v1648
    %v1650 = vpop.f32.mrb[0].mxu0
    %v1651 = vadd.f32 0.0, %v1650
    %1652 = vmatprep.mubr.bf16.mxu0 0
    %1653 = vmatmul.mubr.bf16.gmra.mrb[0].mxu0 %v1240
    %v1654 = vpop.f32.mrb[0].mxu0
    %v1655 = vpop.f32.mrb[0].mxu0
    %v1656 = vpop.f32.mrb[0].mxu0
    %v1657 = vpop.f32.mrb[0].mxu0
    %1658 = vdwg.mxu0
    %1659 = vmatprep.subr.bf16.mxu0 %v1438
    %1660 = vmatpush1.bf16.msra.mxu0 %v1437
    %1661 = vmatprep.subr.bf16.mxu0 %v1446
    %1662 = vmatpush1.bf16.msra.mxu0 %v1445
    %1663 = vmatprep.subr.bf16.mxu0 %v1454
    %1664 = vmatpush1.bf16.msra.mxu0 %v1453
    %1665 = vmatprep.subr.bf16.mxu0 %v1462
    %1666 = vmatpush1.bf16.msra.mxu0 %v1461
    %1667 = vmatprep.subr.bf16.mxu0 %v1470
    %1668 = vmatpush1.bf16.msra.mxu0 %v1469
    %1669 = vmatprep.subr.bf16.mxu0 %v1478
    %1670 = vmatpush1.bf16.msra.mxu0 %v1477
    %1671 = vmatprep.subr.bf16.mxu0 %v1486
    %1672 = vmatpush1.bf16.msra.mxu0 %v1485
    %1673 = vmatprep.subr.bf16.mxu0 %v1494
    %1674 = vmatpush1.bf16.msra.mxu0 %v1493
    %1675 = vmatprep.subr.bf16.mxu0 0
    %1676 = vmatpush1.bf16.msra.mxu0 0
    %1677 = vmatprep.subr.bf16.mxu0 0
    %1678 = vmatpush1.bf16.msra.mxu0 0
    %1679 = vmatprep.subr.bf16.mxu0 0
    %1680 = vmatpush1.bf16.msra.mxu0 0
    %1681 = vmatprep.subr.bf16.mxu0 0
    %1682 = vmatpush1.bf16.msra.mxu0 0
    %1683 = vmatprep.subr.bf16.mxu0 0
    %1684 = vmatpush1.bf16.msra.mxu0 0
    %1685 = vmatprep.subr.bf16.mxu0 0
    %1686 = vmatpush1.bf16.msra.mxu0 0
    %1687 = vmatprep.subr.bf16.mxu0 0
    %1688 = vmatpush1.bf16.msra.mxu0 0
    %1689 = vmatprep.subr.bf16.mxu0 0
    %1690 = vmatpush1.bf16.msra.mxu0 0
    %1691 = vmatprep.mubr.bf16.mxu0 0
    %1692 = vmatmul.mubr.bf16.gmra.mrb[0].mxu0 %v1240
    %v1693 = vpop.f32.mrb[0].mxu0
    %v1694 = vpop.f32.mrb[0].mxu0
    %v1695 = vpop.f32.mrb[0].mxu0
    %v1696 = vpop.f32.mrb[0].mxu0
    %1697 = vmatprep.mubr.bf16.mxu0 0
    %1698 = vmatmul.mubr.bf16.gmra.mrb[0].mxu0 %v1240
    %v1699 = vpop.f32.mrb[0].mxu0
    %v1700 = vadd.f32 0.0, %v1699
    %v1701 = vpop.f32.mrb[0].mxu0
    %v1702 = vadd.f32 0.0, %v1701
    %v1703 = vpop.f32.mrb[0].mxu0
    %v1704 = vadd.f32 0.0, %v1703
    %v1705 = vpop.f32.mrb[0].mxu0
    %v1706 = vadd.f32 0.0, %v1705
    %1707 = vdwg.mxu0
    %1708 = vmatprep.subr.bf16.mxu0 %v1440
    %1709 = vmatpush1.bf16.msra.mxu0 %v1439
    %1710 = vmatprep.subr.bf16.mxu0 %v1448
    %1711 = vmatpush1.bf16.msra.mxu0 %v1447
    %1712 = vmatprep.subr.bf16.mxu0 %v1456
    %1713 = vmatpush1.bf16.msra.mxu0 %v1455
    %1714 = vmatprep.subr.bf16.mxu0 %v1464
    %1715 = vmatpush1.bf16.msra.mxu0 %v1463
    %1716 = vmatprep.subr.bf16.mxu0 %v1472
    %1717 = vmatpush1.bf16.msra.mxu0 %v1471
    %1718 = vmatprep.subr.bf16.mxu0 %v1480
    %1719 = vmatpush1.bf16.msra.mxu0 %v1479
    %1720 = vmatprep.subr.bf16.mxu0 %v1488
    %1721 = vmatpush1.bf16.msra.mxu0 %v1487
    %1722 = vmatprep.subr.bf16.mxu0 %v1496
    %1723 = vmatpush1.bf16.msra.mxu0 %v1495
    %1724 = vmatprep.subr.bf16.mxu0 0
    %1725 = vmatpush1.bf16.msra.mxu0 0
    %1726 = vmatprep.subr.bf16.mxu0 0
    %1727 = vmatpush1.bf16.msra.mxu0 0
    %1728 = vmatprep.subr.bf16.mxu0 0
    %1729 = vmatpush1.bf16.msra.mxu0 0
    %1730 = vmatprep.subr.bf16.mxu0 0
    %1731 = vmatpush1.bf16.msra.mxu0 0
    %1732 = vmatprep.subr.bf16.mxu0 0
    %1733 = vmatpush1.bf16.msra.mxu0 0
    %1734 = vmatprep.subr.bf16.mxu0 0
    %1735 = vmatpush1.bf16.msra.mxu0 0
    %1736 = vmatprep.subr.bf16.mxu0 0
    %1737 = vmatpush1.bf16.msra.mxu0 0
    %1738 = vmatprep.subr.bf16.mxu0 0
    %1739 = vmatpush1.bf16.msra.mxu0 0
    %1740 = vmatprep.mubr.bf16.mxu0 0
    %1741 = vmatmul.mubr.bf16.gmra.mrb[0].mxu0 %v1240
    %v1742 = vpop.f32.mrb[0].mxu0
    %v1743 = vpop.f32.mrb[0].mxu0
    %v1744 = vpop.f32.mrb[0].mxu0
    %v1745 = vpop.f32.mrb[0].mxu0
    %1746 = vmatprep.mubr.bf16.mxu0 0
    %1747 = vmatmul.mubr.bf16.gmra.mrb[0].mxu0 %v1240
    %v1748 = vpop.f32.mrb[0].mxu0
    %v1749 = vadd.f32 0.0, %v1748
    %v1750 = vpop.f32.mrb[0].mxu0
    %v1751 = vadd.f32 0.0, %v1750
    %v1752 = vpop.f32.mrb[0].mxu0
    %v1753 = vadd.f32 0.0, %v1752
    %v1754 = vpop.f32.mrb[0].mxu0
    %v1755 = vadd.f32 0.0, %v1754
    %1756 = vdwg.mxu0
    %v1757 = vld [vmem:[#allocation2] sm:$0xff]
    %v1758 = vld [vmem:[#allocation2 + $0x8] sm:$0xff]
    %v1759 = vld [vmem:[#allocation2 + $0x10] sm:$0xff]
    %v1760 = vld [vmem:[#allocation2 + $0x18] sm:$0xff]
    %v1761 = vunpack.c.l.bf16 %v1757
    %v1762 = vunpack.c.l.bf16 %v1758
    %v1763 = vunpack.c.l.bf16 %v1759
    %v1764 = vunpack.c.l.bf16 %v1760
    %v1765 = vunpack.c.h.bf16 %v1757
    %v1766 = vunpack.c.h.bf16 %v1758
    %v1767 = vunpack.c.h.bf16 %v1759
    %v1768 = vunpack.c.h.bf16 %v1760
    %v1769 = vadd.f32 %v1596, %v1761
    %v1770 = vadd.f32 %v1598, %v1762
    %v1771 = vadd.f32 %v1645, %v1763
    %v1772 = vadd.f32 %v1647, %v1764
    %v1773 = vadd.f32 %v1600, %v1765
    %v1774 = vadd.f32 %v1602, %v1766
    %v1775 = vadd.f32 %v1649, %v1767
    %v1776 = vadd.f32 %v1651, %v1768
    %s1777 = scalar_lea.vmem [#allocation2], 448
    %v1778 = vld [vmem:[%s1777 + $0x20] sm:$0xff]
    %v1779 = vld [vmem:[%s1777 + $0x28] sm:$0xff]
    %v1780 = vld [vmem:[%s1777 + $0x30] sm:$0xff]
    %v1781 = vld [vmem:[%s1777 + $0x38] sm:$0xff]
    %v1782 = vunpack.c.l.bf16 %v1778
    %v1783 = vunpack.c.l.bf16 %v1779
    %v1784 = vunpack.c.l.bf16 %v1780
    %v1785 = vunpack.c.l.bf16 %v1781
    %v1786 = vunpack.c.h.bf16 %v1778
    %v1787 = vunpack.c.h.bf16 %v1779
    %v1788 = vunpack.c.h.bf16 %v1780
    %v1789 = vunpack.c.h.bf16 %v1781
    %v1790 = vadd.f32 %v1700, %v1782
    %v1791 = vadd.f32 %v1702, %v1783
    %v1792 = vadd.f32 %v1749, %v1784
    %v1793 = vadd.f32 %v1751, %v1785
    %v1794 = vadd.f32 %v1704, %v1786
    %v1795 = vadd.f32 %v1706, %v1787
    %v1796 = vadd.f32 %v1753, %v1788
    %v1797 = vadd.f32 %v1755, %v1789
    %v1798 = vxor.u32 %v1769, 2147483648
    %v1799 = vxor.u32 %v1773, 2147483648
    %v1800 = vmul.f32 %v1798, 1.442695
    %v1801 = vpow.pop %v1800
    %v1802 = vmul.f32 %v1799, 1.442695
    %v1803 = vpow.pop %v1802
    %v1804 = vadd.f32 %v1801, 1.0
    %v1805 = vadd.f32 %v1803, 1.0
    %v1806 = vrcp.pop %v1804
    %v1807 = vmul.f32 1.0, %v1806
    %v1808 = vrcp.pop %v1805
    %v1809 = vmul.f32 1.0, %v1808
    %v1810 = vxor.u32 %v1770, 2147483648
    %v1811 = vxor.u32 %v1774, 2147483648
    %v1812 = vmul.f32 %v1810, 1.442695
    %v1813 = vpow.pop %v1812
    %v1814 = vmul.f32 %v1811, 1.442695
    %v1815 = vpow.pop %v1814
    %v1816 = vadd.f32 %v1813, 1.0
    %v1817 = vadd.f32 %v1815, 1.0
    %v1818 = vrcp.pop %v1816
    %v1819 = vmul.f32 1.0, %v1818
    %v1820 = vrcp.pop %v1817
    %v1821 = vmul.f32 1.0, %v1820
    %v1822 = vtanh.pop %v1771
    %v1823 = vtanh.pop %v1775
    %v1824 = vxor.u32 %v1772, 2147483648
    %v1825 = vxor.u32 %v1776, 2147483648
    %v1826 = vmul.f32 %v1824, 1.442695
    %v1827 = vpow.pop %v1826
    %v1828 = vmul.f32 %v1825, 1.442695
    %v1829 = vpow.pop %v1828
    %v1830 = vadd.f32 %v1827, 1.0
    %v1831 = vadd.f32 %v1829, 1.0
    %v1832 = vrcp.pop %v1830
    %v1833 = vmul.f32 1.0, %v1832
    %v1834 = vrcp.pop %v1831
    %v1835 = vmul.f32 1.0, %v1834
    %v1836 = vmul.f32 %v1819, 0.0
    %v1837 = vmul.f32 %v1821, 0.0
    %v1838 = vmul.f32 %v1807, %v1822
    %v1839 = vmul.f32 %v1809, %v1823
    %v1840 = vadd.f32 %v1836, %v1838
    %v1841 = vadd.f32 %v1837, %v1839
    %v1842 = vtanh.pop %v1840
    %v1843 = vtanh.pop %v1841
    %v1844 = vmul.f32 %v1833, %v1842
    %v1845 = vmul.f32 %v1835, %v1843
    %v1846 = vxor.u32 %v1790, 2147483648
    %v1847 = vxor.u32 %v1794, 2147483648
    %v1848 = vmul.f32 %v1846, 1.442695
    %v1849 = vpow.pop %v1848
    %v1850 = vmul.f32 %v1847, 1.442695
    %v1851 = vpow.pop %v1850
    %v1852 = vadd.f32 %v1849, 1.0
    %v1853 = vadd.f32 %v1851, 1.0
    %v1854 = vrcp.pop %v1852
    %v1855 = vmul.f32 1.0, %v1854
    %v1856 = vrcp.pop %v1853
    %v1857 = vmul.f32 1.0, %v1856
    %v1858 = vxor.u32 %v1791, 2147483648
    %v1859 = vxor.u32 %v1795, 2147483648
    %v1860 = vmul.f32 %v1858, 1.442695
    %v1861 = vpow.pop %v1860
    %v1862 = vmul.f32 %v1859, 1.442695
    %v1863 = vpow.pop %v1862
    %v1864 = vadd.f32 %v1861, 1.0
    %v1865 = vadd.f32 %v1863, 1.0
    %v1866 = vrcp.pop %v1864
    %v1867 = vmul.f32 1.0, %v1866
    %v1868 = vrcp.pop %v1865
    %v1869 = vmul.f32 1.0, %v1868
    %v1870 = vtanh.pop %v1792
    %v1871 = vtanh.pop %v1796
    %v1872 = vxor.u32 %v1793, 2147483648
    %v1873 = vxor.u32 %v1797, 2147483648
    %v1874 = vmul.f32 %v1872, 1.442695
    %v1875 = vpow.pop %v1874
    %v1876 = vmul.f32 %v1873, 1.442695
    %v1877 = vpow.pop %v1876
    %v1878 = vadd.f32 %v1875, 1.0
    %v1879 = vadd.f32 %v1877, 1.0
    %v1880 = vrcp.pop %v1878
    %v1881 = vmul.f32 1.0, %v1880
    %v1882 = vrcp.pop %v1879
    %v1883 = vmul.f32 1.0, %v1882
    %v1884 = vmul.f32 %v1867, 0.0
    %v1885 = vmul.f32 %v1869, 0.0
    %v1886 = vmul.f32 %v1855, %v1870
    %v1887 = vmul.f32 %v1857, %v1871
    %v1888 = vadd.f32 %v1884, %v1886
    %v1889 = vadd.f32 %v1885, %v1887
    %v1890 = vtanh.pop %v1888
    %v1891 = vtanh.pop %v1889
    %v1892 = vmul.f32 %v1881, %v1890
    %v1893 = vmul.f32 %v1883, %v1891
    %vm1894 = vcmp.gt.s32.totalorder %v104, 0
    %vm1895 = vcmp.gt.s32.totalorder %v105, 0
    %vm1896 = vcmp.gt.s32.totalorder %v104, 7
    %vm1897 = vcmp.gt.s32.totalorder %v105, 7
    %v1898 = vsel %vm1894, 1, 0
    %v1899 = vsel %vm1895, 1, 0
    %1900 = vset.pattern.permute.xlu0 0
    %1901 = vperm.xlu0 %1900, %v1898
    %v1902 = vpop.permute.xlu0 %1901
    %1903 = vset.pattern.permute.xlu0 0
    %1904 = vperm.xlu0 %1903, %v1899
    %v1905 = vpop.permute.xlu0 %1904
    %vm1906 = vcmp.eq.s32.totalorder %v1902, 1
    %vm1907 = vcmp.eq.s32.totalorder %v1905, 1
    %v1908 = vsel %vm1906, %v1844, 0.0
    %v1909 = vsel %vm1907, %v1845, 0.0
    %v1910 = vpack.c.bf16 %v1909, %v1908
    %1911 = vst [vmem:[#allocation3] sm:$0xff] %v1910
    %v1912 = vsel %vm1896, 1, 0
    %v1913 = vsel %vm1897, 1, 0
    %1914 = vset.pattern.permute.xlu0 0
    %1915 = vperm.xlu0 %1914, %v1912
    %v1916 = vpop.permute.xlu0 %1915
    %1917 = vset.pattern.permute.xlu0 0
    %1918 = vperm.xlu0 %1917, %v1913
    %v1919 = vpop.permute.xlu0 %1918
    %vm1920 = vcmp.eq.s32.totalorder %v1916, 1
    %vm1921 = vcmp.eq.s32.totalorder %v1919, 1
    %v1922 = vsel %vm1920, %v1892, 0.0
    %v1923 = vsel %vm1921, %v1893, 0.0
    %v1924 = vpack.c.bf16 %v1923, %v1922
    %s1925 = scalar_lea.vmem [#allocation4], 56
    %1926 = vst [vmem:[%s1925] sm:$0xff] %v1924
    %v1927 = vsel %vm1906, %v1840, 0.0
    %v1928 = vsel %vm1907, %v1841, 0.0
    %v1929 = vsel %vm1920, %v1888, 0.0
    %v1930 = vsel %vm1921, %v1889, 0.0
    %1931 = vmatprep.subr.bf16.mxu0 %v1434
    %1932 = vmatpush1.bf16.msra.mxu0 %v1433
    %1933 = vmatprep.subr.bf16.mxu0 %v1442
    %1934 = vmatpush1.bf16.msra.mxu0 %v1441
    %1935 = vmatprep.subr.bf16.mxu0 %v1450
    %1936 = vmatpush1.bf16.msra.mxu0 %v1449
    %1937 = vmatprep.subr.bf16.mxu0 %v1458
    %1938 = vmatpush1.bf16.msra.mxu0 %v1457
    %1939 = vmatprep.subr.bf16.mxu0 %v1466
    %1940 = vmatpush1.bf16.msra.mxu0 %v1465
    %1941 = vmatprep.subr.bf16.mxu0 %v1474
    %1942 = vmatpush1.bf16.msra.mxu0 %v1473
    %1943 = vmatprep.subr.bf16.mxu0 %v1482
    %1944 = vmatpush1.bf16.msra.mxu0 %v1481
    %1945 = vmatprep.subr.bf16.mxu0 %v1490
    %1946 = vmatpush1.bf16.msra.mxu0 %v1489
    %1947 = vmatprep.subr.bf16.mxu0 0
    %1948 = vmatpush1.bf16.msra.mxu0 0
    %1949 = vmatprep.subr.bf16.mxu0 0
    %1950 = vmatpush1.bf16.msra.mxu0 0
    %1951 = vmatprep.subr.bf16.mxu0 0
    %1952 = vmatpush1.bf16.msra.mxu0 0
    %1953 = vmatprep.subr.bf16.mxu0 0
    %1954 = vmatpush1.bf16.msra.mxu0 0
    %1955 = vmatprep.subr.bf16.mxu0 0
    %1956 = vmatpush1.bf16.msra.mxu0 0
    %1957 = vmatprep.subr.bf16.mxu0 0
    %1958 = vmatpush1.bf16.msra.mxu0 0
    %1959 = vmatprep.subr.bf16.mxu0 0
    %1960 = vmatpush1.bf16.msra.mxu0 0
    %1961 = vmatprep.subr.bf16.mxu0 0
    %1962 = vmatpush1.bf16.msra.mxu0 0
    %1963 = vmatprep.mubr.bf16.mxu0 0
    %1964 = vmatmul.mubr.bf16.gmra.mrb[0].mxu0 %v1910
    %v1965 = vpop.f32.mrb[0].mxu0
    %v1966 = vadd.f32 0.0, %v1965
    %v1967 = vpop.f32.mrb[0].mxu0
    %v1968 = vadd.f32 0.0, %v1967
    %v1969 = vpop.f32.mrb[0].mxu0
    %v1970 = vadd.f32 0.0, %v1969
    %v1971 = vpop.f32.mrb[0].mxu0
    %v1972 = vadd.f32 0.0, %v1971
    %1973 = vmatprep.mubr.bf16.mxu0 0
    %1974 = vmatmul.mubr.bf16.gmra.mrb[0].mxu0 %v1924
    %v1975 = vpop.f32.mrb[0].mxu0
    %v1976 = vpop.f32.mrb[0].mxu0
    %v1977 = vpop.f32.mrb[0].mxu0
    %v1978 = vpop.f32.mrb[0].mxu0
    %1979 = vdwg.mxu0
    %1980 = vmatprep.subr.bf16.mxu0 %v1436
    %1981 = vmatpush1.bf16.msra.mxu0 %v1435
    %1982 = vmatprep.subr.bf16.mxu0 %v1444
    %1983 = vmatpush1.bf16.msra.mxu0 %v1443
    %1984 = vmatprep.subr.bf16.mxu0 %v1452
    %1985 = vmatpush1.bf16.msra.mxu0 %v1451
    %1986 = vmatprep.subr.bf16.mxu0 %v1460
    %1987 = vmatpush1.bf16.msra.mxu0 %v1459
    %1988 = vmatprep.subr.bf16.mxu0 %v1468
    %1989 = vmatpush1.bf16.msra.mxu0 %v1467
    %1990 = vmatprep.subr.bf16.mxu0 %v1476
    %1991 = vmatpush1.bf16.msra.mxu0 %v1475
    %1992 = vmatprep.subr.bf16.mxu0 %v1484
    %1993 = vmatpush1.bf16.msra.mxu0 %v1483
    %1994 = vmatprep.subr.bf16.mxu0 %v1492
    %1995 = vmatpush1.bf16.msra.mxu0 %v1491
    %1996 = vmatprep.subr.bf16.mxu0 0
    %1997 = vmatpush1.bf16.msra.mxu0 0
    %1998 = vmatprep.subr.bf16.mxu0 0
    %1999 = vmatpush1.bf16.msra.mxu0 0
    %2000 = vmatprep.subr.bf16.mxu0 0
    %2001 = vmatpush1.bf16.msra.mxu0 0
    %2002 = vmatprep.subr.bf16.mxu0 0
    %2003 = vmatpush1.bf16.msra.mxu0 0
    %2004 = vmatprep.subr.bf16.mxu0 0
    %2005 = vmatpush1.bf16.msra.mxu0 0
    %2006 = vmatprep.subr.bf16.mxu0 0
    %2007 = vmatpush1.bf16.msra.mxu0 0
    %2008 = vmatprep.subr.bf16.mxu0 0
    %2009 = vmatpush1.bf16.msra.mxu0 0
    %2010 = vmatprep.subr.bf16.mxu0 0
    %2011 = vmatpush1.bf16.msra.mxu0 0
    %2012 = vmatprep.mubr.bf16.mxu0 0
    %2013 = vmatmul.mubr.bf16.gmra.mrb[0].mxu0 %v1910
    %v2014 = vpop.f32.mrb[0].mxu0
    %v2015 = vadd.f32 0.0, %v2014
    %v2016 = vpop.f32.mrb[0].mxu0
    %v2017 = vadd.f32 0.0, %v2016
    %v2018 = vpop.f32.mrb[0].mxu0
    %v2019 = vadd.f32 0.0, %v2018
    %v2020 = vpop.f32.mrb[0].mxu0
    %v2021 = vadd.f32 0.0, %v2020
    %2022 = vmatprep.mubr.bf16.mxu0 0
    %2023 = vmatmul.mubr.bf16.gmra.mrb[0].mxu0 %v1924
    %v2024 = vpop.f32.mrb[0].mxu0
    %v2025 = vpop.f32.mrb[0].mxu0
    %v2026 = vpop.f32.mrb[0].mxu0
    %v2027 = vpop.f32.mrb[0].mxu0
    %2028 = vdwg.mxu0
    %2029 = vmatprep.subr.bf16.mxu0 %v1438
    %2030 = vmatpush1.bf16.msra.mxu0 %v1437
    %2031 = vmatprep.subr.bf16.mxu0 %v1446
    %2032 = vmatpush1.bf16.msra.mxu0 %v1445
    %2033 = vmatprep.subr.bf16.mxu0 %v1454
    %2034 = vmatpush1.bf16.msra.mxu0 %v1453
    %2035 = vmatprep.subr.bf16.mxu0 %v1462
    %2036 = vmatpush1.bf16.msra.mxu0 %v1461
    %2037 = vmatprep.subr.bf16.mxu0 %v1470
    %2038 = vmatpush1.bf16.msra.mxu0 %v1469
    %2039 = vmatprep.subr.bf16.mxu0 %v1478
    %2040 = vmatpush1.bf16.msra.mxu0 %v1477
    %2041 = vmatprep.subr.bf16.mxu0 %v1486
    %2042 = vmatpush1.bf16.msra.mxu0 %v1485
    %2043 = vmatprep.subr.bf16.mxu0 %v1494
    %2044 = vmatpush1.bf16.msra.mxu0 %v1493
    %2045 = vmatprep.subr.bf16.mxu0 0
    %2046 = vmatpush1.bf16.msra.mxu0 0
    %2047 = vmatprep.subr.bf16.mxu0 0
    %2048 = vmatpush1.bf16.msra.mxu0 0
    %2049 = vmatprep.subr.bf16.mxu0 0
    %2050 = vmatpush1.bf16.msra.mxu0 0
    %2051 = vmatprep.subr.bf16.mxu0 0
    %2052 = vmatpush1.bf16.msra.mxu0 0
    %2053 = vmatprep.subr.bf16.mxu0 0
    %2054 = vmatpush1.bf16.msra.mxu0 0
    %2055 = vmatprep.subr.bf16.mxu0 0
    %2056 = vmatpush1.bf16.msra.mxu0 0
    %2057 = vmatprep.subr.bf16.mxu0 0
    %2058 = vmatpush1.bf16.msra.mxu0 0
    %2059 = vmatprep.subr.bf16.mxu0 0
    %2060 = vmatpush1.bf16.msra.mxu0 0
    %2061 = vmatprep.mubr.bf16.mxu0 0
    %2062 = vmatmul.mubr.bf16.gmra.mrb[0].mxu0 %v1910
    %v2063 = vpop.f32.mrb[0].mxu0
    %v2064 = vpop.f32.mrb[0].mxu0
    %v2065 = vpop.f32.mrb[0].mxu0
    %v2066 = vpop.f32.mrb[0].mxu0
    %2067 = vmatprep.mubr.bf16.mxu0 0
    %2068 = vmatmul.mubr.bf16.gmra.mrb[0].mxu0 %v1924
    %v2069 = vpop.f32.mrb[0].mxu0
    %v2070 = vadd.f32 0.0, %v2069
    %v2071 = vpop.f32.mrb[0].mxu0
    %v2072 = vadd.f32 0.0, %v2071
    %v2073 = vpop.f32.mrb[0].mxu0
    %v2074 = vadd.f32 0.0, %v2073
    %v2075 = vpop.f32.mrb[0].mxu0
    %v2076 = vadd.f32 0.0, %v2075
    %2077 = vdwg.mxu0
    %2078 = vmatprep.subr.bf16.mxu0 %v1440
    %2079 = vmatpush1.bf16.msra.mxu0 %v1439
    %2080 = vmatprep.subr.bf16.mxu0 %v1448
    %2081 = vmatpush1.bf16.msra.mxu0 %v1447
    %2082 = vmatprep.subr.bf16.mxu0 %v1456
    %2083 = vmatpush1.bf16.msra.mxu0 %v1455
    %2084 = vmatprep.subr.bf16.mxu0 %v1464
    %2085 = vmatpush1.bf16.msra.mxu0 %v1463
    %2086 = vmatprep.subr.bf16.mxu0 %v1472
    %2087 = vmatpush1.bf16.msra.mxu0 %v1471
    %2088 = vmatprep.subr.bf16.mxu0 %v1480
    %2089 = vmatpush1.bf16.msra.mxu0 %v1479
    %2090 = vmatprep.subr.bf16.mxu0 %v1488
    %2091 = vmatpush1.bf16.msra.mxu0 %v1487
    %2092 = vmatprep.subr.bf16.mxu0 %v1496
    %2093 = vmatpush1.bf16.msra.mxu0 %v1495
    %2094 = vmatprep.subr.bf16.mxu0 0
    %2095 = vmatpush1.bf16.msra.mxu0 0
    %2096 = vmatprep.subr.bf16.mxu0 0
    %2097 = vmatpush1.bf16.msra.mxu0 0
    %2098 = vmatprep.subr.bf16.mxu0 0
    %2099 = vmatpush1.bf16.msra.mxu0 0
    %2100 = vmatprep.subr.bf16.mxu0 0
    %2101 = vmatpush1.bf16.msra.mxu0 0
    %2102 = vmatprep.subr.bf16.mxu0 0
    %2103 = vmatpush1.bf16.msra.mxu0 0
    %2104 = vmatprep.subr.bf16.mxu0 0
    %2105 = vmatpush1.bf16.msra.mxu0 0
    %2106 = vmatprep.subr.bf16.mxu0 0
    %2107 = vmatpush1.bf16.msra.mxu0 0
    %2108 = vmatprep.subr.bf16.mxu0 0
    %2109 = vmatpush1.bf16.msra.mxu0 0
    %2110 = vmatprep.mubr.bf16.mxu0 0
    %2111 = vmatmul.mubr.bf16.gmra.mrb[0].mxu0 %v1910
    %v2112 = vpop.f32.mrb[0].mxu0
    %v2113 = vpop.f32.mrb[0].mxu0
    %v2114 = vpop.f32.mrb[0].mxu0
    %v2115 = vpop.f32.mrb[0].mxu0
    %2116 = vmatprep.mubr.bf16.mxu0 0
    %2117 = vmatmul.mubr.bf16.gmra.mrb[0].mxu0 %v1924
    %v2118 = vpop.f32.mrb[0].mxu0
    %v2119 = vadd.f32 0.0, %v2118
    %v2120 = vpop.f32.mrb[0].mxu0
    %v2121 = vadd.f32 0.0, %v2120
    %v2122 = vpop.f32.mrb[0].mxu0
    %v2123 = vadd.f32 0.0, %v2122
    %v2124 = vpop.f32.mrb[0].mxu0
    %v2125 = vadd.f32 0.0, %v2124
    %2126 = vdwg.mxu0
    %s2127 = scalar_lea.vmem [#allocation2], 64
    %v2128 = vld [vmem:[%s2127] sm:$0xff]
    %v2129 = vld [vmem:[%s2127 + $0x8] sm:$0xff]
    %v2130 = vld [vmem:[%s2127 + $0x10] sm:$0xff]
    %v2131 = vld [vmem:[%s2127 + $0x18] sm:$0xff]
    %v2132 = vunpack.c.l.bf16 %v2128
    %v2133 = vunpack.c.l.bf16 %v2129
    %v2134 = vunpack.c.l.bf16 %v2130
    %v2135 = vunpack.c.l.bf16 %v2131
    %v2136 = vunpack.c.h.bf16 %v2128
    %v2137 = vunpack.c.h.bf16 %v2129
    %v2138 = vunpack.c.h.bf16 %v2130
    %v2139 = vunpack.c.h.bf16 %v2131
    %v2140 = vadd.f32 %v1966, %v2132
    %v2141 = vadd.f32 %v1968, %v2133
    %v2142 = vadd.f32 %v2015, %v2134
    %v2143 = vadd.f32 %v2017, %v2135
    %v2144 = vadd.f32 %v1970, %v2136
    %v2145 = vadd.f32 %v1972, %v2137
    %v2146 = vadd.f32 %v2019, %v2138
    %v2147 = vadd.f32 %v2021, %v2139
    %s2148 = scalar_lea.vmem [#allocation2], 384
    %v2149 = vld [vmem:[%s2148 + $0x20] sm:$0xff]
    %v2150 = vld [vmem:[%s2148 + $0x28] sm:$0xff]
    %v2151 = vld [vmem:[%s2148 + $0x30] sm:$0xff]
    %v2152 = vld [vmem:[%s2148 + $0x38] sm:$0xff]
    %v2153 = vunpack.c.l.bf16 %v2149
    %v2154 = vunpack.c.l.bf16 %v2150
    %v2155 = vunpack.c.l.bf16 %v2151
    %v2156 = vunpack.c.l.bf16 %v2152
    %v2157 = vunpack.c.h.bf16 %v2149
    %v2158 = vunpack.c.h.bf16 %v2150
    %v2159 = vunpack.c.h.bf16 %v2151
    %v2160 = vunpack.c.h.bf16 %v2152
    %v2161 = vadd.f32 %v2070, %v2153
    %v2162 = vadd.f32 %v2072, %v2154
    %v2163 = vadd.f32 %v2119, %v2155
    %v2164 = vadd.f32 %v2121, %v2156
    %v2165 = vadd.f32 %v2074, %v2157
    %v2166 = vadd.f32 %v2076, %v2158
    %v2167 = vadd.f32 %v2123, %v2159
    %v2168 = vadd.f32 %v2125, %v2160
    %v2169 = vxor.u32 %v2140, 2147483648
    %v2170 = vxor.u32 %v2144, 2147483648
    %v2171 = vmul.f32 %v2169, 1.442695
    %v2172 = vpow.pop %v2171
    %v2173 = vmul.f32 %v2170, 1.442695
    %v2174 = vpow.pop %v2173
    %v2175 = vadd.f32 %v2172, 1.0
    %v2176 = vadd.f32 %v2174, 1.0
    %v2177 = vrcp.pop %v2175
    %v2178 = vmul.f32 1.0, %v2177
    %v2179 = vrcp.pop %v2176
    %v2180 = vmul.f32 1.0, %v2179
    %v2181 = vxor.u32 %v2141, 2147483648
    %v2182 = vxor.u32 %v2145, 2147483648
    %v2183 = vmul.f32 %v2181, 1.442695
    %v2184 = vpow.pop %v2183
    %v2185 = vmul.f32 %v2182, 1.442695
    %v2186 = vpow.pop %v2185
    %v2187 = vadd.f32 %v2184, 1.0
    %v2188 = vadd.f32 %v2186, 1.0
    %v2189 = vrcp.pop %v2187
    %v2190 = vmul.f32 1.0, %v2189
    %v2191 = vrcp.pop %v2188
    %v2192 = vmul.f32 1.0, %v2191
    %v2193 = vtanh.pop %v2142
    %v2194 = vtanh.pop %v2146
    %v2195 = vxor.u32 %v2143, 2147483648
    %v2196 = vxor.u32 %v2147, 2147483648
    %v2197 = vmul.f32 %v2195, 1.442695
    %v2198 = vpow.pop %v2197
    %v2199 = vmul.f32 %v2196, 1.442695
    %v2200 = vpow.pop %v2199
    %v2201 = vadd.f32 %v2198, 1.0
    %v2202 = vadd.f32 %v2200, 1.0
    %v2203 = vrcp.pop %v2201
    %v2204 = vmul.f32 1.0, %v2203
    %v2205 = vrcp.pop %v2202
    %v2206 = vmul.f32 1.0, %v2205
    %v2207 = vmul.f32 %v2190, %v1927
    %v2208 = vmul.f32 %v2192, %v1928
    %v2209 = vmul.f32 %v2178, %v2193
    %v2210 = vmul.f32 %v2180, %v2194
    %v2211 = vadd.f32 %v2207, %v2209
    %v2212 = vadd.f32 %v2208, %v2210
    %v2213 = vtanh.pop %v2211
    %v2214 = vtanh.pop %v2212
    %v2215 = vmul.f32 %v2204, %v2213
    %v2216 = vmul.f32 %v2206, %v2214
    %v2217 = vxor.u32 %v2161, 2147483648
    %v2218 = vxor.u32 %v2165, 2147483648
    %v2219 = vmul.f32 %v2217, 1.442695
    %v2220 = vpow.pop %v2219
    %v2221 = vmul.f32 %v2218, 1.442695
    %v2222 = vpow.pop %v2221
    %v2223 = vadd.f32 %v2220, 1.0
    %v2224 = vadd.f32 %v2222, 1.0
    %v2225 = vrcp.pop %v2223
    %v2226 = vmul.f32 1.0, %v2225
    %v2227 = vrcp.pop %v2224
    %v2228 = vmul.f32 1.0, %v2227
    %v2229 = vxor.u32 %v2162, 2147483648
    %v2230 = vxor.u32 %v2166, 2147483648
    %v2231 = vmul.f32 %v2229, 1.442695
    %v2232 = vpow.pop %v2231
    %v2233 = vmul.f32 %v2230, 1.442695
    %v2234 = vpow.pop %v2233
    %v2235 = vadd.f32 %v2232, 1.0
    %v2236 = vadd.f32 %v2234, 1.0
    %v2237 = vrcp.pop %v2235
    %v2238 = vmul.f32 1.0, %v2237
    %v2239 = vrcp.pop %v2236
    %v2240 = vmul.f32 1.0, %v2239
    %v2241 = vtanh.pop %v2163
    %v2242 = vtanh.pop %v2167
    %v2243 = vxor.u32 %v2164, 2147483648
    %v2244 = vxor.u32 %v2168, 2147483648
    %v2245 = vmul.f32 %v2243, 1.442695
    %v2246 = vpow.pop %v2245
    %v2247 = vmul.f32 %v2244, 1.442695
    %v2248 = vpow.pop %v2247
    %v2249 = vadd.f32 %v2246, 1.0
    %v2250 = vadd.f32 %v2248, 1.0
    %v2251 = vrcp.pop %v2249
    %v2252 = vmul.f32 1.0, %v2251
    %v2253 = vrcp.pop %v2250
    %v2254 = vmul.f32 1.0, %v2253
    %v2255 = vmul.f32 %v2238, %v1929
    %v2256 = vmul.f32 %v2240, %v1930
    %v2257 = vmul.f32 %v2226, %v2241
    %v2258 = vmul.f32 %v2228, %v2242
    %v2259 = vadd.f32 %v2255, %v2257
    %v2260 = vadd.f32 %v2256, %v2258
    %v2261 = vtanh.pop %v2259
    %v2262 = vtanh.pop %v2260
    %v2263 = vmul.f32 %v2252, %v2261
    %v2264 = vmul.f32 %v2254, %v2262
    %vm2265 = vcmp.gt.s32.totalorder %v104, 1
    %vm2266 = vcmp.gt.s32.totalorder %v105, 1
    %vm2267 = vcmp.gt.s32.totalorder %v104, 6
    %vm2268 = vcmp.gt.s32.totalorder %v105, 6
    %v2269 = vsel %vm2265, 1, 0
    %v2270 = vsel %vm2266, 1, 0
    %2271 = vset.pattern.permute.xlu0 0
    %2272 = vperm.xlu0 %2271, %v2269
    %v2273 = vpop.permute.xlu0 %2272
    %2274 = vset.pattern.permute.xlu0 0
    %2275 = vperm.xlu0 %2274, %v2270
    %v2276 = vpop.permute.xlu0 %2275
    %vm2277 = vcmp.eq.s32.totalorder %v2273, 1
    %vm2278 = vcmp.eq.s32.totalorder %v2276, 1
    %v2279 = vsel %vm2277, %v2215, 0.0
    %v2280 = vsel %vm2278, %v2216, 0.0
    %v2281 = vpack.c.bf16 %v2280, %v2279
    %s2282 = scalar_lea.vmem [#allocation3], 8
    %2283 = vst [vmem:[%s2282] sm:$0xff] %v2281
    %v2284 = vsel %vm2267, 1, 0
    %v2285 = vsel %vm2268, 1, 0
    %2286 = vset.pattern.permute.xlu0 0
    %2287 = vperm.xlu0 %2286, %v2284
    %v2288 = vpop.permute.xlu0 %2287
    %2289 = vset.pattern.permute.xlu0 0
    %2290 = vperm.xlu0 %2289, %v2285
    %v2291 = vpop.permute.xlu0 %2290
    %vm2292 = vcmp.eq.s32.totalorder %v2288, 1
    %vm2293 = vcmp.eq.s32.totalorder %v2291, 1
    %v2294 = vsel %vm2292, %v2263, 0.0
    %v2295 = vsel %vm2293, %v2264, 0.0
    %v2296 = vpack.c.bf16 %v2295, %v2294
    %s2297 = scalar_lea.vmem [#allocation4], 48
    %2298 = vst [vmem:[%s2297] sm:$0xff] %v2296
    %v2299 = vsel %vm2277, %v2215, %v1908
    %v2300 = vsel %vm2278, %v2216, %v1909
    %v2301 = vsel %vm2277, %v2211, %v1927
    %v2302 = vsel %vm2278, %v2212, %v1928
    %v2303 = vsel %vm2292, %v2263, %v1922
    %v2304 = vsel %vm2293, %v2264, %v1923
    %v2305 = vsel %vm2292, %v2259, %v1929
    %v2306 = vsel %vm2293, %v2260, %v1930
    %v2307 = vpack.c.bf16 %v2300, %v2299
    %v2308 = vpack.c.bf16 %v2304, %v2303
    %2309 = vmatprep.subr.bf16.mxu0 %v1434
    %2310 = vmatpush1.bf16.msra.mxu0 %v1433
    %2311 = vmatprep.subr.bf16.mxu0 %v1442
    %2312 = vmatpush1.bf16.msra.mxu0 %v1441
    %2313 = vmatprep.subr.bf16.mxu0 %v1450
    %2314 = vmatpush1.bf16.msra.mxu0 %v1449
    %2315 = vmatprep.subr.bf16.mxu0 %v1458
    %2316 = vmatpush1.bf16.msra.mxu0 %v1457
    %2317 = vmatprep.subr.bf16.mxu0 %v1466
    %2318 = vmatpush1.bf16.msra.mxu0 %v1465
    %2319 = vmatprep.subr.bf16.mxu0 %v1474
    %2320 = vmatpush1.bf16.msra.mxu0 %v1473
    %2321 = vmatprep.subr.bf16.mxu0 %v1482
    %2322 = vmatpush1.bf16.msra.mxu0 %v1481
    %2323 = vmatprep.subr.bf16.mxu0 %v1490
    %2324 = vmatpush1.bf16.msra.mxu0 %v1489
    %2325 = vmatprep.subr.bf16.mxu0 0
    %2326 = vmatpush1.bf16.msra.mxu0 0
    %2327 = vmatprep.subr.bf16.mxu0 0
    %2328 = vmatpush1.bf16.msra.mxu0 0
    %2329 = vmatprep.subr.bf16.mxu0 0
    %2330 = vmatpush1.bf16.msra.mxu0 0
    %2331 = vmatprep.subr.bf16.mxu0 0
    %2332 = vmatpush1.bf16.msra.mxu0 0
    %2333 = vmatprep.subr.bf16.mxu0 0
    %2334 = vmatpush1.bf16.msra.mxu0 0
    %2335 = vmatprep.subr.bf16.mxu0 0
    %2336 = vmatpush1.bf16.msra.mxu0 0
    %2337 = vmatprep.subr.bf16.mxu0 0
    %2338 = vmatpush1.bf16.msra.mxu0 0
    %2339 = vmatprep.subr.bf16.mxu0 0
    %2340 = vmatpush1.bf16.msra.mxu0 0
    %2341 = vmatprep.mubr.bf16.mxu0 0
    %2342 = vmatmul.mubr.bf16.gmra.mrb[0].mxu0 %v2307
    %v2343 = vpop.f32.mrb[0].mxu0
    %v2344 = vadd.f32 0.0, %v2343
    %v2345 = vpop.f32.mrb[0].mxu0
    %v2346 = vadd.f32 0.0, %v2345
    %v2347 = vpop.f32.mrb[0].mxu0
    %v2348 = vadd.f32 0.0, %v2347
    %v2349 = vpop.f32.mrb[0].mxu0
    %v2350 = vadd.f32 0.0, %v2349
    %2351 = vmatprep.mubr.bf16.mxu0 0
    %2352 = vmatmul.mubr.bf16.gmra.mrb[0].mxu0 %v2308
    %v2353 = vpop.f32.mrb[0].mxu0
    %v2354 = vpop.f32.mrb[0].mxu0
    %v2355 = vpop.f32.mrb[0].mxu0
    %v2356 = vpop.f32.mrb[0].mxu0
    %2357 = vdwg.mxu0
    %2358 = vmatprep.subr.bf16.mxu0 %v1436
    %2359 = vmatpush1.bf16.msra.mxu0 %v1435
    %2360 = vmatprep.subr.bf16.mxu0 %v1444
    %2361 = vmatpush1.bf16.msra.mxu0 %v1443
    %2362 = vmatprep.subr.bf16.mxu0 %v1452
    %2363 = vmatpush1.bf16.msra.mxu0 %v1451
    %2364 = vmatprep.subr.bf16.mxu0 %v1460
    %2365 = vmatpush1.bf16.msra.mxu0 %v1459
    %2366 = vmatprep.subr.bf16.mxu0 %v1468
    %2367 = vmatpush1.bf16.msra.mxu0 %v1467
    %2368 = vmatprep.subr.bf16.mxu0 %v1476
    %2369 = vmatpush1.bf16.msra.mxu0 %v1475
    %2370 = vmatprep.subr.bf16.mxu0 %v1484
    %2371 = vmatpush1.bf16.msra.mxu0 %v1483
    %2372 = vmatprep.subr.bf16.mxu0 %v1492
    %2373 = vmatpush1.bf16.msra.mxu0 %v1491
    %2374 = vmatprep.subr.bf16.mxu0 0
    %2375 = vmatpush1.bf16.msra.mxu0 0
    %2376 = vmatprep.subr.bf16.mxu0 0
    %2377 = vmatpush1.bf16.msra.mxu0 0
    %2378 = vmatprep.subr.bf16.mxu0 0
    %2379 = vmatpush1.bf16.msra.mxu0 0
    %2380 = vmatprep.subr.bf16.mxu0 0
    %2381 = vmatpush1.bf16.msra.mxu0 0
    %2382 = vmatprep.subr.bf16.mxu0 0
    %2383 = vmatpush1.bf16.msra.mxu0 0
    %2384 = vmatprep.subr.bf16.mxu0 0
    %2385 = vmatpush1.bf16.msra.mxu0 0
    %2386 = vmatprep.subr.bf16.mxu0 0
    %2387 = vmatpush1.bf16.msra.mxu0 0
    %2388 = vmatprep.subr.bf16.mxu0 0
    %2389 = vmatpush1.bf16.msra.mxu0 0
    %2390 = vmatprep.mubr.bf16.mxu0 0
    %2391 = vmatmul.mubr.bf16.gmra.mrb[0].mxu0 %v2307
    %v2392 = vpop.f32.mrb[0].mxu0
    %v2393 = vadd.f32 0.0, %v2392
    %v2394 = vpop.f32.mrb[0].mxu0
    %v2395 = vadd.f32 0.0, %v2394
    %v2396 = vpop.f32.mrb[0].mxu0
    %v2397 = vadd.f32 0.0, %v2396
    %v2398 = vpop.f32.mrb[0].mxu0
    %v2399 = vadd.f32 0.0, %v2398
    %2400 = vmatprep.mubr.bf16.mxu0 0
    %2401 = vmatmul.mubr.bf16.gmra.mrb[0].mxu0 %v2308
    %v2402 = vpop.f32.mrb[0].mxu0
    %v2403 = vpop.f32.mrb[0].mxu0
    %v2404 = vpop.f32.mrb[0].mxu0
    %v2405 = vpop.f32.mrb[0].mxu0
    %2406 = vdwg.mxu0
    %2407 = vmatprep.subr.bf16.mxu0 %v1438
    %2408 = vmatpush1.bf16.msra.mxu0 %v1437
    %2409 = vmatprep.subr.bf16.mxu0 %v1446
    %2410 = vmatpush1.bf16.msra.mxu0 %v1445
    %2411 = vmatprep.subr.bf16.mxu0 %v1454
    %2412 = vmatpush1.bf16.msra.mxu0 %v1453
    %2413 = vmatprep.subr.bf16.mxu0 %v1462
    %2414 = vmatpush1.bf16.msra.mxu0 %v1461
    %2415 = vmatprep.subr.bf16.mxu0 %v1470
    %2416 = vmatpush1.bf16.msra.mxu0 %v1469
    %2417 = vmatprep.subr.bf16.mxu0 %v1478
    %2418 = vmatpush1.bf16.msra.mxu0 %v1477
    %2419 = vmatprep.subr.bf16.mxu0 %v1486
    %2420 = vmatpush1.bf16.msra.mxu0 %v1485
    %2421 = vmatprep.subr.bf16.mxu0 %v1494
    %2422 = vmatpush1.bf16.msra.mxu0 %v1493
    %2423 = vmatprep.subr.bf16.mxu0 0
    %2424 = vmatpush1.bf16.msra.mxu0 0
    %2425 = vmatprep.subr.bf16.mxu0 0
    %2426 = vmatpush1.bf16.msra.mxu0 0
    %2427 = vmatprep.subr.bf16.mxu0 0
    %2428 = vmatpush1.bf16.msra.mxu0 0
    %2429 = vmatprep.subr.bf16.mxu0 0
    %2430 = vmatpush1.bf16.msra.mxu0 0
    %2431 = vmatprep.subr.bf16.mxu0 0
    %2432 = vmatpush1.bf16.msra.mxu0 0
    %2433 = vmatprep.subr.bf16.mxu0 0
    %2434 = vmatpush1.bf16.msra.mxu0 0
    %2435 = vmatprep.subr.bf16.mxu0 0
    %2436 = vmatpush1.bf16.msra.mxu0 0
    %2437 = vmatprep.subr.bf16.mxu0 0
    %2438 = vmatpush1.bf16.msra.mxu0 0
    %2439 = vmatprep.mubr.bf16.mxu0 0
    %2440 = vmatmul.mubr.bf16.gmra.mrb[0].mxu0 %v2307
    %v2441 = vpop.f32.mrb[0].mxu0
    %v2442 = vpop.f32.mrb[0].mxu0
    %v2443 = vpop.f32.mrb[0].mxu0
    %v2444 = vpop.f32.mrb[0].mxu0
    %2445 = vmatprep.mubr.bf16.mxu0 0
    %2446 = vmatmul.mubr.bf16.gmra.mrb[0].mxu0 %v2308
    %v2447 = vpop.f32.mrb[0].mxu0
    %v2448 = vadd.f32 0.0, %v2447
    %v2449 = vpop.f32.mrb[0].mxu0
    %v2450 = vadd.f32 0.0, %v2449
    %v2451 = vpop.f32.mrb[0].mxu0
    %v2452 = vadd.f32 0.0, %v2451
    %v2453 = vpop.f32.mrb[0].mxu0
    %v2454 = vadd.f32 0.0, %v2453
    %2455 = vdwg.mxu0
    %2456 = vmatprep.subr.bf16.mxu0 %v1440
    %2457 = vmatpush1.bf16.msra.mxu0 %v1439
    %2458 = vmatprep.subr.bf16.mxu0 %v1448
    %2459 = vmatpush1.bf16.msra.mxu0 %v1447
    %2460 = vmatprep.subr.bf16.mxu0 %v1456
    %2461 = vmatpush1.bf16.msra.mxu0 %v1455
    %2462 = vmatprep.subr.bf16.mxu0 %v1464
    %2463 = vmatpush1.bf16.msra.mxu0 %v1463
    %2464 = vmatprep.subr.bf16.mxu0 %v1472
    %2465 = vmatpush1.bf16.msra.mxu0 %v1471
    %2466 = vmatprep.subr.bf16.mxu0 %v1480
    %2467 = vmatpush1.bf16.msra.mxu0 %v1479
    %2468 = vmatprep.subr.bf16.mxu0 %v1488
    %2469 = vmatpush1.bf16.msra.mxu0 %v1487
    %2470 = vmatprep.subr.bf16.mxu0 %v1496
    %2471 = vmatpush1.bf16.msra.mxu0 %v1495
    %2472 = vmatprep.subr.bf16.mxu0 0
    %2473 = vmatpush1.bf16.msra.mxu0 0
    %2474 = vmatprep.subr.bf16.mxu0 0
    %2475 = vmatpush1.bf16.msra.mxu0 0
    %2476 = vmatprep.subr.bf16.mxu0 0
    %2477 = vmatpush1.bf16.msra.mxu0 0
    %2478 = vmatprep.subr.bf16.mxu0 0
    %2479 = vmatpush1.bf16.msra.mxu0 0
    %2480 = vmatprep.subr.bf16.mxu0 0
    %2481 = vmatpush1.bf16.msra.mxu0 0
    %2482 = vmatprep.subr.bf16.mxu0 0
    %2483 = vmatpush1.bf16.msra.mxu0 0
    %2484 = vmatprep.subr.bf16.mxu0 0
    %2485 = vmatpush1.bf16.msra.mxu0 0
    %2486 = vmatprep.subr.bf16.mxu0 0
    %2487 = vmatpush1.bf16.msra.mxu0 0
    %2488 = vmatprep.mubr.bf16.mxu0 0
    %2489 = vmatmul.mubr.bf16.gmra.mrb[0].mxu0 %v2307
    %v2490 = vpop.f32.mrb[0].mxu0
    %v2491 = vpop.f32.mrb[0].mxu0
    %v2492 = vpop.f32.mrb[0].mxu0
    %v2493 = vpop.f32.mrb[0].mxu0
    %2494 = vmatprep.mubr.bf16.mxu0 0
    %2495 = vmatmul.mubr.bf16.gmra.mrb[0].mxu0 %v2308
    %v2496 = vpop.f32.mrb[0].mxu0
    %v2497 = vadd.f32 0.0, %v2496
    %v2498 = vpop.f32.mrb[0].mxu0
    %v2499 = vadd.f32 0.0, %v2498
    %v2500 = vpop.f32.mrb[0].mxu0
    %v2501 = vadd.f32 0.0, %v2500
    %v2502 = vpop.f32.mrb[0].mxu0
    %v2503 = vadd.f32 0.0, %v2502
    %2504 = vdwg.mxu0
    %s2505 = scalar_lea.vmem [#allocation2], 128
    %v2506 = vld [vmem:[%s2505] sm:$0xff]
    %v2507 = vld [vmem:[%s2505 + $0x8] sm:$0xff]
    %v2508 = vld [vmem:[%s2505 + $0x10] sm:$0xff]
    %v2509 = vld [vmem:[%s2505 + $0x18] sm:$0xff]
    %v2510 = vunpack.c.l.bf16 %v2506
    %v2511 = vunpack.c.l.bf16 %v2507
    %v2512 = vunpack.c.l.bf16 %v2508
    %v2513 = vunpack.c.l.bf16 %v2509
    %v2514 = vunpack.c.h.bf16 %v2506
    %v2515 = vunpack.c.h.bf16 %v2507
    %v2516 = vunpack.c.h.bf16 %v2508
    %v2517 = vunpack.c.h.bf16 %v2509
    %v2518 = vadd.f32 %v2344, %v2510
    %v2519 = vadd.f32 %v2346, %v2511
    %v2520 = vadd.f32 %v2393, %v2512
    %v2521 = vadd.f32 %v2395, %v2513
    %v2522 = vadd.f32 %v2348, %v2514
    %v2523 = vadd.f32 %v2350, %v2515
    %v2524 = vadd.f32 %v2397, %v2516
    %v2525 = vadd.f32 %v2399, %v2517
    %s2526 = scalar_lea.vmem [#allocation2], 320
    %v2527 = vld [vmem:[%s2526 + $0x20] sm:$0xff]
    %v2528 = vld [vmem:[%s2526 + $0x28] sm:$0xff]
    %v2529 = vld [vmem:[%s2526 + $0x30] sm:$0xff]
    %v2530 = vld [vmem:[%s2526 + $0x38] sm:$0xff]
    %v2531 = vunpack.c.l.bf16 %v2527
    %v2532 = vunpack.c.l.bf16 %v2528
    %v2533 = vunpack.c.l.bf16 %v2529
    %v2534 = vunpack.c.l.bf16 %v2530
    %v2535 = vunpack.c.h.bf16 %v2527
    %v2536 = vunpack.c.h.bf16 %v2528
    %v2537 = vunpack.c.h.bf16 %v2529
    %v2538 = vunpack.c.h.bf16 %v2530
    %v2539 = vadd.f32 %v2448, %v2531
    %v2540 = vadd.f32 %v2450, %v2532
    %v2541 = vadd.f32 %v2497, %v2533
    %v2542 = vadd.f32 %v2499, %v2534
    %v2543 = vadd.f32 %v2452, %v2535
    %v2544 = vadd.f32 %v2454, %v2536
    %v2545 = vadd.f32 %v2501, %v2537
    %v2546 = vadd.f32 %v2503, %v2538
    %v2547 = vxor.u32 %v2518, 2147483648
    %v2548 = vxor.u32 %v2522, 2147483648
    %v2549 = vmul.f32 %v2547, 1.442695
    %v2550 = vpow.pop %v2549
    %v2551 = vmul.f32 %v2548, 1.442695
    %v2552 = vpow.pop %v2551
    %v2553 = vadd.f32 %v2550, 1.0
    %v2554 = vadd.f32 %v2552, 1.0
    %v2555 = vrcp.pop %v2553
    %v2556 = vmul.f32 1.0, %v2555
    %v2557 = vrcp.pop %v2554
    %v2558 = vmul.f32 1.0, %v2557
    %v2559 = vxor.u32 %v2519, 2147483648
    %v2560 = vxor.u32 %v2523, 2147483648
    %v2561 = vmul.f32 %v2559, 1.442695
    %v2562 = vpow.pop %v2561
    %v2563 = vmul.f32 %v2560, 1.442695
    %v2564 = vpow.pop %v2563
    %v2565 = vadd.f32 %v2562, 1.0
    %v2566 = vadd.f32 %v2564, 1.0
    %v2567 = vrcp.pop %v2565
    %v2568 = vmul.f32 1.0, %v2567
    %v2569 = vrcp.pop %v2566
    %v2570 = vmul.f32 1.0, %v2569
    %v2571 = vtanh.pop %v2520
    %v2572 = vtanh.pop %v2524
    %v2573 = vxor.u32 %v2521, 2147483648
    %v2574 = vxor.u32 %v2525, 2147483648
    %v2575 = vmul.f32 %v2573, 1.442695
    %v2576 = vpow.pop %v2575
    %v2577 = vmul.f32 %v2574, 1.442695
    %v2578 = vpow.pop %v2577
    %v2579 = vadd.f32 %v2576, 1.0
    %v2580 = vadd.f32 %v2578, 1.0
    %v2581 = vrcp.pop %v2579
    %v2582 = vmul.f32 1.0, %v2581
    %v2583 = vrcp.pop %v2580
    %v2584 = vmul.f32 1.0, %v2583
    %v2585 = vmul.f32 %v2568, %v2301
    %v2586 = vmul.f32 %v2570, %v2302
    %v2587 = vmul.f32 %v2556, %v2571
    %v2588 = vmul.f32 %v2558, %v2572
    %v2589 = vadd.f32 %v2585, %v2587
    %v2590 = vadd.f32 %v2586, %v2588
    %v2591 = vtanh.pop %v2589
    %v2592 = vtanh.pop %v2590
    %v2593 = vmul.f32 %v2582, %v2591
    %v2594 = vmul.f32 %v2584, %v2592
    %v2595 = vxor.u32 %v2539, 2147483648
    %v2596 = vxor.u32 %v2543, 2147483648
    %v2597 = vmul.f32 %v2595, 1.442695
    %v2598 = vpow.pop %v2597
    %v2599 = vmul.f32 %v2596, 1.442695
    %v2600 = vpow.pop %v2599
    %v2601 = vadd.f32 %v2598, 1.0
    %v2602 = vadd.f32 %v2600, 1.0
    %v2603 = vrcp.pop %v2601
    %v2604 = vmul.f32 1.0, %v2603
    %v2605 = vrcp.pop %v2602
    %v2606 = vmul.f32 1.0, %v2605
    %v2607 = vxor.u32 %v2540, 2147483648
    %v2608 = vxor.u32 %v2544, 2147483648
    %v2609 = vmul.f32 %v2607, 1.442695
    %v2610 = vpow.pop %v2609
    %v2611 = vmul.f32 %v2608, 1.442695
    %v2612 = vpow.pop %v2611
    %v2613 = vadd.f32 %v2610, 1.0
    %v2614 = vadd.f32 %v2612, 1.0
    %v2615 = vrcp.pop %v2613
    %v2616 = vmul.f32 1.0, %v2615
    %v2617 = vrcp.pop %v2614
    %v2618 = vmul.f32 1.0, %v2617
    %v2619 = vtanh.pop %v2541
    %v2620 = vtanh.pop %v2545
    %v2621 = vxor.u32 %v2542, 2147483648
    %v2622 = vxor.u32 %v2546, 2147483648
    %v2623 = vmul.f32 %v2621, 1.442695
    %v2624 = vpow.pop %v2623
    %v2625 = vmul.f32 %v2622, 1.442695
    %v2626 = vpow.pop %v2625
    %v2627 = vadd.f32 %v2624, 1.0
    %v2628 = vadd.f32 %v2626, 1.0
    %v2629 = vrcp.pop %v2627
    %v2630 = vmul.f32 1.0, %v2629
    %v2631 = vrcp.pop %v2628
    %v2632 = vmul.f32 1.0, %v2631
    %v2633 = vmul.f32 %v2616, %v2305
    %v2634 = vmul.f32 %v2618, %v2306
    %v2635 = vmul.f32 %v2604, %v2619
    %v2636 = vmul.f32 %v2606, %v2620
    %v2637 = vadd.f32 %v2633, %v2635
    %v2638 = vadd.f32 %v2634, %v2636
    %v2639 = vtanh.pop %v2637
    %v2640 = vtanh.pop %v2638
    %v2641 = vmul.f32 %v2630, %v2639
    %v2642 = vmul.f32 %v2632, %v2640
    %vm2643 = vcmp.gt.s32.totalorder %v104, 2
    %vm2644 = vcmp.gt.s32.totalorder %v105, 2
    %vm2645 = vcmp.gt.s32.totalorder %v104, 5
    %vm2646 = vcmp.gt.s32.totalorder %v105, 5
    %v2647 = vsel %vm2643, 1, 0
    %v2648 = vsel %vm2644, 1, 0
    %2649 = vset.pattern.permute.xlu0 0
    %2650 = vperm.xlu0 %2649, %v2647
    %v2651 = vpop.permute.xlu0 %2650
    %2652 = vset.pattern.permute.xlu0 0
    %2653 = vperm.xlu0 %2652, %v2648
    %v2654 = vpop.permute.xlu0 %2653
    %vm2655 = vcmp.eq.s32.totalorder %v2651, 1
    %vm2656 = vcmp.eq.s32.totalorder %v2654, 1
    %v2657 = vsel %vm2655, %v2593, 0.0
    %v2658 = vsel %vm2656, %v2594, 0.0
    %v2659 = vpack.c.bf16 %v2658, %v2657
    %s2660 = scalar_lea.vmem [#allocation3], 16
    %2661 = vst [vmem:[%s2660] sm:$0xff] %v2659
    %v2662 = vsel %vm2645, 1, 0
    %v2663 = vsel %vm2646, 1, 0
    %2664 = vset.pattern.permute.xlu0 0
    %2665 = vperm.xlu0 %2664, %v2662
    %v2666 = vpop.permute.xlu0 %2665
    %2667 = vset.pattern.permute.xlu0 0
    %2668 = vperm.xlu0 %2667, %v2663
    %v2669 = vpop.permute.xlu0 %2668
    %vm2670 = vcmp.eq.s32.totalorder %v2666, 1
    %vm2671 = vcmp.eq.s32.totalorder %v2669, 1
    %v2672 = vsel %vm2670, %v2641, 0.0
    %v2673 = vsel %vm2671, %v2642, 0.0
    %v2674 = vpack.c.bf16 %v2673, %v2672
    %s2675 = scalar_lea.vmem [#allocation4], 40
    %2676 = vst [vmem:[%s2675] sm:$0xff] %v2674
    %v2677 = vsel %vm2655, %v2593, %v2299
    %v2678 = vsel %vm2656, %v2594, %v2300
    %v2679 = vsel %vm2655, %v2589, %v2301
    %v2680 = vsel %vm2656, %v2590, %v2302
    %v2681 = vsel %vm2670, %v2641, %v2303
    %v2682 = vsel %vm2671, %v2642, %v2304
    %v2683 = vsel %vm2670, %v2637, %v2305
    %v2684 = vsel %vm2671, %v2638, %v2306
    %v2685 = vpack.c.bf16 %v2678, %v2677
    %v2686 = vpack.c.bf16 %v2682, %v2681
    %2687 = vmatprep.subr.bf16.mxu0 %v1434
    %2688 = vmatpush1.bf16.msra.mxu0 %v1433
    %2689 = vmatprep.subr.bf16.mxu0 %v1442
    %2690 = vmatpush1.bf16.msra.mxu0 %v1441
    %2691 = vmatprep.subr.bf16.mxu0 %v1450
    %2692 = vmatpush1.bf16.msra.mxu0 %v1449
    %2693 = vmatprep.subr.bf16.mxu0 %v1458
    %2694 = vmatpush1.bf16.msra.mxu0 %v1457
    %2695 = vmatprep.subr.bf16.mxu0 %v1466
    %2696 = vmatpush1.bf16.msra.mxu0 %v1465
    %2697 = vmatprep.subr.bf16.mxu0 %v1474
    %2698 = vmatpush1.bf16.msra.mxu0 %v1473
    %2699 = vmatprep.subr.bf16.mxu0 %v1482
    %2700 = vmatpush1.bf16.msra.mxu0 %v1481
    %2701 = vmatprep.subr.bf16.mxu0 %v1490
    %2702 = vmatpush1.bf16.msra.mxu0 %v1489
    %2703 = vmatprep.subr.bf16.mxu0 0
    %2704 = vmatpush1.bf16.msra.mxu0 0
    %2705 = vmatprep.subr.bf16.mxu0 0
    %2706 = vmatpush1.bf16.msra.mxu0 0
    %2707 = vmatprep.subr.bf16.mxu0 0
    %2708 = vmatpush1.bf16.msra.mxu0 0
    %2709 = vmatprep.subr.bf16.mxu0 0
    %2710 = vmatpush1.bf16.msra.mxu0 0
    %2711 = vmatprep.subr.bf16.mxu0 0
    %2712 = vmatpush1.bf16.msra.mxu0 0
    %2713 = vmatprep.subr.bf16.mxu0 0
    %2714 = vmatpush1.bf16.msra.mxu0 0
    %2715 = vmatprep.subr.bf16.mxu0 0
    %2716 = vmatpush1.bf16.msra.mxu0 0
    %2717 = vmatprep.subr.bf16.mxu0 0
    %2718 = vmatpush1.bf16.msra.mxu0 0
    %2719 = vmatprep.mubr.bf16.mxu0 0
    %2720 = vmatmul.mubr.bf16.gmra.mrb[0].mxu0 %v2685
    %v2721 = vpop.f32.mrb[0].mxu0
    %v2722 = vadd.f32 0.0, %v2721
    %v2723 = vpop.f32.mrb[0].mxu0
    %v2724 = vadd.f32 0.0, %v2723
    %v2725 = vpop.f32.mrb[0].mxu0
    %v2726 = vadd.f32 0.0, %v2725
    %v2727 = vpop.f32.mrb[0].mxu0
    %v2728 = vadd.f32 0.0, %v2727
    %2729 = vmatprep.mubr.bf16.mxu0 0
    %2730 = vmatmul.mubr.bf16.gmra.mrb[0].mxu0 %v2686
    %v2731 = vpop.f32.mrb[0].mxu0
    %v2732 = vpop.f32.mrb[0].mxu0
    %v2733 = vpop.f32.mrb[0].mxu0
    %v2734 = vpop.f32.mrb[0].mxu0
    %2735 = vdwg.mxu0
    %2736 = vmatprep.subr.bf16.mxu0 %v1436
    %2737 = vmatpush1.bf16.msra.mxu0 %v1435
    %2738 = vmatprep.subr.bf16.mxu0 %v1444
    %2739 = vmatpush1.bf16.msra.mxu0 %v1443
    %2740 = vmatprep.subr.bf16.mxu0 %v1452
    %2741 = vmatpush1.bf16.msra.mxu0 %v1451
    %2742 = vmatprep.subr.bf16.mxu0 %v1460
    %2743 = vmatpush1.bf16.msra.mxu0 %v1459
    %2744 = vmatprep.subr.bf16.mxu0 %v1468
    %2745 = vmatpush1.bf16.msra.mxu0 %v1467
    %2746 = vmatprep.subr.bf16.mxu0 %v1476
    %2747 = vmatpush1.bf16.msra.mxu0 %v1475
    %2748 = vmatprep.subr.bf16.mxu0 %v1484
    %2749 = vmatpush1.bf16.msra.mxu0 %v1483
    %2750 = vmatprep.subr.bf16.mxu0 %v1492
    %2751 = vmatpush1.bf16.msra.mxu0 %v1491
    %2752 = vmatprep.subr.bf16.mxu0 0
    %2753 = vmatpush1.bf16.msra.mxu0 0
    %2754 = vmatprep.subr.bf16.mxu0 0
    %2755 = vmatpush1.bf16.msra.mxu0 0
    %2756 = vmatprep.subr.bf16.mxu0 0
    %2757 = vmatpush1.bf16.msra.mxu0 0
    %2758 = vmatprep.subr.bf16.mxu0 0
    %2759 = vmatpush1.bf16.msra.mxu0 0
    %2760 = vmatprep.subr.bf16.mxu0 0
    %2761 = vmatpush1.bf16.msra.mxu0 0
    %2762 = vmatprep.subr.bf16.mxu0 0
    %2763 = vmatpush1.bf16.msra.mxu0 0
    %2764 = vmatprep.subr.bf16.mxu0 0
    %2765 = vmatpush1.bf16.msra.mxu0 0
    %2766 = vmatprep.subr.bf16.mxu0 0
    %2767 = vmatpush1.bf16.msra.mxu0 0
    %2768 = vmatprep.mubr.bf16.mxu0 0
    %2769 = vmatmul.mubr.bf16.gmra.mrb[0].mxu0 %v2685
    %v2770 = vpop.f32.mrb[0].mxu0
    %v2771 = vadd.f32 0.0, %v2770
    %v2772 = vpop.f32.mrb[0].mxu0
    %v2773 = vadd.f32 0.0, %v2772
    %v2774 = vpop.f32.mrb[0].mxu0
    %v2775 = vadd.f32 0.0, %v2774
    %v2776 = vpop.f32.mrb[0].mxu0
    %v2777 = vadd.f32 0.0, %v2776
    %2778 = vmatprep.mubr.bf16.mxu0 0
    %2779 = vmatmul.mubr.bf16.gmra.mrb[0].mxu0 %v2686
    %v2780 = vpop.f32.mrb[0].mxu0
    %v2781 = vpop.f32.mrb[0].mxu0
    %v2782 = vpop.f32.mrb[0].mxu0
    %v2783 = vpop.f32.mrb[0].mxu0
    %2784 = vdwg.mxu0
    %2785 = vmatprep.subr.bf16.mxu0 %v1438
    %2786 = vmatpush1.bf16.msra.mxu0 %v1437
    %2787 = vmatprep.subr.bf16.mxu0 %v1446
    %2788 = vmatpush1.bf16.msra.mxu0 %v1445
    %2789 = vmatprep.subr.bf16.mxu0 %v1454
    %2790 = vmatpush1.bf16.msra.mxu0 %v1453
    %2791 = vmatprep.subr.bf16.mxu0 %v1462
    %2792 = vmatpush1.bf16.msra.mxu0 %v1461
    %2793 = vmatprep.subr.bf16.mxu0 %v1470
    %2794 = vmatpush1.bf16.msra.mxu0 %v1469
    %2795 = vmatprep.subr.bf16.mxu0 %v1478
    %2796 = vmatpush1.bf16.msra.mxu0 %v1477
    %2797 = vmatprep.subr.bf16.mxu0 %v1486
    %2798 = vmatpush1.bf16.msra.mxu0 %v1485
    %2799 = vmatprep.subr.bf16.mxu0 %v1494
    %2800 = vmatpush1.bf16.msra.mxu0 %v1493
    %2801 = vmatprep.subr.bf16.mxu0 0
    %2802 = vmatpush1.bf16.msra.mxu0 0
    %2803 = vmatprep.subr.bf16.mxu0 0
    %2804 = vmatpush1.bf16.msra.mxu0 0
    %2805 = vmatprep.subr.bf16.mxu0 0
    %2806 = vmatpush1.bf16.msra.mxu0 0
    %2807 = vmatprep.subr.bf16.mxu0 0
    %2808 = vmatpush1.bf16.msra.mxu0 0
    %2809 = vmatprep.subr.bf16.mxu0 0
    %2810 = vmatpush1.bf16.msra.mxu0 0
    %2811 = vmatprep.subr.bf16.mxu0 0
    %2812 = vmatpush1.bf16.msra.mxu0 0
    %2813 = vmatprep.subr.bf16.mxu0 0
    %2814 = vmatpush1.bf16.msra.mxu0 0
    %2815 = vmatprep.subr.bf16.mxu0 0
    %2816 = vmatpush1.bf16.msra.mxu0 0
    %2817 = vmatprep.mubr.bf16.mxu0 0
    %2818 = vmatmul.mubr.bf16.gmra.mrb[0].mxu0 %v2685
    %v2819 = vpop.f32.mrb[0].mxu0
    %v2820 = vpop.f32.mrb[0].mxu0
    %v2821 = vpop.f32.mrb[0].mxu0
    %v2822 = vpop.f32.mrb[0].mxu0
    %2823 = vmatprep.mubr.bf16.mxu0 0
    %2824 = vmatmul.mubr.bf16.gmra.mrb[0].mxu0 %v2686
    %v2825 = vpop.f32.mrb[0].mxu0
    %v2826 = vadd.f32 0.0, %v2825
    %v2827 = vpop.f32.mrb[0].mxu0
    %v2828 = vadd.f32 0.0, %v2827
    %v2829 = vpop.f32.mrb[0].mxu0
    %v2830 = vadd.f32 0.0, %v2829
    %v2831 = vpop.f32.mrb[0].mxu0
    %v2832 = vadd.f32 0.0, %v2831
    %2833 = vdwg.mxu0
    %2834 = vmatprep.subr.bf16.mxu0 %v1440
    %2835 = vmatpush1.bf16.msra.mxu0 %v1439
    %2836 = vmatprep.subr.bf16.mxu0 %v1448
    %2837 = vmatpush1.bf16.msra.mxu0 %v1447
    %2838 = vmatprep.subr.bf16.mxu0 %v1456
    %2839 = vmatpush1.bf16.msra.mxu0 %v1455
    %2840 = vmatprep.subr.bf16.mxu0 %v1464
    %2841 = vmatpush1.bf16.msra.mxu0 %v1463
    %2842 = vmatprep.subr.bf16.mxu0 %v1472
    %2843 = vmatpush1.bf16.msra.mxu0 %v1471
    %2844 = vmatprep.subr.bf16.mxu0 %v1480
    %2845 = vmatpush1.bf16.msra.mxu0 %v1479
    %2846 = vmatprep.subr.bf16.mxu0 %v1488
    %2847 = vmatpush1.bf16.msra.mxu0 %v1487
    %2848 = vmatprep.subr.bf16.mxu0 %v1496
    %2849 = vmatpush1.bf16.msra.mxu0 %v1495
    %2850 = vmatprep.subr.bf16.mxu0 0
    %2851 = vmatpush1.bf16.msra.mxu0 0
    %2852 = vmatprep.subr.bf16.mxu0 0
    %2853 = vmatpush1.bf16.msra.mxu0 0
    %2854 = vmatprep.subr.bf16.mxu0 0
    %2855 = vmatpush1.bf16.msra.mxu0 0
    %2856 = vmatprep.subr.bf16.mxu0 0
    %2857 = vmatpush1.bf16.msra.mxu0 0
    %2858 = vmatprep.subr.bf16.mxu0 0
    %2859 = vmatpush1.bf16.msra.mxu0 0
    %2860 = vmatprep.subr.bf16.mxu0 0
    %2861 = vmatpush1.bf16.msra.mxu0 0
    %2862 = vmatprep.subr.bf16.mxu0 0
    %2863 = vmatpush1.bf16.msra.mxu0 0
    %2864 = vmatprep.subr.bf16.mxu0 0
    %2865 = vmatpush1.bf16.msra.mxu0 0
    %2866 = vmatprep.mubr.bf16.mxu0 0
    %2867 = vmatmul.mubr.bf16.gmra.mrb[0].mxu0 %v2685
    %v2868 = vpop.f32.mrb[0].mxu0
    %v2869 = vpop.f32.mrb[0].mxu0
    %v2870 = vpop.f32.mrb[0].mxu0
    %v2871 = vpop.f32.mrb[0].mxu0
    %2872 = vmatprep.mubr.bf16.mxu0 0
    %2873 = vmatmul.mubr.bf16.gmra.mrb[0].mxu0 %v2686
    %v2874 = vpop.f32.mrb[0].mxu0
    %v2875 = vadd.f32 0.0, %v2874
    %v2876 = vpop.f32.mrb[0].mxu0
    %v2877 = vadd.f32 0.0, %v2876
    %v2878 = vpop.f32.mrb[0].mxu0
    %v2879 = vadd.f32 0.0, %v2878
    %v2880 = vpop.f32.mrb[0].mxu0
    %v2881 = vadd.f32 0.0, %v2880
    %2882 = vdwg.mxu0
    %s2883 = scalar_lea.vmem [#allocation2], 192
    %v2884 = vld [vmem:[%s2883] sm:$0xff]
    %v2885 = vld [vmem:[%s2883 + $0x8] sm:$0xff]
    %v2886 = vld [vmem:[%s2883 + $0x10] sm:$0xff]
    %v2887 = vld [vmem:[%s2883 + $0x18] sm:$0xff]
    %v2888 = vunpack.c.l.bf16 %v2884
    %v2889 = vunpack.c.l.bf16 %v2885
    %v2890 = vunpack.c.l.bf16 %v2886
    %v2891 = vunpack.c.l.bf16 %v2887
    %v2892 = vunpack.c.h.bf16 %v2884
    %v2893 = vunpack.c.h.bf16 %v2885
    %v2894 = vunpack.c.h.bf16 %v2886
    %v2895 = vunpack.c.h.bf16 %v2887
    %v2896 = vadd.f32 %v2722, %v2888
    %v2897 = vadd.f32 %v2724, %v2889
    %v2898 = vadd.f32 %v2771, %v2890
    %v2899 = vadd.f32 %v2773, %v2891
    %v2900 = vadd.f32 %v2726, %v2892
    %v2901 = vadd.f32 %v2728, %v2893
    %v2902 = vadd.f32 %v2775, %v2894
    %v2903 = vadd.f32 %v2777, %v2895
    %s2904 = scalar_lea.vmem [#allocation2], 256
    %v2905 = vld [vmem:[%s2904 + $0x20] sm:$0xff]
    %v2906 = vld [vmem:[%s2904 + $0x28] sm:$0xff]
    %v2907 = vld [vmem:[%s2904 + $0x30] sm:$0xff]
    %v2908 = vld [vmem:[%s2904 + $0x38] sm:$0xff]
    %v2909 = vunpack.c.l.bf16 %v2905
    %v2910 = vunpack.c.l.bf16 %v2906
    %v2911 = vunpack.c.l.bf16 %v2907
    %v2912 = vunpack.c.l.bf16 %v2908
    %v2913 = vunpack.c.h.bf16 %v2905
    %v2914 = vunpack.c.h.bf16 %v2906
    %v2915 = vunpack.c.h.bf16 %v2907
    %v2916 = vunpack.c.h.bf16 %v2908
    %v2917 = vadd.f32 %v2826, %v2909
    %v2918 = vadd.f32 %v2828, %v2910
    %v2919 = vadd.f32 %v2875, %v2911
    %v2920 = vadd.f32 %v2877, %v2912
    %v2921 = vadd.f32 %v2830, %v2913
    %v2922 = vadd.f32 %v2832, %v2914
    %v2923 = vadd.f32 %v2879, %v2915
    %v2924 = vadd.f32 %v2881, %v2916
    %v2925 = vxor.u32 %v2896, 2147483648
    %v2926 = vxor.u32 %v2900, 2147483648
    %v2927 = vmul.f32 %v2925, 1.442695
    %v2928 = vpow.pop %v2927
    %v2929 = vmul.f32 %v2926, 1.442695
    %v2930 = vpow.pop %v2929
    %v2931 = vadd.f32 %v2928, 1.0
    %v2932 = vadd.f32 %v2930, 1.0
    %v2933 = vrcp.pop %v2931
    %v2934 = vmul.f32 1.0, %v2933
    %v2935 = vrcp.pop %v2932
    %v2936 = vmul.f32 1.0, %v2935
    %v2937 = vxor.u32 %v2897, 2147483648
    %v2938 = vxor.u32 %v2901, 2147483648
    %v2939 = vmul.f32 %v2937, 1.442695
    %v2940 = vpow.pop %v2939
    %v2941 = vmul.f32 %v2938, 1.442695
    %v2942 = vpow.pop %v2941
    %v2943 = vadd.f32 %v2940, 1.0
    %v2944 = vadd.f32 %v2942, 1.0
    %v2945 = vrcp.pop %v2943
    %v2946 = vmul.f32 1.0, %v2945
    %v2947 = vrcp.pop %v2944
    %v2948 = vmul.f32 1.0, %v2947
    %v2949 = vtanh.pop %v2898
    %v2950 = vtanh.pop %v2902
    %v2951 = vxor.u32 %v2899, 2147483648
    %v2952 = vxor.u32 %v2903, 2147483648
    %v2953 = vmul.f32 %v2951, 1.442695
    %v2954 = vpow.pop %v2953
    %v2955 = vmul.f32 %v2952, 1.442695
    %v2956 = vpow.pop %v2955
    %v2957 = vadd.f32 %v2954, 1.0
    %v2958 = vadd.f32 %v2956, 1.0
    %v2959 = vrcp.pop %v2957
    %v2960 = vmul.f32 1.0, %v2959
    %v2961 = vrcp.pop %v2958
    %v2962 = vmul.f32 1.0, %v2961
    %v2963 = vmul.f32 %v2946, %v2679
    %v2964 = vmul.f32 %v2948, %v2680
    %v2965 = vmul.f32 %v2934, %v2949
    %v2966 = vmul.f32 %v2936, %v2950
    %v2967 = vadd.f32 %v2963, %v2965
    %v2968 = vadd.f32 %v2964, %v2966
    %v2969 = vtanh.pop %v2967
    %v2970 = vtanh.pop %v2968
    %v2971 = vmul.f32 %v2960, %v2969
    %v2972 = vmul.f32 %v2962, %v2970
    %v2973 = vxor.u32 %v2917, 2147483648
    %v2974 = vxor.u32 %v2921, 2147483648
    %v2975 = vmul.f32 %v2973, 1.442695
    %v2976 = vpow.pop %v2975
    %v2977 = vmul.f32 %v2974, 1.442695
    %v2978 = vpow.pop %v2977
    %v2979 = vadd.f32 %v2976, 1.0
    %v2980 = vadd.f32 %v2978, 1.0
    %v2981 = vrcp.pop %v2979
    %v2982 = vmul.f32 1.0, %v2981
    %v2983 = vrcp.pop %v2980
    %v2984 = vmul.f32 1.0, %v2983
    %v2985 = vxor.u32 %v2918, 2147483648
    %v2986 = vxor.u32 %v2922, 2147483648
    %v2987 = vmul.f32 %v2985, 1.442695
    %v2988 = vpow.pop %v2987
    %v2989 = vmul.f32 %v2986, 1.442695
    %v2990 = vpow.pop %v2989
    %v2991 = vadd.f32 %v2988, 1.0
    %v2992 = vadd.f32 %v2990, 1.0
    %v2993 = vrcp.pop %v2991
    %v2994 = vmul.f32 1.0, %v2993
    %v2995 = vrcp.pop %v2992
    %v2996 = vmul.f32 1.0, %v2995
    %v2997 = vtanh.pop %v2919
    %v2998 = vtanh.pop %v2923
    %v2999 = vxor.u32 %v2920, 2147483648
    %v3000 = vxor.u32 %v2924, 2147483648
    %v3001 = vmul.f32 %v2999, 1.442695
    %v3002 = vpow.pop %v3001
    %v3003 = vmul.f32 %v3000, 1.442695
    %v3004 = vpow.pop %v3003
    %v3005 = vadd.f32 %v3002, 1.0
    %v3006 = vadd.f32 %v3004, 1.0
    %v3007 = vrcp.pop %v3005
    %v3008 = vmul.f32 1.0, %v3007
    %v3009 = vrcp.pop %v3006
    %v3010 = vmul.f32 1.0, %v3009
    %v3011 = vmul.f32 %v2994, %v2683
    %v3012 = vmul.f32 %v2996, %v2684
    %v3013 = vmul.f32 %v2982, %v2997
    %v3014 = vmul.f32 %v2984, %v2998
    %v3015 = vadd.f32 %v3011, %v3013
    %v3016 = vadd.f32 %v3012, %v3014
    %v3017 = vtanh.pop %v3015
    %v3018 = vtanh.pop %v3016
    %v3019 = vmul.f32 %v3008, %v3017
    %v3020 = vmul.f32 %v3010, %v3018
    %vm3021 = vcmp.gt.s32.totalorder %v104, 3
    %vm3022 = vcmp.gt.s32.totalorder %v105, 3
    %vm3023 = vcmp.gt.s32.totalorder %v104, 4
    %vm3024 = vcmp.gt.s32.totalorder %v105, 4
    %v3025 = vsel %vm3021, 1, 0
    %v3026 = vsel %vm3022, 1, 0
    %3027 = vset.pattern.permute.xlu0 0
    %3028 = vperm.xlu0 %3027, %v3025
    %v3029 = vpop.permute.xlu0 %3028
    %3030 = vset.pattern.permute.xlu0 0
    %3031 = vperm.xlu0 %3030, %v3026
    %v3032 = vpop.permute.xlu0 %3031
    %vm3033 = vcmp.eq.s32.totalorder %v3029, 1
    %vm3034 = vcmp.eq.s32.totalorder %v3032, 1
    %v3035 = vsel %vm3033, %v2971, 0.0
    %v3036 = vsel %vm3034, %v2972, 0.0
    %v3037 = vpack.c.bf16 %v3036, %v3035
    %s3038 = scalar_lea.vmem [#allocation3], 24
    %3039 = vst [vmem:[%s3038] sm:$0xff] %v3037
    %v3040 = vsel %vm3023, 1, 0
    %v3041 = vsel %vm3024, 1, 0
    %3042 = vset.pattern.permute.xlu0 0
    %3043 = vperm.xlu0 %3042, %v3040
    %v3044 = vpop.permute.xlu0 %3043
    %3045 = vset.pattern.permute.xlu0 0
    %3046 = vperm.xlu0 %3045, %v3041
    %v3047 = vpop.permute.xlu0 %3046
    %vm3048 = vcmp.eq.s32.totalorder %v3044, 1
    %vm3049 = vcmp.eq.s32.totalorder %v3047, 1
    %v3050 = vsel %vm3048, %v3019, 0.0
    %v3051 = vsel %vm3049, %v3020, 0.0
    %v3052 = vpack.c.bf16 %v3051, %v3050
    %s3053 = scalar_lea.vmem [#allocation4], 32
    %3054 = vst [vmem:[%s3053] sm:$0xff] %v3052
    %v3055 = vsel %vm3033, %v2971, %v2677
    %v3056 = vsel %vm3034, %v2972, %v2678
    %v3057 = vsel %vm3033, %v2967, %v2679
    %v3058 = vsel %vm3034, %v2968, %v2680
    %v3059 = vsel %vm3048, %v3019, %v2681
    %v3060 = vsel %vm3049, %v3020, %v2682
    %v3061 = vsel %vm3048, %v3015, %v2683
    %v3062 = vsel %vm3049, %v3016, %v2684
    %v3063 = vpack.c.bf16 %v3056, %v3055
    %v3064 = vpack.c.bf16 %v3060, %v3059
    %3065 = vmatprep.subr.bf16.mxu0 %v1434
    %3066 = vmatpush1.bf16.msra.mxu0 %v1433
    %3067 = vmatprep.subr.bf16.mxu0 %v1442
    %3068 = vmatpush1.bf16.msra.mxu0 %v1441
    %3069 = vmatprep.subr.bf16.mxu0 %v1450
    %3070 = vmatpush1.bf16.msra.mxu0 %v1449
    %3071 = vmatprep.subr.bf16.mxu0 %v1458
    %3072 = vmatpush1.bf16.msra.mxu0 %v1457
    %3073 = vmatprep.subr.bf16.mxu0 %v1466
    %3074 = vmatpush1.bf16.msra.mxu0 %v1465
    %3075 = vmatprep.subr.bf16.mxu0 %v1474
    %3076 = vmatpush1.bf16.msra.mxu0 %v1473
    %3077 = vmatprep.subr.bf16.mxu0 %v1482
    %3078 = vmatpush1.bf16.msra.mxu0 %v1481
    %3079 = vmatprep.subr.bf16.mxu0 %v1490
    %3080 = vmatpush1.bf16.msra.mxu0 %v1489
    %3081 = vmatprep.subr.bf16.mxu0 0
    %3082 = vmatpush1.bf16.msra.mxu0 0
    %3083 = vmatprep.subr.bf16.mxu0 0
    %3084 = vmatpush1.bf16.msra.mxu0 0
    %3085 = vmatprep.subr.bf16.mxu0 0
    %3086 = vmatpush1.bf16.msra.mxu0 0
    %3087 = vmatprep.subr.bf16.mxu0 0
    %3088 = vmatpush1.bf16.msra.mxu0 0
    %3089 = vmatprep.subr.bf16.mxu0 0
    %3090 = vmatpush1.bf16.msra.mxu0 0
    %3091 = vmatprep.subr.bf16.mxu0 0
    %3092 = vmatpush1.bf16.msra.mxu0 0
    %3093 = vmatprep.subr.bf16.mxu0 0
    %3094 = vmatpush1.bf16.msra.mxu0 0
    %3095 = vmatprep.subr.bf16.mxu0 0
    %3096 = vmatpush1.bf16.msra.mxu0 0
    %3097 = vmatprep.mubr.bf16.mxu0 0
    %3098 = vmatmul.mubr.bf16.gmra.mrb[0].mxu0 %v3063
    %v3099 = vpop.f32.mrb[0].mxu0
    %v3100 = vadd.f32 0.0, %v3099
    %v3101 = vpop.f32.mrb[0].mxu0
    %v3102 = vadd.f32 0.0, %v3101
    %v3103 = vpop.f32.mrb[0].mxu0
    %v3104 = vadd.f32 0.0, %v3103
    %v3105 = vpop.f32.mrb[0].mxu0
    %v3106 = vadd.f32 0.0, %v3105
    %3107 = vmatprep.mubr.bf16.mxu0 0
    %3108 = vmatmul.mubr.bf16.gmra.mrb[0].mxu0 %v3064
    %v3109 = vpop.f32.mrb[0].mxu0
    %v3110 = vpop.f32.mrb[0].mxu0
    %v3111 = vpop.f32.mrb[0].mxu0
    %v3112 = vpop.f32.mrb[0].mxu0
    %3113 = vdwg.mxu0
    %3114 = vmatprep.subr.bf16.mxu0 %v1436
    %3115 = vmatpush1.bf16.msra.mxu0 %v1435
    %3116 = vmatprep.subr.bf16.mxu0 %v1444
    %3117 = vmatpush1.bf16.msra.mxu0 %v1443
    %3118 = vmatprep.subr.bf16.mxu0 %v1452
    %3119 = vmatpush1.bf16.msra.mxu0 %v1451
    %3120 = vmatprep.subr.bf16.mxu0 %v1460
    %3121 = vmatpush1.bf16.msra.mxu0 %v1459
    %3122 = vmatprep.subr.bf16.mxu0 %v1468
    %3123 = vmatpush1.bf16.msra.mxu0 %v1467
    %3124 = vmatprep.subr.bf16.mxu0 %v1476
    %3125 = vmatpush1.bf16.msra.mxu0 %v1475
    %3126 = vmatprep.subr.bf16.mxu0 %v1484
    %3127 = vmatpush1.bf16.msra.mxu0 %v1483
    %3128 = vmatprep.subr.bf16.mxu0 %v1492
    %3129 = vmatpush1.bf16.msra.mxu0 %v1491
    %3130 = vmatprep.subr.bf16.mxu0 0
    %3131 = vmatpush1.bf16.msra.mxu0 0
    %3132 = vmatprep.subr.bf16.mxu0 0
    %3133 = vmatpush1.bf16.msra.mxu0 0
    %3134 = vmatprep.subr.bf16.mxu0 0
    %3135 = vmatpush1.bf16.msra.mxu0 0
    %3136 = vmatprep.subr.bf16.mxu0 0
    %3137 = vmatpush1.bf16.msra.mxu0 0
    %3138 = vmatprep.subr.bf16.mxu0 0
    %3139 = vmatpush1.bf16.msra.mxu0 0
    %3140 = vmatprep.subr.bf16.mxu0 0
    %3141 = vmatpush1.bf16.msra.mxu0 0
    %3142 = vmatprep.subr.bf16.mxu0 0
    %3143 = vmatpush1.bf16.msra.mxu0 0
    %3144 = vmatprep.subr.bf16.mxu0 0
    %3145 = vmatpush1.bf16.msra.mxu0 0
    %3146 = vmatprep.mubr.bf16.mxu0 0
    %3147 = vmatmul.mubr.bf16.gmra.mrb[0].mxu0 %v3063
    %v3148 = vpop.f32.mrb[0].mxu0
    %v3149 = vadd.f32 0.0, %v3148
    %v3150 = vpop.f32.mrb[0].mxu0
    %v3151 = vadd.f32 0.0, %v3150
    %v3152 = vpop.f32.mrb[0].mxu0
    %v3153 = vadd.f32 0.0, %v3152
    %v3154 = vpop.f32.mrb[0].mxu0
    %v3155 = vadd.f32 0.0, %v3154
    %3156 = vmatprep.mubr.bf16.mxu0 0
    %3157 = vmatmul.mubr.bf16.gmra.mrb[0].mxu0 %v3064
    %v3158 = vpop.f32.mrb[0].mxu0
    %v3159 = vpop.f32.mrb[0].mxu0
    %v3160 = vpop.f32.mrb[0].mxu0
    %v3161 = vpop.f32.mrb[0].mxu0
    %3162 = vdwg.mxu0
    %3163 = vmatprep.subr.bf16.mxu0 %v1438
    %3164 = vmatpush1.bf16.msra.mxu0 %v1437
    %3165 = vmatprep.subr.bf16.mxu0 %v1446
    %3166 = vmatpush1.bf16.msra.mxu0 %v1445
    %3167 = vmatprep.subr.bf16.mxu0 %v1454
    %3168 = vmatpush1.bf16.msra.mxu0 %v1453
    %3169 = vmatprep.subr.bf16.mxu0 %v1462
    %3170 = vmatpush1.bf16.msra.mxu0 %v1461
    %3171 = vmatprep.subr.bf16.mxu0 %v1470
    %3172 = vmatpush1.bf16.msra.mxu0 %v1469
    %3173 = vmatprep.subr.bf16.mxu0 %v1478
    %3174 = vmatpush1.bf16.msra.mxu0 %v1477
    %3175 = vmatprep.subr.bf16.mxu0 %v1486
    %3176 = vmatpush1.bf16.msra.mxu0 %v1485
    %3177 = vmatprep.subr.bf16.mxu0 %v1494
    %3178 = vmatpush1.bf16.msra.mxu0 %v1493
    %3179 = vmatprep.subr.bf16.mxu0 0
    %3180 = vmatpush1.bf16.msra.mxu0 0
    %3181 = vmatprep.subr.bf16.mxu0 0
    %3182 = vmatpush1.bf16.msra.mxu0 0
    %3183 = vmatprep.subr.bf16.mxu0 0
    %3184 = vmatpush1.bf16.msra.mxu0 0
    %3185 = vmatprep.subr.bf16.mxu0 0
    %3186 = vmatpush1.bf16.msra.mxu0 0
    %3187 = vmatprep.subr.bf16.mxu0 0
    %3188 = vmatpush1.bf16.msra.mxu0 0
    %3189 = vmatprep.subr.bf16.mxu0 0
    %3190 = vmatpush1.bf16.msra.mxu0 0
    %3191 = vmatprep.subr.bf16.mxu0 0
    %3192 = vmatpush1.bf16.msra.mxu0 0
    %3193 = vmatprep.subr.bf16.mxu0 0
    %3194 = vmatpush1.bf16.msra.mxu0 0
    %3195 = vmatprep.mubr.bf16.mxu0 0
    %3196 = vmatmul.mubr.bf16.gmra.mrb[0].mxu0 %v3063
    %v3197 = vpop.f32.mrb[0].mxu0
    %v3198 = vpop.f32.mrb[0].mxu0
    %v3199 = vpop.f32.mrb[0].mxu0
    %v3200 = vpop.f32.mrb[0].mxu0
    %3201 = vmatprep.mubr.bf16.mxu0 0
    %3202 = vmatmul.mubr.bf16.gmra.mrb[0].mxu0 %v3064
    %v3203 = vpop.f32.mrb[0].mxu0
    %v3204 = vadd.f32 0.0, %v3203
    %v3205 = vpop.f32.mrb[0].mxu0
    %v3206 = vadd.f32 0.0, %v3205
    %v3207 = vpop.f32.mrb[0].mxu0
    %v3208 = vadd.f32 0.0, %v3207
    %v3209 = vpop.f32.mrb[0].mxu0
    %v3210 = vadd.f32 0.0, %v3209
    %3211 = vdwg.mxu0
    %3212 = vmatprep.subr.bf16.mxu0 %v1440
    %3213 = vmatpush1.bf16.msra.mxu0 %v1439
    %3214 = vmatprep.subr.bf16.mxu0 %v1448
    %3215 = vmatpush1.bf16.msra.mxu0 %v1447
    %3216 = vmatprep.subr.bf16.mxu0 %v1456
    %3217 = vmatpush1.bf16.msra.mxu0 %v1455
    %3218 = vmatprep.subr.bf16.mxu0 %v1464
    %3219 = vmatpush1.bf16.msra.mxu0 %v1463
    %3220 = vmatprep.subr.bf16.mxu0 %v1472
    %3221 = vmatpush1.bf16.msra.mxu0 %v1471
    %3222 = vmatprep.subr.bf16.mxu0 %v1480
    %3223 = vmatpush1.bf16.msra.mxu0 %v1479
    %3224 = vmatprep.subr.bf16.mxu0 %v1488
    %3225 = vmatpush1.bf16.msra.mxu0 %v1487
    %3226 = vmatprep.subr.bf16.mxu0 %v1496
    %3227 = vmatpush1.bf16.msra.mxu0 %v1495
    %3228 = vmatprep.subr.bf16.mxu0 0
    %3229 = vmatpush1.bf16.msra.mxu0 0
    %3230 = vmatprep.subr.bf16.mxu0 0
    %3231 = vmatpush1.bf16.msra.mxu0 0
    %3232 = vmatprep.subr.bf16.mxu0 0
    %3233 = vmatpush1.bf16.msra.mxu0 0
    %3234 = vmatprep.subr.bf16.mxu0 0
    %3235 = vmatpush1.bf16.msra.mxu0 0
    %3236 = vmatprep.subr.bf16.mxu0 0
    %3237 = vmatpush1.bf16.msra.mxu0 0
    %3238 = vmatprep.subr.bf16.mxu0 0
    %3239 = vmatpush1.bf16.msra.mxu0 0
    %3240 = vmatprep.subr.bf16.mxu0 0
    %3241 = vmatpush1.bf16.msra.mxu0 0
    %3242 = vmatprep.subr.bf16.mxu0 0
    %3243 = vmatpush1.bf16.msra.mxu0 0
    %3244 = vmatprep.mubr.bf16.mxu0 0
    %3245 = vmatmul.mubr.bf16.gmra.mrb[0].mxu0 %v3063
    %v3246 = vpop.f32.mrb[0].mxu0
    %v3247 = vpop.f32.mrb[0].mxu0
    %v3248 = vpop.f32.mrb[0].mxu0
    %v3249 = vpop.f32.mrb[0].mxu0
    %3250 = vmatprep.mubr.bf16.mxu0 0
    %3251 = vmatmul.mubr.bf16.gmra.mrb[0].mxu0 %v3064
    %v3252 = vpop.f32.mrb[0].mxu0
    %v3253 = vadd.f32 0.0, %v3252
    %v3254 = vpop.f32.mrb[0].mxu0
    %v3255 = vadd.f32 0.0, %v3254
    %v3256 = vpop.f32.mrb[0].mxu0
    %v3257 = vadd.f32 0.0, %v3256
    %v3258 = vpop.f32.mrb[0].mxu0
    %v3259 = vadd.f32 0.0, %v3258
    %3260 = vdwg.mxu0
    %v3261 = vld [vmem:[%s2904] sm:$0xff]
    %v3262 = vld [vmem:[%s2904 + $0x8] sm:$0xff]
    %v3263 = vld [vmem:[%s2904 + $0x10] sm:$0xff]
    %v3264 = vld [vmem:[%s2904 + $0x18] sm:$0xff]
    %v3265 = vunpack.c.l.bf16 %v3261
    %v3266 = vunpack.c.l.bf16 %v3262
    %v3267 = vunpack.c.l.bf16 %v3263
    %v3268 = vunpack.c.l.bf16 %v3264
    %v3269 = vunpack.c.h.bf16 %v3261
    %v3270 = vunpack.c.h.bf16 %v3262
    %v3271 = vunpack.c.h.bf16 %v3263
    %v3272 = vunpack.c.h.bf16 %v3264
    %v3273 = vadd.f32 %v3100, %v3265
    %v3274 = vadd.f32 %v3102, %v3266
    %v3275 = vadd.f32 %v3149, %v3267
    %v3276 = vadd.f32 %v3151, %v3268
    %v3277 = vadd.f32 %v3104, %v3269
    %v3278 = vadd.f32 %v3106, %v3270
    %v3279 = vadd.f32 %v3153, %v3271
    %v3280 = vadd.f32 %v3155, %v3272
    %v3281 = vld [vmem:[%s2883 + $0x20] sm:$0xff]
    %v3282 = vld [vmem:[%s2883 + $0x28] sm:$0xff]
    %v3283 = vld [vmem:[%s2883 + $0x30] sm:$0xff]
    %v3284 = vld [vmem:[%s2883 + $0x38] sm:$0xff]
    %v3285 = vunpack.c.l.bf16 %v3281
    %v3286 = vunpack.c.l.bf16 %v3282
    %v3287 = vunpack.c.l.bf16 %v3283
    %v3288 = vunpack.c.l.bf16 %v3284
    %v3289 = vunpack.c.h.bf16 %v3281
    %v3290 = vunpack.c.h.bf16 %v3282
    %v3291 = vunpack.c.h.bf16 %v3283
    %v3292 = vunpack.c.h.bf16 %v3284
    %v3293 = vadd.f32 %v3204, %v3285
    %v3294 = vadd.f32 %v3206, %v3286
    %v3295 = vadd.f32 %v3253, %v3287
    %v3296 = vadd.f32 %v3255, %v3288
    %v3297 = vadd.f32 %v3208, %v3289
    %v3298 = vadd.f32 %v3210, %v3290
    %v3299 = vadd.f32 %v3257, %v3291
    %v3300 = vadd.f32 %v3259, %v3292
    %v3301 = vxor.u32 %v3273, 2147483648
    %v3302 = vxor.u32 %v3277, 2147483648
    %v3303 = vmul.f32 %v3301, 1.442695
    %v3304 = vpow.pop %v3303
    %v3305 = vmul.f32 %v3302, 1.442695
    %v3306 = vpow.pop %v3305
    %v3307 = vadd.f32 %v3304, 1.0
    %v3308 = vadd.f32 %v3306, 1.0
    %v3309 = vrcp.pop %v3307
    %v3310 = vmul.f32 1.0, %v3309
    %v3311 = vrcp.pop %v3308
    %v3312 = vmul.f32 1.0, %v3311
    %v3313 = vxor.u32 %v3274, 2147483648
    %v3314 = vxor.u32 %v3278, 2147483648
    %v3315 = vmul.f32 %v3313, 1.442695
    %v3316 = vpow.pop %v3315
    %v3317 = vmul.f32 %v3314, 1.442695
    %v3318 = vpow.pop %v3317
    %v3319 = vadd.f32 %v3316, 1.0
    %v3320 = vadd.f32 %v3318, 1.0
    %v3321 = vrcp.pop %v3319
    %v3322 = vmul.f32 1.0, %v3321
    %v3323 = vrcp.pop %v3320
    %v3324 = vmul.f32 1.0, %v3323
    %v3325 = vtanh.pop %v3275
    %v3326 = vtanh.pop %v3279
    %v3327 = vxor.u32 %v3276, 2147483648
    %v3328 = vxor.u32 %v3280, 2147483648
    %v3329 = vmul.f32 %v3327, 1.442695
    %v3330 = vpow.pop %v3329
    %v3331 = vmul.f32 %v3328, 1.442695
    %v3332 = vpow.pop %v3331
    %v3333 = vadd.f32 %v3330, 1.0
    %v3334 = vadd.f32 %v3332, 1.0
    %v3335 = vrcp.pop %v3333
    %v3336 = vmul.f32 1.0, %v3335
    %v3337 = vrcp.pop %v3334
    %v3338 = vmul.f32 1.0, %v3337
    %v3339 = vmul.f32 %v3322, %v3057
    %v3340 = vmul.f32 %v3324, %v3058
    %v3341 = vmul.f32 %v3310, %v3325
    %v3342 = vmul.f32 %v3312, %v3326
    %v3343 = vadd.f32 %v3339, %v3341
    %v3344 = vadd.f32 %v3340, %v3342
    %v3345 = vtanh.pop %v3343
    %v3346 = vtanh.pop %v3344
    %v3347 = vmul.f32 %v3336, %v3345
    %v3348 = vmul.f32 %v3338, %v3346
    %v3349 = vxor.u32 %v3293, 2147483648
    %v3350 = vxor.u32 %v3297, 2147483648
    %v3351 = vmul.f32 %v3349, 1.442695
    %v3352 = vpow.pop %v3351
    %v3353 = vmul.f32 %v3350, 1.442695
    %v3354 = vpow.pop %v3353
    %v3355 = vadd.f32 %v3352, 1.0
    %v3356 = vadd.f32 %v3354, 1.0
    %v3357 = vrcp.pop %v3355
    %v3358 = vmul.f32 1.0, %v3357
    %v3359 = vrcp.pop %v3356
    %v3360 = vmul.f32 1.0, %v3359
    %v3361 = vxor.u32 %v3294, 2147483648
    %v3362 = vxor.u32 %v3298, 2147483648
    %v3363 = vmul.f32 %v3361, 1.442695
    %v3364 = vpow.pop %v3363
    %v3365 = vmul.f32 %v3362, 1.442695
    %v3366 = vpow.pop %v3365
    %v3367 = vadd.f32 %v3364, 1.0
    %v3368 = vadd.f32 %v3366, 1.0
    %v3369 = vrcp.pop %v3367
    %v3370 = vmul.f32 1.0, %v3369
    %v3371 = vrcp.pop %v3368
    %v3372 = vmul.f32 1.0, %v3371
    %v3373 = vtanh.pop %v3295
    %v3374 = vtanh.pop %v3299
    %v3375 = vxor.u32 %v3296, 2147483648
    %v3376 = vxor.u32 %v3300, 2147483648
    %v3377 = vmul.f32 %v3375, 1.442695
    %v3378 = vpow.pop %v3377
    %v3379 = vmul.f32 %v3376, 1.442695
    %v3380 = vpow.pop %v3379
    %v3381 = vadd.f32 %v3378, 1.0
    %v3382 = vadd.f32 %v3380, 1.0
    %v3383 = vrcp.pop %v3381
    %v3384 = vmul.f32 1.0, %v3383
    %v3385 = vrcp.pop %v3382
    %v3386 = vmul.f32 1.0, %v3385
    %v3387 = vmul.f32 %v3370, %v3061
    %v3388 = vmul.f32 %v3372, %v3062
    %v3389 = vmul.f32 %v3358, %v3373
    %v3390 = vmul.f32 %v3360, %v3374
    %v3391 = vadd.f32 %v3387, %v3389
    %v3392 = vadd.f32 %v3388, %v3390
    %v3393 = vtanh.pop %v3391
    %v3394 = vtanh.pop %v3392
    %v3395 = vmul.f32 %v3384, %v3393
    %v3396 = vmul.f32 %v3386, %v3394
    %v3397 = vsel %vm3048, %v3347, 0.0
    %v3398 = vsel %vm3049, %v3348, 0.0
    %v3399 = vpack.c.bf16 %v3398, %v3397
    %s3400 = scalar_lea.vmem [#allocation3], 32
    %3401 = vst [vmem:[%s3400] sm:$0xff] %v3399
    %v3402 = vsel %vm3033, %v3395, 0.0
    %v3403 = vsel %vm3034, %v3396, 0.0
    %v3404 = vpack.c.bf16 %v3403, %v3402
    %s3405 = scalar_lea.vmem [#allocation4], 24
    %3406 = vst [vmem:[%s3405] sm:$0xff] %v3404
    %v3407 = vsel %vm3048, %v3347, %v3055
    %v3408 = vsel %vm3049, %v3348, %v3056
    %v3409 = vsel %vm3048, %v3343, %v3057
    %v3410 = vsel %vm3049, %v3344, %v3058
    %v3411 = vsel %vm3033, %v3395, %v3059
    %v3412 = vsel %vm3034, %v3396, %v3060
    %v3413 = vsel %vm3033, %v3391, %v3061
    %v3414 = vsel %vm3034, %v3392, %v3062
    %v3415 = vpack.c.bf16 %v3408, %v3407
    %v3416 = vpack.c.bf16 %v3412, %v3411
    %3417 = vmatprep.subr.bf16.mxu0 %v1434
    %3418 = vmatpush1.bf16.msra.mxu0 %v1433
    %3419 = vmatprep.subr.bf16.mxu0 %v1442
    %3420 = vmatpush1.bf16.msra.mxu0 %v1441
    %3421 = vmatprep.subr.bf16.mxu0 %v1450
    %3422 = vmatpush1.bf16.msra.mxu0 %v1449
    %3423 = vmatprep.subr.bf16.mxu0 %v1458
    %3424 = vmatpush1.bf16.msra.mxu0 %v1457
    %3425 = vmatprep.subr.bf16.mxu0 %v1466
    %3426 = vmatpush1.bf16.msra.mxu0 %v1465
    %3427 = vmatprep.subr.bf16.mxu0 %v1474
    %3428 = vmatpush1.bf16.msra.mxu0 %v1473
    %3429 = vmatprep.subr.bf16.mxu0 %v1482
    %3430 = vmatpush1.bf16.msra.mxu0 %v1481
    %3431 = vmatprep.subr.bf16.mxu0 %v1490
    %3432 = vmatpush1.bf16.msra.mxu0 %v1489
    %3433 = vmatprep.subr.bf16.mxu0 0
    %3434 = vmatpush1.bf16.msra.mxu0 0
    %3435 = vmatprep.subr.bf16.mxu0 0
    %3436 = vmatpush1.bf16.msra.mxu0 0
    %3437 = vmatprep.subr.bf16.mxu0 0
    %3438 = vmatpush1.bf16.msra.mxu0 0
    %3439 = vmatprep.subr.bf16.mxu0 0
    %3440 = vmatpush1.bf16.msra.mxu0 0
    %3441 = vmatprep.subr.bf16.mxu0 0
    %3442 = vmatpush1.bf16.msra.mxu0 0
    %3443 = vmatprep.subr.bf16.mxu0 0
    %3444 = vmatpush1.bf16.msra.mxu0 0
    %3445 = vmatprep.subr.bf16.mxu0 0
    %3446 = vmatpush1.bf16.msra.mxu0 0
    %3447 = vmatprep.subr.bf16.mxu0 0
    %3448 = vmatpush1.bf16.msra.mxu0 0
    %3449 = vmatprep.mubr.bf16.mxu0 0
    %3450 = vmatmul.mubr.bf16.gmra.mrb[0].mxu0 %v3415
    %v3451 = vpop.f32.mrb[0].mxu0
    %v3452 = vadd.f32 0.0, %v3451
    %v3453 = vpop.f32.mrb[0].mxu0
    %v3454 = vadd.f32 0.0, %v3453
    %v3455 = vpop.f32.mrb[0].mxu0
    %v3456 = vadd.f32 0.0, %v3455
    %v3457 = vpop.f32.mrb[0].mxu0
    %v3458 = vadd.f32 0.0, %v3457
    %3459 = vmatprep.mubr.bf16.mxu0 0
    %3460 = vmatmul.mubr.bf16.gmra.mrb[0].mxu0 %v3416
    %v3461 = vpop.f32.mrb[0].mxu0
    %v3462 = vpop.f32.mrb[0].mxu0
    %v3463 = vpop.f32.mrb[0].mxu0
    %v3464 = vpop.f32.mrb[0].mxu0
    %3465 = vdwg.mxu0
    %3466 = vmatprep.subr.bf16.mxu0 %v1436
    %3467 = vmatpush1.bf16.msra.mxu0 %v1435
    %3468 = vmatprep.subr.bf16.mxu0 %v1444
    %3469 = vmatpush1.bf16.msra.mxu0 %v1443
    %3470 = vmatprep.subr.bf16.mxu0 %v1452
    %3471 = vmatpush1.bf16.msra.mxu0 %v1451
    %3472 = vmatprep.subr.bf16.mxu0 %v1460
    %3473 = vmatpush1.bf16.msra.mxu0 %v1459
    %3474 = vmatprep.subr.bf16.mxu0 %v1468
    %3475 = vmatpush1.bf16.msra.mxu0 %v1467
    %3476 = vmatprep.subr.bf16.mxu0 %v1476
    %3477 = vmatpush1.bf16.msra.mxu0 %v1475
    %3478 = vmatprep.subr.bf16.mxu0 %v1484
    %3479 = vmatpush1.bf16.msra.mxu0 %v1483
    %3480 = vmatprep.subr.bf16.mxu0 %v1492
    %3481 = vmatpush1.bf16.msra.mxu0 %v1491
    %3482 = vmatprep.subr.bf16.mxu0 0
    %3483 = vmatpush1.bf16.msra.mxu0 0
    %3484 = vmatprep.subr.bf16.mxu0 0
    %3485 = vmatpush1.bf16.msra.mxu0 0
    %3486 = vmatprep.subr.bf16.mxu0 0
    %3487 = vmatpush1.bf16.msra.mxu0 0
    %3488 = vmatprep.subr.bf16.mxu0 0
    %3489 = vmatpush1.bf16.msra.mxu0 0
    %3490 = vmatprep.subr.bf16.mxu0 0
    %3491 = vmatpush1.bf16.msra.mxu0 0
    %3492 = vmatprep.subr.bf16.mxu0 0
    %3493 = vmatpush1.bf16.msra.mxu0 0
    %3494 = vmatprep.subr.bf16.mxu0 0
    %3495 = vmatpush1.bf16.msra.mxu0 0
    %3496 = vmatprep.subr.bf16.mxu0 0
    %3497 = vmatpush1.bf16.msra.mxu0 0
    %3498 = vmatprep.mubr.bf16.mxu0 0
    %3499 = vmatmul.mubr.bf16.gmra.mrb[0].mxu0 %v3415
    %v3500 = vpop.f32.mrb[0].mxu0
    %v3501 = vadd.f32 0.0, %v3500
    %v3502 = vpop.f32.mrb[0].mxu0
    %v3503 = vadd.f32 0.0, %v3502
    %v3504 = vpop.f32.mrb[0].mxu0
    %v3505 = vadd.f32 0.0, %v3504
    %v3506 = vpop.f32.mrb[0].mxu0
    %v3507 = vadd.f32 0.0, %v3506
    %3508 = vmatprep.mubr.bf16.mxu0 0
    %3509 = vmatmul.mubr.bf16.gmra.mrb[0].mxu0 %v3416
    %v3510 = vpop.f32.mrb[0].mxu0
    %v3511 = vpop.f32.mrb[0].mxu0
    %v3512 = vpop.f32.mrb[0].mxu0
    %v3513 = vpop.f32.mrb[0].mxu0
    %3514 = vdwg.mxu0
    %3515 = vmatprep.subr.bf16.mxu0 %v1438
    %3516 = vmatpush1.bf16.msra.mxu0 %v1437
    %3517 = vmatprep.subr.bf16.mxu0 %v1446
    %3518 = vmatpush1.bf16.msra.mxu0 %v1445
    %3519 = vmatprep.subr.bf16.mxu0 %v1454
    %3520 = vmatpush1.bf16.msra.mxu0 %v1453
    %3521 = vmatprep.subr.bf16.mxu0 %v1462
    %3522 = vmatpush1.bf16.msra.mxu0 %v1461
    %3523 = vmatprep.subr.bf16.mxu0 %v1470
    %3524 = vmatpush1.bf16.msra.mxu0 %v1469
    %3525 = vmatprep.subr.bf16.mxu0 %v1478
    %3526 = vmatpush1.bf16.msra.mxu0 %v1477
    %3527 = vmatprep.subr.bf16.mxu0 %v1486
    %3528 = vmatpush1.bf16.msra.mxu0 %v1485
    %3529 = vmatprep.subr.bf16.mxu0 %v1494
    %3530 = vmatpush1.bf16.msra.mxu0 %v1493
    %3531 = vmatprep.subr.bf16.mxu0 0
    %3532 = vmatpush1.bf16.msra.mxu0 0
    %3533 = vmatprep.subr.bf16.mxu0 0
    %3534 = vmatpush1.bf16.msra.mxu0 0
    %3535 = vmatprep.subr.bf16.mxu0 0
    %3536 = vmatpush1.bf16.msra.mxu0 0
    %3537 = vmatprep.subr.bf16.mxu0 0
    %3538 = vmatpush1.bf16.msra.mxu0 0
    %3539 = vmatprep.subr.bf16.mxu0 0
    %3540 = vmatpush1.bf16.msra.mxu0 0
    %3541 = vmatprep.subr.bf16.mxu0 0
    %3542 = vmatpush1.bf16.msra.mxu0 0
    %3543 = vmatprep.subr.bf16.mxu0 0
    %3544 = vmatpush1.bf16.msra.mxu0 0
    %3545 = vmatprep.subr.bf16.mxu0 0
    %3546 = vmatpush1.bf16.msra.mxu0 0
    %3547 = vmatprep.mubr.bf16.mxu0 0
    %3548 = vmatmul.mubr.bf16.gmra.mrb[0].mxu0 %v3415
    %v3549 = vpop.f32.mrb[0].mxu0
    %v3550 = vpop.f32.mrb[0].mxu0
    %v3551 = vpop.f32.mrb[0].mxu0
    %v3552 = vpop.f32.mrb[0].mxu0
    %3553 = vmatprep.mubr.bf16.mxu0 0
    %3554 = vmatmul.mubr.bf16.gmra.mrb[0].mxu0 %v3416
    %v3555 = vpop.f32.mrb[0].mxu0
    %v3556 = vadd.f32 0.0, %v3555
    %v3557 = vpop.f32.mrb[0].mxu0
    %v3558 = vadd.f32 0.0, %v3557
    %v3559 = vpop.f32.mrb[0].mxu0
    %v3560 = vadd.f32 0.0, %v3559
    %v3561 = vpop.f32.mrb[0].mxu0
    %v3562 = vadd.f32 0.0, %v3561
    %3563 = vdwg.mxu0
    %3564 = vmatprep.subr.bf16.mxu0 %v1440
    %3565 = vmatpush1.bf16.msra.mxu0 %v1439
    %3566 = vmatprep.subr.bf16.mxu0 %v1448
    %3567 = vmatpush1.bf16.msra.mxu0 %v1447
    %3568 = vmatprep.subr.bf16.mxu0 %v1456
    %3569 = vmatpush1.bf16.msra.mxu0 %v1455
    %3570 = vmatprep.subr.bf16.mxu0 %v1464
    %3571 = vmatpush1.bf16.msra.mxu0 %v1463
    %3572 = vmatprep.subr.bf16.mxu0 %v1472
    %3573 = vmatpush1.bf16.msra.mxu0 %v1471
    %3574 = vmatprep.subr.bf16.mxu0 %v1480
    %3575 = vmatpush1.bf16.msra.mxu0 %v1479
    %3576 = vmatprep.subr.bf16.mxu0 %v1488
    %3577 = vmatpush1.bf16.msra.mxu0 %v1487
    %3578 = vmatprep.subr.bf16.mxu0 %v1496
    %3579 = vmatpush1.bf16.msra.mxu0 %v1495
    %3580 = vmatprep.subr.bf16.mxu0 0
    %3581 = vmatpush1.bf16.msra.mxu0 0
    %3582 = vmatprep.subr.bf16.mxu0 0
    %3583 = vmatpush1.bf16.msra.mxu0 0
    %3584 = vmatprep.subr.bf16.mxu0 0
    %3585 = vmatpush1.bf16.msra.mxu0 0
    %3586 = vmatprep.subr.bf16.mxu0 0
    %3587 = vmatpush1.bf16.msra.mxu0 0
    %3588 = vmatprep.subr.bf16.mxu0 0
    %3589 = vmatpush1.bf16.msra.mxu0 0
    %3590 = vmatprep.subr.bf16.mxu0 0
    %3591 = vmatpush1.bf16.msra.mxu0 0
    %3592 = vmatprep.subr.bf16.mxu0 0
    %3593 = vmatpush1.bf16.msra.mxu0 0
    %3594 = vmatprep.subr.bf16.mxu0 0
    %3595 = vmatpush1.bf16.msra.mxu0 0
    %3596 = vmatprep.mubr.bf16.mxu0 0
    %3597 = vmatmul.mubr.bf16.gmra.mrb[0].mxu0 %v3415
    %v3598 = vpop.f32.mrb[0].mxu0
    %v3599 = vpop.f32.mrb[0].mxu0
    %v3600 = vpop.f32.mrb[0].mxu0
    %v3601 = vpop.f32.mrb[0].mxu0
    %3602 = vmatprep.mubr.bf16.mxu0 0
    %3603 = vmatmul.mubr.bf16.gmra.mrb[0].mxu0 %v3416
    %v3604 = vpop.f32.mrb[0].mxu0
    %v3605 = vadd.f32 0.0, %v3604
    %v3606 = vpop.f32.mrb[0].mxu0
    %v3607 = vadd.f32 0.0, %v3606
    %v3608 = vpop.f32.mrb[0].mxu0
    %v3609 = vadd.f32 0.0, %v3608
    %v3610 = vpop.f32.mrb[0].mxu0
    %v3611 = vadd.f32 0.0, %v3610
    %3612 = vdwg.mxu0
    %v3613 = vld [vmem:[%s2526] sm:$0xff]
    %v3614 = vld [vmem:[%s2526 + $0x8] sm:$0xff]
    %v3615 = vld [vmem:[%s2526 + $0x10] sm:$0xff]
    %v3616 = vld [vmem:[%s2526 + $0x18] sm:$0xff]
    %v3617 = vunpack.c.l.bf16 %v3613
    %v3618 = vunpack.c.l.bf16 %v3614
    %v3619 = vunpack.c.l.bf16 %v3615
    %v3620 = vunpack.c.l.bf16 %v3616
    %v3621 = vunpack.c.h.bf16 %v3613
    %v3622 = vunpack.c.h.bf16 %v3614
    %v3623 = vunpack.c.h.bf16 %v3615
    %v3624 = vunpack.c.h.bf16 %v3616
    %v3625 = vadd.f32 %v3452, %v3617
    %v3626 = vadd.f32 %v3454, %v3618
    %v3627 = vadd.f32 %v3501, %v3619
    %v3628 = vadd.f32 %v3503, %v3620
    %v3629 = vadd.f32 %v3456, %v3621
    %v3630 = vadd.f32 %v3458, %v3622
    %v3631 = vadd.f32 %v3505, %v3623
    %v3632 = vadd.f32 %v3507, %v3624
    %v3633 = vld [vmem:[%s2505 + $0x20] sm:$0xff]
    %v3634 = vld [vmem:[%s2505 + $0x28] sm:$0xff]
    %v3635 = vld [vmem:[%s2505 + $0x30] sm:$0xff]
    %v3636 = vld [vmem:[%s2505 + $0x38] sm:$0xff]
    %v3637 = vunpack.c.l.bf16 %v3633
    %v3638 = vunpack.c.l.bf16 %v3634
    %v3639 = vunpack.c.l.bf16 %v3635
    %v3640 = vunpack.c.l.bf16 %v3636
    %v3641 = vunpack.c.h.bf16 %v3633
    %v3642 = vunpack.c.h.bf16 %v3634
    %v3643 = vunpack.c.h.bf16 %v3635
    %v3644 = vunpack.c.h.bf16 %v3636
    %v3645 = vadd.f32 %v3556, %v3637
    %v3646 = vadd.f32 %v3558, %v3638
    %v3647 = vadd.f32 %v3605, %v3639
    %v3648 = vadd.f32 %v3607, %v3640
    %v3649 = vadd.f32 %v3560, %v3641
    %v3650 = vadd.f32 %v3562, %v3642
    %v3651 = vadd.f32 %v3609, %v3643
    %v3652 = vadd.f32 %v3611, %v3644
    %v3653 = vxor.u32 %v3625, 2147483648
    %v3654 = vxor.u32 %v3629, 2147483648
    %v3655 = vmul.f32 %v3653, 1.442695
    %v3656 = vpow.pop %v3655
    %v3657 = vmul.f32 %v3654, 1.442695
    %v3658 = vpow.pop %v3657
    %v3659 = vadd.f32 %v3656, 1.0
    %v3660 = vadd.f32 %v3658, 1.0
    %v3661 = vrcp.pop %v3659
    %v3662 = vmul.f32 1.0, %v3661
    %v3663 = vrcp.pop %v3660
    %v3664 = vmul.f32 1.0, %v3663
    %v3665 = vxor.u32 %v3626, 2147483648
    %v3666 = vxor.u32 %v3630, 2147483648
    %v3667 = vmul.f32 %v3665, 1.442695
    %v3668 = vpow.pop %v3667
    %v3669 = vmul.f32 %v3666, 1.442695
    %v3670 = vpow.pop %v3669
    %v3671 = vadd.f32 %v3668, 1.0
    %v3672 = vadd.f32 %v3670, 1.0
    %v3673 = vrcp.pop %v3671
    %v3674 = vmul.f32 1.0, %v3673
    %v3675 = vrcp.pop %v3672
    %v3676 = vmul.f32 1.0, %v3675
    %v3677 = vtanh.pop %v3627
    %v3678 = vtanh.pop %v3631
    %v3679 = vxor.u32 %v3628, 2147483648
    %v3680 = vxor.u32 %v3632, 2147483648
    %v3681 = vmul.f32 %v3679, 1.442695
    %v3682 = vpow.pop %v3681
    %v3683 = vmul.f32 %v3680, 1.442695
    %v3684 = vpow.pop %v3683
    %v3685 = vadd.f32 %v3682, 1.0
    %v3686 = vadd.f32 %v3684, 1.0
    %v3687 = vrcp.pop %v3685
    %v3688 = vmul.f32 1.0, %v3687
    %v3689 = vrcp.pop %v3686
    %v3690 = vmul.f32 1.0, %v3689
    %v3691 = vmul.f32 %v3674, %v3409
    %v3692 = vmul.f32 %v3676, %v3410
    %v3693 = vmul.f32 %v3662, %v3677
    %v3694 = vmul.f32 %v3664, %v3678
    %v3695 = vadd.f32 %v3691, %v3693
    %v3696 = vadd.f32 %v3692, %v3694
    %v3697 = vtanh.pop %v3695
    %v3698 = vtanh.pop %v3696
    %v3699 = vmul.f32 %v3688, %v3697
    %v3700 = vmul.f32 %v3690, %v3698
    %v3701 = vxor.u32 %v3645, 2147483648
    %v3702 = vxor.u32 %v3649, 2147483648
    %v3703 = vmul.f32 %v3701, 1.442695
    %v3704 = vpow.pop %v3703
    %v3705 = vmul.f32 %v3702, 1.442695
    %v3706 = vpow.pop %v3705
    %v3707 = vadd.f32 %v3704, 1.0
    %v3708 = vadd.f32 %v3706, 1.0
    %v3709 = vrcp.pop %v3707
    %v3710 = vmul.f32 1.0, %v3709
    %v3711 = vrcp.pop %v3708
    %v3712 = vmul.f32 1.0, %v3711
    %v3713 = vxor.u32 %v3646, 2147483648
    %v3714 = vxor.u32 %v3650, 2147483648
    %v3715 = vmul.f32 %v3713, 1.442695
    %v3716 = vpow.pop %v3715
    %v3717 = vmul.f32 %v3714, 1.442695
    %v3718 = vpow.pop %v3717
    %v3719 = vadd.f32 %v3716, 1.0
    %v3720 = vadd.f32 %v3718, 1.0
    %v3721 = vrcp.pop %v3719
    %v3722 = vmul.f32 1.0, %v3721
    %v3723 = vrcp.pop %v3720
    %v3724 = vmul.f32 1.0, %v3723
    %v3725 = vtanh.pop %v3647
    %v3726 = vtanh.pop %v3651
    %v3727 = vxor.u32 %v3648, 2147483648
    %v3728 = vxor.u32 %v3652, 2147483648
    %v3729 = vmul.f32 %v3727, 1.442695
    %v3730 = vpow.pop %v3729
    %v3731 = vmul.f32 %v3728, 1.442695
    %v3732 = vpow.pop %v3731
    %v3733 = vadd.f32 %v3730, 1.0
    %v3734 = vadd.f32 %v3732, 1.0
    %v3735 = vrcp.pop %v3733
    %v3736 = vmul.f32 1.0, %v3735
    %v3737 = vrcp.pop %v3734
    %v3738 = vmul.f32 1.0, %v3737
    %v3739 = vmul.f32 %v3722, %v3413
    %v3740 = vmul.f32 %v3724, %v3414
    %v3741 = vmul.f32 %v3710, %v3725
    %v3742 = vmul.f32 %v3712, %v3726
    %v3743 = vadd.f32 %v3739, %v3741
    %v3744 = vadd.f32 %v3740, %v3742
    %v3745 = vtanh.pop %v3743
    %v3746 = vtanh.pop %v3744
    %v3747 = vmul.f32 %v3736, %v3745
    %v3748 = vmul.f32 %v3738, %v3746
    %v3749 = vsel %vm2670, %v3699, 0.0
    %v3750 = vsel %vm2671, %v3700, 0.0
    %v3751 = vpack.c.bf16 %v3750, %v3749
    %s3752 = scalar_lea.vmem [#allocation3], 40
    %3753 = vst [vmem:[%s3752] sm:$0xff] %v3751
    %v3754 = vsel %vm2655, %v3747, 0.0
    %v3755 = vsel %vm2656, %v3748, 0.0
    %v3756 = vpack.c.bf16 %v3755, %v3754
    %s3757 = scalar_lea.vmem [#allocation4], 16
    %3758 = vst [vmem:[%s3757] sm:$0xff] %v3756
    %v3759 = vsel %vm2670, %v3699, %v3407
    %v3760 = vsel %vm2671, %v3700, %v3408
    %v3761 = vsel %vm2670, %v3695, %v3409
    %v3762 = vsel %vm2671, %v3696, %v3410
    %v3763 = vsel %vm2655, %v3747, %v3411
    %v3764 = vsel %vm2656, %v3748, %v3412
    %v3765 = vsel %vm2655, %v3743, %v3413
    %v3766 = vsel %vm2656, %v3744, %v3414
    %v3767 = vpack.c.bf16 %v3760, %v3759
    %v3768 = vpack.c.bf16 %v3764, %v3763
    %3769 = vmatprep.subr.bf16.mxu0 %v1434
    %3770 = vmatpush1.bf16.msra.mxu0 %v1433
    %3771 = vmatprep.subr.bf16.mxu0 %v1442
    %3772 = vmatpush1.bf16.msra.mxu0 %v1441
    %3773 = vmatprep.subr.bf16.mxu0 %v1450
    %3774 = vmatpush1.bf16.msra.mxu0 %v1449
    %3775 = vmatprep.subr.bf16.mxu0 %v1458
    %3776 = vmatpush1.bf16.msra.mxu0 %v1457
    %3777 = vmatprep.subr.bf16.mxu0 %v1466
    %3778 = vmatpush1.bf16.msra.mxu0 %v1465
    %3779 = vmatprep.subr.bf16.mxu0 %v1474
    %3780 = vmatpush1.bf16.msra.mxu0 %v1473
    %3781 = vmatprep.subr.bf16.mxu0 %v1482
    %3782 = vmatpush1.bf16.msra.mxu0 %v1481
    %3783 = vmatprep.subr.bf16.mxu0 %v1490
    %3784 = vmatpush1.bf16.msra.mxu0 %v1489
    %3785 = vmatprep.subr.bf16.mxu0 0
    %3786 = vmatpush1.bf16.msra.mxu0 0
    %3787 = vmatprep.subr.bf16.mxu0 0
    %3788 = vmatpush1.bf16.msra.mxu0 0
    %3789 = vmatprep.subr.bf16.mxu0 0
    %3790 = vmatpush1.bf16.msra.mxu0 0
    %3791 = vmatprep.subr.bf16.mxu0 0
    %3792 = vmatpush1.bf16.msra.mxu0 0
    %3793 = vmatprep.subr.bf16.mxu0 0
    %3794 = vmatpush1.bf16.msra.mxu0 0
    %3795 = vmatprep.subr.bf16.mxu0 0
    %3796 = vmatpush1.bf16.msra.mxu0 0
    %3797 = vmatprep.subr.bf16.mxu0 0
    %3798 = vmatpush1.bf16.msra.mxu0 0
    %3799 = vmatprep.subr.bf16.mxu0 0
    %3800 = vmatpush1.bf16.msra.mxu0 0
    %3801 = vmatprep.mubr.bf16.mxu0 0
    %3802 = vmatmul.mubr.bf16.gmra.mrb[0].mxu0 %v3767
    %v3803 = vpop.f32.mrb[0].mxu0
    %v3804 = vadd.f32 0.0, %v3803
    %v3805 = vpop.f32.mrb[0].mxu0
    %v3806 = vadd.f32 0.0, %v3805
    %v3807 = vpop.f32.mrb[0].mxu0
    %v3808 = vadd.f32 0.0, %v3807
    %v3809 = vpop.f32.mrb[0].mxu0
    %v3810 = vadd.f32 0.0, %v3809
    %3811 = vmatprep.mubr.bf16.mxu0 0
    %3812 = vmatmul.mubr.bf16.gmra.mrb[0].mxu0 %v3768
    %v3813 = vpop.f32.mrb[0].mxu0
    %v3814 = vpop.f32.mrb[0].mxu0
    %v3815 = vpop.f32.mrb[0].mxu0
    %v3816 = vpop.f32.mrb[0].mxu0
    %3817 = vdwg.mxu0
    %3818 = vmatprep.subr.bf16.mxu0 %v1436
    %3819 = vmatpush1.bf16.msra.mxu0 %v1435
    %3820 = vmatprep.subr.bf16.mxu0 %v1444
    %3821 = vmatpush1.bf16.msra.mxu0 %v1443
    %3822 = vmatprep.subr.bf16.mxu0 %v1452
    %3823 = vmatpush1.bf16.msra.mxu0 %v1451
    %3824 = vmatprep.subr.bf16.mxu0 %v1460
    %3825 = vmatpush1.bf16.msra.mxu0 %v1459
    %3826 = vmatprep.subr.bf16.mxu0 %v1468
    %3827 = vmatpush1.bf16.msra.mxu0 %v1467
    %3828 = vmatprep.subr.bf16.mxu0 %v1476
    %3829 = vmatpush1.bf16.msra.mxu0 %v1475
    %3830 = vmatprep.subr.bf16.mxu0 %v1484
    %3831 = vmatpush1.bf16.msra.mxu0 %v1483
    %3832 = vmatprep.subr.bf16.mxu0 %v1492
    %3833 = vmatpush1.bf16.msra.mxu0 %v1491
    %3834 = vmatprep.subr.bf16.mxu0 0
    %3835 = vmatpush1.bf16.msra.mxu0 0
    %3836 = vmatprep.subr.bf16.mxu0 0
    %3837 = vmatpush1.bf16.msra.mxu0 0
    %3838 = vmatprep.subr.bf16.mxu0 0
    %3839 = vmatpush1.bf16.msra.mxu0 0
    %3840 = vmatprep.subr.bf16.mxu0 0
    %3841 = vmatpush1.bf16.msra.mxu0 0
    %3842 = vmatprep.subr.bf16.mxu0 0
    %3843 = vmatpush1.bf16.msra.mxu0 0
    %3844 = vmatprep.subr.bf16.mxu0 0
    %3845 = vmatpush1.bf16.msra.mxu0 0
    %3846 = vmatprep.subr.bf16.mxu0 0
    %3847 = vmatpush1.bf16.msra.mxu0 0
    %3848 = vmatprep.subr.bf16.mxu0 0
    %3849 = vmatpush1.bf16.msra.mxu0 0
    %3850 = vmatprep.mubr.bf16.mxu0 0
    %3851 = vmatmul.mubr.bf16.gmra.mrb[0].mxu0 %v3767
    %v3852 = vpop.f32.mrb[0].mxu0
    %v3853 = vadd.f32 0.0, %v3852
    %v3854 = vpop.f32.mrb[0].mxu0
    %v3855 = vadd.f32 0.0, %v3854
    %v3856 = vpop.f32.mrb[0].mxu0
    %v3857 = vadd.f32 0.0, %v3856
    %v3858 = vpop.f32.mrb[0].mxu0
    %v3859 = vadd.f32 0.0, %v3858
    %3860 = vmatprep.mubr.bf16.mxu0 0
    %3861 = vmatmul.mubr.bf16.gmra.mrb[0].mxu0 %v3768
    %v3862 = vpop.f32.mrb[0].mxu0
    %v3863 = vpop.f32.mrb[0].mxu0
    %v3864 = vpop.f32.mrb[0].mxu0
    %v3865 = vpop.f32.mrb[0].mxu0
    %3866 = vdwg.mxu0
    %3867 = vmatprep.subr.bf16.mxu0 %v1438
    %3868 = vmatpush1.bf16.msra.mxu0 %v1437
    %3869 = vmatprep.subr.bf16.mxu0 %v1446
    %3870 = vmatpush1.bf16.msra.mxu0 %v1445
    %3871 = vmatprep.subr.bf16.mxu0 %v1454
    %3872 = vmatpush1.bf16.msra.mxu0 %v1453
    %3873 = vmatprep.subr.bf16.mxu0 %v1462
    %3874 = vmatpush1.bf16.msra.mxu0 %v1461
    %3875 = vmatprep.subr.bf16.mxu0 %v1470
    %3876 = vmatpush1.bf16.msra.mxu0 %v1469
    %3877 = vmatprep.subr.bf16.mxu0 %v1478
    %3878 = vmatpush1.bf16.msra.mxu0 %v1477
    %3879 = vmatprep.subr.bf16.mxu0 %v1486
    %3880 = vmatpush1.bf16.msra.mxu0 %v1485
    %3881 = vmatprep.subr.bf16.mxu0 %v1494
    %3882 = vmatpush1.bf16.msra.mxu0 %v1493
    %3883 = vmatprep.subr.bf16.mxu0 0
    %3884 = vmatpush1.bf16.msra.mxu0 0
    %3885 = vmatprep.subr.bf16.mxu0 0
    %3886 = vmatpush1.bf16.msra.mxu0 0
    %3887 = vmatprep.subr.bf16.mxu0 0
    %3888 = vmatpush1.bf16.msra.mxu0 0
    %3889 = vmatprep.subr.bf16.mxu0 0
    %3890 = vmatpush1.bf16.msra.mxu0 0
    %3891 = vmatprep.subr.bf16.mxu0 0
    %3892 = vmatpush1.bf16.msra.mxu0 0
    %3893 = vmatprep.subr.bf16.mxu0 0
    %3894 = vmatpush1.bf16.msra.mxu0 0
    %3895 = vmatprep.subr.bf16.mxu0 0
    %3896 = vmatpush1.bf16.msra.mxu0 0
    %3897 = vmatprep.subr.bf16.mxu0 0
    %3898 = vmatpush1.bf16.msra.mxu0 0
    %3899 = vmatprep.mubr.bf16.mxu0 0
    %3900 = vmatmul.mubr.bf16.gmra.mrb[0].mxu0 %v3767
    %v3901 = vpop.f32.mrb[0].mxu0
    %v3902 = vpop.f32.mrb[0].mxu0
    %v3903 = vpop.f32.mrb[0].mxu0
    %v3904 = vpop.f32.mrb[0].mxu0
    %3905 = vmatprep.mubr.bf16.mxu0 0
    %3906 = vmatmul.mubr.bf16.gmra.mrb[0].mxu0 %v3768
    %v3907 = vpop.f32.mrb[0].mxu0
    %v3908 = vadd.f32 0.0, %v3907
    %v3909 = vpop.f32.mrb[0].mxu0
    %v3910 = vadd.f32 0.0, %v3909
    %v3911 = vpop.f32.mrb[0].mxu0
    %v3912 = vadd.f32 0.0, %v3911
    %v3913 = vpop.f32.mrb[0].mxu0
    %v3914 = vadd.f32 0.0, %v3913
    %3915 = vdwg.mxu0
    %3916 = vmatprep.subr.bf16.mxu0 %v1440
    %3917 = vmatpush1.bf16.msra.mxu0 %v1439
    %3918 = vmatprep.subr.bf16.mxu0 %v1448
    %3919 = vmatpush1.bf16.msra.mxu0 %v1447
    %3920 = vmatprep.subr.bf16.mxu0 %v1456
    %3921 = vmatpush1.bf16.msra.mxu0 %v1455
    %3922 = vmatprep.subr.bf16.mxu0 %v1464
    %3923 = vmatpush1.bf16.msra.mxu0 %v1463
    %3924 = vmatprep.subr.bf16.mxu0 %v1472
    %3925 = vmatpush1.bf16.msra.mxu0 %v1471
    %3926 = vmatprep.subr.bf16.mxu0 %v1480
    %3927 = vmatpush1.bf16.msra.mxu0 %v1479
    %3928 = vmatprep.subr.bf16.mxu0 %v1488
    %3929 = vmatpush1.bf16.msra.mxu0 %v1487
    %3930 = vmatprep.subr.bf16.mxu0 %v1496
    %3931 = vmatpush1.bf16.msra.mxu0 %v1495
    %3932 = vmatprep.subr.bf16.mxu0 0
    %3933 = vmatpush1.bf16.msra.mxu0 0
    %3934 = vmatprep.subr.bf16.mxu0 0
    %3935 = vmatpush1.bf16.msra.mxu0 0
    %3936 = vmatprep.subr.bf16.mxu0 0
    %3937 = vmatpush1.bf16.msra.mxu0 0
    %3938 = vmatprep.subr.bf16.mxu0 0
    %3939 = vmatpush1.bf16.msra.mxu0 0
    %3940 = vmatprep.subr.bf16.mxu0 0
    %3941 = vmatpush1.bf16.msra.mxu0 0
    %3942 = vmatprep.subr.bf16.mxu0 0
    %3943 = vmatpush1.bf16.msra.mxu0 0
    %3944 = vmatprep.subr.bf16.mxu0 0
    %3945 = vmatpush1.bf16.msra.mxu0 0
    %3946 = vmatprep.subr.bf16.mxu0 0
    %3947 = vmatpush1.bf16.msra.mxu0 0
    %3948 = vmatprep.mubr.bf16.mxu0 0
    %3949 = vmatmul.mubr.bf16.gmra.mrb[0].mxu0 %v3767
    %v3950 = vpop.f32.mrb[0].mxu0
    %v3951 = vpop.f32.mrb[0].mxu0
    %v3952 = vpop.f32.mrb[0].mxu0
    %v3953 = vpop.f32.mrb[0].mxu0
    %3954 = vmatprep.mubr.bf16.mxu0 0
    %3955 = vmatmul.mubr.bf16.gmra.mrb[0].mxu0 %v3768
    %v3956 = vpop.f32.mrb[0].mxu0
    %v3957 = vadd.f32 0.0, %v3956
    %v3958 = vpop.f32.mrb[0].mxu0
    %v3959 = vadd.f32 0.0, %v3958
    %v3960 = vpop.f32.mrb[0].mxu0
    %v3961 = vadd.f32 0.0, %v3960
    %v3962 = vpop.f32.mrb[0].mxu0
    %v3963 = vadd.f32 0.0, %v3962
    %3964 = vdwg.mxu0
    %v3965 = vld [vmem:[%s2148] sm:$0xff]
    %v3966 = vld [vmem:[%s2148 + $0x8] sm:$0xff]
    %v3967 = vld [vmem:[%s2148 + $0x10] sm:$0xff]
    %v3968 = vld [vmem:[%s2148 + $0x18] sm:$0xff]
    %v3969 = vunpack.c.l.bf16 %v3965
    %v3970 = vunpack.c.l.bf16 %v3966
    %v3971 = vunpack.c.l.bf16 %v3967
    %v3972 = vunpack.c.l.bf16 %v3968
    %v3973 = vunpack.c.h.bf16 %v3965
    %v3974 = vunpack.c.h.bf16 %v3966
    %v3975 = vunpack.c.h.bf16 %v3967
    %v3976 = vunpack.c.h.bf16 %v3968
    %v3977 = vadd.f32 %v3804, %v3969
    %v3978 = vadd.f32 %v3806, %v3970
    %v3979 = vadd.f32 %v3853, %v3971
    %v3980 = vadd.f32 %v3855, %v3972
    %v3981 = vadd.f32 %v3808, %v3973
    %v3982 = vadd.f32 %v3810, %v3974
    %v3983 = vadd.f32 %v3857, %v3975
    %v3984 = vadd.f32 %v3859, %v3976
    %v3985 = vld [vmem:[%s2127 + $0x20] sm:$0xff]
    %v3986 = vld [vmem:[%s2127 + $0x28] sm:$0xff]
    %v3987 = vld [vmem:[%s2127 + $0x30] sm:$0xff]
    %v3988 = vld [vmem:[%s2127 + $0x38] sm:$0xff]
    %v3989 = vunpack.c.l.bf16 %v3985
    %v3990 = vunpack.c.l.bf16 %v3986
    %v3991 = vunpack.c.l.bf16 %v3987
    %v3992 = vunpack.c.l.bf16 %v3988
    %v3993 = vunpack.c.h.bf16 %v3985
    %v3994 = vunpack.c.h.bf16 %v3986
    %v3995 = vunpack.c.h.bf16 %v3987
    %v3996 = vunpack.c.h.bf16 %v3988
    %v3997 = vadd.f32 %v3908, %v3989
    %v3998 = vadd.f32 %v3910, %v3990
    %v3999 = vadd.f32 %v3957, %v3991
    %v4000 = vadd.f32 %v3959, %v3992
    %v4001 = vadd.f32 %v3912, %v3993
    %v4002 = vadd.f32 %v3914, %v3994
    %v4003 = vadd.f32 %v3961, %v3995
    %v4004 = vadd.f32 %v3963, %v3996
    %v4005 = vxor.u32 %v3977, 2147483648
    %v4006 = vxor.u32 %v3981, 2147483648
    %v4007 = vmul.f32 %v4005, 1.442695
    %v4008 = vpow.pop %v4007
    %v4009 = vmul.f32 %v4006, 1.442695
    %v4010 = vpow.pop %v4009
    %v4011 = vadd.f32 %v4008, 1.0
    %v4012 = vadd.f32 %v4010, 1.0
    %v4013 = vrcp.pop %v4011
    %v4014 = vmul.f32 1.0, %v4013
    %v4015 = vrcp.pop %v4012
    %v4016 = vmul.f32 1.0, %v4015
    %v4017 = vxor.u32 %v3978, 2147483648
    %v4018 = vxor.u32 %v3982, 2147483648
    %v4019 = vmul.f32 %v4017, 1.442695
    %v4020 = vpow.pop %v4019
    %v4021 = vmul.f32 %v4018, 1.442695
    %v4022 = vpow.pop %v4021
    %v4023 = vadd.f32 %v4020, 1.0
    %v4024 = vadd.f32 %v4022, 1.0
    %v4025 = vrcp.pop %v4023
    %v4026 = vmul.f32 1.0, %v4025
    %v4027 = vrcp.pop %v4024
    %v4028 = vmul.f32 1.0, %v4027
    %v4029 = vtanh.pop %v3979
    %v4030 = vtanh.pop %v3983
    %v4031 = vxor.u32 %v3980, 2147483648
    %v4032 = vxor.u32 %v3984, 2147483648
    %v4033 = vmul.f32 %v4031, 1.442695
    %v4034 = vpow.pop %v4033
    %v4035 = vmul.f32 %v4032, 1.442695
    %v4036 = vpow.pop %v4035
    %v4037 = vadd.f32 %v4034, 1.0
    %v4038 = vadd.f32 %v4036, 1.0
    %v4039 = vrcp.pop %v4037
    %v4040 = vmul.f32 1.0, %v4039
    %v4041 = vrcp.pop %v4038
    %v4042 = vmul.f32 1.0, %v4041
    %v4043 = vmul.f32 %v4026, %v3761
    %v4044 = vmul.f32 %v4028, %v3762
    %v4045 = vmul.f32 %v4014, %v4029
    %v4046 = vmul.f32 %v4016, %v4030
    %v4047 = vadd.f32 %v4043, %v4045
    %v4048 = vadd.f32 %v4044, %v4046
    %v4049 = vtanh.pop %v4047
    %v4050 = vtanh.pop %v4048
    %v4051 = vmul.f32 %v4040, %v4049
    %v4052 = vmul.f32 %v4042, %v4050
    %v4053 = vxor.u32 %v3997, 2147483648
    %v4054 = vxor.u32 %v4001, 2147483648
    %v4055 = vmul.f32 %v4053, 1.442695
    %v4056 = vpow.pop %v4055
    %v4057 = vmul.f32 %v4054, 1.442695
    %v4058 = vpow.pop %v4057
    %v4059 = vadd.f32 %v4056, 1.0
    %v4060 = vadd.f32 %v4058, 1.0
    %v4061 = vrcp.pop %v4059
    %v4062 = vmul.f32 1.0, %v4061
    %v4063 = vrcp.pop %v4060
    %v4064 = vmul.f32 1.0, %v4063
    %v4065 = vxor.u32 %v3998, 2147483648
    %v4066 = vxor.u32 %v4002, 2147483648
    %v4067 = vmul.f32 %v4065, 1.442695
    %v4068 = vpow.pop %v4067
    %v4069 = vmul.f32 %v4066, 1.442695
    %v4070 = vpow.pop %v4069
    %v4071 = vadd.f32 %v4068, 1.0
    %v4072 = vadd.f32 %v4070, 1.0
    %v4073 = vrcp.pop %v4071
    %v4074 = vmul.f32 1.0, %v4073
    %v4075 = vrcp.pop %v4072
    %v4076 = vmul.f32 1.0, %v4075
    %v4077 = vtanh.pop %v3999
    %v4078 = vtanh.pop %v4003
    %v4079 = vxor.u32 %v4000, 2147483648
    %v4080 = vxor.u32 %v4004, 2147483648
    %v4081 = vmul.f32 %v4079, 1.442695
    %v4082 = vpow.pop %v4081
    %v4083 = vmul.f32 %v4080, 1.442695
    %v4084 = vpow.pop %v4083
    %v4085 = vadd.f32 %v4082, 1.0
    %v4086 = vadd.f32 %v4084, 1.0
    %v4087 = vrcp.pop %v4085
    %v4088 = vmul.f32 1.0, %v4087
    %v4089 = vrcp.pop %v4086
    %v4090 = vmul.f32 1.0, %v4089
    %v4091 = vmul.f32 %v4074, %v3765
    %v4092 = vmul.f32 %v4076, %v3766
    %v4093 = vmul.f32 %v4062, %v4077
    %v4094 = vmul.f32 %v4064, %v4078
    %v4095 = vadd.f32 %v4091, %v4093
    %v4096 = vadd.f32 %v4092, %v4094
    %v4097 = vtanh.pop %v4095
    %v4098 = vtanh.pop %v4096
    %v4099 = vmul.f32 %v4088, %v4097
    %v4100 = vmul.f32 %v4090, %v4098
    %v4101 = vsel %vm2292, %v4051, 0.0
    %v4102 = vsel %vm2293, %v4052, 0.0
    %v4103 = vpack.c.bf16 %v4102, %v4101
    %s4104 = scalar_lea.vmem [#allocation3], 48
    %4105 = vst [vmem:[%s4104] sm:$0xff] %v4103
    %v4106 = vsel %vm2277, %v4099, 0.0
    %v4107 = vsel %vm2278, %v4100, 0.0
    %v4108 = vpack.c.bf16 %v4107, %v4106
    %s4109 = scalar_lea.vmem [#allocation4], 8
    %4110 = vst [vmem:[%s4109] sm:$0xff] %v4108
    %v4111 = vsel %vm2292, %v4051, %v3759
    %v4112 = vsel %vm2293, %v4052, %v3760
    %v4113 = vsel %vm2292, %v4047, %v3761
    %v4114 = vsel %vm2293, %v4048, %v3762
    %v4115 = vsel %vm2277, %v4099, %v3763
    %v4116 = vsel %vm2278, %v4100, %v3764
    %v4117 = vsel %vm2277, %v4095, %v3765
    %v4118 = vsel %vm2278, %v4096, %v3766
    %v4119 = vpack.c.bf16 %v4112, %v4111
    %v4120 = vpack.c.bf16 %v4116, %v4115
    %4121 = vmatprep.subr.bf16.mxu0 %v1434
    %4122 = vmatpush1.bf16.msra.mxu0 %v1433
    %4123 = vmatprep.subr.bf16.mxu0 %v1442
    %4124 = vmatpush1.bf16.msra.mxu0 %v1441
    %4125 = vmatprep.subr.bf16.mxu0 %v1450
    %4126 = vmatpush1.bf16.msra.mxu0 %v1449
    %4127 = vmatprep.subr.bf16.mxu0 %v1458
    %4128 = vmatpush1.bf16.msra.mxu0 %v1457
    %4129 = vmatprep.subr.bf16.mxu0 %v1466
    %4130 = vmatpush1.bf16.msra.mxu0 %v1465
    %4131 = vmatprep.subr.bf16.mxu0 %v1474
    %4132 = vmatpush1.bf16.msra.mxu0 %v1473
    %4133 = vmatprep.subr.bf16.mxu0 %v1482
    %4134 = vmatpush1.bf16.msra.mxu0 %v1481
    %4135 = vmatprep.subr.bf16.mxu0 %v1490
    %4136 = vmatpush1.bf16.msra.mxu0 %v1489
    %4137 = vmatprep.subr.bf16.mxu0 0
    %4138 = vmatpush1.bf16.msra.mxu0 0
    %4139 = vmatprep.subr.bf16.mxu0 0
    %4140 = vmatpush1.bf16.msra.mxu0 0
    %4141 = vmatprep.subr.bf16.mxu0 0
    %4142 = vmatpush1.bf16.msra.mxu0 0
    %4143 = vmatprep.subr.bf16.mxu0 0
    %4144 = vmatpush1.bf16.msra.mxu0 0
    %4145 = vmatprep.subr.bf16.mxu0 0
    %4146 = vmatpush1.bf16.msra.mxu0 0
    %4147 = vmatprep.subr.bf16.mxu0 0
    %4148 = vmatpush1.bf16.msra.mxu0 0
    %4149 = vmatprep.subr.bf16.mxu0 0
    %4150 = vmatpush1.bf16.msra.mxu0 0
    %4151 = vmatprep.subr.bf16.mxu0 0
    %4152 = vmatpush1.bf16.msra.mxu0 0
    %4153 = vmatprep.mubr.bf16.mxu0 0
    %4154 = vmatmul.mubr.bf16.gmra.mrb[0].mxu0 %v4119
    %v4155 = vpop.f32.mrb[0].mxu0
    %v4156 = vadd.f32 0.0, %v4155
    %v4157 = vpop.f32.mrb[0].mxu0
    %v4158 = vadd.f32 0.0, %v4157
    %v4159 = vpop.f32.mrb[0].mxu0
    %v4160 = vadd.f32 0.0, %v4159
    %v4161 = vpop.f32.mrb[0].mxu0
    %v4162 = vadd.f32 0.0, %v4161
    %4163 = vmatprep.mubr.bf16.mxu0 0
    %4164 = vmatmul.mubr.bf16.gmra.mrb[0].mxu0 %v4120
    %v4165 = vpop.f32.mrb[0].mxu0
    %v4166 = vpop.f32.mrb[0].mxu0
    %v4167 = vpop.f32.mrb[0].mxu0
    %v4168 = vpop.f32.mrb[0].mxu0
    %4169 = vdwg.mxu0
    %4170 = vmatprep.subr.bf16.mxu0 %v1436
    %4171 = vmatpush1.bf16.msra.mxu0 %v1435
    %4172 = vmatprep.subr.bf16.mxu0 %v1444
    %4173 = vmatpush1.bf16.msra.mxu0 %v1443
    %4174 = vmatprep.subr.bf16.mxu0 %v1452
    %4175 = vmatpush1.bf16.msra.mxu0 %v1451
    %4176 = vmatprep.subr.bf16.mxu0 %v1460
    %4177 = vmatpush1.bf16.msra.mxu0 %v1459
    %4178 = vmatprep.subr.bf16.mxu0 %v1468
    %4179 = vmatpush1.bf16.msra.mxu0 %v1467
    %4180 = vmatprep.subr.bf16.mxu0 %v1476
    %4181 = vmatpush1.bf16.msra.mxu0 %v1475
    %4182 = vmatprep.subr.bf16.mxu0 %v1484
    %4183 = vmatpush1.bf16.msra.mxu0 %v1483
    %4184 = vmatprep.subr.bf16.mxu0 %v1492
    %4185 = vmatpush1.bf16.msra.mxu0 %v1491
    %4186 = vmatprep.subr.bf16.mxu0 0
    %4187 = vmatpush1.bf16.msra.mxu0 0
    %4188 = vmatprep.subr.bf16.mxu0 0
    %4189 = vmatpush1.bf16.msra.mxu0 0
    %4190 = vmatprep.subr.bf16.mxu0 0
    %4191 = vmatpush1.bf16.msra.mxu0 0
    %4192 = vmatprep.subr.bf16.mxu0 0
    %4193 = vmatpush1.bf16.msra.mxu0 0
    %4194 = vmatprep.subr.bf16.mxu0 0
    %4195 = vmatpush1.bf16.msra.mxu0 0
    %4196 = vmatprep.subr.bf16.mxu0 0
    %4197 = vmatpush1.bf16.msra.mxu0 0
    %4198 = vmatprep.subr.bf16.mxu0 0
    %4199 = vmatpush1.bf16.msra.mxu0 0
    %4200 = vmatprep.subr.bf16.mxu0 0
    %4201 = vmatpush1.bf16.msra.mxu0 0
    %4202 = vmatprep.mubr.bf16.mxu0 0
    %4203 = vmatmul.mubr.bf16.gmra.mrb[0].mxu0 %v4119
    %v4204 = vpop.f32.mrb[0].mxu0
    %v4205 = vadd.f32 0.0, %v4204
    %v4206 = vpop.f32.mrb[0].mxu0
    %v4207 = vadd.f32 0.0, %v4206
    %v4208 = vpop.f32.mrb[0].mxu0
    %v4209 = vadd.f32 0.0, %v4208
    %v4210 = vpop.f32.mrb[0].mxu0
    %v4211 = vadd.f32 0.0, %v4210
    %4212 = vmatprep.mubr.bf16.mxu0 0
    %4213 = vmatmul.mubr.bf16.gmra.mrb[0].mxu0 %v4120
    %v4214 = vpop.f32.mrb[0].mxu0
    %v4215 = vpop.f32.mrb[0].mxu0
    %v4216 = vpop.f32.mrb[0].mxu0
    %v4217 = vpop.f32.mrb[0].mxu0
    %4218 = vdwg.mxu0
    %4219 = vmatprep.subr.bf16.mxu0 %v1438
    %4220 = vmatpush1.bf16.msra.mxu0 %v1437
    %4221 = vmatprep.subr.bf16.mxu0 %v1446
    %4222 = vmatpush1.bf16.msra.mxu0 %v1445
    %4223 = vmatprep.subr.bf16.mxu0 %v1454
    %4224 = vmatpush1.bf16.msra.mxu0 %v1453
    %4225 = vmatprep.subr.bf16.mxu0 %v1462
    %4226 = vmatpush1.bf16.msra.mxu0 %v1461
    %4227 = vmatprep.subr.bf16.mxu0 %v1470
    %4228 = vmatpush1.bf16.msra.mxu0 %v1469
    %4229 = vmatprep.subr.bf16.mxu0 %v1478
    %4230 = vmatpush1.bf16.msra.mxu0 %v1477
    %4231 = vmatprep.subr.bf16.mxu0 %v1486
    %4232 = vmatpush1.bf16.msra.mxu0 %v1485
    %4233 = vmatprep.subr.bf16.mxu0 %v1494
    %4234 = vmatpush1.bf16.msra.mxu0 %v1493
    %4235 = vmatprep.subr.bf16.mxu0 0
    %4236 = vmatpush1.bf16.msra.mxu0 0
    %4237 = vmatprep.subr.bf16.mxu0 0
    %4238 = vmatpush1.bf16.msra.mxu0 0
    %4239 = vmatprep.subr.bf16.mxu0 0
    %4240 = vmatpush1.bf16.msra.mxu0 0
    %4241 = vmatprep.subr.bf16.mxu0 0
    %4242 = vmatpush1.bf16.msra.mxu0 0
    %4243 = vmatprep.subr.bf16.mxu0 0
    %4244 = vmatpush1.bf16.msra.mxu0 0
    %4245 = vmatprep.subr.bf16.mxu0 0
    %4246 = vmatpush1.bf16.msra.mxu0 0
    %4247 = vmatprep.subr.bf16.mxu0 0
    %4248 = vmatpush1.bf16.msra.mxu0 0
    %4249 = vmatprep.subr.bf16.mxu0 0
    %4250 = vmatpush1.bf16.msra.mxu0 0
    %4251 = vmatprep.mubr.bf16.mxu0 0
    %4252 = vmatmul.mubr.bf16.gmra.mrb[0].mxu0 %v4119
    %v4253 = vpop.f32.mrb[0].mxu0
    %v4254 = vpop.f32.mrb[0].mxu0
    %v4255 = vpop.f32.mrb[0].mxu0
    %v4256 = vpop.f32.mrb[0].mxu0
    %4257 = vmatprep.mubr.bf16.mxu0 0
    %4258 = vmatmul.mubr.bf16.gmra.mrb[0].mxu0 %v4120
    %v4259 = vpop.f32.mrb[0].mxu0
    %v4260 = vadd.f32 0.0, %v4259
    %v4261 = vpop.f32.mrb[0].mxu0
    %v4262 = vadd.f32 0.0, %v4261
    %v4263 = vpop.f32.mrb[0].mxu0
    %v4264 = vadd.f32 0.0, %v4263
    %v4265 = vpop.f32.mrb[0].mxu0
    %v4266 = vadd.f32 0.0, %v4265
    %4267 = vdwg.mxu0
    %4268 = vmatprep.subr.bf16.mxu0 %v1440
    %4269 = vmatpush1.bf16.msra.mxu0 %v1439
    %4270 = vmatprep.subr.bf16.mxu0 %v1448
    %4271 = vmatpush1.bf16.msra.mxu0 %v1447
    %4272 = vmatprep.subr.bf16.mxu0 %v1456
    %4273 = vmatpush1.bf16.msra.mxu0 %v1455
    %4274 = vmatprep.subr.bf16.mxu0 %v1464
    %4275 = vmatpush1.bf16.msra.mxu0 %v1463
    %4276 = vmatprep.subr.bf16.mxu0 %v1472
    %4277 = vmatpush1.bf16.msra.mxu0 %v1471
    %4278 = vmatprep.subr.bf16.mxu0 %v1480
    %4279 = vmatpush1.bf16.msra.mxu0 %v1479
    %4280 = vmatprep.subr.bf16.mxu0 %v1488
    %4281 = vmatpush1.bf16.msra.mxu0 %v1487
    %4282 = vmatprep.subr.bf16.mxu0 %v1496
    %4283 = vmatpush1.bf16.msra.mxu0 %v1495
    %4284 = vmatprep.subr.bf16.mxu0 0
    %4285 = vmatpush1.bf16.msra.mxu0 0
    %4286 = vmatprep.subr.bf16.mxu0 0
    %4287 = vmatpush1.bf16.msra.mxu0 0
    %4288 = vmatprep.subr.bf16.mxu0 0
    %4289 = vmatpush1.bf16.msra.mxu0 0
    %4290 = vmatprep.subr.bf16.mxu0 0
    %4291 = vmatpush1.bf16.msra.mxu0 0
    %4292 = vmatprep.subr.bf16.mxu0 0
    %4293 = vmatpush1.bf16.msra.mxu0 0
    %4294 = vmatprep.subr.bf16.mxu0 0
    %4295 = vmatpush1.bf16.msra.mxu0 0
    %4296 = vmatprep.subr.bf16.mxu0 0
    %4297 = vmatpush1.bf16.msra.mxu0 0
    %4298 = vmatprep.subr.bf16.mxu0 0
    %4299 = vmatpush1.bf16.msra.mxu0 0
    %4300 = vmatprep.mubr.bf16.mxu0 0
    %4301 = vmatmul.mubr.bf16.gmra.mrb[0].mxu0 %v4119
    %v4302 = vpop.f32.mrb[0].mxu0
    %v4303 = vpop.f32.mrb[0].mxu0
    %v4304 = vpop.f32.mrb[0].mxu0
    %v4305 = vpop.f32.mrb[0].mxu0
    %4306 = vmatprep.mubr.bf16.mxu0 0
    %4307 = vmatmul.mubr.bf16.gmra.mrb[0].mxu0 %v4120
    %v4308 = vpop.f32.mrb[0].mxu0
    %v4309 = vadd.f32 0.0, %v4308
    %v4310 = vpop.f32.mrb[0].mxu0
    %v4311 = vadd.f32 0.0, %v4310
    %v4312 = vpop.f32.mrb[0].mxu0
    %v4313 = vadd.f32 0.0, %v4312
    %v4314 = vpop.f32.mrb[0].mxu0
    %v4315 = vadd.f32 0.0, %v4314
    %4316 = vdwg.mxu0
    %v4317 = vld [vmem:[%s1777] sm:$0xff]
    %v4318 = vld [vmem:[%s1777 + $0x8] sm:$0xff]
    %v4319 = vld [vmem:[%s1777 + $0x10] sm:$0xff]
    %v4320 = vld [vmem:[%s1777 + $0x18] sm:$0xff]
    %v4321 = vunpack.c.l.bf16 %v4317
    %v4322 = vunpack.c.l.bf16 %v4318
    %v4323 = vunpack.c.l.bf16 %v4319
    %v4324 = vunpack.c.l.bf16 %v4320
    %v4325 = vunpack.c.h.bf16 %v4317
    %v4326 = vunpack.c.h.bf16 %v4318
    %v4327 = vunpack.c.h.bf16 %v4319
    %v4328 = vunpack.c.h.bf16 %v4320
    %v4329 = vadd.f32 %v4156, %v4321
    %v4330 = vadd.f32 %v4158, %v4322
    %v4331 = vadd.f32 %v4205, %v4323
    %v4332 = vadd.f32 %v4207, %v4324
    %v4333 = vadd.f32 %v4160, %v4325
    %v4334 = vadd.f32 %v4162, %v4326
    %v4335 = vadd.f32 %v4209, %v4327
    %v4336 = vadd.f32 %v4211, %v4328
    %v4337 = vld [vmem:[#allocation2 + $0x20] sm:$0xff]
    %v4338 = vld [vmem:[#allocation2 + $0x28] sm:$0xff]
    %v4339 = vld [vmem:[#allocation2 + $0x30] sm:$0xff]
    %v4340 = vld [vmem:[#allocation2 + $0x38] sm:$0xff]
    %v4341 = vunpack.c.l.bf16 %v4337
    %v4342 = vunpack.c.l.bf16 %v4338
    %v4343 = vunpack.c.l.bf16 %v4339
    %v4344 = vunpack.c.l.bf16 %v4340
    %v4345 = vunpack.c.h.bf16 %v4337
    %v4346 = vunpack.c.h.bf16 %v4338
    %v4347 = vunpack.c.h.bf16 %v4339
    %v4348 = vunpack.c.h.bf16 %v4340
    %v4349 = vadd.f32 %v4260, %v4341
    %v4350 = vadd.f32 %v4262, %v4342
    %v4351 = vadd.f32 %v4309, %v4343
    %v4352 = vadd.f32 %v4311, %v4344
    %v4353 = vadd.f32 %v4264, %v4345
    %v4354 = vadd.f32 %v4266, %v4346
    %v4355 = vadd.f32 %v4313, %v4347
    %v4356 = vadd.f32 %v4315, %v4348
    %v4357 = vxor.u32 %v4329, 2147483648
    %v4358 = vxor.u32 %v4333, 2147483648
    %v4359 = vmul.f32 %v4357, 1.442695
    %v4360 = vpow.pop %v4359
    %v4361 = vmul.f32 %v4358, 1.442695
    %v4362 = vpow.pop %v4361
    %v4363 = vadd.f32 %v4360, 1.0
    %v4364 = vadd.f32 %v4362, 1.0
    %v4365 = vrcp.pop %v4363
    %v4366 = vmul.f32 1.0, %v4365
    %v4367 = vrcp.pop %v4364
    %v4368 = vmul.f32 1.0, %v4367
    %v4369 = vxor.u32 %v4330, 2147483648
    %v4370 = vxor.u32 %v4334, 2147483648
    %v4371 = vmul.f32 %v4369, 1.442695
    %v4372 = vpow.pop %v4371
    %v4373 = vmul.f32 %v4370, 1.442695
    %v4374 = vpow.pop %v4373
    %v4375 = vadd.f32 %v4372, 1.0
    %v4376 = vadd.f32 %v4374, 1.0
    %v4377 = vrcp.pop %v4375
    %v4378 = vmul.f32 1.0, %v4377
    %v4379 = vrcp.pop %v4376
    %v4380 = vmul.f32 1.0, %v4379
    %v4381 = vtanh.pop %v4331
    %v4382 = vtanh.pop %v4335
    %v4383 = vxor.u32 %v4332, 2147483648
    %v4384 = vxor.u32 %v4336, 2147483648
    %v4385 = vmul.f32 %v4383, 1.442695
    %v4386 = vpow.pop %v4385
    %v4387 = vmul.f32 %v4384, 1.442695
    %v4388 = vpow.pop %v4387
    %v4389 = vadd.f32 %v4386, 1.0
    %v4390 = vadd.f32 %v4388, 1.0
    %v4391 = vrcp.pop %v4389
    %v4392 = vmul.f32 1.0, %v4391
    %v4393 = vrcp.pop %v4390
    %v4394 = vmul.f32 1.0, %v4393
    %v4395 = vmul.f32 %v4378, %v4113
    %v4396 = vmul.f32 %v4380, %v4114
    %v4397 = vmul.f32 %v4366, %v4381
    %v4398 = vmul.f32 %v4368, %v4382
    %v4399 = vadd.f32 %v4395, %v4397
    %v4400 = vadd.f32 %v4396, %v4398
    %v4401 = vtanh.pop %v4399
    %v4402 = vtanh.pop %v4400
    %v4403 = vmul.f32 %v4392, %v4401
    %v4404 = vmul.f32 %v4394, %v4402
    %v4405 = vxor.u32 %v4349, 2147483648
    %v4406 = vxor.u32 %v4353, 2147483648
    %v4407 = vmul.f32 %v4405, 1.442695
    %v4408 = vpow.pop %v4407
    %v4409 = vmul.f32 %v4406, 1.442695
    %v4410 = vpow.pop %v4409
    %v4411 = vadd.f32 %v4408, 1.0
    %v4412 = vadd.f32 %v4410, 1.0
    %v4413 = vrcp.pop %v4411
    %v4414 = vmul.f32 1.0, %v4413
    %v4415 = vrcp.pop %v4412
    %v4416 = vmul.f32 1.0, %v4415
    %v4417 = vxor.u32 %v4350, 2147483648
    %v4418 = vxor.u32 %v4354, 2147483648
    %v4419 = vmul.f32 %v4417, 1.442695
    %v4420 = vpow.pop %v4419
    %v4421 = vmul.f32 %v4418, 1.442695
    %v4422 = vpow.pop %v4421
    %v4423 = vadd.f32 %v4420, 1.0
    %v4424 = vadd.f32 %v4422, 1.0
    %v4425 = vrcp.pop %v4423
    %v4426 = vmul.f32 1.0, %v4425
    %v4427 = vrcp.pop %v4424
    %v4428 = vmul.f32 1.0, %v4427
    %v4429 = vtanh.pop %v4351
    %v4430 = vtanh.pop %v4355
    %v4431 = vxor.u32 %v4352, 2147483648
    %v4432 = vxor.u32 %v4356, 2147483648
    %v4433 = vmul.f32 %v4431, 1.442695
    %v4434 = vpow.pop %v4433
    %v4435 = vmul.f32 %v4432, 1.442695
    %v4436 = vpow.pop %v4435
    %v4437 = vadd.f32 %v4434, 1.0
    %v4438 = vadd.f32 %v4436, 1.0
    %v4439 = vrcp.pop %v4437
    %v4440 = vmul.f32 1.0, %v4439
    %v4441 = vrcp.pop %v4438
    %v4442 = vmul.f32 1.0, %v4441
    %v4443 = vmul.f32 %v4426, %v4117
    %v4444 = vmul.f32 %v4428, %v4118
    %v4445 = vmul.f32 %v4414, %v4429
    %v4446 = vmul.f32 %v4416, %v4430
    %v4447 = vadd.f32 %v4443, %v4445
    %v4448 = vadd.f32 %v4444, %v4446
    %v4449 = vtanh.pop %v4447
    %v4450 = vtanh.pop %v4448
    %v4451 = vmul.f32 %v4440, %v4449
    %v4452 = vmul.f32 %v4442, %v4450
    %v4453 = vsel %vm1920, %v4403, 0.0
    %v4454 = vsel %vm1921, %v4404, 0.0
    %v4455 = vpack.c.bf16 %v4454, %v4453
    %s4456 = scalar_lea.vmem [#allocation3], 56
    %4457 = vst [vmem:[%s4456] sm:$0xff] %v4455
    %v4458 = vsel %vm1906, %v4451, 0.0
    %v4459 = vsel %vm1907, %v4452, 0.0
    %v4460 = vpack.c.bf16 %v4459, %v4458
    %4461 = vst [vmem:[#allocation4] sm:$0xff] %v4460
    %v4462 = vsel %vm1920, %v4403, %v4111
    %v4463 = vsel %vm1921, %v4404, %v4112
    %v4464 = vsel %vm1906, %v4451, %v4115
    %v4465 = vsel %vm1907, %v4452, %v4116
    %v4466 = vld [vmem:[#allocation3] sm:$0xff]
    %v4467 = vld [vmem:[#allocation3 + $0x8] sm:$0xff]
    %v4468 = vld [vmem:[#allocation3 + $0x10] sm:$0xff]
    %v4469 = vld [vmem:[#allocation3 + $0x18] sm:$0xff]
    %v4470 = vld [vmem:[#allocation3 + $0x20] sm:$0xff]
    %v4471 = vld [vmem:[#allocation3 + $0x28] sm:$0xff]
    %v4472 = vld [vmem:[#allocation3 + $0x30] sm:$0xff]
    %v4473 = vld [vmem:[#allocation3 + $0x38] sm:$0xff]
    %v4474 = vunpack.c.l.bf16 %v4466
    %v4475 = vunpack.c.h.bf16 %v4466
    %v4476 = vunpack.c.l.bf16 %v4467
    %v4477 = vunpack.c.h.bf16 %v4467
    %v4478 = vunpack.c.l.bf16 %v4468
    %v4479 = vunpack.c.h.bf16 %v4468
    %v4480 = vunpack.c.l.bf16 %v4469
    %v4481 = vunpack.c.h.bf16 %v4469
    %v4482 = vunpack.c.l.bf16 %v4470
    %v4483 = vunpack.c.h.bf16 %v4470
    %v4484 = vunpack.c.l.bf16 %v4471
    %v4485 = vunpack.c.h.bf16 %v4471
    %v4486 = vunpack.c.l.bf16 %v4472
    %v4487 = vunpack.c.h.bf16 %v4472
    %v4488 = vunpack.c.l.bf16 %v4473
    %v4489 = vunpack.c.h.bf16 %v4473
    %v4490 = vld [vmem:[#allocation4] sm:$0xff]
    %v4491 = vld [vmem:[#allocation4 + $0x8] sm:$0xff]
    %v4492 = vld [vmem:[#allocation4 + $0x10] sm:$0xff]
    %v4493 = vld [vmem:[#allocation4 + $0x18] sm:$0xff]
    %v4494 = vld [vmem:[#allocation4 + $0x20] sm:$0xff]
    %v4495 = vld [vmem:[#allocation4 + $0x28] sm:$0xff]
    %v4496 = vld [vmem:[#allocation4 + $0x30] sm:$0xff]
    %v4497 = vld [vmem:[#allocation4 + $0x38] sm:$0xff]
    %v4498 = vunpack.c.l.bf16 %v4490
    %v4499 = vunpack.c.h.bf16 %v4490
    %v4500 = vunpack.c.l.bf16 %v4491
    %v4501 = vunpack.c.h.bf16 %v4491
    %v4502 = vunpack.c.l.bf16 %v4492
    %v4503 = vunpack.c.h.bf16 %v4492
    %v4504 = vunpack.c.l.bf16 %v4493
    %v4505 = vunpack.c.h.bf16 %v4493
    %v4506 = vunpack.c.l.bf16 %v4494
    %v4507 = vunpack.c.h.bf16 %v4494
    %v4508 = vunpack.c.l.bf16 %v4495
    %v4509 = vunpack.c.h.bf16 %v4495
    %v4510 = vunpack.c.l.bf16 %v4496
    %v4511 = vunpack.c.h.bf16 %v4496
    %v4512 = vunpack.c.l.bf16 %v4497
    %v4513 = vunpack.c.h.bf16 %v4497
    %v4514 = vadd.f32 %v4474, %v4498
    %v4515 = vadd.f32 %v4475, %v4499
    %v4516 = vadd.f32 %v4476, %v4500
    %v4517 = vadd.f32 %v4477, %v4501
    %v4518 = vadd.f32 %v4478, %v4502
    %v4519 = vadd.f32 %v4479, %v4503
    %v4520 = vadd.f32 %v4480, %v4504
    %v4521 = vadd.f32 %v4481, %v4505
    %v4522 = vadd.f32 %v4482, %v4506
    %v4523 = vadd.f32 %v4483, %v4507
    %v4524 = vadd.f32 %v4484, %v4508
    %v4525 = vadd.f32 %v4485, %v4509
    %v4526 = vadd.f32 %v4486, %v4510
    %v4527 = vadd.f32 %v4487, %v4511
    %v4528 = vadd.f32 %v4488, %v4512
    %v4529 = vadd.f32 %v4489, %v4513
    %v4530 = vadd.f32 %v4462, %v4464
    %v4531 = vadd.f32 %v4463, %v4465
    %v4532 = vpack.c.bf16 %v4531, %v4530
    %v4533 = vld [vmem:[#allocation11] sm:$0xf]
    %v4534 = vld [vmem:[#allocation11 + $0x4] sm:$0xf]
    %v4535 = vld [vmem:[#allocation11 + $0x8] sm:$0xf]
    %v4536 = vld [vmem:[#allocation11 + $0xc] sm:$0xf]
    %v4537 = vld [vmem:[#allocation11 + $0x10] sm:$0xf]
    %v4538 = vld [vmem:[#allocation11 + $0x14] sm:$0xf]
    %v4539 = vld [vmem:[#allocation11 + $0x18] sm:$0xf]
    %v4540 = vld [vmem:[#allocation11 + $0x1c] sm:$0xf]
    %v4541 = vld [vmem:[#allocation11 + $0x20] sm:$0xf]
    %v4542 = vld [vmem:[#allocation11 + $0x24] sm:$0xf]
    %v4543 = vld [vmem:[#allocation11 + $0x28] sm:$0xf]
    %v4544 = vld [vmem:[#allocation11 + $0x2c] sm:$0xf]
    %v4545 = vld [vmem:[#allocation11 + $0x30] sm:$0xf]
    %v4546 = vld [vmem:[#allocation11 + $0x34] sm:$0xf]
    %v4547 = vld [vmem:[#allocation11 + $0x38] sm:$0xf]
    %v4548 = vld [vmem:[#allocation11 + $0x3c] sm:$0xf]
    %v4549 = vld [vmem:[%s6] sm:$0x1]
    %v4551 = vlaneseq
    %v4552 = vshrl.u32 %v4551, 7
    %v4553 = vsub.s32 0, %v4552
    %v4554 = vrot.slane %v4549, %v4553
    %v4572 = vunpack.c.l.b16 %v4533
    %v4573 = vunpack.c.l.b16 %v4534
    %v4574 = vunpack.c.l.b16 %v4535
    %v4575 = vunpack.c.l.b16 %v4536
    %v4576 = vunpack.c.l.b16 %v4537
    %v4577 = vunpack.c.l.b16 %v4538
    %v4578 = vunpack.c.l.b16 %v4539
    %v4579 = vunpack.c.l.b16 %v4540
    %v4580 = vunpack.c.l.b16 %v4541
    %v4581 = vunpack.c.l.b16 %v4542
    %v4582 = vunpack.c.l.b16 %v4543
    %v4583 = vunpack.c.l.b16 %v4544
    %v4584 = vunpack.c.l.b16 %v4545
    %v4585 = vunpack.c.l.b16 %v4546
    %v4586 = vunpack.c.l.b16 %v4547
    %v4587 = vunpack.c.l.b16 %v4548
    %v4588 = vpack.c.b16 %v4573, %v4572
    %v4589 = vpack.c.b16 %v4575, %v4574
    %v4590 = vpack.c.b16 %v4577, %v4576
    %v4591 = vpack.c.b16 %v4579, %v4578
    %v4592 = vpack.c.b16 %v4581, %v4580
    %v4593 = vpack.c.b16 %v4583, %v4582
    %v4594 = vpack.c.b16 %v4585, %v4584
    %v4595 = vpack.c.b16 %v4587, %v4586
    %4604 = vmatprep.subr.bf16.mxu0 0
    %4605 = vmatpush1.bf16.msra.mxu0 %v4588
    %4606 = vmatprep.subr.bf16.mxu0 0
    %4607 = vmatpush1.bf16.msra.mxu0 %v4589
    %4608 = vmatprep.subr.bf16.mxu0 0
    %4609 = vmatpush1.bf16.msra.mxu0 %v4590
    %4610 = vmatprep.subr.bf16.mxu0 0
    %4611 = vmatpush1.bf16.msra.mxu0 %v4591
    %4612 = vmatprep.subr.bf16.mxu0 0
    %4613 = vmatpush1.bf16.msra.mxu0 %v4592
    %4614 = vmatprep.subr.bf16.mxu0 0
    %4615 = vmatpush1.bf16.msra.mxu0 %v4593
    %4616 = vmatprep.subr.bf16.mxu0 0
    %4617 = vmatpush1.bf16.msra.mxu0 %v4594
    %4618 = vmatprep.subr.bf16.mxu0 0
    %4619 = vmatpush1.bf16.msra.mxu0 %v4595
    %4620 = vmatprep.subr.bf16.mxu0 0
    %4621 = vmatpush1.bf16.msra.mxu0 0
    %4622 = vmatprep.subr.bf16.mxu0 0
    %4623 = vmatpush1.bf16.msra.mxu0 0
    %4624 = vmatprep.subr.bf16.mxu0 0
    %4625 = vmatpush1.bf16.msra.mxu0 0
    %4626 = vmatprep.subr.bf16.mxu0 0
    %4627 = vmatpush1.bf16.msra.mxu0 0
    %4628 = vmatprep.subr.bf16.mxu0 0
    %4629 = vmatpush1.bf16.msra.mxu0 0
    %4630 = vmatprep.subr.bf16.mxu0 0
    %4631 = vmatpush1.bf16.msra.mxu0 0
    %4632 = vmatprep.subr.bf16.mxu0 0
    %4633 = vmatpush1.bf16.msra.mxu0 0
    %4634 = vmatprep.subr.bf16.mxu0 0
    %4635 = vmatpush1.bf16.msra.mxu0 0
    %4636 = vmatprep.mubr.bf16.mxu0 0
    %4637 = vmatmul.mubr.bf16.gmra.mrb[0].mxu0 %v4532
    %v4638 = vpop.f32.mrb[0].mxu0
    %v4639 = vadd.f32 %v4554, %v4638
    %v4640 = vpop.f32.mrb[0].mxu0
    %v4641 = vpop.f32.mrb[0].mxu0
    %v4642 = vadd.f32 %v4554, %v4641
    %v4643 = vpop.f32.mrb[0].mxu0
    %4644 = vdwg.mxu0
    %v4645 = vmax.f32 %v4639, 0.0
    %v4646 = vmax.f32 %v4642, 0.0
    %v4647 = vtanh.pop %v4514
    %v4648 = vtanh.pop %v4515
    %v4649 = vtanh.pop %v4516
    %v4650 = vtanh.pop %v4517
    %v4651 = vtanh.pop %v4518
    %v4652 = vtanh.pop %v4519
    %v4653 = vtanh.pop %v4520
    %v4654 = vtanh.pop %v4521
    %v4655 = vtanh.pop %v4522
    %v4656 = vtanh.pop %v4523
    %v4657 = vtanh.pop %v4524
    %v4658 = vtanh.pop %v4525
    %v4659 = vtanh.pop %v4526
    %v4660 = vtanh.pop %v4527
    %v4661 = vtanh.pop %v4528
    %v4662 = vtanh.pop %v4529
    %v4663 = vmul.f32 %v4645, %v4647
    %v4664 = vmul.f32 %v4646, %v4648
    %v4665 = vmul.f32 %v4645, %v4649
    %v4666 = vmul.f32 %v4646, %v4650
    %v4667 = vmul.f32 %v4645, %v4651
    %v4668 = vmul.f32 %v4646, %v4652
    %v4669 = vmul.f32 %v4645, %v4653
    %v4670 = vmul.f32 %v4646, %v4654
    %v4671 = vmul.f32 %v4645, %v4655
    %v4672 = vmul.f32 %v4646, %v4656
    %v4673 = vmul.f32 %v4645, %v4657
    %v4674 = vmul.f32 %v4646, %v4658
    %v4675 = vmul.f32 %v4645, %v4659
    %v4676 = vmul.f32 %v4646, %v4660
    %v4677 = vmul.f32 %v4645, %v4661
    %v4678 = vmul.f32 %v4646, %v4662
    %4679 = vadd.xlane.f32.xlu0 %v4663
    %v4680 = vpop.xlane.xlu0 %4679
    %4681 = vadd.xlane.f32.xlu0 %v4664
    %v4682 = vpop.xlane.xlu0 %4681
    %4683 = vadd.xlane.f32.xlu0 %v4665
    %v4684 = vpop.xlane.xlu0 %4683
    %4685 = vadd.xlane.f32.xlu0 %v4666
    %v4686 = vpop.xlane.xlu0 %4685
    %4687 = vadd.xlane.f32.xlu0 %v4667
    %v4688 = vpop.xlane.xlu0 %4687
    %4689 = vadd.xlane.f32.xlu0 %v4668
    %v4690 = vpop.xlane.xlu0 %4689
    %4691 = vadd.xlane.f32.xlu0 %v4669
    %v4692 = vpop.xlane.xlu0 %4691
    %4693 = vadd.xlane.f32.xlu0 %v4670
    %v4694 = vpop.xlane.xlu0 %4693
    %4695 = vadd.xlane.f32.xlu0 %v4671
    %v4696 = vpop.xlane.xlu0 %4695
    %4697 = vadd.xlane.f32.xlu0 %v4672
    %v4698 = vpop.xlane.xlu0 %4697
    %4699 = vadd.xlane.f32.xlu0 %v4673
    %v4700 = vpop.xlane.xlu0 %4699
    %4701 = vadd.xlane.f32.xlu0 %v4674
    %v4702 = vpop.xlane.xlu0 %4701
    %4703 = vadd.xlane.f32.xlu0 %v4675
    %v4704 = vpop.xlane.xlu0 %4703
    %4705 = vadd.xlane.f32.xlu0 %v4676
    %v4706 = vpop.xlane.xlu0 %4705
    %4707 = vadd.xlane.f32.xlu0 %v4677
    %v4708 = vpop.xlane.xlu0 %4707
    %4709 = vadd.xlane.f32.xlu0 %v4678
    %v4710 = vpop.xlane.xlu0 %4709
    %v4711 = vlaneseq
    %v4712 = vshrl.u32 %v4711, 7
    %v4713 = vadd.s32 %v4712, 8
    %v4714 = vlaneseq
    %v4715 = vand.u32 %v4714, 127
    %vm4716 = vcmp.eq.s32.totalorder %v4712, %v4715
    %vm4717 = vcmp.eq.s32.totalorder %v4713, %v4715
    %v4718 = vsel %vm4716, 1, 0
    %v4719 = vsel %vm4717, 1, 0
    %v4720 = vcvt.s32.f32 %v4718
    %v4721 = vcvt.s32.f32 %v4719
    %v4738 = vlaneseq
    %v4739 = vshrl.u32 %v4738, 7
    %v4740 = vsub.s32 %v4715, %v4739
    %v4741 = vrot.slane %v4680, %v4740
    %v4742 = vadd.s32 %v4715, 4294967288
    %v4743 = vlaneseq
    %v4744 = vshrl.u32 %v4743, 7
    %v4745 = vsub.s32 %v4742, %v4744
    %v4746 = vrot.slane %v4682, %v4745
    %vm4747 = vcmask 130112
    %v4748 = vsel %vm4747, %v4746, %v4741
    %v4749 = vlaneseq
    %v4750 = vshrl.u32 %v4749, 7
    %v4751 = vsub.s32 %v4715, %v4750
    %v4752 = vrot.slane %v4684, %v4751
    %v4753 = vlaneseq
    %v4754 = vshrl.u32 %v4753, 7
    %v4755 = vsub.s32 %v4742, %v4754
    %v4756 = vrot.slane %v4686, %v4755
    %v4757 = vsel %vm4747, %v4756, %v4752
    %v4758 = vlaneseq
    %v4759 = vshrl.u32 %v4758, 7
    %v4760 = vsub.s32 %v4715, %v4759
    %v4761 = vrot.slane %v4688, %v4760
    %v4762 = vlaneseq
    %v4763 = vshrl.u32 %v4762, 7
    %v4764 = vsub.s32 %v4742, %v4763
    %v4765 = vrot.slane %v4690, %v4764
    %v4766 = vsel %vm4747, %v4765, %v4761
    %v4767 = vlaneseq
    %v4768 = vshrl.u32 %v4767, 7
    %v4769 = vsub.s32 %v4715, %v4768
    %v4770 = vrot.slane %v4692, %v4769
    %v4771 = vlaneseq
    %v4772 = vshrl.u32 %v4771, 7
    %v4773 = vsub.s32 %v4742, %v4772
    %v4774 = vrot.slane %v4694, %v4773
    %v4775 = vsel %vm4747, %v4774, %v4770
    %v4776 = vlaneseq
    %v4777 = vshrl.u32 %v4776, 7
    %v4778 = vsub.s32 %v4715, %v4777
    %v4779 = vrot.slane %v4696, %v4778
    %v4780 = vlaneseq
    %v4781 = vshrl.u32 %v4780, 7
    %v4782 = vsub.s32 %v4742, %v4781
    %v4783 = vrot.slane %v4698, %v4782
    %v4784 = vsel %vm4747, %v4783, %v4779
    %v4785 = vlaneseq
    %v4786 = vshrl.u32 %v4785, 7
    %v4787 = vsub.s32 %v4715, %v4786
    %v4788 = vrot.slane %v4700, %v4787
    %v4789 = vlaneseq
    %v4790 = vshrl.u32 %v4789, 7
    %v4791 = vsub.s32 %v4742, %v4790
    %v4792 = vrot.slane %v4702, %v4791
    %v4793 = vsel %vm4747, %v4792, %v4788
    %v4794 = vlaneseq
    %v4795 = vshrl.u32 %v4794, 7
    %v4796 = vsub.s32 %v4715, %v4795
    %v4797 = vrot.slane %v4704, %v4796
    %v4798 = vlaneseq
    %v4799 = vshrl.u32 %v4798, 7
    %v4800 = vsub.s32 %v4742, %v4799
    %v4801 = vrot.slane %v4706, %v4800
    %v4802 = vsel %vm4747, %v4801, %v4797
    %v4803 = vlaneseq
    %v4804 = vshrl.u32 %v4803, 7
    %v4805 = vsub.s32 %v4715, %v4804
    %v4806 = vrot.slane %v4708, %v4805
    %v4807 = vlaneseq
    %v4808 = vshrl.u32 %v4807, 7
    %v4809 = vsub.s32 %v4742, %v4808
    %v4810 = vrot.slane %v4710, %v4809
    %v4811 = vsel %vm4747, %v4810, %v4806
    %vm4812 = vcmask 1041409
    %v4813 = vsel %vm4812, %v4757, %v4748
    %vm4814 = vcmask 1042434
    %v4815 = vsel %vm4814, %v4766, %v4813
    %vm4816 = vcmask 1043459
    %v4817 = vsel %vm4816, %v4775, %v4815
    %vm4818 = vcmask 1044484
    %v4819 = vsel %vm4818, %v4784, %v4817
    %vm4820 = vcmask 1045509
    %v4821 = vsel %vm4820, %v4793, %v4819
    %vm4822 = vcmask 1046534
    %v4823 = vsel %vm4822, %v4802, %v4821
    %vm4824 = vcmask 1047559
    %v4825 = vsel %vm4824, %v4811, %v4823
    %vm4826 = vcmask 130048
    %v4828 = vsel %vm4826, %v4720, 0
    %v4831 = vsel %vm4826, %v4721, 0
    %v4833 = vsel %vm4826, %v4825, 0
    %4835 = vmatprep.subr.mxu0 0.0
    %4836 = vmatpush1.xpose.msra.mxu0 %v4833
    %4837 = vmatprep.subr.mxu0 0.0
    %4838 = vmatpush1.xpose.msra.mxu0 0.0
    %4839 = vmatprep.subr.mxu0 0.0
    %4840 = vmatpush1.xpose.msra.mxu0 0.0
    %4841 = vmatprep.subr.mxu0 0.0
    %4842 = vmatpush1.xpose.msra.mxu0 0.0
    %4843 = vmatprep.subr.mxu0 0.0
    %4844 = vmatpush1.xpose.msra.mxu0 0.0
    %4845 = vmatprep.subr.mxu0 0.0
    %4846 = vmatpush1.xpose.msra.mxu0 0.0
    %4847 = vmatprep.subr.mxu0 0.0
    %4848 = vmatpush1.xpose.msra.mxu0 0.0
    %4849 = vmatprep.subr.mxu0 0.0
    %4850 = vmatpush1.xpose.msra.mxu0 0.0
    %4851 = vmatprep.subr.mxu0 0.0
    %4852 = vmatpush1.xpose.msra.mxu0 0.0
    %4853 = vmatprep.subr.mxu0 0.0
    %4854 = vmatpush1.xpose.msra.mxu0 0.0
    %4855 = vmatprep.subr.mxu0 0.0
    %4856 = vmatpush1.xpose.msra.mxu0 0.0
    %4857 = vmatprep.subr.mxu0 0.0
    %4858 = vmatpush1.xpose.msra.mxu0 0.0
    %4859 = vmatprep.subr.mxu0 0.0
    %4860 = vmatpush1.xpose.msra.mxu0 0.0
    %4861 = vmatprep.subr.mxu0 0.0
    %4862 = vmatpush1.xpose.msra.mxu0 0.0
    %4863 = vmatprep.subr.mxu0 0.0
    %4864 = vmatpush1.xpose.msra.mxu0 0.0
    %4865 = vmatprep.subr.mxu0 0.0
    %4866 = vmatpush1.xpose.msra.mxu0 0.0
    %4867 = vmatprep.subr.mxu0 0.0
    %4868 = vmatpush1.xpose.msra.mxu0 0.0
    %4869 = vmatprep.subr.mxu0 0.0
    %4870 = vmatpush1.xpose.msra.mxu0 0.0
    %4871 = vmatprep.subr.mxu0 0.0
    %4872 = vmatpush1.xpose.msra.mxu0 0.0
    %4873 = vmatprep.subr.mxu0 0.0
    %4874 = vmatpush1.xpose.msra.mxu0 0.0
    %4875 = vmatprep.subr.mxu0 0.0
    %4876 = vmatpush1.xpose.msra.mxu0 0.0
    %4877 = vmatprep.subr.mxu0 0.0
    %4878 = vmatpush1.xpose.msra.mxu0 0.0
    %4879 = vmatprep.subr.mxu0 0.0
    %4880 = vmatpush1.xpose.msra.mxu0 0.0
    %4881 = vmatprep.subr.mxu0 0.0
    %4882 = vmatpush1.xpose.msra.mxu0 0.0
    %4883 = vmatprep.subr.mxu0 0.0
    %4884 = vmatpush1.xpose.msra.mxu0 0.0
    %4885 = vmatprep.subr.mxu0 0.0
    %4886 = vmatpush1.xpose.msra.mxu0 0.0
    %4887 = vmatprep.subr.mxu0 0.0
    %4888 = vmatpush1.xpose.msra.mxu0 0.0
    %4889 = vmatprep.subr.mxu0 0.0
    %4890 = vmatpush1.xpose.msra.mxu0 0.0
    %4891 = vmatprep.subr.mxu0 0.0
    %4892 = vmatpush1.xpose.msra.mxu0 0.0
    %4893 = vmatprep.subr.mxu0 0.0
    %4894 = vmatpush1.xpose.msra.mxu0 0.0
    %4895 = vmatprep.subr.mxu0 0.0
    %4896 = vmatpush1.xpose.msra.mxu0 0.0
    %4897 = vmatprep.subr.mxu0 0.0
    %4898 = vmatpush1.xpose.msra.mxu0 0.0
    %4899 = vmatprep.mubr.f32.mxu0 0.0
    %4900 = vmatmul.mubr.f32.gmra.mrb[0].mxu0 %v4828
    %v4901 = vpop.f32.mrb[0].mxu0
    %v4902 = vadd.f32 0.0, %v4901
    %v4903 = vpop.f32.mrb[0].mxu0
    %4904 = vmatprep.mubr.f32.mxu0 0.0
    %4905 = vmatmul.mubr.f32.gmra.mrb[0].mxu0 %v4831
    %v4906 = vpop.f32.mrb[0].mxu0
    %v4907 = vadd.f32 0.0, %v4906
    %v4908 = vpop.f32.mrb[0].mxu0
    %4909 = vdwg.mxu0
    %vm4910 = vcmask 64512
    %v4911 = vsel %vm4910, %v4902, -inf
    %4912 = vmax.xlane.f32.xlu0 %v4911
    %v4913 = vpop.xlane.xlu0 %4912
    %v4914 = vsel %vm4910, %v4907, -inf
    %4915 = vmax.xlane.f32.xlu0 %v4914
    %v4916 = vpop.xlane.xlu0 %4915
    %v4917 = vsub.f32 %v4902, %v4913
    %v4918 = vsub.f32 %v4907, %v4916
    %v4919 = vmul.f32 %v4917, 1.442695
    %v4920 = vpow.pop %v4919
    %v4921 = vmul.f32 %v4918, 1.442695
    %v4922 = vpow.pop %v4921
    %v4923 = vsel %vm4910, %v4920, 0.0
    %4924 = vadd.xlane.f32.xlu0 %v4923
    %v4925 = vpop.xlane.xlu0 %4924
    %v4926 = vsel %vm4910, %v4922, 0.0
    %4927 = vadd.xlane.f32.xlu0 %v4926
    %v4928 = vpop.xlane.xlu0 %4927
    %v4929 = vrcp.pop %v4925
    %v4930 = vmul.f32 %v4920, %v4929
    %v4931 = vrcp.pop %v4928
    %v4932 = vmul.f32 %v4922, %v4931
    %4934 = vset.pattern.permute.xlu0 0
    %4935 = vperm.xlu0 %4934, %v4930
    %v4936 = vpop.permute.xlu0 %4935
    %4939 = vset.pattern.permute.xlu0 0
    %4940 = vperm.xlu0 %4939, %v4932
    %v4941 = vpop.permute.xlu0 %4940
    %v4943 = vmul.f32 %v4936, %v4514
    %v4944 = vmul.f32 %v4941, %v4515
    %v4945 = vadd.f32 %v4943, 0.0
    %v4946 = vadd.f32 %v4944, 0.0
    %4947 = vset.pattern.permute.xlu0 1
    %4948 = vperm.xlu0 %4947, %v4930
    %v4949 = vpop.permute.xlu0 %4948
    %4951 = vset.pattern.permute.xlu0 1
    %4952 = vperm.xlu0 %4951, %v4932
    %v4953 = vpop.permute.xlu0 %4952
    %v4955 = vmul.f32 %v4949, %v4516
    %v4956 = vmul.f32 %v4953, %v4517
    %v4957 = vadd.f32 %v4945, %v4955
    %v4958 = vadd.f32 %v4946, %v4956
    %4959 = vset.pattern.permute.xlu0 2
    %4960 = vperm.xlu0 %4959, %v4930
    %v4961 = vpop.permute.xlu0 %4960
    %4963 = vset.pattern.permute.xlu0 2
    %4964 = vperm.xlu0 %4963, %v4932
    %v4965 = vpop.permute.xlu0 %4964
    %v4967 = vmul.f32 %v4961, %v4518
    %v4968 = vmul.f32 %v4965, %v4519
    %v4969 = vadd.f32 %v4957, %v4967
    %v4970 = vadd.f32 %v4958, %v4968
    %4971 = vset.pattern.permute.xlu0 3
    %4972 = vperm.xlu0 %4971, %v4930
    %v4973 = vpop.permute.xlu0 %4972
    %4975 = vset.pattern.permute.xlu0 3
    %4976 = vperm.xlu0 %4975, %v4932
    %v4977 = vpop.permute.xlu0 %4976
    %v4979 = vmul.f32 %v4973, %v4520
    %v4980 = vmul.f32 %v4977, %v4521
    %v4981 = vadd.f32 %v4969, %v4979
    %v4982 = vadd.f32 %v4970, %v4980
    %4983 = vset.pattern.permute.xlu0 4
    %4984 = vperm.xlu0 %4983, %v4930
    %v4985 = vpop.permute.xlu0 %4984
    %4987 = vset.pattern.permute.xlu0 4
    %4988 = vperm.xlu0 %4987, %v4932
    %v4989 = vpop.permute.xlu0 %4988
    %v4991 = vmul.f32 %v4985, %v4522
    %v4992 = vmul.f32 %v4989, %v4523
    %v4993 = vadd.f32 %v4981, %v4991
    %v4994 = vadd.f32 %v4982, %v4992
    %4995 = vset.pattern.permute.xlu0 5
    %4996 = vperm.xlu0 %4995, %v4930
    %v4997 = vpop.permute.xlu0 %4996
    %4999 = vset.pattern.permute.xlu0 5
    %5000 = vperm.xlu0 %4999, %v4932
    %v5001 = vpop.permute.xlu0 %5000
    %v5003 = vmul.f32 %v4997, %v4524
    %v5004 = vmul.f32 %v5001, %v4525
    %v5005 = vadd.f32 %v4993, %v5003
    %v5006 = vadd.f32 %v4994, %v5004
    %5007 = vset.pattern.permute.xlu0 6
    %5008 = vperm.xlu0 %5007, %v4930
    %v5009 = vpop.permute.xlu0 %5008
    %5011 = vset.pattern.permute.xlu0 6
    %5012 = vperm.xlu0 %5011, %v4932
    %v5013 = vpop.permute.xlu0 %5012
    %v5015 = vmul.f32 %v5009, %v4526
    %v5016 = vmul.f32 %v5013, %v4527
    %v5017 = vadd.f32 %v5005, %v5015
    %v5018 = vadd.f32 %v5006, %v5016
    %5019 = vset.pattern.permute.xlu0 7
    %5020 = vperm.xlu0 %5019, %v4930
    %v5021 = vpop.permute.xlu0 %5020
    %5023 = vset.pattern.permute.xlu0 7
    %5024 = vperm.xlu0 %5023, %v4932
    %v5025 = vpop.permute.xlu0 %5024
    %v5027 = vmul.f32 %v5021, %v4528
    %v5028 = vmul.f32 %v5025, %v4529
    %v5029 = vadd.f32 %v5017, %v5027
    %v5030 = vadd.f32 %v5018, %v5028
    %v5031 = vpack.c.bf16 %v5030, %v5029
    %v5032 = vld [vmem:[#allocation13] sm:$0xf]
    %v5033 = vld [vmem:[#allocation13 + $0x4] sm:$0xf]
    %v5034 = vld [vmem:[#allocation13 + $0x8] sm:$0xf]
    %v5035 = vld [vmem:[#allocation13 + $0xc] sm:$0xf]
    %v5036 = vld [vmem:[#allocation13 + $0x10] sm:$0xf]
    %v5037 = vld [vmem:[#allocation13 + $0x14] sm:$0xf]
    %v5038 = vld [vmem:[#allocation13 + $0x18] sm:$0xf]
    %v5039 = vld [vmem:[#allocation13 + $0x1c] sm:$0xf]
    %v5040 = vld [vmem:[#allocation13 + $0x20] sm:$0xf]
    %v5041 = vld [vmem:[#allocation13 + $0x24] sm:$0xf]
    %v5042 = vld [vmem:[#allocation13 + $0x28] sm:$0xf]
    %v5043 = vld [vmem:[#allocation13 + $0x2c] sm:$0xf]
    %v5044 = vld [vmem:[#allocation13 + $0x30] sm:$0xf]
    %v5045 = vld [vmem:[#allocation13 + $0x34] sm:$0xf]
    %v5046 = vld [vmem:[#allocation13 + $0x38] sm:$0xf]
    %v5047 = vld [vmem:[#allocation13 + $0x3c] sm:$0xf]
    %v5048 = vld [vmem:[%s8] sm:$0x1]
    %v5050 = vlaneseq
    %v5051 = vshrl.u32 %v5050, 7
    %v5052 = vsub.s32 0, %v5051
    %v5053 = vrot.slane %v5048, %v5052
    %v5071 = vunpack.c.l.b16 %v5032
    %v5072 = vunpack.c.l.b16 %v5033
    %v5073 = vunpack.c.l.b16 %v5034
    %v5074 = vunpack.c.l.b16 %v5035
    %v5075 = vunpack.c.l.b16 %v5036
    %v5076 = vunpack.c.l.b16 %v5037
    %v5077 = vunpack.c.l.b16 %v5038
    %v5078 = vunpack.c.l.b16 %v5039
    %v5079 = vunpack.c.l.b16 %v5040
    %v5080 = vunpack.c.l.b16 %v5041
    %v5081 = vunpack.c.l.b16 %v5042
    %v5082 = vunpack.c.l.b16 %v5043
    %v5083 = vunpack.c.l.b16 %v5044
    %v5084 = vunpack.c.l.b16 %v5045
    %v5085 = vunpack.c.l.b16 %v5046
    %v5086 = vunpack.c.l.b16 %v5047
    %v5087 = vpack.c.b16 %v5072, %v5071
    %v5088 = vpack.c.b16 %v5074, %v5073
    %v5089 = vpack.c.b16 %v5076, %v5075
    %v5090 = vpack.c.b16 %v5078, %v5077
    %v5091 = vpack.c.b16 %v5080, %v5079
    %v5092 = vpack.c.b16 %v5082, %v5081
    %v5093 = vpack.c.b16 %v5084, %v5083
    %v5094 = vpack.c.b16 %v5086, %v5085
    %5103 = vmatprep.subr.bf16.mxu0 0
    %5104 = vmatpush1.bf16.msra.mxu0 %v5087
    %5105 = vmatprep.subr.bf16.mxu0 0
    %5106 = vmatpush1.bf16.msra.mxu0 %v5088
    %5107 = vmatprep.subr.bf16.mxu0 0
    %5108 = vmatpush1.bf16.msra.mxu0 %v5089
    %5109 = vmatprep.subr.bf16.mxu0 0
    %5110 = vmatpush1.bf16.msra.mxu0 %v5090
    %5111 = vmatprep.subr.bf16.mxu0 0
    %5112 = vmatpush1.bf16.msra.mxu0 %v5091
    %5113 = vmatprep.subr.bf16.mxu0 0
    %5114 = vmatpush1.bf16.msra.mxu0 %v5092
    %5115 = vmatprep.subr.bf16.mxu0 0
    %5116 = vmatpush1.bf16.msra.mxu0 %v5093
    %5117 = vmatprep.subr.bf16.mxu0 0
    %5118 = vmatpush1.bf16.msra.mxu0 %v5094
    %5119 = vmatprep.subr.bf16.mxu0 0
    %5120 = vmatpush1.bf16.msra.mxu0 0
    %5121 = vmatprep.subr.bf16.mxu0 0
    %5122 = vmatpush1.bf16.msra.mxu0 0
    %5123 = vmatprep.subr.bf16.mxu0 0
    %5124 = vmatpush1.bf16.msra.mxu0 0
    %5125 = vmatprep.subr.bf16.mxu0 0
    %5126 = vmatpush1.bf16.msra.mxu0 0
    %5127 = vmatprep.subr.bf16.mxu0 0
    %5128 = vmatpush1.bf16.msra.mxu0 0
    %5129 = vmatprep.subr.bf16.mxu0 0
    %5130 = vmatpush1.bf16.msra.mxu0 0
    %5131 = vmatprep.subr.bf16.mxu0 0
    %5132 = vmatpush1.bf16.msra.mxu0 0
    %5133 = vmatprep.subr.bf16.mxu0 0
    %5134 = vmatpush1.bf16.msra.mxu0 0
    %5135 = vmatprep.mubr.bf16.mxu0 0
    %5136 = vmatmul.mubr.bf16.gmra.mrb[0].mxu0 %v5031
    %v5137 = vpop.f32.mrb[0].mxu0
    %v5138 = vadd.f32 %v5053, %v5137
    %v5139 = vpop.f32.mrb[0].mxu0
    %v5140 = vpop.f32.mrb[0].mxu0
    %v5141 = vadd.f32 %v5053, %v5140
    %v5142 = vpop.f32.mrb[0].mxu0
    %5143 = vdwg.mxu0
    %5144 = vst [vmem:[#allocation14] sm:$0xff] %v5138
    %5145 = vst [vmem:[#allocation14 + $0x8] sm:$0xff] %v5141
    %5146 = vst.msk [vmem:[%s10] sm:$0xff] %vm4910, %v4930
    %5147 = vst.msk [vmem:[%s10 + $0x8] sm:$0xff] %vm4910, %v4932
    // Predicated region
    $region58: #{tpu_custom_call.1} parent=1 // pred_check
      _
    $region59: #{tpu_custom_call.1} parent=1 // pred_check_branch
      %5149 = sbr.rel (0) target = $region61
    $region60: #{tpu_custom_call.1} parent=1 // pred_region
      %s5151 = ssub.s32 256, 256
      %5152 = vsyncadd [#allocation7], %s5151
      %s5153 = sshll.u32 [#allocation14], 4
      %s5154 = int_to_ptr.vmem [resolvable:$true] %s5153
      %5159 = dma.vmem_to_hbm [thread:$0]  %s5154, 256, %s9, [#allocation7], 128, 128, 8
    $region61: #{tpu_custom_call.1} parent=1 // pred_fallthru
      _
    // Predicated region
    $region62: #{tpu_custom_call.1} parent=1 // pred_check
      _
    $region63: #{tpu_custom_call.1} parent=1 // pred_check_branch
      %5161 = sbr.rel (0) target = $region65
    $region64: #{tpu_custom_call.1} parent=1 // pred_region
      _
    $region65: #{tpu_custom_call.1} parent=1 // pred_fallthru
      _
    // Predicated region
    $region66: #{tpu_custom_call.1} parent=1 // pred_check
      _
    $region67: #{tpu_custom_call.1} parent=1 // pred_check_branch
      %5163 = sbr.rel (0) target = $region69
    $region68: #{tpu_custom_call.1} parent=1 // pred_region
      %5164 = dma.done [#allocation7], 256
    $region69: #{tpu_custom_call.1} parent=1 // pred_fallthru
      _
    // Predicated region
    $region70: #{tpu_custom_call.1} parent=1 // pred_check
      _
    $region71: #{tpu_custom_call.1} parent=1 // pred_check_branch
      %5166 = sbr.rel (0) target = $region73
    $region72: #{tpu_custom_call.1} parent=1 // pred_region
      _
    $region73: #{tpu_custom_call.1} parent=1 // pred_fallthru
      _
    %5167 = vsyncpa [#allocation6], 1
    %5168 = vsyncpa [#allocation9], 1
    %5169 = vsyncpa [#allocation12], 1
    %5170 = vsyncpa [#allocation7], 1

</llo_original>
